<compile_context>
chip_gen: v6e
topology: v6e:2x2x1
jax: 0.10.0
libtpu: 0.0.40
codegen_flags: <defaults>
</compile_context>

<pallas_src>
import functools

import jax
import jax.numpy as jnp
from jax import lax
from jax.experimental import pallas as pl
from jax.experimental.pallas import tpu as pltpu


def _round_up(x, m):
    return (x + m - 1) // m * m


# ---------------------------------------------------------------------------
# Fused Pallas kernel: embedding gather + 2-layer BiLSTM + linear head
# ---------------------------------------------------------------------------
def _bilstm_classifier_kernel(ids_ref, emb_hbm,
                              wih0_ref, b0_ref, whh0_ref,
                              w1a_ref, w1b_ref, b1_ref, whh1_ref,
                              whead_f_ref, whead_b_ref, bhead_ref,
                              tag_ref,
                              x_sc, z_sc, yf_sc, yb_sc, gather_sem,
                              *, T, B, Bp, Hp):
    """Whole forward pass in one kernel.

    ids_ref   : (T*B,)     i32  SMEM (scalar prefetch), time-major r = t*B + b
    emb_hbm   : (V, E)     f32  HBM (pl.ANY), gathered by row DMAs
    wih*_ref  : (Din, 8Hp) bf16 fused+padded input->gate weights
    b*_ref    : (1, 8Hp)   f32  fused bias (b_ih + b_hh), padded lanes zero
    whh*_ref  : (2Hp, 8Hp) bf16 block-diagonal (fwd|bwd) recurrent weights
    whead_*   : (2Hp, Cp)  f32  head weights (fwd-row / bwd-row variants)
    tag_ref   : (4Bp, Cp)  f32  padded output, rows [l0f, l0b, l1f, l1b] x Bp
    x_sc      : (T*Bp, E)  f32  gathered embeddings (time-major, batch padded)
    z_sc      : (T*Bp, 8Hp)f32  staged input projections (reused by both layers)
    yf_sc/yb_sc:(T*Bp, 2Hp)f32  layer-0 outputs (fwd-time / bwd-time indexed)
    """
    f32, bf16 = jnp.float32, jnp.bfloat16
    DH = 2 * Hp            # fused (fwd | bwd) hidden width -> multiple of 128
    G = 4 * DH             # fused gate width [i | f | g | o]
    E = x_sc.shape[1]

    # ---- 0. embedding gather: per-row HBM -> VMEM DMAs --------------------
    copies = []
    for t in range(T):
        for b in range(B):
            row = ids_ref[t * B + b]                       # SMEM scalar read
            cp = pltpu.make_async_copy(
                emb_hbm.at[pl.ds(row, 1), :],              # (1, E) HBM slice
                x_sc.at[pl.ds(t * Bp + b, 1), :],          # time-major dest
                gather_sem)
            cp.start()
            copies.append(cp)
    for cp in copies:
        cp.wait()
    if Bp > B:
        # Deterministic zeros in the padded batch rows.  Padded rows never mix
        # with real rows anywhere downstream; this just keeps them clean.
        for t in range(T):
            x_sc[t * Bp + B:(t + 1) * Bp, :] = jnp.zeros((Bp - B, E), f32)

    # Lane mask (hoisted): fwd half vs bwd half of every 128*k-aligned gate
    # block.  Used only for the cheap elementwise merge of the two z tiles.
    lane = lax.broadcasted_iota(jnp.int32, (Bp, G), 1)
    fwd_mask = (lane % DH) < Hp

    def run_layer(whh_ref, write_y):
        """One fused fwd+bwd recurrence over the projections staged in z_sc."""
        h = jnp.zeros((Bp, DH), f32)
        c = jnp.zeros((Bp, DH), f32)
        # T is a small static constant -> the short fixed-trip-count loop is
        # intentionally fully unrolled; the per-step working set stays bounded
        # because z / y live in VMEM scratch, not vregs.  For production-length
        # T switch this to pl.loop with pl.ds(i * Bp, Bp) indices.
        for i in range(T):
            t_f = i                       # forward direction time index
            t_b = T - 1 - i               # backward direction time index
            z_f = z_sc[t_f * Bp:(t_f + 1) * Bp, :]     # aligned (Bp, G) tiles
            z_b = z_sc[t_b * Bp:(t_b + 1) * Bp, :]
            # whh is loop invariant; Mosaic keeps the weight push off the
            # serial chain.
            # TODO(synk): pltpu.matmul_push_rhs/acc_lhs could pin whh in the
            #             MXU explicitly across the unrolled steps.
            z = (jnp.where(fwd_mask, z_f, z_b)
                 + jnp.dot(h.astype(bf16), whh_ref[...],
                           preferred_element_type=f32))
            # 128-lane aligned gate slices; tanh only on the g block -> half
            # the EUP pushes on the serial critical path.
            i_g = jax.nn.sigmoid(z[:, 0 * DH:1 * DH])
            f_g = jax.nn.sigmoid(z[:, 1 * DH:2 * DH])
            g_g = jnp.tanh(z[:, 2 * DH:3 * DH])
            o_g = jax.nn.sigmoid(z[:, 3 * DH:4 * DH])
            c = f_g * c + i_g * g_g
            h = o_g * jnp.tanh(c)
            if write_y:
                # Full-tile aligned stores; the stale half-lanes are killed
                # later by the zero rows of w1a / w1b.
                yf_sc[t_f * Bp:(t_f + 1) * Bp, :] = h
                yb_sc[t_b * Bp:(t_b + 1) * Bp, :] = h
        return h      # (Bp, DH) = [final fwd hidden | final bwd hidden]

    # ---- 1. layer 0: bulk input projection (one MXU matmul) + recurrence ---
    z_sc[...] = (jnp.dot(x_sc[...].astype(bf16), wih0_ref[...],
                         preferred_element_type=f32) + b0_ref[...])
    h0 = run_layer(whh0_ref, write_y=True)

    # ---- 2. layer 1: bulk projection of layer-0 outputs + recurrence -------
    # (z_sc is reused; layer 0 has fully consumed it by now)
    z_sc[...] = (jnp.dot(yf_sc[...].astype(bf16), w1a_ref[...],
                         preferred_element_type=f32) + b1_ref[...])
    z_sc[...] += jnp.dot(yb_sc[...].astype(bf16), w1b_ref[...],
                         preferred_element_type=f32)
    h1 = run_layer(whh1_ref, write_y=False)

    # ---- 3. linear head: one row-block matmul + store per h_n entry --------
    # h_n row order: l0_fwd, l0_bwd, l1_fwd, l1_bwd (each Bp rows, B real).
    bh = bhead_ref[...]
    tag_ref[0 * Bp:1 * Bp, :] = (jnp.dot(h0, whead_f_ref[...],
                                         preferred_element_type=f32) + bh)
    tag_ref[1 * Bp:2 * Bp, :] = (jnp.dot(h0, whead_b_ref[...],
                                         preferred_element_type=f32) + bh)
    tag_ref[2 * Bp:3 * Bp, :] = (jnp.dot(h1, whead_f_ref[...],
                                         preferred_element_type=f32) + bh)
    tag_ref[3 * Bp:4 * Bp, :] = (jnp.dot(h1, whead_b_ref[...],
                                         preferred_element_type=f32) + bh)


# ---------------------------------------------------------------------------
# Weight fusion / padding helpers (plain JAX, done once per call)
# ---------------------------------------------------------------------------
def _fuse_gate_weights(w_f, w_b, H, Hp):
    """PyTorch (4H, Din) fwd/bwd input weights -> (Din, 8*Hp), lane padded."""
    din = w_f.shape[1]
    DH, G = 2 * Hp, 8 * Hp
    wf_t, wb_t = w_f.T, w_b.T                         # (Din, 4H)
    out = jnp.zeros((din, G), jnp.float32)
    for k in range(4):
        out = out.at[:, k * DH:k * DH + H].set(wf_t[:, k * H:(k + 1) * H])
        out = out.at[:, k * DH + Hp:k * DH + Hp + H].set(
            wb_t[:, k * H:(k + 1) * H])
    return out


def _fuse_gate_bias(p_f, p_b, H, Hp):
    DH, G = 2 * Hp, 8 * Hp
    bf = p_f["b_ih"] + p_f["b_hh"]
    bb = p_b["b_ih"] + p_b["b_hh"]
    out = jnp.zeros((1, G), jnp.float32)
    for k in range(4):
        out = out.at[0, k * DH:k * DH + H].set(bf[k * H:(k + 1) * H])
        out = out.at[0, k * DH + Hp:k * DH + Hp + H].set(bb[k * H:(k + 1) * H])
    return out


def _fuse_hh_blockdiag(w_f, w_b, H, Hp):
    """(4H, H) fwd/bwd recurrent weights -> block-diagonal (2*Hp, 8*Hp).
    Padded rows/columns stay zero so padded hidden lanes never leak."""
    DH, G = 2 * Hp, 8 * Hp
    wf_t, wb_t = w_f.T, w_b.T                         # (H, 4H)
    out = jnp.zeros((DH, G), jnp.float32)
    for k in range(4):
        out = out.at[0:H, k * DH:k * DH + H].set(wf_t[:, k * H:(k + 1) * H])
        out = out.at[Hp:Hp + H, k * DH + Hp:k * DH + Hp + H].set(
            wb_t[:, k * H:(k + 1) * H])
    return out


def _fuse_l1_input_weights(w_f, w_b, H, Hp):
    """Layer-1 (4H, 2H) fwd/bwd input weights -> (w1a, w1b), each (2*Hp, 8*Hp).

    Layer-0 outputs are staged in two scratch buffers: the fwd-time buffer
    carries time-aligned forward outputs only in lanes [0, H), the bwd-time
    buffer carries backward outputs only in lanes [Hp, Hp+H); all other rows
    of w1a / w1b are zero so stale / padded lanes contribute nothing.
    """
    DH, G = 2 * Hp, 8 * Hp
    w1a = jnp.zeros((DH, G), jnp.float32)
    w1b = jnp.zeros((DH, G), jnp.float32)
    for k in range(4):
        df = slice(k * DH, k * DH + H)                # fwd-direction gate lanes
        db = slice(k * DH + Hp, k * DH + Hp + H)      # bwd-direction gate lanes
        w1a = w1a.at[0:H, df].set(w_f[k * H:(k + 1) * H, 0:H].T)
        w1a = w1a.at[0:H, db].set(w_b[k * H:(k + 1) * H, 0:H].T)
        w1b = w1b.at[Hp:Hp + H, df].set(w_f[k * H:(k + 1) * H, H:2 * H].T)
        w1b = w1b.at[Hp:Hp + H, db].set(w_b[k * H:(k + 1) * H, H:2 * H].T)
    return w1a, w1b


def _fuse_head(w_out, b_out, H, Hp, C, Cp):
    DH = 2 * Hp
    w_f = jnp.zeros((DH, Cp), jnp.float32).at[0:H, 0:C].set(w_out.T)
    w_b = jnp.zeros((DH, Cp), jnp.float32).at[Hp:Hp + H, 0:C].set(w_out.T)
    b = jnp.zeros((1, Cp), jnp.float32).at[0, 0:C].set(b_out)
    return w_f, w_b, b


# ---------------------------------------------------------------------------
# Forward wrapper
# ---------------------------------------------------------------------------
def lstm_classifier_forward(params, ids, h_size):
    # TODO(synk): sent_to_ids tokenization (nltk, stemming, stopwords) has no
    #             Pallas equivalent; the model consumes pre-tokenized ids.
    B, T = ids.shape
    E = params["embedding"].shape[1]
    H = h_size
    C = params["w_out"].shape[0]

    Bp = _round_up(B, 8)      # sublane-tile padded batch
    Hp = _round_up(H, 64)     # -> 2*Hp (one fwd|bwd pair) is a 128-lane tile
    Cp = _round_up(C, 128)    # lane-dense output block
    DH, G = 2 * Hp, 8 * Hp

    l0f, l0b = params["lstm"][(0, 0)], params["lstm"][(0, 1)]
    l1f, l1b = params["lstm"][(1, 0)], params["lstm"][(1, 1)]

    bf16 = jnp.bfloat16
    wih0 = _fuse_gate_weights(l0f["w_ih"], l0b["w_ih"], H, Hp).astype(bf16)
    whh0 = _fuse_hh_blockdiag(l0f["w_hh"], l0b["w_hh"], H, Hp).astype(bf16)
    b0 = _fuse_gate_bias(l0f, l0b, H, Hp)
    w1a, w1b = _fuse_l1_input_weights(l1f["w_ih"], l1b["w_ih"], H, Hp)
    w1a, w1b = w1a.astype(bf16), w1b.astype(bf16)
    whh1 = _fuse_hh_blockdiag(l1f["w_hh"], l1b["w_hh"], H, Hp).astype(bf16)
    b1 = _fuse_gate_bias(l1f, l1b, H, Hp)
    whead_f, whead_b, bhead = _fuse_head(params["w_out"], params["b_out"],
                                         H, Hp, C, Cp)

    ids_tm = ids.T.reshape(-1).astype(jnp.int32)      # time-major: r = t*B + b

    kernel = functools.partial(_bilstm_classifier_kernel,
                               T=T, B=B, Bp=Bp, Hp=Hp)

    def full(shape):
        return pl.BlockSpec(shape, lambda i, ids_sc: (0, 0))

    tag_pad = pl.pallas_call(
        kernel,
        out_shape=jax.ShapeDtypeStruct((4 * Bp, Cp), jnp.float32),
        grid_spec=pltpu.PrefetchScalarGridSpec(
            num_scalar_prefetch=1,                    # ids -> SMEM
            grid=(1,),
            in_specs=[
                pl.BlockSpec(memory_space=pl.ANY),    # embedding stays in HBM
                full((E, G)),                         # wih0
                full((1, G)),                         # b0
                full((DH, G)),                        # whh0
                full((DH, G)),                        # w1a (layer-1, fwd rows)
                full((DH, G)),                        # w1b (layer-1, bwd rows)
                full((1, G)),                         # b1
                full((DH, G)),                        # whh1
                full((DH, Cp)),                       # head weight (fwd rows)
                full((DH, Cp)),                       # head weight (bwd rows)
                full((1, Cp)),                        # head bias
            ],
            out_specs=full((4 * Bp, Cp)),
            scratch_shapes=[
                pltpu.VMEM((T * Bp, E), jnp.float32),   # gathered embeddings
                pltpu.VMEM((T * Bp, G), jnp.float32),   # z (reused, both layers)
                pltpu.VMEM((T * Bp, DH), jnp.float32),  # layer-0 fwd outputs
                pltpu.VMEM((T * Bp, DH), jnp.float32),  # layer-0 bwd outputs
                pltpu.SemaphoreType.DMA,                # gather DMA semaphore
            ]),
        compiler_params=pltpu.CompilerParams(
            dimension_semantics=("arbitrary",),
            vmem_limit_bytes=32 * 1024 * 1024),
    )(ids_tm, params["embedding"], wih0, b0, whh0, w1a, w1b, b1, whh1,
      whead_f, whead_b, bhead)

    # Drop batch / class padding; block order is [l0_fwd, l0_bwd, l1_fwd, l1_bwd]
    return tag_pad.reshape(4, Bp, Cp)[:, :B, :C].reshape(4 * B, C)


# ---------------------------------------------------------------------------
# Parameter init (deterministic, shapes match nn.Embedding/nn.LSTM/nn.Linear)
# ---------------------------------------------------------------------------
def init_params(key, v_size, e_size, h_size, c_size):
    params = {}
    k_emb, k_lstm, k_out = jax.random.split(key, 3)

    emb = 0.1 * jax.random.normal(k_emb, (v_size, e_size), jnp.float32)
    emb = emb.at[0].set(0.0)                      # padding_idx=0
    params["embedding"] = emb

    lstm = {}
    lkeys = jax.random.split(k_lstm, 2 * 2 * 4)
    idx = 0
    for layer in range(2):
        in_size = e_size if layer == 0 else 2 * h_size
        for direction in range(2):
            lstm[(layer, direction)] = {
                "w_ih": 0.1 * jax.random.normal(lkeys[idx + 0],
                                                (4 * h_size, in_size), jnp.float32),
                "w_hh": 0.1 * jax.random.normal(lkeys[idx + 1],
                                                (4 * h_size, h_size), jnp.float32),
                "b_ih": 0.1 * jax.random.normal(lkeys[idx + 2],
                                                (4 * h_size,), jnp.float32),
                "b_hh": 0.1 * jax.random.normal(lkeys[idx + 3],
                                                (4 * h_size,), jnp.float32),
            }
            idx += 4
    params["lstm"] = lstm

    k_w, k_b = jax.random.split(k_out)
    params["w_out"] = 0.1 * jax.random.normal(k_w, (c_size, h_size), jnp.float32)
    params["b_out"] = 0.1 * jax.random.normal(k_b, (c_size,), jnp.float32)
    return params


# ---------------------------------------------------------------------------
# Pure-JAX reference (same math, f32 everywhere) for a sanity check
# ---------------------------------------------------------------------------
def _ref_lstm_dir(x_tbd, p, h_size, reverse):
    T, B, _ = x_tbd.shape
    order = range(T - 1, -1, -1) if reverse else range(T)
    h = jnp.zeros((B, h_size), jnp.float32)
    c = jnp.zeros((B, h_size), jnp.float32)
    ys = [None] * T
    for t in order:
        z = x_tbd[t] @ p["w_ih"].T + h @ p["w_hh"].T + p["b_ih"] + p["b_hh"]
        i_g = jax.nn.sigmoid(z[:, 0 * h_size:1 * h_size])
        f_g = jax.nn.sigmoid(z[:, 1 * h_size:2 * h_size])
        g_g = jnp.tanh(z[:, 2 * h_size:3 * h_size])
        o_g = jax.nn.sigmoid(z[:, 3 * h_size:4 * h_size])
        c = f_g * c + i_g * g_g
        h = o_g * jnp.tanh(c)
        ys[t] = h
    return jnp.stack(ys, axis=0), h


def reference_forward(params, ids, h_size):
    emb = jnp.take(params["embedding"], ids, axis=0)
    x = jnp.transpose(emb, (1, 0, 2))
    h_states, layer_in = [], x
    for layer in range(2):
        outs = []
        for direction, rev in enumerate((False, True)):
            y, h_fin = _ref_lstm_dir(layer_in, params["lstm"][(layer, direction)],
                                     h_size, rev)
            outs.append(y)
            h_states.append(h_fin)
        layer_in = jnp.concatenate(outs, axis=-1)
    h_n = jnp.stack(h_states, axis=0)
    flat = h_n.reshape(-1, h_size)
    return flat @ params["w_out"].T + params["b_out"]


# ---------------------------------------------------------------------------
if __name__ == "__main__":
    V_SIZE, E_SIZE, H_SIZE, C_SIZE = 100, 64, 32, 4
    B_SIZE, MAX_LEN = 2, 8

    key = jax.random.PRNGKey(0)
    k_params, k_ids = jax.random.split(key)
    params = init_params(k_params, V_SIZE, E_SIZE, H_SIZE, C_SIZE)
    ids = jax.random.randint(k_ids, (B_SIZE, MAX_LEN), 0, V_SIZE, dtype=jnp.int32)

    out = lstm_classifier_forward(params, ids, H_SIZE)
    out = jax.block_until_ready(out)
    assert out.shape == (4 * B_SIZE, C_SIZE), out.shape

    ref = reference_forward(params, ids, H_SIZE)
    # bf16 MXU operands vs f32 reference -> modest tolerance
    assert jnp.allclose(out, ref, rtol=2e-2, atol=2e-2), "mismatch vs reference"

    print("KERNEL_OK")
</pallas_src>

<mosaic_0001>
module attributes {stable_mosaic.version = 11 : i64} {
  func.func @_bilstm_classifier_kernel(%arg0: i32, %arg1: memref<16xi32, #tpu.memory_space<smem>>, %arg2: memref<100x64xf32, #tpu.memory_space<any>>, %arg3: memref<64x512xbf16, #tpu.memory_space<vmem>>, %arg4: memref<1x512xf32, #tpu.memory_space<vmem>>, %arg5: memref<128x512xbf16, #tpu.memory_space<vmem>>, %arg6: memref<128x512xbf16, #tpu.memory_space<vmem>>, %arg7: memref<128x512xbf16, #tpu.memory_space<vmem>>, %arg8: memref<1x512xf32, #tpu.memory_space<vmem>>, %arg9: memref<128x512xbf16, #tpu.memory_space<vmem>>, %arg10: memref<128x128xf32, #tpu.memory_space<vmem>>, %arg11: memref<128x128xf32, #tpu.memory_space<vmem>>, %arg12: memref<1x128xf32, #tpu.memory_space<vmem>>, %arg13: memref<32x128xf32, #tpu.memory_space<vmem>>, %arg14: memref<64x64xf32, #tpu.memory_space<vmem>>, %arg15: memref<64x512xf32, #tpu.memory_space<vmem>>, %arg16: memref<64x128xf32, #tpu.memory_space<vmem>>, %arg17: memref<64x128xf32, #tpu.memory_space<vmem>>, %arg18: memref<!tpu.dma_semaphore, #tpu.memory_space<semaphore_mem>>) attributes {dimension_semantics = [#tpu.dimension_semantics<arbitrary>], iteration_bounds = array<i64: 1>, scalar_prefetch = 1 : i64, scratch_operands = 5 : i64, tpu.core_type = #tpu.core_type<tc>, window_params = [{}, {pipeline_mode = #tpu.pipeline_mode<synchronous>, transform_indices = @transform_1, window_bounds = array<i64: 64, 512>}, {pipeline_mode = #tpu.pipeline_mode<synchronous>, transform_indices = @transform_2, window_bounds = array<i64: 1, 512>}, {pipeline_mode = #tpu.pipeline_mode<synchronous>, transform_indices = @transform_3, window_bounds = array<i64: 128, 512>}, {pipeline_mode = #tpu.pipeline_mode<synchronous>, transform_indices = @transform_4, window_bounds = array<i64: 128, 512>}, {pipeline_mode = #tpu.pipeline_mode<synchronous>, transform_indices = @transform_5, window_bounds = array<i64: 128, 512>}, {pipeline_mode = #tpu.pipeline_mode<synchronous>, transform_indices = @transform_6, window_bounds = array<i64: 1, 512>}, {pipeline_mode = #tpu.pipeline_mode<synchronous>, transform_indices = @transform_7, window_bounds = array<i64: 128, 512>}, {pipeline_mode = #tpu.pipeline_mode<synchronous>, transform_indices = @transform_8, window_bounds = array<i64: 128, 128>}, {pipeline_mode = #tpu.pipeline_mode<synchronous>, transform_indices = @transform_9, window_bounds = array<i64: 128, 128>}, {pipeline_mode = #tpu.pipeline_mode<synchronous>, transform_indices = @transform_10, window_bounds = array<i64: 1, 128>}, {pipeline_mode = #tpu.pipeline_mode<synchronous>, transform_indices = @transform_11, window_bounds = array<i64: 32, 128>}]} {
    %c0 = arith.constant 0 : index
    %0 = memref.load %arg1[%c0] : memref<16xi32, #tpu.memory_space<smem>>
    %c0_i32 = arith.constant 0 : i32
    %1 = tpu.memref_slice %arg2[%0, %c0_i32] : memref<100x64xf32, #tpu.memory_space<any>> -> memref<1x64xf32, #tpu.memory_space<any>>
    %c0_i32_0 = arith.constant 0 : i32
    %c0_i32_1 = arith.constant 0 : i32
    %2 = tpu.memref_slice %arg14[%c0_i32_0, %c0_i32_1] : memref<64x64xf32, #tpu.memory_space<vmem>> -> memref<1x64xf32, #tpu.memory_space<vmem>>
    tpu.enqueue_dma source(%1 : memref<1x64xf32, #tpu.memory_space<any>>) target(%2 : memref<1x64xf32, #tpu.memory_space<vmem>>) target_semaphore(%arg18 : memref<!tpu.dma_semaphore, #tpu.memory_space<semaphore_mem>>)
    %c1 = arith.constant 1 : index
    %3 = memref.load %arg1[%c1] : memref<16xi32, #tpu.memory_space<smem>>
    %c0_i32_2 = arith.constant 0 : i32
    %4 = tpu.memref_slice %arg2[%3, %c0_i32_2] : memref<100x64xf32, #tpu.memory_space<any>> -> memref<1x64xf32, #tpu.memory_space<any>>
    %c1_i32 = arith.constant 1 : i32
    %c0_i32_3 = arith.constant 0 : i32
    %5 = tpu.memref_slice %arg14[%c1_i32, %c0_i32_3] : memref<64x64xf32, #tpu.memory_space<vmem>> -> memref<1x64xf32, #tpu.memory_space<vmem>>
    tpu.enqueue_dma source(%4 : memref<1x64xf32, #tpu.memory_space<any>>) target(%5 : memref<1x64xf32, #tpu.memory_space<vmem>>) target_semaphore(%arg18 : memref<!tpu.dma_semaphore, #tpu.memory_space<semaphore_mem>>)
    %c2 = arith.constant 2 : index
    %6 = memref.load %arg1[%c2] : memref<16xi32, #tpu.memory_space<smem>>
    %c0_i32_4 = arith.constant 0 : i32
    %7 = tpu.memref_slice %arg2[%6, %c0_i32_4] : memref<100x64xf32, #tpu.memory_space<any>> -> memref<1x64xf32, #tpu.memory_space<any>>
    %c8_i32 = arith.constant 8 : i32
    %c0_i32_5 = arith.constant 0 : i32
    %8 = tpu.memref_slice %arg14[%c8_i32, %c0_i32_5] : memref<64x64xf32, #tpu.memory_space<vmem>> -> memref<1x64xf32, #tpu.memory_space<vmem>>
    tpu.enqueue_dma source(%7 : memref<1x64xf32, #tpu.memory_space<any>>) target(%8 : memref<1x64xf32, #tpu.memory_space<vmem>>) target_semaphore(%arg18 : memref<!tpu.dma_semaphore, #tpu.memory_space<semaphore_mem>>)
    %c3 = arith.constant 3 : index
    %9 = memref.load %arg1[%c3] : memref<16xi32, #tpu.memory_space<smem>>
    %c0_i32_6 = arith.constant 0 : i32
    %10 = tpu.memref_slice %arg2[%9, %c0_i32_6] : memref<100x64xf32, #tpu.memory_space<any>> -> memref<1x64xf32, #tpu.memory_space<any>>
    %c9_i32 = arith.constant 9 : i32
    %c0_i32_7 = arith.constant 0 : i32
    %11 = tpu.memref_slice %arg14[%c9_i32, %c0_i32_7] : memref<64x64xf32, #tpu.memory_space<vmem>> -> memref<1x64xf32, #tpu.memory_space<vmem>>
    tpu.enqueue_dma source(%10 : memref<1x64xf32, #tpu.memory_space<any>>) target(%11 : memref<1x64xf32, #tpu.memory_space<vmem>>) target_semaphore(%arg18 : memref<!tpu.dma_semaphore, #tpu.memory_space<semaphore_mem>>)
    %c4 = arith.constant 4 : index
    %12 = memref.load %arg1[%c4] : memref<16xi32, #tpu.memory_space<smem>>
    %c0_i32_8 = arith.constant 0 : i32
    %13 = tpu.memref_slice %arg2[%12, %c0_i32_8] : memref<100x64xf32, #tpu.memory_space<any>> -> memref<1x64xf32, #tpu.memory_space<any>>
    %c16_i32 = arith.constant 16 : i32
    %c0_i32_9 = arith.constant 0 : i32
    %14 = tpu.memref_slice %arg14[%c16_i32, %c0_i32_9] : memref<64x64xf32, #tpu.memory_space<vmem>> -> memref<1x64xf32, #tpu.memory_space<vmem>>
    tpu.enqueue_dma source(%13 : memref<1x64xf32, #tpu.memory_space<any>>) target(%14 : memref<1x64xf32, #tpu.memory_space<vmem>>) target_semaphore(%arg18 : memref<!tpu.dma_semaphore, #tpu.memory_space<semaphore_mem>>)
    %c5 = arith.constant 5 : index
    %15 = memref.load %arg1[%c5] : memref<16xi32, #tpu.memory_space<smem>>
    %c0_i32_10 = arith.constant 0 : i32
    %16 = tpu.memref_slice %arg2[%15, %c0_i32_10] : memref<100x64xf32, #tpu.memory_space<any>> -> memref<1x64xf32, #tpu.memory_space<any>>
    %c17_i32 = arith.constant 17 : i32
    %c0_i32_11 = arith.constant 0 : i32
    %17 = tpu.memref_slice %arg14[%c17_i32, %c0_i32_11] : memref<64x64xf32, #tpu.memory_space<vmem>> -> memref<1x64xf32, #tpu.memory_space<vmem>>
    tpu.enqueue_dma source(%16 : memref<1x64xf32, #tpu.memory_space<any>>) target(%17 : memref<1x64xf32, #tpu.memory_space<vmem>>) target_semaphore(%arg18 : memref<!tpu.dma_semaphore, #tpu.memory_space<semaphore_mem>>)
    %c6 = arith.constant 6 : index
    %18 = memref.load %arg1[%c6] : memref<16xi32, #tpu.memory_space<smem>>
    %c0_i32_12 = arith.constant 0 : i32
    %19 = tpu.memref_slice %arg2[%18, %c0_i32_12] : memref<100x64xf32, #tpu.memory_space<any>> -> memref<1x64xf32, #tpu.memory_space<any>>
    %c24_i32 = arith.constant 24 : i32
    %c0_i32_13 = arith.constant 0 : i32
    %20 = tpu.memref_slice %arg14[%c24_i32, %c0_i32_13] : memref<64x64xf32, #tpu.memory_space<vmem>> -> memref<1x64xf32, #tpu.memory_space<vmem>>
    tpu.enqueue_dma source(%19 : memref<1x64xf32, #tpu.memory_space<any>>) target(%20 : memref<1x64xf32, #tpu.memory_space<vmem>>) target_semaphore(%arg18 : memref<!tpu.dma_semaphore, #tpu.memory_space<semaphore_mem>>)
    %c7 = arith.constant 7 : index
    %21 = memref.load %arg1[%c7] : memref<16xi32, #tpu.memory_space<smem>>
    %c0_i32_14 = arith.constant 0 : i32
    %22 = tpu.memref_slice %arg2[%21, %c0_i32_14] : memref<100x64xf32, #tpu.memory_space<any>> -> memref<1x64xf32, #tpu.memory_space<any>>
    %c25_i32 = arith.constant 25 : i32
    %c0_i32_15 = arith.constant 0 : i32
    %23 = tpu.memref_slice %arg14[%c25_i32, %c0_i32_15] : memref<64x64xf32, #tpu.memory_space<vmem>> -> memref<1x64xf32, #tpu.memory_space<vmem>>
    tpu.enqueue_dma source(%22 : memref<1x64xf32, #tpu.memory_space<any>>) target(%23 : memref<1x64xf32, #tpu.memory_space<vmem>>) target_semaphore(%arg18 : memref<!tpu.dma_semaphore, #tpu.memory_space<semaphore_mem>>)
    %c8 = arith.constant 8 : index
    %24 = memref.load %arg1[%c8] : memref<16xi32, #tpu.memory_space<smem>>
    %c0_i32_16 = arith.constant 0 : i32
    %25 = tpu.memref_slice %arg2[%24, %c0_i32_16] : memref<100x64xf32, #tpu.memory_space<any>> -> memref<1x64xf32, #tpu.memory_space<any>>
    %c32_i32 = arith.constant 32 : i32
    %c0_i32_17 = arith.constant 0 : i32
    %26 = tpu.memref_slice %arg14[%c32_i32, %c0_i32_17] : memref<64x64xf32, #tpu.memory_space<vmem>> -> memref<1x64xf32, #tpu.memory_space<vmem>>
    tpu.enqueue_dma source(%25 : memref<1x64xf32, #tpu.memory_space<any>>) target(%26 : memref<1x64xf32, #tpu.memory_space<vmem>>) target_semaphore(%arg18 : memref<!tpu.dma_semaphore, #tpu.memory_space<semaphore_mem>>)
    %c9 = arith.constant 9 : index
    %27 = memref.load %arg1[%c9] : memref<16xi32, #tpu.memory_space<smem>>
    %c0_i32_18 = arith.constant 0 : i32
    %28 = tpu.memref_slice %arg2[%27, %c0_i32_18] : memref<100x64xf32, #tpu.memory_space<any>> -> memref<1x64xf32, #tpu.memory_space<any>>
    %c33_i32 = arith.constant 33 : i32
    %c0_i32_19 = arith.constant 0 : i32
    %29 = tpu.memref_slice %arg14[%c33_i32, %c0_i32_19] : memref<64x64xf32, #tpu.memory_space<vmem>> -> memref<1x64xf32, #tpu.memory_space<vmem>>
    tpu.enqueue_dma source(%28 : memref<1x64xf32, #tpu.memory_space<any>>) target(%29 : memref<1x64xf32, #tpu.memory_space<vmem>>) target_semaphore(%arg18 : memref<!tpu.dma_semaphore, #tpu.memory_space<semaphore_mem>>)
    %c10 = arith.constant 10 : index
    %30 = memref.load %arg1[%c10] : memref<16xi32, #tpu.memory_space<smem>>
    %c0_i32_20 = arith.constant 0 : i32
    %31 = tpu.memref_slice %arg2[%30, %c0_i32_20] : memref<100x64xf32, #tpu.memory_space<any>> -> memref<1x64xf32, #tpu.memory_space<any>>
    %c40_i32 = arith.constant 40 : i32
    %c0_i32_21 = arith.constant 0 : i32
    %32 = tpu.memref_slice %arg14[%c40_i32, %c0_i32_21] : memref<64x64xf32, #tpu.memory_space<vmem>> -> memref<1x64xf32, #tpu.memory_space<vmem>>
    tpu.enqueue_dma source(%31 : memref<1x64xf32, #tpu.memory_space<any>>) target(%32 : memref<1x64xf32, #tpu.memory_space<vmem>>) target_semaphore(%arg18 : memref<!tpu.dma_semaphore, #tpu.memory_space<semaphore_mem>>)
    %c11 = arith.constant 11 : index
    %33 = memref.load %arg1[%c11] : memref<16xi32, #tpu.memory_space<smem>>
    %c0_i32_22 = arith.constant 0 : i32
    %34 = tpu.memref_slice %arg2[%33, %c0_i32_22] : memref<100x64xf32, #tpu.memory_space<any>> -> memref<1x64xf32, #tpu.memory_space<any>>
    %c41_i32 = arith.constant 41 : i32
    %c0_i32_23 = arith.constant 0 : i32
    %35 = tpu.memref_slice %arg14[%c41_i32, %c0_i32_23] : memref<64x64xf32, #tpu.memory_space<vmem>> -> memref<1x64xf32, #tpu.memory_space<vmem>>
    tpu.enqueue_dma source(%34 : memref<1x64xf32, #tpu.memory_space<any>>) target(%35 : memref<1x64xf32, #tpu.memory_space<vmem>>) target_semaphore(%arg18 : memref<!tpu.dma_semaphore, #tpu.memory_space<semaphore_mem>>)
    %c12 = arith.constant 12 : index
    %36 = memref.load %arg1[%c12] : memref<16xi32, #tpu.memory_space<smem>>
    %c0_i32_24 = arith.constant 0 : i32
    %37 = tpu.memref_slice %arg2[%36, %c0_i32_24] : memref<100x64xf32, #tpu.memory_space<any>> -> memref<1x64xf32, #tpu.memory_space<any>>
    %c48_i32 = arith.constant 48 : i32
    %c0_i32_25 = arith.constant 0 : i32
    %38 = tpu.memref_slice %arg14[%c48_i32, %c0_i32_25] : memref<64x64xf32, #tpu.memory_space<vmem>> -> memref<1x64xf32, #tpu.memory_space<vmem>>
    tpu.enqueue_dma source(%37 : memref<1x64xf32, #tpu.memory_space<any>>) target(%38 : memref<1x64xf32, #tpu.memory_space<vmem>>) target_semaphore(%arg18 : memref<!tpu.dma_semaphore, #tpu.memory_space<semaphore_mem>>)
    %c13 = arith.constant 13 : index
    %39 = memref.load %arg1[%c13] : memref<16xi32, #tpu.memory_space<smem>>
    %c0_i32_26 = arith.constant 0 : i32
    %40 = tpu.memref_slice %arg2[%39, %c0_i32_26] : memref<100x64xf32, #tpu.memory_space<any>> -> memref<1x64xf32, #tpu.memory_space<any>>
    %c49_i32 = arith.constant 49 : i32
    %c0_i32_27 = arith.constant 0 : i32
    %41 = tpu.memref_slice %arg14[%c49_i32, %c0_i32_27] : memref<64x64xf32, #tpu.memory_space<vmem>> -> memref<1x64xf32, #tpu.memory_space<vmem>>
    tpu.enqueue_dma source(%40 : memref<1x64xf32, #tpu.memory_space<any>>) target(%41 : memref<1x64xf32, #tpu.memory_space<vmem>>) target_semaphore(%arg18 : memref<!tpu.dma_semaphore, #tpu.memory_space<semaphore_mem>>)
    %c14 = arith.constant 14 : index
    %42 = memref.load %arg1[%c14] : memref<16xi32, #tpu.memory_space<smem>>
    %c0_i32_28 = arith.constant 0 : i32
    %43 = tpu.memref_slice %arg2[%42, %c0_i32_28] : memref<100x64xf32, #tpu.memory_space<any>> -> memref<1x64xf32, #tpu.memory_space<any>>
    %c56_i32 = arith.constant 56 : i32
    %c0_i32_29 = arith.constant 0 : i32
    %44 = tpu.memref_slice %arg14[%c56_i32, %c0_i32_29] : memref<64x64xf32, #tpu.memory_space<vmem>> -> memref<1x64xf32, #tpu.memory_space<vmem>>
    tpu.enqueue_dma source(%43 : memref<1x64xf32, #tpu.memory_space<any>>) target(%44 : memref<1x64xf32, #tpu.memory_space<vmem>>) target_semaphore(%arg18 : memref<!tpu.dma_semaphore, #tpu.memory_space<semaphore_mem>>)
    %c15 = arith.constant 15 : index
    %45 = memref.load %arg1[%c15] : memref<16xi32, #tpu.memory_space<smem>>
    %c0_i32_30 = arith.constant 0 : i32
    %46 = tpu.memref_slice %arg2[%45, %c0_i32_30] : memref<100x64xf32, #tpu.memory_space<any>> -> memref<1x64xf32, #tpu.memory_space<any>>
    %c57_i32 = arith.constant 57 : i32
    %c0_i32_31 = arith.constant 0 : i32
    %47 = tpu.memref_slice %arg14[%c57_i32, %c0_i32_31] : memref<64x64xf32, #tpu.memory_space<vmem>> -> memref<1x64xf32, #tpu.memory_space<vmem>>
    tpu.enqueue_dma source(%46 : memref<1x64xf32, #tpu.memory_space<any>>) target(%47 : memref<1x64xf32, #tpu.memory_space<vmem>>) target_semaphore(%arg18 : memref<!tpu.dma_semaphore, #tpu.memory_space<semaphore_mem>>)
    %c0_i32_32 = arith.constant 0 : i32
    %48 = tpu.memref_slice %arg2[%0, %c0_i32_32] : memref<100x64xf32, #tpu.memory_space<any>> -> memref<1x64xf32, #tpu.memory_space<any>>
    %c0_i32_33 = arith.constant 0 : i32
    %c0_i32_34 = arith.constant 0 : i32
    %49 = tpu.memref_slice %arg14[%c0_i32_33, %c0_i32_34] : memref<64x64xf32, #tpu.memory_space<vmem>> -> memref<1x64xf32, #tpu.memory_space<vmem>>
    tpu.wait_dma2 semaphore(%arg18 : memref<!tpu.dma_semaphore, #tpu.memory_space<semaphore_mem>>) src(%48 : memref<1x64xf32, #tpu.memory_space<any>>) dst(%49 : memref<1x64xf32, #tpu.memory_space<vmem>>)
    %c0_i32_35 = arith.constant 0 : i32
    %50 = tpu.memref_slice %arg2[%3, %c0_i32_35] : memref<100x64xf32, #tpu.memory_space<any>> -> memref<1x64xf32, #tpu.memory_space<any>>
    %c1_i32_36 = arith.constant 1 : i32
    %c0_i32_37 = arith.constant 0 : i32
    %51 = tpu.memref_slice %arg14[%c1_i32_36, %c0_i32_37] : memref<64x64xf32, #tpu.memory_space<vmem>> -> memref<1x64xf32, #tpu.memory_space<vmem>>
    tpu.wait_dma2 semaphore(%arg18 : memref<!tpu.dma_semaphore, #tpu.memory_space<semaphore_mem>>) src(%50 : memref<1x64xf32, #tpu.memory_space<any>>) dst(%51 : memref<1x64xf32, #tpu.memory_space<vmem>>)
    %c0_i32_38 = arith.constant 0 : i32
    %52 = tpu.memref_slice %arg2[%6, %c0_i32_38] : memref<100x64xf32, #tpu.memory_space<any>> -> memref<1x64xf32, #tpu.memory_space<any>>
    %c8_i32_39 = arith.constant 8 : i32
    %c0_i32_40 = arith.constant 0 : i32
    %53 = tpu.memref_slice %arg14[%c8_i32_39, %c0_i32_40] : memref<64x64xf32, #tpu.memory_space<vmem>> -> memref<1x64xf32, #tpu.memory_space<vmem>>
    tpu.wait_dma2 semaphore(%arg18 : memref<!tpu.dma_semaphore, #tpu.memory_space<semaphore_mem>>) src(%52 : memref<1x64xf32, #tpu.memory_space<any>>) dst(%53 : memref<1x64xf32, #tpu.memory_space<vmem>>)
    %c0_i32_41 = arith.constant 0 : i32
    %54 = tpu.memref_slice %arg2[%9, %c0_i32_41] : memref<100x64xf32, #tpu.memory_space<any>> -> memref<1x64xf32, #tpu.memory_space<any>>
    %c9_i32_42 = arith.constant 9 : i32
    %c0_i32_43 = arith.constant 0 : i32
    %55 = tpu.memref_slice %arg14[%c9_i32_42, %c0_i32_43] : memref<64x64xf32, #tpu.memory_space<vmem>> -> memref<1x64xf32, #tpu.memory_space<vmem>>
    tpu.wait_dma2 semaphore(%arg18 : memref<!tpu.dma_semaphore, #tpu.memory_space<semaphore_mem>>) src(%54 : memref<1x64xf32, #tpu.memory_space<any>>) dst(%55 : memref<1x64xf32, #tpu.memory_space<vmem>>)
    %c0_i32_44 = arith.constant 0 : i32
    %56 = tpu.memref_slice %arg2[%12, %c0_i32_44] : memref<100x64xf32, #tpu.memory_space<any>> -> memref<1x64xf32, #tpu.memory_space<any>>
    %c16_i32_45 = arith.constant 16 : i32
    %c0_i32_46 = arith.constant 0 : i32
    %57 = tpu.memref_slice %arg14[%c16_i32_45, %c0_i32_46] : memref<64x64xf32, #tpu.memory_space<vmem>> -> memref<1x64xf32, #tpu.memory_space<vmem>>
    tpu.wait_dma2 semaphore(%arg18 : memref<!tpu.dma_semaphore, #tpu.memory_space<semaphore_mem>>) src(%56 : memref<1x64xf32, #tpu.memory_space<any>>) dst(%57 : memref<1x64xf32, #tpu.memory_space<vmem>>)
    %c0_i32_47 = arith.constant 0 : i32
    %58 = tpu.memref_slice %arg2[%15, %c0_i32_47] : memref<100x64xf32, #tpu.memory_space<any>> -> memref<1x64xf32, #tpu.memory_space<any>>
    %c17_i32_48 = arith.constant 17 : i32
    %c0_i32_49 = arith.constant 0 : i32
    %59 = tpu.memref_slice %arg14[%c17_i32_48, %c0_i32_49] : memref<64x64xf32, #tpu.memory_space<vmem>> -> memref<1x64xf32, #tpu.memory_space<vmem>>
    tpu.wait_dma2 semaphore(%arg18 : memref<!tpu.dma_semaphore, #tpu.memory_space<semaphore_mem>>) src(%58 : memref<1x64xf32, #tpu.memory_space<any>>) dst(%59 : memref<1x64xf32, #tpu.memory_space<vmem>>)
    %c0_i32_50 = arith.constant 0 : i32
    %60 = tpu.memref_slice %arg2[%18, %c0_i32_50] : memref<100x64xf32, #tpu.memory_space<any>> -> memref<1x64xf32, #tpu.memory_space<any>>
    %c24_i32_51 = arith.constant 24 : i32
    %c0_i32_52 = arith.constant 0 : i32
    %61 = tpu.memref_slice %arg14[%c24_i32_51, %c0_i32_52] : memref<64x64xf32, #tpu.memory_space<vmem>> -> memref<1x64xf32, #tpu.memory_space<vmem>>
    tpu.wait_dma2 semaphore(%arg18 : memref<!tpu.dma_semaphore, #tpu.memory_space<semaphore_mem>>) src(%60 : memref<1x64xf32, #tpu.memory_space<any>>) dst(%61 : memref<1x64xf32, #tpu.memory_space<vmem>>)
    %c0_i32_53 = arith.constant 0 : i32
    %62 = tpu.memref_slice %arg2[%21, %c0_i32_53] : memref<100x64xf32, #tpu.memory_space<any>> -> memref<1x64xf32, #tpu.memory_space<any>>
    %c25_i32_54 = arith.constant 25 : i32
    %c0_i32_55 = arith.constant 0 : i32
    %63 = tpu.memref_slice %arg14[%c25_i32_54, %c0_i32_55] : memref<64x64xf32, #tpu.memory_space<vmem>> -> memref<1x64xf32, #tpu.memory_space<vmem>>
    tpu.wait_dma2 semaphore(%arg18 : memref<!tpu.dma_semaphore, #tpu.memory_space<semaphore_mem>>) src(%62 : memref<1x64xf32, #tpu.memory_space<any>>) dst(%63 : memref<1x64xf32, #tpu.memory_space<vmem>>)
    %c0_i32_56 = arith.constant 0 : i32
    %64 = tpu.memref_slice %arg2[%24, %c0_i32_56] : memref<100x64xf32, #tpu.memory_space<any>> -> memref<1x64xf32, #tpu.memory_space<any>>
    %c32_i32_57 = arith.constant 32 : i32
    %c0_i32_58 = arith.constant 0 : i32
    %65 = tpu.memref_slice %arg14[%c32_i32_57, %c0_i32_58] : memref<64x64xf32, #tpu.memory_space<vmem>> -> memref<1x64xf32, #tpu.memory_space<vmem>>
    tpu.wait_dma2 semaphore(%arg18 : memref<!tpu.dma_semaphore, #tpu.memory_space<semaphore_mem>>) src(%64 : memref<1x64xf32, #tpu.memory_space<any>>) dst(%65 : memref<1x64xf32, #tpu.memory_space<vmem>>)
    %c0_i32_59 = arith.constant 0 : i32
    %66 = tpu.memref_slice %arg2[%27, %c0_i32_59] : memref<100x64xf32, #tpu.memory_space<any>> -> memref<1x64xf32, #tpu.memory_space<any>>
    %c33_i32_60 = arith.constant 33 : i32
    %c0_i32_61 = arith.constant 0 : i32
    %67 = tpu.memref_slice %arg14[%c33_i32_60, %c0_i32_61] : memref<64x64xf32, #tpu.memory_space<vmem>> -> memref<1x64xf32, #tpu.memory_space<vmem>>
    tpu.wait_dma2 semaphore(%arg18 : memref<!tpu.dma_semaphore, #tpu.memory_space<semaphore_mem>>) src(%66 : memref<1x64xf32, #tpu.memory_space<any>>) dst(%67 : memref<1x64xf32, #tpu.memory_space<vmem>>)
    %c0_i32_62 = arith.constant 0 : i32
    %68 = tpu.memref_slice %arg2[%30, %c0_i32_62] : memref<100x64xf32, #tpu.memory_space<any>> -> memref<1x64xf32, #tpu.memory_space<any>>
    %c40_i32_63 = arith.constant 40 : i32
    %c0_i32_64 = arith.constant 0 : i32
    %69 = tpu.memref_slice %arg14[%c40_i32_63, %c0_i32_64] : memref<64x64xf32, #tpu.memory_space<vmem>> -> memref<1x64xf32, #tpu.memory_space<vmem>>
    tpu.wait_dma2 semaphore(%arg18 : memref<!tpu.dma_semaphore, #tpu.memory_space<semaphore_mem>>) src(%68 : memref<1x64xf32, #tpu.memory_space<any>>) dst(%69 : memref<1x64xf32, #tpu.memory_space<vmem>>)
    %c0_i32_65 = arith.constant 0 : i32
    %70 = tpu.memref_slice %arg2[%33, %c0_i32_65] : memref<100x64xf32, #tpu.memory_space<any>> -> memref<1x64xf32, #tpu.memory_space<any>>
    %c41_i32_66 = arith.constant 41 : i32
    %c0_i32_67 = arith.constant 0 : i32
    %71 = tpu.memref_slice %arg14[%c41_i32_66, %c0_i32_67] : memref<64x64xf32, #tpu.memory_space<vmem>> -> memref<1x64xf32, #tpu.memory_space<vmem>>
    tpu.wait_dma2 semaphore(%arg18 : memref<!tpu.dma_semaphore, #tpu.memory_space<semaphore_mem>>) src(%70 : memref<1x64xf32, #tpu.memory_space<any>>) dst(%71 : memref<1x64xf32, #tpu.memory_space<vmem>>)
    %c0_i32_68 = arith.constant 0 : i32
    %72 = tpu.memref_slice %arg2[%36, %c0_i32_68] : memref<100x64xf32, #tpu.memory_space<any>> -> memref<1x64xf32, #tpu.memory_space<any>>
    %c48_i32_69 = arith.constant 48 : i32
    %c0_i32_70 = arith.constant 0 : i32
    %73 = tpu.memref_slice %arg14[%c48_i32_69, %c0_i32_70] : memref<64x64xf32, #tpu.memory_space<vmem>> -> memref<1x64xf32, #tpu.memory_space<vmem>>
    tpu.wait_dma2 semaphore(%arg18 : memref<!tpu.dma_semaphore, #tpu.memory_space<semaphore_mem>>) src(%72 : memref<1x64xf32, #tpu.memory_space<any>>) dst(%73 : memref<1x64xf32, #tpu.memory_space<vmem>>)
    %c0_i32_71 = arith.constant 0 : i32
    %74 = tpu.memref_slice %arg2[%39, %c0_i32_71] : memref<100x64xf32, #tpu.memory_space<any>> -> memref<1x64xf32, #tpu.memory_space<any>>
    %c49_i32_72 = arith.constant 49 : i32
    %c0_i32_73 = arith.constant 0 : i32
    %75 = tpu.memref_slice %arg14[%c49_i32_72, %c0_i32_73] : memref<64x64xf32, #tpu.memory_space<vmem>> -> memref<1x64xf32, #tpu.memory_space<vmem>>
    tpu.wait_dma2 semaphore(%arg18 : memref<!tpu.dma_semaphore, #tpu.memory_space<semaphore_mem>>) src(%74 : memref<1x64xf32, #tpu.memory_space<any>>) dst(%75 : memref<1x64xf32, #tpu.memory_space<vmem>>)
    %c0_i32_74 = arith.constant 0 : i32
    %76 = tpu.memref_slice %arg2[%42, %c0_i32_74] : memref<100x64xf32, #tpu.memory_space<any>> -> memref<1x64xf32, #tpu.memory_space<any>>
    %c56_i32_75 = arith.constant 56 : i32
    %c0_i32_76 = arith.constant 0 : i32
    %77 = tpu.memref_slice %arg14[%c56_i32_75, %c0_i32_76] : memref<64x64xf32, #tpu.memory_space<vmem>> -> memref<1x64xf32, #tpu.memory_space<vmem>>
    tpu.wait_dma2 semaphore(%arg18 : memref<!tpu.dma_semaphore, #tpu.memory_space<semaphore_mem>>) src(%76 : memref<1x64xf32, #tpu.memory_space<any>>) dst(%77 : memref<1x64xf32, #tpu.memory_space<vmem>>)
    %c0_i32_77 = arith.constant 0 : i32
    %78 = tpu.memref_slice %arg2[%45, %c0_i32_77] : memref<100x64xf32, #tpu.memory_space<any>> -> memref<1x64xf32, #tpu.memory_space<any>>
    %c57_i32_78 = arith.constant 57 : i32
    %c0_i32_79 = arith.constant 0 : i32
    %79 = tpu.memref_slice %arg14[%c57_i32_78, %c0_i32_79] : memref<64x64xf32, #tpu.memory_space<vmem>> -> memref<1x64xf32, #tpu.memory_space<vmem>>
    tpu.wait_dma2 semaphore(%arg18 : memref<!tpu.dma_semaphore, #tpu.memory_space<semaphore_mem>>) src(%78 : memref<1x64xf32, #tpu.memory_space<any>>) dst(%79 : memref<1x64xf32, #tpu.memory_space<vmem>>)
    %cst = arith.constant 0.000000e+00 : f32
    %80 = vector.broadcast %cst : f32 to vector<6x64xf32>
    %c2_80 = arith.constant 2 : index
    %c0_81 = arith.constant 0 : index
    %81 = vector.load %arg14[%c2_80, %c0_81] : memref<64x64xf32, #tpu.memory_space<vmem>>, vector<6x64xf32>
    tpu.vector_store %arg14[%c2_80, %c0_81], %80 {strides = array<i32>} : memref<64x64xf32, #tpu.memory_space<vmem>>, vector<6x64xf32>,
    %cst_82 = arith.constant 0.000000e+00 : f32
    %82 = vector.broadcast %cst_82 : f32 to vector<6x64xf32>
    %c10_83 = arith.constant 10 : index
    %c0_84 = arith.constant 0 : index
    %83 = vector.load %arg14[%c10_83, %c0_84] : memref<64x64xf32, #tpu.memory_space<vmem>>, vector<6x64xf32>
    tpu.vector_store %arg14[%c10_83, %c0_84], %82 {strides = array<i32>} : memref<64x64xf32, #tpu.memory_space<vmem>>, vector<6x64xf32>,
    %cst_85 = arith.constant 0.000000e+00 : f32
    %84 = vector.broadcast %cst_85 : f32 to vector<6x64xf32>
    %c18 = arith.constant 18 : index
    %c0_86 = arith.constant 0 : index
    %85 = vector.load %arg14[%c18, %c0_86] : memref<64x64xf32, #tpu.memory_space<vmem>>, vector<6x64xf32>
    tpu.vector_store %arg14[%c18, %c0_86], %84 {strides = array<i32>} : memref<64x64xf32, #tpu.memory_space<vmem>>, vector<6x64xf32>,
    %cst_87 = arith.constant 0.000000e+00 : f32
    %86 = vector.broadcast %cst_87 : f32 to vector<6x64xf32>
    %c26 = arith.constant 26 : index
    %c0_88 = arith.constant 0 : index
    %87 = vector.load %arg14[%c26, %c0_88] : memref<64x64xf32, #tpu.memory_space<vmem>>, vector<6x64xf32>
    tpu.vector_store %arg14[%c26, %c0_88], %86 {strides = array<i32>} : memref<64x64xf32, #tpu.memory_space<vmem>>, vector<6x64xf32>,
    %cst_89 = arith.constant 0.000000e+00 : f32
    %88 = vector.broadcast %cst_89 : f32 to vector<6x64xf32>
    %c34 = arith.constant 34 : index
    %c0_90 = arith.constant 0 : index
    %89 = vector.load %arg14[%c34, %c0_90] : memref<64x64xf32, #tpu.memory_space<vmem>>, vector<6x64xf32>
    tpu.vector_store %arg14[%c34, %c0_90], %88 {strides = array<i32>} : memref<64x64xf32, #tpu.memory_space<vmem>>, vector<6x64xf32>,
    %cst_91 = arith.constant 0.000000e+00 : f32
    %90 = vector.broadcast %cst_91 : f32 to vector<6x64xf32>
    %c42 = arith.constant 42 : index
    %c0_92 = arith.constant 0 : index
    %91 = vector.load %arg14[%c42, %c0_92] : memref<64x64xf32, #tpu.memory_space<vmem>>, vector<6x64xf32>
    tpu.vector_store %arg14[%c42, %c0_92], %90 {strides = array<i32>} : memref<64x64xf32, #tpu.memory_space<vmem>>, vector<6x64xf32>,
    %cst_93 = arith.constant 0.000000e+00 : f32
    %92 = vector.broadcast %cst_93 : f32 to vector<6x64xf32>
    %c50 = arith.constant 50 : index
    %c0_94 = arith.constant 0 : index
    %93 = vector.load %arg14[%c50, %c0_94] : memref<64x64xf32, #tpu.memory_space<vmem>>, vector<6x64xf32>
    tpu.vector_store %arg14[%c50, %c0_94], %92 {strides = array<i32>} : memref<64x64xf32, #tpu.memory_space<vmem>>, vector<6x64xf32>,
    %cst_95 = arith.constant 0.000000e+00 : f32
    %94 = vector.broadcast %cst_95 : f32 to vector<6x64xf32>
    %c58 = arith.constant 58 : index
    %c0_96 = arith.constant 0 : index
    %95 = vector.load %arg14[%c58, %c0_96] : memref<64x64xf32, #tpu.memory_space<vmem>>, vector<6x64xf32>
    tpu.vector_store %arg14[%c58, %c0_96], %94 {strides = array<i32>} : memref<64x64xf32, #tpu.memory_space<vmem>>, vector<6x64xf32>,
    %96 = tpu.iota {dimensions = array<i32: 1>} : vector<8x512xi32>
    %c128_i32 = arith.constant 128 : i32
    %c0_i32_97 = arith.constant 0 : i32
    %97 = arith.cmpi eq, %c128_i32, %c0_i32_97 : i32
    %c1_i32_98 = arith.constant 1 : i32
    %98 = arith.select %97, %c1_i32_98, %c128_i32 : i32
    %99 = vector.broadcast %98 : i32 to vector<8x512xi32>
    %100 = arith.remsi %96, %99 : vector<8x512xi32>
    %c0_i32_99 = arith.constant 0 : i32
    %101 = vector.broadcast %c0_i32_99 : i32 to vector<8x512xi32>
    %102 = arith.cmpi ne, %100, %101 : vector<8x512xi32>
    %c0_i32_100 = arith.constant 0 : i32
    %103 = vector.broadcast %c0_i32_100 : i32 to vector<8x512xi32>
    %104 = arith.cmpi slt, %100, %103 : vector<8x512xi32>
    %c0_i32_101 = arith.constant 0 : i32
    %105 = arith.cmpi slt, %98, %c0_i32_101 : i32
    %106 = vector.broadcast %105 : i1 to vector<8x512xi1>
    %107 = vector.broadcast %106 : vector<8x512xi1> to vector<8x512xi1>
    %108 = arith.xori %104, %107 : vector<8x512xi1>
    %109 = arith.andi %108, %102 : vector<8x512xi1>
    %110 = vector.broadcast %98 : i32 to vector<8x512xi32>
    %111 = arith.addi %100, %110 : vector<8x512xi32>
    %112 = arith.select %109, %111, %100 : vector<8x512xi1>, vector<8x512xi32>
    %c64_i32 = arith.constant 64 : i32
    %113 = vector.broadcast %c64_i32 : i32 to vector<8x512xi32>
    %114 = arith.cmpi slt, %112, %113 : vector<8x512xi32>
    %c0_102 = arith.constant 0 : index
    %c0_103 = arith.constant 0 : index
    %115 = vector.load %arg14[%c0_102, %c0_103] : memref<64x64xf32, #tpu.memory_space<vmem>>, vector<64x64xf32>
    %116 = arith.truncf %115 : vector<64x64xf32> to vector<64x64xbf16>
    %c0_104 = arith.constant 0 : index
    %c0_105 = arith.constant 0 : index
    %117 = vector.load %arg3[%c0_104, %c0_105] : memref<64x512xbf16, #tpu.memory_space<vmem>>, vector<64x512xbf16>
    %cst_106 = arith.constant dense<0.000000e+00> : vector<64x512xf32>
    %118 = tpu.matmul %116, %117, %cst_106 {dimension_numbers = #tpu.dot_dimension_numbers<[1], [0], [0], [1], [0, 0, 1, 1], [], []>} : vector<64x64xbf16>, vector<64x512xbf16>, vector<64x512xf32> -> vector<64x512xf32>
    %c0_107 = arith.constant 0 : index
    %c0_108 = arith.constant 0 : index
    %119 = vector.load %arg4[%c0_107, %c0_108] : memref<1x512xf32, #tpu.memory_space<vmem>>, vector<1x512xf32>
    %120 = vector.broadcast %119 : vector<1x512xf32> to vector<64x512xf32>
    %121 = arith.addf %118, %120 : vector<64x512xf32>
    %c0_109 = arith.constant 0 : index
    %c0_110 = arith.constant 0 : index
    %122 = vector.load %arg15[%c0_109, %c0_110] : memref<64x512xf32, #tpu.memory_space<vmem>>, vector<64x512xf32>
    tpu.vector_store %arg15[%c0_109, %c0_110], %121 {strides = array<i32>} : memref<64x512xf32, #tpu.memory_space<vmem>>, vector<64x512xf32>,
    %cst_111 = arith.constant 0.000000e+00 : f32
    %123 = vector.broadcast %cst_111 : f32 to vector<8x128xf32>
    %cst_112 = arith.constant 0.000000e+00 : f32
    %124 = vector.broadcast %cst_112 : f32 to vector<8x128xf32>
    %c0_113 = arith.constant 0 : index
    %c0_114 = arith.constant 0 : index
    %125 = vector.load %arg15[%c0_113, %c0_114] : memref<64x512xf32, #tpu.memory_space<vmem>>, vector<8x512xf32>
    %c56 = arith.constant 56 : index
    %c0_115 = arith.constant 0 : index
    %126 = vector.load %arg15[%c56, %c0_115] : memref<64x512xf32, #tpu.memory_space<vmem>>, vector<8x512xf32>
    %127 = arith.select %114, %125, %126 : vector<8x512xi1>, vector<8x512xf32>
    %128 = arith.truncf %123 : vector<8x128xf32> to vector<8x128xbf16>
    %c0_116 = arith.constant 0 : index
    %c0_117 = arith.constant 0 : index
    %129 = vector.load %arg5[%c0_116, %c0_117] : memref<128x512xbf16, #tpu.memory_space<vmem>>, vector<128x512xbf16>
    %cst_118 = arith.constant dense<0.000000e+00> : vector<8x512xf32>
    %130 = tpu.matmul %128, %129, %cst_118 {dimension_numbers = #tpu.dot_dimension_numbers<[1], [0], [0], [1], [0, 0, 1, 1], [], []>} : vector<8x128xbf16>, vector<128x512xbf16>, vector<8x512xf32> -> vector<8x512xf32>
    %131 = arith.addf %127, %130 : vector<8x512xf32>
    %132 = vector.extract_strided_slice %131 {offsets = [0, 0], sizes = [8, 128], strides = [1, 1]} : vector<8x512xf32> to vector<8x128xf32>
    %133 = arith.negf %132 : vector<8x128xf32>
    %134 = math.exp %133 : vector<8x128xf32>
    %cst_119 = arith.constant 1.000000e+00 : f32
    %135 = vector.broadcast %cst_119 : f32 to vector<8x128xf32>
    %136 = arith.addf %135, %134 : vector<8x128xf32>
    %137 = arith.divf %135, %136 : vector<8x128xf32>
    %138 = vector.extract_strided_slice %131 {offsets = [0, 128], sizes = [8, 128], strides = [1, 1]} : vector<8x512xf32> to vector<8x128xf32>
    %139 = arith.negf %138 : vector<8x128xf32>
    %140 = math.exp %139 : vector<8x128xf32>
    %cst_120 = arith.constant 1.000000e+00 : f32
    %141 = vector.broadcast %cst_120 : f32 to vector<8x128xf32>
    %142 = arith.addf %141, %140 : vector<8x128xf32>
    %143 = arith.divf %141, %142 : vector<8x128xf32>
    %144 = vector.extract_strided_slice %131 {offsets = [0, 256], sizes = [8, 128], strides = [1, 1]} : vector<8x512xf32> to vector<8x128xf32>
    %145 = math.tanh %144 : vector<8x128xf32>
    %146 = vector.extract_strided_slice %131 {offsets = [0, 384], sizes = [8, 128], strides = [1, 1]} : vector<8x512xf32> to vector<8x128xf32>
    %147 = arith.negf %146 : vector<8x128xf32>
    %148 = math.exp %147 : vector<8x128xf32>
    %cst_121 = arith.constant 1.000000e+00 : f32
    %149 = vector.broadcast %cst_121 : f32 to vector<8x128xf32>
    %150 = arith.addf %149, %148 : vector<8x128xf32>
    %151 = arith.divf %149, %150 : vector<8x128xf32>
    %152 = arith.mulf %143, %124 : vector<8x128xf32>
    %153 = arith.mulf %137, %145 : vector<8x128xf32>
    %154 = arith.addf %152, %153 : vector<8x128xf32>
    %155 = math.tanh %154 : vector<8x128xf32>
    %156 = arith.mulf %151, %155 : vector<8x128xf32>
    %c0_122 = arith.constant 0 : index
    %c0_123 = arith.constant 0 : index
    %157 = vector.load %arg16[%c0_122, %c0_123] : memref<64x128xf32, #tpu.memory_space<vmem>>, vector<8x128xf32>
    tpu.vector_store %arg16[%c0_122, %c0_123], %156 {strides = array<i32>} : memref<64x128xf32, #tpu.memory_space<vmem>>, vector<8x128xf32>,
    %c56_124 = arith.constant 56 : index
    %c0_125 = arith.constant 0 : index
    %158 = vector.load %arg17[%c56_124, %c0_125] : memref<64x128xf32, #tpu.memory_space<vmem>>, vector<8x128xf32>
    tpu.vector_store %arg17[%c56_124, %c0_125], %156 {strides = array<i32>} : memref<64x128xf32, #tpu.memory_space<vmem>>, vector<8x128xf32>,
    %c8_126 = arith.constant 8 : index
    %c0_127 = arith.constant 0 : index
    %159 = vector.load %arg15[%c8_126, %c0_127] : memref<64x512xf32, #tpu.memory_space<vmem>>, vector<8x512xf32>
    %c48 = arith.constant 48 : index
    %c0_128 = arith.constant 0 : index
    %160 = vector.load %arg15[%c48, %c0_128] : memref<64x512xf32, #tpu.memory_space<vmem>>, vector<8x512xf32>
    %161 = arith.select %114, %159, %160 : vector<8x512xi1>, vector<8x512xf32>
    %162 = arith.truncf %156 : vector<8x128xf32> to vector<8x128xbf16>
    %c0_129 = arith.constant 0 : index
    %c0_130 = arith.constant 0 : index
    %163 = vector.load %arg5[%c0_129, %c0_130] : memref<128x512xbf16, #tpu.memory_space<vmem>>, vector<128x512xbf16>
    %cst_131 = arith.constant dense<0.000000e+00> : vector<8x512xf32>
    %164 = tpu.matmul %162, %163, %cst_131 {dimension_numbers = #tpu.dot_dimension_numbers<[1], [0], [0], [1], [0, 0, 1, 1], [], []>} : vector<8x128xbf16>, vector<128x512xbf16>, vector<8x512xf32> -> vector<8x512xf32>
    %165 = arith.addf %161, %164 : vector<8x512xf32>
    %166 = vector.extract_strided_slice %165 {offsets = [0, 0], sizes = [8, 128], strides = [1, 1]} : vector<8x512xf32> to vector<8x128xf32>
    %167 = arith.negf %166 : vector<8x128xf32>
    %168 = math.exp %167 : vector<8x128xf32>
    %cst_132 = arith.constant 1.000000e+00 : f32
    %169 = vector.broadcast %cst_132 : f32 to vector<8x128xf32>
    %170 = arith.addf %169, %168 : vector<8x128xf32>
    %171 = arith.divf %169, %170 : vector<8x128xf32>
    %172 = vector.extract_strided_slice %165 {offsets = [0, 128], sizes = [8, 128], strides = [1, 1]} : vector<8x512xf32> to vector<8x128xf32>
    %173 = arith.negf %172 : vector<8x128xf32>
    %174 = math.exp %173 : vector<8x128xf32>
    %cst_133 = arith.constant 1.000000e+00 : f32
    %175 = vector.broadcast %cst_133 : f32 to vector<8x128xf32>
    %176 = arith.addf %175, %174 : vector<8x128xf32>
    %177 = arith.divf %175, %176 : vector<8x128xf32>
    %178 = vector.extract_strided_slice %165 {offsets = [0, 256], sizes = [8, 128], strides = [1, 1]} : vector<8x512xf32> to vector<8x128xf32>
    %179 = math.tanh %178 : vector<8x128xf32>
    %180 = vector.extract_strided_slice %165 {offsets = [0, 384], sizes = [8, 128], strides = [1, 1]} : vector<8x512xf32> to vector<8x128xf32>
    %181 = arith.negf %180 : vector<8x128xf32>
    %182 = math.exp %181 : vector<8x128xf32>
    %cst_134 = arith.constant 1.000000e+00 : f32
    %183 = vector.broadcast %cst_134 : f32 to vector<8x128xf32>
    %184 = arith.addf %183, %182 : vector<8x128xf32>
    %185 = arith.divf %183, %184 : vector<8x128xf32>
    %186 = arith.mulf %177, %154 : vector<8x128xf32>
    %187 = arith.mulf %171, %179 : vector<8x128xf32>
    %188 = arith.addf %186, %187 : vector<8x128xf32>
    %189 = math.tanh %188 : vector<8x128xf32>
    %190 = arith.mulf %185, %189 : vector<8x128xf32>
    %c8_135 = arith.constant 8 : index
    %c0_136 = arith.constant 0 : index
    %191 = vector.load %arg16[%c8_135, %c0_136] : memref<64x128xf32, #tpu.memory_space<vmem>>, vector<8x128xf32>
    tpu.vector_store %arg16[%c8_135, %c0_136], %190 {strides = array<i32>} : memref<64x128xf32, #tpu.memory_space<vmem>>, vector<8x128xf32>,
    %c48_137 = arith.constant 48 : index
    %c0_138 = arith.constant 0 : index
    %192 = vector.load %arg17[%c48_137, %c0_138] : memref<64x128xf32, #tpu.memory_space<vmem>>, vector<8x128xf32>
    tpu.vector_store %arg17[%c48_137, %c0_138], %190 {strides = array<i32>} : memref<64x128xf32, #tpu.memory_space<vmem>>, vector<8x128xf32>,
    %c16 = arith.constant 16 : index
    %c0_139 = arith.constant 0 : index
    %193 = vector.load %arg15[%c16, %c0_139] : memref<64x512xf32, #tpu.memory_space<vmem>>, vector<8x512xf32>
    %c40 = arith.constant 40 : index
    %c0_140 = arith.constant 0 : index
    %194 = vector.load %arg15[%c40, %c0_140] : memref<64x512xf32, #tpu.memory_space<vmem>>, vector<8x512xf32>
    %195 = arith.select %114, %193, %194 : vector<8x512xi1>, vector<8x512xf32>
    %196 = arith.truncf %190 : vector<8x128xf32> to vector<8x128xbf16>
    %c0_141 = arith.constant 0 : index
    %c0_142 = arith.constant 0 : index
    %197 = vector.load %arg5[%c0_141, %c0_142] : memref<128x512xbf16, #tpu.memory_space<vmem>>, vector<128x512xbf16>
    %cst_143 = arith.constant dense<0.000000e+00> : vector<8x512xf32>
    %198 = tpu.matmul %196, %197, %cst_143 {dimension_numbers = #tpu.dot_dimension_numbers<[1], [0], [0], [1], [0, 0, 1, 1], [], []>} : vector<8x128xbf16>, vector<128x512xbf16>, vector<8x512xf32> -> vector<8x512xf32>
    %199 = arith.addf %195, %198 : vector<8x512xf32>
    %200 = vector.extract_strided_slice %199 {offsets = [0, 0], sizes = [8, 128], strides = [1, 1]} : vector<8x512xf32> to vector<8x128xf32>
    %201 = arith.negf %200 : vector<8x128xf32>
    %202 = math.exp %201 : vector<8x128xf32>
    %cst_144 = arith.constant 1.000000e+00 : f32
    %203 = vector.broadcast %cst_144 : f32 to vector<8x128xf32>
    %204 = arith.addf %203, %202 : vector<8x128xf32>
    %205 = arith.divf %203, %204 : vector<8x128xf32>
    %206 = vector.extract_strided_slice %199 {offsets = [0, 128], sizes = [8, 128], strides = [1, 1]} : vector<8x512xf32> to vector<8x128xf32>
    %207 = arith.negf %206 : vector<8x128xf32>
    %208 = math.exp %207 : vector<8x128xf32>
    %cst_145 = arith.constant 1.000000e+00 : f32
    %209 = vector.broadcast %cst_145 : f32 to vector<8x128xf32>
    %210 = arith.addf %209, %208 : vector<8x128xf32>
    %211 = arith.divf %209, %210 : vector<8x128xf32>
    %212 = vector.extract_strided_slice %199 {offsets = [0, 256], sizes = [8, 128], strides = [1, 1]} : vector<8x512xf32> to vector<8x128xf32>
    %213 = math.tanh %212 : vector<8x128xf32>
    %214 = vector.extract_strided_slice %199 {offsets = [0, 384], sizes = [8, 128], strides = [1, 1]} : vector<8x512xf32> to vector<8x128xf32>
    %215 = arith.negf %214 : vector<8x128xf32>
    %216 = math.exp %215 : vector<8x128xf32>
    %cst_146 = arith.constant 1.000000e+00 : f32
    %217 = vector.broadcast %cst_146 : f32 to vector<8x128xf32>
    %218 = arith.addf %217, %216 : vector<8x128xf32>
    %219 = arith.divf %217, %218 : vector<8x128xf32>
    %220 = arith.mulf %211, %188 : vector<8x128xf32>
    %221 = arith.mulf %205, %213 : vector<8x128xf32>
    %222 = arith.addf %220, %221 : vector<8x128xf32>
    %223 = math.tanh %222 : vector<8x128xf32>
    %224 = arith.mulf %219, %223 : vector<8x128xf32>
    %c16_147 = arith.constant 16 : index
    %c0_148 = arith.constant 0 : index
    %225 = vector.load %arg16[%c16_147, %c0_148] : memref<64x128xf32, #tpu.memory_space<vmem>>, vector<8x128xf32>
    tpu.vector_store %arg16[%c16_147, %c0_148], %224 {strides = array<i32>} : memref<64x128xf32, #tpu.memory_space<vmem>>, vector<8x128xf32>,
    %c40_149 = arith.constant 40 : index
    %c0_150 = arith.constant 0 : index
    %226 = vector.load %arg17[%c40_149, %c0_150] : memref<64x128xf32, #tpu.memory_space<vmem>>, vector<8x128xf32>
    tpu.vector_store %arg17[%c40_149, %c0_150], %224 {strides = array<i32>} : memref<64x128xf32, #tpu.memory_space<vmem>>, vector<8x128xf32>,
    %c24 = arith.constant 24 : index
    %c0_151 = arith.constant 0 : index
    %227 = vector.load %arg15[%c24, %c0_151] : memref<64x512xf32, #tpu.memory_space<vmem>>, vector<8x512xf32>
    %c32 = arith.constant 32 : index
    %c0_152 = arith.constant 0 : index
    %228 = vector.load %arg15[%c32, %c0_152] : memref<64x512xf32, #tpu.memory_space<vmem>>, vector<8x512xf32>
    %229 = arith.select %114, %227, %228 : vector<8x512xi1>, vector<8x512xf32>
    %230 = arith.truncf %224 : vector<8x128xf32> to vector<8x128xbf16>
    %c0_153 = arith.constant 0 : index
    %c0_154 = arith.constant 0 : index
    %231 = vector.load %arg5[%c0_153, %c0_154] : memref<128x512xbf16, #tpu.memory_space<vmem>>, vector<128x512xbf16>
    %cst_155 = arith.constant dense<0.000000e+00> : vector<8x512xf32>
    %232 = tpu.matmul %230, %231, %cst_155 {dimension_numbers = #tpu.dot_dimension_numbers<[1], [0], [0], [1], [0, 0, 1, 1], [], []>} : vector<8x128xbf16>, vector<128x512xbf16>, vector<8x512xf32> -> vector<8x512xf32>
    %233 = arith.addf %229, %232 : vector<8x512xf32>
    %234 = vector.extract_strided_slice %233 {offsets = [0, 0], sizes = [8, 128], strides = [1, 1]} : vector<8x512xf32> to vector<8x128xf32>
    %235 = arith.negf %234 : vector<8x128xf32>
    %236 = math.exp %235 : vector<8x128xf32>
    %cst_156 = arith.constant 1.000000e+00 : f32
    %237 = vector.broadcast %cst_156 : f32 to vector<8x128xf32>
    %238 = arith.addf %237, %236 : vector<8x128xf32>
    %239 = arith.divf %237, %238 : vector<8x128xf32>
    %240 = vector.extract_strided_slice %233 {offsets = [0, 128], sizes = [8, 128], strides = [1, 1]} : vector<8x512xf32> to vector<8x128xf32>
    %241 = arith.negf %240 : vector<8x128xf32>
    %242 = math.exp %241 : vector<8x128xf32>
    %cst_157 = arith.constant 1.000000e+00 : f32
    %243 = vector.broadcast %cst_157 : f32 to vector<8x128xf32>
    %244 = arith.addf %243, %242 : vector<8x128xf32>
    %245 = arith.divf %243, %244 : vector<8x128xf32>
    %246 = vector.extract_strided_slice %233 {offsets = [0, 256], sizes = [8, 128], strides = [1, 1]} : vector<8x512xf32> to vector<8x128xf32>
    %247 = math.tanh %246 : vector<8x128xf32>
    %248 = vector.extract_strided_slice %233 {offsets = [0, 384], sizes = [8, 128], strides = [1, 1]} : vector<8x512xf32> to vector<8x128xf32>
    %249 = arith.negf %248 : vector<8x128xf32>
    %250 = math.exp %249 : vector<8x128xf32>
    %cst_158 = arith.constant 1.000000e+00 : f32
    %251 = vector.broadcast %cst_158 : f32 to vector<8x128xf32>
    %252 = arith.addf %251, %250 : vector<8x128xf32>
    %253 = arith.divf %251, %252 : vector<8x128xf32>
    %254 = arith.mulf %245, %222 : vector<8x128xf32>
    %255 = arith.mulf %239, %247 : vector<8x128xf32>
    %256 = arith.addf %254, %255 : vector<8x128xf32>
    %257 = math.tanh %256 : vector<8x128xf32>
    %258 = arith.mulf %253, %257 : vector<8x128xf32>
    %c24_159 = arith.constant 24 : index
    %c0_160 = arith.constant 0 : index
    %259 = vector.load %arg16[%c24_159, %c0_160] : memref<64x128xf32, #tpu.memory_space<vmem>>, vector<8x128xf32>
    tpu.vector_store %arg16[%c24_159, %c0_160], %258 {strides = array<i32>} : memref<64x128xf32, #tpu.memory_space<vmem>>, vector<8x128xf32>,
    %c32_161 = arith.constant 32 : index
    %c0_162 = arith.constant 0 : index
    %260 = vector.load %arg17[%c32_161, %c0_162] : memref<64x128xf32, #tpu.memory_space<vmem>>, vector<8x128xf32>
    tpu.vector_store %arg17[%c32_161, %c0_162], %258 {strides = array<i32>} : memref<64x128xf32, #tpu.memory_space<vmem>>, vector<8x128xf32>,
    %c32_163 = arith.constant 32 : index
    %c0_164 = arith.constant 0 : index
    %261 = vector.load %arg15[%c32_163, %c0_164] : memref<64x512xf32, #tpu.memory_space<vmem>>, vector<8x512xf32>
    %c24_165 = arith.constant 24 : index
    %c0_166 = arith.constant 0 : index
    %262 = vector.load %arg15[%c24_165, %c0_166] : memref<64x512xf32, #tpu.memory_space<vmem>>, vector<8x512xf32>
    %263 = arith.select %114, %261, %262 : vector<8x512xi1>, vector<8x512xf32>
    %264 = arith.truncf %258 : vector<8x128xf32> to vector<8x128xbf16>
    %c0_167 = arith.constant 0 : index
    %c0_168 = arith.constant 0 : index
    %265 = vector.load %arg5[%c0_167, %c0_168] : memref<128x512xbf16, #tpu.memory_space<vmem>>, vector<128x512xbf16>
    %cst_169 = arith.constant dense<0.000000e+00> : vector<8x512xf32>
    %266 = tpu.matmul %264, %265, %cst_169 {dimension_numbers = #tpu.dot_dimension_numbers<[1], [0], [0], [1], [0, 0, 1, 1], [], []>} : vector<8x128xbf16>, vector<128x512xbf16>, vector<8x512xf32> -> vector<8x512xf32>
    %267 = arith.addf %263, %266 : vector<8x512xf32>
    %268 = vector.extract_strided_slice %267 {offsets = [0, 0], sizes = [8, 128], strides = [1, 1]} : vector<8x512xf32> to vector<8x128xf32>
    %269 = arith.negf %268 : vector<8x128xf32>
    %270 = math.exp %269 : vector<8x128xf32>
    %cst_170 = arith.constant 1.000000e+00 : f32
    %271 = vector.broadcast %cst_170 : f32 to vector<8x128xf32>
    %272 = arith.addf %271, %270 : vector<8x128xf32>
    %273 = arith.divf %271, %272 : vector<8x128xf32>
    %274 = vector.extract_strided_slice %267 {offsets = [0, 128], sizes = [8, 128], strides = [1, 1]} : vector<8x512xf32> to vector<8x128xf32>
    %275 = arith.negf %274 : vector<8x128xf32>
    %276 = math.exp %275 : vector<8x128xf32>
    %cst_171 = arith.constant 1.000000e+00 : f32
    %277 = vector.broadcast %cst_171 : f32 to vector<8x128xf32>
    %278 = arith.addf %277, %276 : vector<8x128xf32>
    %279 = arith.divf %277, %278 : vector<8x128xf32>
    %280 = vector.extract_strided_slice %267 {offsets = [0, 256], sizes = [8, 128], strides = [1, 1]} : vector<8x512xf32> to vector<8x128xf32>
    %281 = math.tanh %280 : vector<8x128xf32>
    %282 = vector.extract_strided_slice %267 {offsets = [0, 384], sizes = [8, 128], strides = [1, 1]} : vector<8x512xf32> to vector<8x128xf32>
    %283 = arith.negf %282 : vector<8x128xf32>
    %284 = math.exp %283 : vector<8x128xf32>
    %cst_172 = arith.constant 1.000000e+00 : f32
    %285 = vector.broadcast %cst_172 : f32 to vector<8x128xf32>
    %286 = arith.addf %285, %284 : vector<8x128xf32>
    %287 = arith.divf %285, %286 : vector<8x128xf32>
    %288 = arith.mulf %279, %256 : vector<8x128xf32>
    %289 = arith.mulf %273, %281 : vector<8x128xf32>
    %290 = arith.addf %288, %289 : vector<8x128xf32>
    %291 = math.tanh %290 : vector<8x128xf32>
    %292 = arith.mulf %287, %291 : vector<8x128xf32>
    %c32_173 = arith.constant 32 : index
    %c0_174 = arith.constant 0 : index
    %293 = vector.load %arg16[%c32_173, %c0_174] : memref<64x128xf32, #tpu.memory_space<vmem>>, vector<8x128xf32>
    tpu.vector_store %arg16[%c32_173, %c0_174], %292 {strides = array<i32>} : memref<64x128xf32, #tpu.memory_space<vmem>>, vector<8x128xf32>,
    %c24_175 = arith.constant 24 : index
    %c0_176 = arith.constant 0 : index
    %294 = vector.load %arg17[%c24_175, %c0_176] : memref<64x128xf32, #tpu.memory_space<vmem>>, vector<8x128xf32>
    tpu.vector_store %arg17[%c24_175, %c0_176], %292 {strides = array<i32>} : memref<64x128xf32, #tpu.memory_space<vmem>>, vector<8x128xf32>,
    %c40_177 = arith.constant 40 : index
    %c0_178 = arith.constant 0 : index
    %295 = vector.load %arg15[%c40_177, %c0_178] : memref<64x512xf32, #tpu.memory_space<vmem>>, vector<8x512xf32>
    %c16_179 = arith.constant 16 : index
    %c0_180 = arith.constant 0 : index
    %296 = vector.load %arg15[%c16_179, %c0_180] : memref<64x512xf32, #tpu.memory_space<vmem>>, vector<8x512xf32>
    %297 = arith.select %114, %295, %296 : vector<8x512xi1>, vector<8x512xf32>
    %298 = arith.truncf %292 : vector<8x128xf32> to vector<8x128xbf16>
    %c0_181 = arith.constant 0 : index
    %c0_182 = arith.constant 0 : index
    %299 = vector.load %arg5[%c0_181, %c0_182] : memref<128x512xbf16, #tpu.memory_space<vmem>>, vector<128x512xbf16>
    %cst_183 = arith.constant dense<0.000000e+00> : vector<8x512xf32>
    %300 = tpu.matmul %298, %299, %cst_183 {dimension_numbers = #tpu.dot_dimension_numbers<[1], [0], [0], [1], [0, 0, 1, 1], [], []>} : vector<8x128xbf16>, vector<128x512xbf16>, vector<8x512xf32> -> vector<8x512xf32>
    %301 = arith.addf %297, %300 : vector<8x512xf32>
    %302 = vector.extract_strided_slice %301 {offsets = [0, 0], sizes = [8, 128], strides = [1, 1]} : vector<8x512xf32> to vector<8x128xf32>
    %303 = arith.negf %302 : vector<8x128xf32>
    %304 = math.exp %303 : vector<8x128xf32>
    %cst_184 = arith.constant 1.000000e+00 : f32
    %305 = vector.broadcast %cst_184 : f32 to vector<8x128xf32>
    %306 = arith.addf %305, %304 : vector<8x128xf32>
    %307 = arith.divf %305, %306 : vector<8x128xf32>
    %308 = vector.extract_strided_slice %301 {offsets = [0, 128], sizes = [8, 128], strides = [1, 1]} : vector<8x512xf32> to vector<8x128xf32>
    %309 = arith.negf %308 : vector<8x128xf32>
    %310 = math.exp %309 : vector<8x128xf32>
    %cst_185 = arith.constant 1.000000e+00 : f32
    %311 = vector.broadcast %cst_185 : f32 to vector<8x128xf32>
    %312 = arith.addf %311, %310 : vector<8x128xf32>
    %313 = arith.divf %311, %312 : vector<8x128xf32>
    %314 = vector.extract_strided_slice %301 {offsets = [0, 256], sizes = [8, 128], strides = [1, 1]} : vector<8x512xf32> to vector<8x128xf32>
    %315 = math.tanh %314 : vector<8x128xf32>
    %316 = vector.extract_strided_slice %301 {offsets = [0, 384], sizes = [8, 128], strides = [1, 1]} : vector<8x512xf32> to vector<8x128xf32>
    %317 = arith.negf %316 : vector<8x128xf32>
    %318 = math.exp %317 : vector<8x128xf32>
    %cst_186 = arith.constant 1.000000e+00 : f32
    %319 = vector.broadcast %cst_186 : f32 to vector<8x128xf32>
    %320 = arith.addf %319, %318 : vector<8x128xf32>
    %321 = arith.divf %319, %320 : vector<8x128xf32>
    %322 = arith.mulf %313, %290 : vector<8x128xf32>
    %323 = arith.mulf %307, %315 : vector<8x128xf32>
    %324 = arith.addf %322, %323 : vector<8x128xf32>
    %325 = math.tanh %324 : vector<8x128xf32>
    %326 = arith.mulf %321, %325 : vector<8x128xf32>
    %c40_187 = arith.constant 40 : index
    %c0_188 = arith.constant 0 : index
    %327 = vector.load %arg16[%c40_187, %c0_188] : memref<64x128xf32, #tpu.memory_space<vmem>>, vector<8x128xf32>
    tpu.vector_store %arg16[%c40_187, %c0_188], %326 {strides = array<i32>} : memref<64x128xf32, #tpu.memory_space<vmem>>, vector<8x128xf32>,
    %c16_189 = arith.constant 16 : index
    %c0_190 = arith.constant 0 : index
    %328 = vector.load %arg17[%c16_189, %c0_190] : memref<64x128xf32, #tpu.memory_space<vmem>>, vector<8x128xf32>
    tpu.vector_store %arg17[%c16_189, %c0_190], %326 {strides = array<i32>} : memref<64x128xf32, #tpu.memory_space<vmem>>, vector<8x128xf32>,
    %c48_191 = arith.constant 48 : index
    %c0_192 = arith.constant 0 : index
    %329 = vector.load %arg15[%c48_191, %c0_192] : memref<64x512xf32, #tpu.memory_space<vmem>>, vector<8x512xf32>
    %c8_193 = arith.constant 8 : index
    %c0_194 = arith.constant 0 : index
    %330 = vector.load %arg15[%c8_193, %c0_194] : memref<64x512xf32, #tpu.memory_space<vmem>>, vector<8x512xf32>
    %331 = arith.select %114, %329, %330 : vector<8x512xi1>, vector<8x512xf32>
    %332 = arith.truncf %326 : vector<8x128xf32> to vector<8x128xbf16>
    %c0_195 = arith.constant 0 : index
    %c0_196 = arith.constant 0 : index
    %333 = vector.load %arg5[%c0_195, %c0_196] : memref<128x512xbf16, #tpu.memory_space<vmem>>, vector<128x512xbf16>
    %cst_197 = arith.constant dense<0.000000e+00> : vector<8x512xf32>
    %334 = tpu.matmul %332, %333, %cst_197 {dimension_numbers = #tpu.dot_dimension_numbers<[1], [0], [0], [1], [0, 0, 1, 1], [], []>} : vector<8x128xbf16>, vector<128x512xbf16>, vector<8x512xf32> -> vector<8x512xf32>
    %335 = arith.addf %331, %334 : vector<8x512xf32>
    %336 = vector.extract_strided_slice %335 {offsets = [0, 0], sizes = [8, 128], strides = [1, 1]} : vector<8x512xf32> to vector<8x128xf32>
    %337 = arith.negf %336 : vector<8x128xf32>
    %338 = math.exp %337 : vector<8x128xf32>
    %cst_198 = arith.constant 1.000000e+00 : f32
    %339 = vector.broadcast %cst_198 : f32 to vector<8x128xf32>
    %340 = arith.addf %339, %338 : vector<8x128xf32>
    %341 = arith.divf %339, %340 : vector<8x128xf32>
    %342 = vector.extract_strided_slice %335 {offsets = [0, 128], sizes = [8, 128], strides = [1, 1]} : vector<8x512xf32> to vector<8x128xf32>
    %343 = arith.negf %342 : vector<8x128xf32>
    %344 = math.exp %343 : vector<8x128xf32>
    %cst_199 = arith.constant 1.000000e+00 : f32
    %345 = vector.broadcast %cst_199 : f32 to vector<8x128xf32>
    %346 = arith.addf %345, %344 : vector<8x128xf32>
    %347 = arith.divf %345, %346 : vector<8x128xf32>
    %348 = vector.extract_strided_slice %335 {offsets = [0, 256], sizes = [8, 128], strides = [1, 1]} : vector<8x512xf32> to vector<8x128xf32>
    %349 = math.tanh %348 : vector<8x128xf32>
    %350 = vector.extract_strided_slice %335 {offsets = [0, 384], sizes = [8, 128], strides = [1, 1]} : vector<8x512xf32> to vector<8x128xf32>
    %351 = arith.negf %350 : vector<8x128xf32>
    %352 = math.exp %351 : vector<8x128xf32>
    %cst_200 = arith.constant 1.000000e+00 : f32
    %353 = vector.broadcast %cst_200 : f32 to vector<8x128xf32>
    %354 = arith.addf %353, %352 : vector<8x128xf32>
    %355 = arith.divf %353, %354 : vector<8x128xf32>
    %356 = arith.mulf %347, %324 : vector<8x128xf32>
    %357 = arith.mulf %341, %349 : vector<8x128xf32>
    %358 = arith.addf %356, %357 : vector<8x128xf32>
    %359 = math.tanh %358 : vector<8x128xf32>
    %360 = arith.mulf %355, %359 : vector<8x128xf32>
    %c48_201 = arith.constant 48 : index
    %c0_202 = arith.constant 0 : index
    %361 = vector.load %arg16[%c48_201, %c0_202] : memref<64x128xf32, #tpu.memory_space<vmem>>, vector<8x128xf32>
    tpu.vector_store %arg16[%c48_201, %c0_202], %360 {strides = array<i32>} : memref<64x128xf32, #tpu.memory_space<vmem>>, vector<8x128xf32>,
    %c8_203 = arith.constant 8 : index
    %c0_204 = arith.constant 0 : index
    %362 = vector.load %arg17[%c8_203, %c0_204] : memref<64x128xf32, #tpu.memory_space<vmem>>, vector<8x128xf32>
    tpu.vector_store %arg17[%c8_203, %c0_204], %360 {strides = array<i32>} : memref<64x128xf32, #tpu.memory_space<vmem>>, vector<8x128xf32>,
    %c56_205 = arith.constant 56 : index
    %c0_206 = arith.constant 0 : index
    %363 = vector.load %arg15[%c56_205, %c0_206] : memref<64x512xf32, #tpu.memory_space<vmem>>, vector<8x512xf32>
    %c0_207 = arith.constant 0 : index
    %c0_208 = arith.constant 0 : index
    %364 = vector.load %arg15[%c0_207, %c0_208] : memref<64x512xf32, #tpu.memory_space<vmem>>, vector<8x512xf32>
    %365 = arith.select %114, %363, %364 : vector<8x512xi1>, vector<8x512xf32>
    %366 = arith.truncf %360 : vector<8x128xf32> to vector<8x128xbf16>
    %c0_209 = arith.constant 0 : index
    %c0_210 = arith.constant 0 : index
    %367 = vector.load %arg5[%c0_209, %c0_210] : memref<128x512xbf16, #tpu.memory_space<vmem>>, vector<128x512xbf16>
    %cst_211 = arith.constant dense<0.000000e+00> : vector<8x512xf32>
    %368 = tpu.matmul %366, %367, %cst_211 {dimension_numbers = #tpu.dot_dimension_numbers<[1], [0], [0], [1], [0, 0, 1, 1], [], []>} : vector<8x128xbf16>, vector<128x512xbf16>, vector<8x512xf32> -> vector<8x512xf32>
    %369 = arith.addf %365, %368 : vector<8x512xf32>
    %370 = vector.extract_strided_slice %369 {offsets = [0, 0], sizes = [8, 128], strides = [1, 1]} : vector<8x512xf32> to vector<8x128xf32>
    %371 = arith.negf %370 : vector<8x128xf32>
    %372 = math.exp %371 : vector<8x128xf32>
    %cst_212 = arith.constant 1.000000e+00 : f32
    %373 = vector.broadcast %cst_212 : f32 to vector<8x128xf32>
    %374 = arith.addf %373, %372 : vector<8x128xf32>
    %375 = arith.divf %373, %374 : vector<8x128xf32>
    %376 = vector.extract_strided_slice %369 {offsets = [0, 128], sizes = [8, 128], strides = [1, 1]} : vector<8x512xf32> to vector<8x128xf32>
    %377 = arith.negf %376 : vector<8x128xf32>
    %378 = math.exp %377 : vector<8x128xf32>
    %cst_213 = arith.constant 1.000000e+00 : f32
    %379 = vector.broadcast %cst_213 : f32 to vector<8x128xf32>
    %380 = arith.addf %379, %378 : vector<8x128xf32>
    %381 = arith.divf %379, %380 : vector<8x128xf32>
    %382 = vector.extract_strided_slice %369 {offsets = [0, 256], sizes = [8, 128], strides = [1, 1]} : vector<8x512xf32> to vector<8x128xf32>
    %383 = math.tanh %382 : vector<8x128xf32>
    %384 = vector.extract_strided_slice %369 {offsets = [0, 384], sizes = [8, 128], strides = [1, 1]} : vector<8x512xf32> to vector<8x128xf32>
    %385 = arith.negf %384 : vector<8x128xf32>
    %386 = math.exp %385 : vector<8x128xf32>
    %cst_214 = arith.constant 1.000000e+00 : f32
    %387 = vector.broadcast %cst_214 : f32 to vector<8x128xf32>
    %388 = arith.addf %387, %386 : vector<8x128xf32>
    %389 = arith.divf %387, %388 : vector<8x128xf32>
    %390 = arith.mulf %381, %358 : vector<8x128xf32>
    %391 = arith.mulf %375, %383 : vector<8x128xf32>
    %392 = arith.addf %390, %391 : vector<8x128xf32>
    %393 = math.tanh %392 : vector<8x128xf32>
    %394 = arith.mulf %389, %393 : vector<8x128xf32>
    %c56_215 = arith.constant 56 : index
    %c0_216 = arith.constant 0 : index
    %395 = vector.load %arg16[%c56_215, %c0_216] : memref<64x128xf32, #tpu.memory_space<vmem>>, vector<8x128xf32>
    tpu.vector_store %arg16[%c56_215, %c0_216], %394 {strides = array<i32>} : memref<64x128xf32, #tpu.memory_space<vmem>>, vector<8x128xf32>,
    %c0_217 = arith.constant 0 : index
    %c0_218 = arith.constant 0 : index
    %396 = vector.load %arg17[%c0_217, %c0_218] : memref<64x128xf32, #tpu.memory_space<vmem>>, vector<8x128xf32>
    tpu.vector_store %arg17[%c0_217, %c0_218], %394 {strides = array<i32>} : memref<64x128xf32, #tpu.memory_space<vmem>>, vector<8x128xf32>,
    %c0_219 = arith.constant 0 : index
    %c0_220 = arith.constant 0 : index
    %397 = vector.load %arg16[%c0_219, %c0_220] : memref<64x128xf32, #tpu.memory_space<vmem>>, vector<64x128xf32>
    %398 = arith.truncf %397 : vector<64x128xf32> to vector<64x128xbf16>
    %c0_221 = arith.constant 0 : index
    %c0_222 = arith.constant 0 : index
    %399 = vector.load %arg6[%c0_221, %c0_222] : memref<128x512xbf16, #tpu.memory_space<vmem>>, vector<128x512xbf16>
    %cst_223 = arith.constant dense<0.000000e+00> : vector<64x512xf32>
    %400 = tpu.matmul %398, %399, %cst_223 {dimension_numbers = #tpu.dot_dimension_numbers<[1], [0], [0], [1], [0, 0, 1, 1], [], []>} : vector<64x128xbf16>, vector<128x512xbf16>, vector<64x512xf32> -> vector<64x512xf32>
    %c0_224 = arith.constant 0 : index
    %c0_225 = arith.constant 0 : index
    %401 = vector.load %arg8[%c0_224, %c0_225] : memref<1x512xf32, #tpu.memory_space<vmem>>, vector<1x512xf32>
    %402 = vector.broadcast %401 : vector<1x512xf32> to vector<64x512xf32>
    %403 = arith.addf %400, %402 : vector<64x512xf32>
    %c0_226 = arith.constant 0 : index
    %c0_227 = arith.constant 0 : index
    %404 = vector.load %arg15[%c0_226, %c0_227] : memref<64x512xf32, #tpu.memory_space<vmem>>, vector<64x512xf32>
    tpu.vector_store %arg15[%c0_226, %c0_227], %403 {strides = array<i32>} : memref<64x512xf32, #tpu.memory_space<vmem>>, vector<64x512xf32>,
    %c0_228 = arith.constant 0 : index
    %c0_229 = arith.constant 0 : index
    %405 = vector.load %arg15[%c0_228, %c0_229] : memref<64x512xf32, #tpu.memory_space<vmem>>, vector<64x512xf32>
    %c0_230 = arith.constant 0 : index
    %c0_231 = arith.constant 0 : index
    %406 = vector.load %arg17[%c0_230, %c0_231] : memref<64x128xf32, #tpu.memory_space<vmem>>, vector<64x128xf32>
    %407 = arith.truncf %406 : vector<64x128xf32> to vector<64x128xbf16>
    %c0_232 = arith.constant 0 : index
    %c0_233 = arith.constant 0 : index
    %408 = vector.load %arg7[%c0_232, %c0_233] : memref<128x512xbf16, #tpu.memory_space<vmem>>, vector<128x512xbf16>
    %cst_234 = arith.constant dense<0.000000e+00> : vector<64x512xf32>
    %409 = tpu.matmul %407, %408, %cst_234 {dimension_numbers = #tpu.dot_dimension_numbers<[1], [0], [0], [1], [0, 0, 1, 1], [], []>} : vector<64x128xbf16>, vector<128x512xbf16>, vector<64x512xf32> -> vector<64x512xf32>
    %410 = arith.addf %405, %409 : vector<64x512xf32>
    %c0_235 = arith.constant 0 : index
    %c0_236 = arith.constant 0 : index
    %411 = vector.load %arg15[%c0_235, %c0_236] : memref<64x512xf32, #tpu.memory_space<vmem>>, vector<64x512xf32>
    tpu.vector_store %arg15[%c0_235, %c0_236], %410 {strides = array<i32>} : memref<64x512xf32, #tpu.memory_space<vmem>>, vector<64x512xf32>,
    %cst_237 = arith.constant 0.000000e+00 : f32
    %412 = vector.broadcast %cst_237 : f32 to vector<8x128xf32>
    %cst_238 = arith.constant 0.000000e+00 : f32
    %413 = vector.broadcast %cst_238 : f32 to vector<8x128xf32>
    %c0_239 = arith.constant 0 : index
    %c0_240 = arith.constant 0 : index
    %414 = vector.load %arg15[%c0_239, %c0_240] : memref<64x512xf32, #tpu.memory_space<vmem>>, vector<8x512xf32>
    %c56_241 = arith.constant 56 : index
    %c0_242 = arith.constant 0 : index
    %415 = vector.load %arg15[%c56_241, %c0_242] : memref<64x512xf32, #tpu.memory_space<vmem>>, vector<8x512xf32>
    %416 = arith.select %114, %414, %415 : vector<8x512xi1>, vector<8x512xf32>
    %417 = arith.truncf %412 : vector<8x128xf32> to vector<8x128xbf16>
    %c0_243 = arith.constant 0 : index
    %c0_244 = arith.constant 0 : index
    %418 = vector.load %arg9[%c0_243, %c0_244] : memref<128x512xbf16, #tpu.memory_space<vmem>>, vector<128x512xbf16>
    %cst_245 = arith.constant dense<0.000000e+00> : vector<8x512xf32>
    %419 = tpu.matmul %417, %418, %cst_245 {dimension_numbers = #tpu.dot_dimension_numbers<[1], [0], [0], [1], [0, 0, 1, 1], [], []>} : vector<8x128xbf16>, vector<128x512xbf16>, vector<8x512xf32> -> vector<8x512xf32>
    %420 = arith.addf %416, %419 : vector<8x512xf32>
    %421 = vector.extract_strided_slice %420 {offsets = [0, 0], sizes = [8, 128], strides = [1, 1]} : vector<8x512xf32> to vector<8x128xf32>
    %422 = arith.negf %421 : vector<8x128xf32>
    %423 = math.exp %422 : vector<8x128xf32>
    %cst_246 = arith.constant 1.000000e+00 : f32
    %424 = vector.broadcast %cst_246 : f32 to vector<8x128xf32>
    %425 = arith.addf %424, %423 : vector<8x128xf32>
    %426 = arith.divf %424, %425 : vector<8x128xf32>
    %427 = vector.extract_strided_slice %420 {offsets = [0, 128], sizes = [8, 128], strides = [1, 1]} : vector<8x512xf32> to vector<8x128xf32>
    %428 = arith.negf %427 : vector<8x128xf32>
    %429 = math.exp %428 : vector<8x128xf32>
    %cst_247 = arith.constant 1.000000e+00 : f32
    %430 = vector.broadcast %cst_247 : f32 to vector<8x128xf32>
    %431 = arith.addf %430, %429 : vector<8x128xf32>
    %432 = arith.divf %430, %431 : vector<8x128xf32>
    %433 = vector.extract_strided_slice %420 {offsets = [0, 256], sizes = [8, 128], strides = [1, 1]} : vector<8x512xf32> to vector<8x128xf32>
    %434 = math.tanh %433 : vector<8x128xf32>
    %435 = vector.extract_strided_slice %420 {offsets = [0, 384], sizes = [8, 128], strides = [1, 1]} : vector<8x512xf32> to vector<8x128xf32>
    %436 = arith.negf %435 : vector<8x128xf32>
    %437 = math.exp %436 : vector<8x128xf32>
    %cst_248 = arith.constant 1.000000e+00 : f32
    %438 = vector.broadcast %cst_248 : f32 to vector<8x128xf32>
    %439 = arith.addf %438, %437 : vector<8x128xf32>
    %440 = arith.divf %438, %439 : vector<8x128xf32>
    %441 = arith.mulf %432, %413 : vector<8x128xf32>
    %442 = arith.mulf %426, %434 : vector<8x128xf32>
    %443 = arith.addf %441, %442 : vector<8x128xf32>
    %444 = math.tanh %443 : vector<8x128xf32>
    %445 = arith.mulf %440, %444 : vector<8x128xf32>
    %c8_249 = arith.constant 8 : index
    %c0_250 = arith.constant 0 : index
    %446 = vector.load %arg15[%c8_249, %c0_250] : memref<64x512xf32, #tpu.memory_space<vmem>>, vector<8x512xf32>
    %c48_251 = arith.constant 48 : index
    %c0_252 = arith.constant 0 : index
    %447 = vector.load %arg15[%c48_251, %c0_252] : memref<64x512xf32, #tpu.memory_space<vmem>>, vector<8x512xf32>
    %448 = arith.select %114, %446, %447 : vector<8x512xi1>, vector<8x512xf32>
    %449 = arith.truncf %445 : vector<8x128xf32> to vector<8x128xbf16>
    %c0_253 = arith.constant 0 : index
    %c0_254 = arith.constant 0 : index
    %450 = vector.load %arg9[%c0_253, %c0_254] : memref<128x512xbf16, #tpu.memory_space<vmem>>, vector<128x512xbf16>
    %cst_255 = arith.constant dense<0.000000e+00> : vector<8x512xf32>
    %451 = tpu.matmul %449, %450, %cst_255 {dimension_numbers = #tpu.dot_dimension_numbers<[1], [0], [0], [1], [0, 0, 1, 1], [], []>} : vector<8x128xbf16>, vector<128x512xbf16>, vector<8x512xf32> -> vector<8x512xf32>
    %452 = arith.addf %448, %451 : vector<8x512xf32>
    %453 = vector.extract_strided_slice %452 {offsets = [0, 0], sizes = [8, 128], strides = [1, 1]} : vector<8x512xf32> to vector<8x128xf32>
    %454 = arith.negf %453 : vector<8x128xf32>
    %455 = math.exp %454 : vector<8x128xf32>
    %cst_256 = arith.constant 1.000000e+00 : f32
    %456 = vector.broadcast %cst_256 : f32 to vector<8x128xf32>
    %457 = arith.addf %456, %455 : vector<8x128xf32>
    %458 = arith.divf %456, %457 : vector<8x128xf32>
    %459 = vector.extract_strided_slice %452 {offsets = [0, 128], sizes = [8, 128], strides = [1, 1]} : vector<8x512xf32> to vector<8x128xf32>
    %460 = arith.negf %459 : vector<8x128xf32>
    %461 = math.exp %460 : vector<8x128xf32>
    %cst_257 = arith.constant 1.000000e+00 : f32
    %462 = vector.broadcast %cst_257 : f32 to vector<8x128xf32>
    %463 = arith.addf %462, %461 : vector<8x128xf32>
    %464 = arith.divf %462, %463 : vector<8x128xf32>
    %465 = vector.extract_strided_slice %452 {offsets = [0, 256], sizes = [8, 128], strides = [1, 1]} : vector<8x512xf32> to vector<8x128xf32>
    %466 = math.tanh %465 : vector<8x128xf32>
    %467 = vector.extract_strided_slice %452 {offsets = [0, 384], sizes = [8, 128], strides = [1, 1]} : vector<8x512xf32> to vector<8x128xf32>
    %468 = arith.negf %467 : vector<8x128xf32>
    %469 = math.exp %468 : vector<8x128xf32>
    %cst_258 = arith.constant 1.000000e+00 : f32
    %470 = vector.broadcast %cst_258 : f32 to vector<8x128xf32>
    %471 = arith.addf %470, %469 : vector<8x128xf32>
    %472 = arith.divf %470, %471 : vector<8x128xf32>
    %473 = arith.mulf %464, %443 : vector<8x128xf32>
    %474 = arith.mulf %458, %466 : vector<8x128xf32>
    %475 = arith.addf %473, %474 : vector<8x128xf32>
    %476 = math.tanh %475 : vector<8x128xf32>
    %477 = arith.mulf %472, %476 : vector<8x128xf32>
    %c16_259 = arith.constant 16 : index
    %c0_260 = arith.constant 0 : index
    %478 = vector.load %arg15[%c16_259, %c0_260] : memref<64x512xf32, #tpu.memory_space<vmem>>, vector<8x512xf32>
    %c40_261 = arith.constant 40 : index
    %c0_262 = arith.constant 0 : index
    %479 = vector.load %arg15[%c40_261, %c0_262] : memref<64x512xf32, #tpu.memory_space<vmem>>, vector<8x512xf32>
    %480 = arith.select %114, %478, %479 : vector<8x512xi1>, vector<8x512xf32>
    %481 = arith.truncf %477 : vector<8x128xf32> to vector<8x128xbf16>
    %c0_263 = arith.constant 0 : index
    %c0_264 = arith.constant 0 : index
    %482 = vector.load %arg9[%c0_263, %c0_264] : memref<128x512xbf16, #tpu.memory_space<vmem>>, vector<128x512xbf16>
    %cst_265 = arith.constant dense<0.000000e+00> : vector<8x512xf32>
    %483 = tpu.matmul %481, %482, %cst_265 {dimension_numbers = #tpu.dot_dimension_numbers<[1], [0], [0], [1], [0, 0, 1, 1], [], []>} : vector<8x128xbf16>, vector<128x512xbf16>, vector<8x512xf32> -> vector<8x512xf32>
    %484 = arith.addf %480, %483 : vector<8x512xf32>
    %485 = vector.extract_strided_slice %484 {offsets = [0, 0], sizes = [8, 128], strides = [1, 1]} : vector<8x512xf32> to vector<8x128xf32>
    %486 = arith.negf %485 : vector<8x128xf32>
    %487 = math.exp %486 : vector<8x128xf32>
    %cst_266 = arith.constant 1.000000e+00 : f32
    %488 = vector.broadcast %cst_266 : f32 to vector<8x128xf32>
    %489 = arith.addf %488, %487 : vector<8x128xf32>
    %490 = arith.divf %488, %489 : vector<8x128xf32>
    %491 = vector.extract_strided_slice %484 {offsets = [0, 128], sizes = [8, 128], strides = [1, 1]} : vector<8x512xf32> to vector<8x128xf32>
    %492 = arith.negf %491 : vector<8x128xf32>
    %493 = math.exp %492 : vector<8x128xf32>
    %cst_267 = arith.constant 1.000000e+00 : f32
    %494 = vector.broadcast %cst_267 : f32 to vector<8x128xf32>
    %495 = arith.addf %494, %493 : vector<8x128xf32>
    %496 = arith.divf %494, %495 : vector<8x128xf32>
    %497 = vector.extract_strided_slice %484 {offsets = [0, 256], sizes = [8, 128], strides = [1, 1]} : vector<8x512xf32> to vector<8x128xf32>
    %498 = math.tanh %497 : vector<8x128xf32>
    %499 = vector.extract_strided_slice %484 {offsets = [0, 384], sizes = [8, 128], strides = [1, 1]} : vector<8x512xf32> to vector<8x128xf32>
    %500 = arith.negf %499 : vector<8x128xf32>
    %501 = math.exp %500 : vector<8x128xf32>
    %cst_268 = arith.constant 1.000000e+00 : f32
    %502 = vector.broadcast %cst_268 : f32 to vector<8x128xf32>
    %503 = arith.addf %502, %501 : vector<8x128xf32>
    %504 = arith.divf %502, %503 : vector<8x128xf32>
    %505 = arith.mulf %496, %475 : vector<8x128xf32>
    %506 = arith.mulf %490, %498 : vector<8x128xf32>
    %507 = arith.addf %505, %506 : vector<8x128xf32>
    %508 = math.tanh %507 : vector<8x128xf32>
    %509 = arith.mulf %504, %508 : vector<8x128xf32>
    %c24_269 = arith.constant 24 : index
    %c0_270 = arith.constant 0 : index
    %510 = vector.load %arg15[%c24_269, %c0_270] : memref<64x512xf32, #tpu.memory_space<vmem>>, vector<8x512xf32>
    %c32_271 = arith.constant 32 : index
    %c0_272 = arith.constant 0 : index
    %511 = vector.load %arg15[%c32_271, %c0_272] : memref<64x512xf32, #tpu.memory_space<vmem>>, vector<8x512xf32>
    %512 = arith.select %114, %510, %511 : vector<8x512xi1>, vector<8x512xf32>
    %513 = arith.truncf %509 : vector<8x128xf32> to vector<8x128xbf16>
    %c0_273 = arith.constant 0 : index
    %c0_274 = arith.constant 0 : index
    %514 = vector.load %arg9[%c0_273, %c0_274] : memref<128x512xbf16, #tpu.memory_space<vmem>>, vector<128x512xbf16>
    %cst_275 = arith.constant dense<0.000000e+00> : vector<8x512xf32>
    %515 = tpu.matmul %513, %514, %cst_275 {dimension_numbers = #tpu.dot_dimension_numbers<[1], [0], [0], [1], [0, 0, 1, 1], [], []>} : vector<8x128xbf16>, vector<128x512xbf16>, vector<8x512xf32> -> vector<8x512xf32>
    %516 = arith.addf %512, %515 : vector<8x512xf32>
    %517 = vector.extract_strided_slice %516 {offsets = [0, 0], sizes = [8, 128], strides = [1, 1]} : vector<8x512xf32> to vector<8x128xf32>
    %518 = arith.negf %517 : vector<8x128xf32>
    %519 = math.exp %518 : vector<8x128xf32>
    %cst_276 = arith.constant 1.000000e+00 : f32
    %520 = vector.broadcast %cst_276 : f32 to vector<8x128xf32>
    %521 = arith.addf %520, %519 : vector<8x128xf32>
    %522 = arith.divf %520, %521 : vector<8x128xf32>
    %523 = vector.extract_strided_slice %516 {offsets = [0, 128], sizes = [8, 128], strides = [1, 1]} : vector<8x512xf32> to vector<8x128xf32>
    %524 = arith.negf %523 : vector<8x128xf32>
    %525 = math.exp %524 : vector<8x128xf32>
    %cst_277 = arith.constant 1.000000e+00 : f32
    %526 = vector.broadcast %cst_277 : f32 to vector<8x128xf32>
    %527 = arith.addf %526, %525 : vector<8x128xf32>
    %528 = arith.divf %526, %527 : vector<8x128xf32>
    %529 = vector.extract_strided_slice %516 {offsets = [0, 256], sizes = [8, 128], strides = [1, 1]} : vector<8x512xf32> to vector<8x128xf32>
    %530 = math.tanh %529 : vector<8x128xf32>
    %531 = vector.extract_strided_slice %516 {offsets = [0, 384], sizes = [8, 128], strides = [1, 1]} : vector<8x512xf32> to vector<8x128xf32>
    %532 = arith.negf %531 : vector<8x128xf32>
    %533 = math.exp %532 : vector<8x128xf32>
    %cst_278 = arith.constant 1.000000e+00 : f32
    %534 = vector.broadcast %cst_278 : f32 to vector<8x128xf32>
    %535 = arith.addf %534, %533 : vector<8x128xf32>
    %536 = arith.divf %534, %535 : vector<8x128xf32>
    %537 = arith.mulf %528, %507 : vector<8x128xf32>
    %538 = arith.mulf %522, %530 : vector<8x128xf32>
    %539 = arith.addf %537, %538 : vector<8x128xf32>
    %540 = math.tanh %539 : vector<8x128xf32>
    %541 = arith.mulf %536, %540 : vector<8x128xf32>
    %c32_279 = arith.constant 32 : index
    %c0_280 = arith.constant 0 : index
    %542 = vector.load %arg15[%c32_279, %c0_280] : memref<64x512xf32, #tpu.memory_space<vmem>>, vector<8x512xf32>
    %c24_281 = arith.constant 24 : index
    %c0_282 = arith.constant 0 : index
    %543 = vector.load %arg15[%c24_281, %c0_282] : memref<64x512xf32, #tpu.memory_space<vmem>>, vector<8x512xf32>
    %544 = arith.select %114, %542, %543 : vector<8x512xi1>, vector<8x512xf32>
    %545 = arith.truncf %541 : vector<8x128xf32> to vector<8x128xbf16>
    %c0_283 = arith.constant 0 : index
    %c0_284 = arith.constant 0 : index
    %546 = vector.load %arg9[%c0_283, %c0_284] : memref<128x512xbf16, #tpu.memory_space<vmem>>, vector<128x512xbf16>
    %cst_285 = arith.constant dense<0.000000e+00> : vector<8x512xf32>
    %547 = tpu.matmul %545, %546, %cst_285 {dimension_numbers = #tpu.dot_dimension_numbers<[1], [0], [0], [1], [0, 0, 1, 1], [], []>} : vector<8x128xbf16>, vector<128x512xbf16>, vector<8x512xf32> -> vector<8x512xf32>
    %548 = arith.addf %544, %547 : vector<8x512xf32>
    %549 = vector.extract_strided_slice %548 {offsets = [0, 0], sizes = [8, 128], strides = [1, 1]} : vector<8x512xf32> to vector<8x128xf32>
    %550 = arith.negf %549 : vector<8x128xf32>
    %551 = math.exp %550 : vector<8x128xf32>
    %cst_286 = arith.constant 1.000000e+00 : f32
    %552 = vector.broadcast %cst_286 : f32 to vector<8x128xf32>
    %553 = arith.addf %552, %551 : vector<8x128xf32>
    %554 = arith.divf %552, %553 : vector<8x128xf32>
    %555 = vector.extract_strided_slice %548 {offsets = [0, 128], sizes = [8, 128], strides = [1, 1]} : vector<8x512xf32> to vector<8x128xf32>
    %556 = arith.negf %555 : vector<8x128xf32>
    %557 = math.exp %556 : vector<8x128xf32>
    %cst_287 = arith.constant 1.000000e+00 : f32
    %558 = vector.broadcast %cst_287 : f32 to vector<8x128xf32>
    %559 = arith.addf %558, %557 : vector<8x128xf32>
    %560 = arith.divf %558, %559 : vector<8x128xf32>
    %561 = vector.extract_strided_slice %548 {offsets = [0, 256], sizes = [8, 128], strides = [1, 1]} : vector<8x512xf32> to vector<8x128xf32>
    %562 = math.tanh %561 : vector<8x128xf32>
    %563 = vector.extract_strided_slice %548 {offsets = [0, 384], sizes = [8, 128], strides = [1, 1]} : vector<8x512xf32> to vector<8x128xf32>
    %564 = arith.negf %563 : vector<8x128xf32>
    %565 = math.exp %564 : vector<8x128xf32>
    %cst_288 = arith.constant 1.000000e+00 : f32
    %566 = vector.broadcast %cst_288 : f32 to vector<8x128xf32>
    %567 = arith.addf %566, %565 : vector<8x128xf32>
    %568 = arith.divf %566, %567 : vector<8x128xf32>
    %569 = arith.mulf %560, %539 : vector<8x128xf32>
    %570 = arith.mulf %554, %562 : vector<8x128xf32>
    %571 = arith.addf %569, %570 : vector<8x128xf32>
    %572 = math.tanh %571 : vector<8x128xf32>
    %573 = arith.mulf %568, %572 : vector<8x128xf32>
    %c40_289 = arith.constant 40 : index
    %c0_290 = arith.constant 0 : index
    %574 = vector.load %arg15[%c40_289, %c0_290] : memref<64x512xf32, #tpu.memory_space<vmem>>, vector<8x512xf32>
    %c16_291 = arith.constant 16 : index
    %c0_292 = arith.constant 0 : index
    %575 = vector.load %arg15[%c16_291, %c0_292] : memref<64x512xf32, #tpu.memory_space<vmem>>, vector<8x512xf32>
    %576 = arith.select %114, %574, %575 : vector<8x512xi1>, vector<8x512xf32>
    %577 = arith.truncf %573 : vector<8x128xf32> to vector<8x128xbf16>
    %c0_293 = arith.constant 0 : index
    %c0_294 = arith.constant 0 : index
    %578 = vector.load %arg9[%c0_293, %c0_294] : memref<128x512xbf16, #tpu.memory_space<vmem>>, vector<128x512xbf16>
    %cst_295 = arith.constant dense<0.000000e+00> : vector<8x512xf32>
    %579 = tpu.matmul %577, %578, %cst_295 {dimension_numbers = #tpu.dot_dimension_numbers<[1], [0], [0], [1], [0, 0, 1, 1], [], []>} : vector<8x128xbf16>, vector<128x512xbf16>, vector<8x512xf32> -> vector<8x512xf32>
    %580 = arith.addf %576, %579 : vector<8x512xf32>
    %581 = vector.extract_strided_slice %580 {offsets = [0, 0], sizes = [8, 128], strides = [1, 1]} : vector<8x512xf32> to vector<8x128xf32>
    %582 = arith.negf %581 : vector<8x128xf32>
    %583 = math.exp %582 : vector<8x128xf32>
    %cst_296 = arith.constant 1.000000e+00 : f32
    %584 = vector.broadcast %cst_296 : f32 to vector<8x128xf32>
    %585 = arith.addf %584, %583 : vector<8x128xf32>
    %586 = arith.divf %584, %585 : vector<8x128xf32>
    %587 = vector.extract_strided_slice %580 {offsets = [0, 128], sizes = [8, 128], strides = [1, 1]} : vector<8x512xf32> to vector<8x128xf32>
    %588 = arith.negf %587 : vector<8x128xf32>
    %589 = math.exp %588 : vector<8x128xf32>
    %cst_297 = arith.constant 1.000000e+00 : f32
    %590 = vector.broadcast %cst_297 : f32 to vector<8x128xf32>
    %591 = arith.addf %590, %589 : vector<8x128xf32>
    %592 = arith.divf %590, %591 : vector<8x128xf32>
    %593 = vector.extract_strided_slice %580 {offsets = [0, 256], sizes = [8, 128], strides = [1, 1]} : vector<8x512xf32> to vector<8x128xf32>
    %594 = math.tanh %593 : vector<8x128xf32>
    %595 = vector.extract_strided_slice %580 {offsets = [0, 384], sizes = [8, 128], strides = [1, 1]} : vector<8x512xf32> to vector<8x128xf32>
    %596 = arith.negf %595 : vector<8x128xf32>
    %597 = math.exp %596 : vector<8x128xf32>
    %cst_298 = arith.constant 1.000000e+00 : f32
    %598 = vector.broadcast %cst_298 : f32 to vector<8x128xf32>
    %599 = arith.addf %598, %597 : vector<8x128xf32>
    %600 = arith.divf %598, %599 : vector<8x128xf32>
    %601 = arith.mulf %592, %571 : vector<8x128xf32>
    %602 = arith.mulf %586, %594 : vector<8x128xf32>
    %603 = arith.addf %601, %602 : vector<8x128xf32>
    %604 = math.tanh %603 : vector<8x128xf32>
    %605 = arith.mulf %600, %604 : vector<8x128xf32>
    %c48_299 = arith.constant 48 : index
    %c0_300 = arith.constant 0 : index
    %606 = vector.load %arg15[%c48_299, %c0_300] : memref<64x512xf32, #tpu.memory_space<vmem>>, vector<8x512xf32>
    %c8_301 = arith.constant 8 : index
    %c0_302 = arith.constant 0 : index
    %607 = vector.load %arg15[%c8_301, %c0_302] : memref<64x512xf32, #tpu.memory_space<vmem>>, vector<8x512xf32>
    %608 = arith.select %114, %606, %607 : vector<8x512xi1>, vector<8x512xf32>
    %609 = arith.truncf %605 : vector<8x128xf32> to vector<8x128xbf16>
    %c0_303 = arith.constant 0 : index
    %c0_304 = arith.constant 0 : index
    %610 = vector.load %arg9[%c0_303, %c0_304] : memref<128x512xbf16, #tpu.memory_space<vmem>>, vector<128x512xbf16>
    %cst_305 = arith.constant dense<0.000000e+00> : vector<8x512xf32>
    %611 = tpu.matmul %609, %610, %cst_305 {dimension_numbers = #tpu.dot_dimension_numbers<[1], [0], [0], [1], [0, 0, 1, 1], [], []>} : vector<8x128xbf16>, vector<128x512xbf16>, vector<8x512xf32> -> vector<8x512xf32>
    %612 = arith.addf %608, %611 : vector<8x512xf32>
    %613 = vector.extract_strided_slice %612 {offsets = [0, 0], sizes = [8, 128], strides = [1, 1]} : vector<8x512xf32> to vector<8x128xf32>
    %614 = arith.negf %613 : vector<8x128xf32>
    %615 = math.exp %614 : vector<8x128xf32>
    %cst_306 = arith.constant 1.000000e+00 : f32
    %616 = vector.broadcast %cst_306 : f32 to vector<8x128xf32>
    %617 = arith.addf %616, %615 : vector<8x128xf32>
    %618 = arith.divf %616, %617 : vector<8x128xf32>
    %619 = vector.extract_strided_slice %612 {offsets = [0, 128], sizes = [8, 128], strides = [1, 1]} : vector<8x512xf32> to vector<8x128xf32>
    %620 = arith.negf %619 : vector<8x128xf32>
    %621 = math.exp %620 : vector<8x128xf32>
    %cst_307 = arith.constant 1.000000e+00 : f32
    %622 = vector.broadcast %cst_307 : f32 to vector<8x128xf32>
    %623 = arith.addf %622, %621 : vector<8x128xf32>
    %624 = arith.divf %622, %623 : vector<8x128xf32>
    %625 = vector.extract_strided_slice %612 {offsets = [0, 256], sizes = [8, 128], strides = [1, 1]} : vector<8x512xf32> to vector<8x128xf32>
    %626 = math.tanh %625 : vector<8x128xf32>
    %627 = vector.extract_strided_slice %612 {offsets = [0, 384], sizes = [8, 128], strides = [1, 1]} : vector<8x512xf32> to vector<8x128xf32>
    %628 = arith.negf %627 : vector<8x128xf32>
    %629 = math.exp %628 : vector<8x128xf32>
    %cst_308 = arith.constant 1.000000e+00 : f32
    %630 = vector.broadcast %cst_308 : f32 to vector<8x128xf32>
    %631 = arith.addf %630, %629 : vector<8x128xf32>
    %632 = arith.divf %630, %631 : vector<8x128xf32>
    %633 = arith.mulf %624, %603 : vector<8x128xf32>
    %634 = arith.mulf %618, %626 : vector<8x128xf32>
    %635 = arith.addf %633, %634 : vector<8x128xf32>
    %636 = math.tanh %635 : vector<8x128xf32>
    %637 = arith.mulf %632, %636 : vector<8x128xf32>
    %c56_309 = arith.constant 56 : index
    %c0_310 = arith.constant 0 : index
    %638 = vector.load %arg15[%c56_309, %c0_310] : memref<64x512xf32, #tpu.memory_space<vmem>>, vector<8x512xf32>
    %c0_311 = arith.constant 0 : index
    %c0_312 = arith.constant 0 : index
    %639 = vector.load %arg15[%c0_311, %c0_312] : memref<64x512xf32, #tpu.memory_space<vmem>>, vector<8x512xf32>
    %640 = arith.select %114, %638, %639 : vector<8x512xi1>, vector<8x512xf32>
    %641 = arith.truncf %637 : vector<8x128xf32> to vector<8x128xbf16>
    %c0_313 = arith.constant 0 : index
    %c0_314 = arith.constant 0 : index
    %642 = vector.load %arg9[%c0_313, %c0_314] : memref<128x512xbf16, #tpu.memory_space<vmem>>, vector<128x512xbf16>
    %cst_315 = arith.constant dense<0.000000e+00> : vector<8x512xf32>
    %643 = tpu.matmul %641, %642, %cst_315 {dimension_numbers = #tpu.dot_dimension_numbers<[1], [0], [0], [1], [0, 0, 1, 1], [], []>} : vector<8x128xbf16>, vector<128x512xbf16>, vector<8x512xf32> -> vector<8x512xf32>
    %644 = arith.addf %640, %643 : vector<8x512xf32>
    %645 = vector.extract_strided_slice %644 {offsets = [0, 0], sizes = [8, 128], strides = [1, 1]} : vector<8x512xf32> to vector<8x128xf32>
    %646 = arith.negf %645 : vector<8x128xf32>
    %647 = math.exp %646 : vector<8x128xf32>
    %cst_316 = arith.constant 1.000000e+00 : f32
    %648 = vector.broadcast %cst_316 : f32 to vector<8x128xf32>
    %649 = arith.addf %648, %647 : vector<8x128xf32>
    %650 = arith.divf %648, %649 : vector<8x128xf32>
    %651 = vector.extract_strided_slice %644 {offsets = [0, 128], sizes = [8, 128], strides = [1, 1]} : vector<8x512xf32> to vector<8x128xf32>
    %652 = arith.negf %651 : vector<8x128xf32>
    %653 = math.exp %652 : vector<8x128xf32>
    %cst_317 = arith.constant 1.000000e+00 : f32
    %654 = vector.broadcast %cst_317 : f32 to vector<8x128xf32>
    %655 = arith.addf %654, %653 : vector<8x128xf32>
    %656 = arith.divf %654, %655 : vector<8x128xf32>
    %657 = vector.extract_strided_slice %644 {offsets = [0, 256], sizes = [8, 128], strides = [1, 1]} : vector<8x512xf32> to vector<8x128xf32>
    %658 = math.tanh %657 : vector<8x128xf32>
    %659 = vector.extract_strided_slice %644 {offsets = [0, 384], sizes = [8, 128], strides = [1, 1]} : vector<8x512xf32> to vector<8x128xf32>
    %660 = arith.negf %659 : vector<8x128xf32>
    %661 = math.exp %660 : vector<8x128xf32>
    %cst_318 = arith.constant 1.000000e+00 : f32
    %662 = vector.broadcast %cst_318 : f32 to vector<8x128xf32>
    %663 = arith.addf %662, %661 : vector<8x128xf32>
    %664 = arith.divf %662, %663 : vector<8x128xf32>
    %665 = arith.mulf %656, %635 : vector<8x128xf32>
    %666 = arith.mulf %650, %658 : vector<8x128xf32>
    %667 = arith.addf %665, %666 : vector<8x128xf32>
    %668 = math.tanh %667 : vector<8x128xf32>
    %669 = arith.mulf %664, %668 : vector<8x128xf32>
    %c0_319 = arith.constant 0 : index
    %c0_320 = arith.constant 0 : index
    %670 = vector.load %arg12[%c0_319, %c0_320] : memref<1x128xf32, #tpu.memory_space<vmem>>, vector<1x128xf32>
    %c0_321 = arith.constant 0 : index
    %c0_322 = arith.constant 0 : index
    %671 = vector.load %arg10[%c0_321, %c0_322] : memref<128x128xf32, #tpu.memory_space<vmem>>, vector<128x128xf32>
    %cst_323 = arith.constant dense<0.000000e+00> : vector<8x128xf32>
    %672 = tpu.matmul %394, %671, %cst_323 {dimension_numbers = #tpu.dot_dimension_numbers<[1], [0], [0], [1], [0, 0, 1, 1], [], []>} : vector<8x128xf32>, vector<128x128xf32>, vector<8x128xf32> -> vector<8x128xf32>
    %673 = vector.broadcast %670 : vector<1x128xf32> to vector<8x128xf32>
    %674 = arith.addf %672, %673 : vector<8x128xf32>
    %c0_324 = arith.constant 0 : index
    %c0_325 = arith.constant 0 : index
    %675 = vector.load %arg13[%c0_324, %c0_325] : memref<32x128xf32, #tpu.memory_space<vmem>>, vector<8x128xf32>
    tpu.vector_store %arg13[%c0_324, %c0_325], %674 {strides = array<i32>} : memref<32x128xf32, #tpu.memory_space<vmem>>, vector<8x128xf32>,
    %c0_326 = arith.constant 0 : index
    %c0_327 = arith.constant 0 : index
    %676 = vector.load %arg11[%c0_326, %c0_327] : memref<128x128xf32, #tpu.memory_space<vmem>>, vector<128x128xf32>
    %cst_328 = arith.constant dense<0.000000e+00> : vector<8x128xf32>
    %677 = tpu.matmul %394, %676, %cst_328 {dimension_numbers = #tpu.dot_dimension_numbers<[1], [0], [0], [1], [0, 0, 1, 1], [], []>} : vector<8x128xf32>, vector<128x128xf32>, vector<8x128xf32> -> vector<8x128xf32>
    %678 = vector.broadcast %670 : vector<1x128xf32> to vector<8x128xf32>
    %679 = arith.addf %677, %678 : vector<8x128xf32>
    %c8_329 = arith.constant 8 : index
    %c0_330 = arith.constant 0 : index
    %680 = vector.load %arg13[%c8_329, %c0_330] : memref<32x128xf32, #tpu.memory_space<vmem>>, vector<8x128xf32>
    tpu.vector_store %arg13[%c8_329, %c0_330], %679 {strides = array<i32>} : memref<32x128xf32, #tpu.memory_space<vmem>>, vector<8x128xf32>,
    %c0_331 = arith.constant 0 : index
    %c0_332 = arith.constant 0 : index
    %681 = vector.load %arg10[%c0_331, %c0_332] : memref<128x128xf32, #tpu.memory_space<vmem>>, vector<128x128xf32>
    %cst_333 = arith.constant dense<0.000000e+00> : vector<8x128xf32>
    %682 = tpu.matmul %669, %681, %cst_333 {dimension_numbers = #tpu.dot_dimension_numbers<[1], [0], [0], [1], [0, 0, 1, 1], [], []>} : vector<8x128xf32>, vector<128x128xf32>, vector<8x128xf32> -> vector<8x128xf32>
    %683 = vector.broadcast %670 : vector<1x128xf32> to vector<8x128xf32>
    %684 = arith.addf %682, %683 : vector<8x128xf32>
    %c16_334 = arith.constant 16 : index
    %c0_335 = arith.constant 0 : index
    %685 = vector.load %arg13[%c16_334, %c0_335] : memref<32x128xf32, #tpu.memory_space<vmem>>, vector<8x128xf32>
    tpu.vector_store %arg13[%c16_334, %c0_335], %684 {strides = array<i32>} : memref<32x128xf32, #tpu.memory_space<vmem>>, vector<8x128xf32>,
    %c0_336 = arith.constant 0 : index
    %c0_337 = arith.constant 0 : index
    %686 = vector.load %arg11[%c0_336, %c0_337] : memref<128x128xf32, #tpu.memory_space<vmem>>, vector<128x128xf32>
    %cst_338 = arith.constant dense<0.000000e+00> : vector<8x128xf32>
    %687 = tpu.matmul %669, %686, %cst_338 {dimension_numbers = #tpu.dot_dimension_numbers<[1], [0], [0], [1], [0, 0, 1, 1], [], []>} : vector<8x128xf32>, vector<128x128xf32>, vector<8x128xf32> -> vector<8x128xf32>
    %688 = vector.broadcast %670 : vector<1x128xf32> to vector<8x128xf32>
    %689 = arith.addf %687, %688 : vector<8x128xf32>
    %c24_339 = arith.constant 24 : index
    %c0_340 = arith.constant 0 : index
    %690 = vector.load %arg13[%c24_339, %c0_340] : memref<32x128xf32, #tpu.memory_space<vmem>>, vector<8x128xf32>
    tpu.vector_store %arg13[%c24_339, %c0_340], %689 {strides = array<i32>} : memref<32x128xf32, #tpu.memory_space<vmem>>, vector<8x128xf32>,
    return
  }
  func.func @transform_1(%arg0: i32, %arg1: memref<16xi32, #tpu.memory_space<smem>>) -> (i32, i32) {
    %c0_i32 = arith.constant 0 : i32
    %c0_i32_0 = arith.constant 0 : i32
    %c0_i32_1 = arith.constant 0 : i32
    return %c0_i32, %c0_i32_0 : i32, i32
  }
  func.func @transform_2(%arg0: i32, %arg1: memref<16xi32, #tpu.memory_space<smem>>) -> (i32, i32) {
    %c0_i32 = arith.constant 0 : i32
    %c0_i32_0 = arith.constant 0 : i32
    %c0_i32_1 = arith.constant 0 : i32
    return %c0_i32, %c0_i32_0 : i32, i32
  }
  func.func @transform_3(%arg0: i32, %arg1: memref<16xi32, #tpu.memory_space<smem>>) -> (i32, i32) {
    %c0_i32 = arith.constant 0 : i32
    %c0_i32_0 = arith.constant 0 : i32
    %c0_i32_1 = arith.constant 0 : i32
    return %c0_i32, %c0_i32_0 : i32, i32
  }
  func.func @transform_4(%arg0: i32, %arg1: memref<16xi32, #tpu.memory_space<smem>>) -> (i32, i32) {
    %c0_i32 = arith.constant 0 : i32
    %c0_i32_0 = arith.constant 0 : i32
    %c0_i32_1 = arith.constant 0 : i32
    return %c0_i32, %c0_i32_0 : i32, i32
  }
  func.func @transform_5(%arg0: i32, %arg1: memref<16xi32, #tpu.memory_space<smem>>) -> (i32, i32) {
    %c0_i32 = arith.constant 0 : i32
    %c0_i32_0 = arith.constant 0 : i32
    %c0_i32_1 = arith.constant 0 : i32
    return %c0_i32, %c0_i32_0 : i32, i32
  }
  func.func @transform_6(%arg0: i32, %arg1: memref<16xi32, #tpu.memory_space<smem>>) -> (i32, i32) {
    %c0_i32 = arith.constant 0 : i32
    %c0_i32_0 = arith.constant 0 : i32
    %c0_i32_1 = arith.constant 0 : i32
    return %c0_i32, %c0_i32_0 : i32, i32
  }
  func.func @transform_7(%arg0: i32, %arg1: memref<16xi32, #tpu.memory_space<smem>>) -> (i32, i32) {
    %c0_i32 = arith.constant 0 : i32
    %c0_i32_0 = arith.constant 0 : i32
    %c0_i32_1 = arith.constant 0 : i32
    return %c0_i32, %c0_i32_0 : i32, i32
  }
  func.func @transform_8(%arg0: i32, %arg1: memref<16xi32, #tpu.memory_space<smem>>) -> (i32, i32) {
    %c0_i32 = arith.constant 0 : i32
    %c0_i32_0 = arith.constant 0 : i32
    %c0_i32_1 = arith.constant 0 : i32
    return %c0_i32, %c0_i32_0 : i32, i32
  }
  func.func @transform_9(%arg0: i32, %arg1: memref<16xi32, #tpu.memory_space<smem>>) -> (i32, i32) {
    %c0_i32 = arith.constant 0 : i32
    %c0_i32_0 = arith.constant 0 : i32
    %c0_i32_1 = arith.constant 0 : i32
    return %c0_i32, %c0_i32_0 : i32, i32
  }
  func.func @transform_10(%arg0: i32, %arg1: memref<16xi32, #tpu.memory_space<smem>>) -> (i32, i32) {
    %c0_i32 = arith.constant 0 : i32
    %c0_i32_0 = arith.constant 0 : i32
    %c0_i32_1 = arith.constant 0 : i32
    return %c0_i32, %c0_i32_0 : i32, i32
  }
  func.func @transform_11(%arg0: i32, %arg1: memref<16xi32, #tpu.memory_space<smem>>) -> (i32, i32) {
    %c0_i32 = arith.constant 0 : i32
    %c0_i32_0 = arith.constant 0 : i32
    %c0_i32_1 = arith.constant 0 : i32
    return %c0_i32, %c0_i32_0 : i32, i32
  }
}

</mosaic_0001>

<llo_original>
// kernel: tpu_custom_call.1
$region0: #{tpu_custom_call.1}
  #allocation0 [shape = 'u32[]', space=smem, size = 0x4, offset = 0x4, fixed_abs, tag = 'smem constant byte address 0x4 - core index']
  #allocation1 [shape = 'u32[144,128]{1,0:T(1,128)}', space=vmem, size = 0x12000, scoped, tag = 'internal scratch']
  #allocation2 [shape = 'f32[64,64]{1,0:T(8,128)}', space=vmem, size = 0x8000, scoped, tag = 'scratch operand']
  #allocation3 [shape = 'f32[64,512]{1,0:T(8,128)}', space=vmem, size = 0x20000, scoped, tag = 'scratch operand']
  #allocation4 [shape = 'f32[64,128]{1,0:T(8,128)}', space=vmem, size = 0x8000, scoped, tag = 'scratch operand']
  #allocation5 [shape = 'f32[64,128]{1,0:T(8,128)}', space=vmem, size = 0x8000, scoped, tag = 'scratch operand']
  #allocation6 [shape = 's32[1]{0}', space=sflag, size = 0x4, scoped, tag = 'scratch operand']
  #allocation7 [shape = 's32[1]{0}', space=sflag, size = 0x4, scoped, tag = 'scoped memory for tpu_custom_call.1']
  #allocation8 [shape = 'u8[512]{0}', space=smem, size = 0x200, scoped, tag = 'prefetched SMEM operand 0']
  #allocation21 [shape = 's32[]', space=sflag, size = 0x4, offset = 0, fixed_abs, tag = 'sflag constant byte address 0x0 - dummy sync flag']
  #allocation22 [shape = 's32[]', space=sflag, size = 0x4, offset = 0, fixed_abs, tag = 'sflag constant byte address 0x0 - dummy sync flag']
  #allocation23 [shape = 's32[]', space=sflag, size = 0x4, offset = 0, fixed_abs, tag = 'sflag constant byte address 0x0 - dummy sync flag']
  #allocation24 [shape = 's32[]', space=sflag, size = 0x4, offset = 0, fixed_abs, tag = 'sflag constant byte address 0x0 - dummy sync flag']
  #allocation25 [shape = 's32[]', space=sflag, size = 0x4, offset = 0, fixed_abs, tag = 'sflag constant byte address 0x0 - dummy sync flag']
  #allocation26 [shape = 's32[]', space=sflag, size = 0x4, offset = 0, fixed_abs, tag = 'sflag constant byte address 0x0 - dummy sync flag']
  #allocation27 [shape = 's32[]', space=sflag, size = 0x4, offset = 0, fixed_abs, tag = 'sflag constant byte address 0x0 - dummy sync flag']
  #allocation28 [shape = 's32[]', space=sflag, size = 0x4, offset = 0, fixed_abs, tag = 'sflag constant byte address 0x0 - dummy sync flag']
  #allocation29 [shape = 's32[]', space=sflag, size = 0x4, offset = 0, fixed_abs, tag = 'sflag constant byte address 0x0 - dummy sync flag']
  #allocation30 [shape = 's32[]', space=sflag, size = 0x4, offset = 0, fixed_abs, tag = 'sflag constant byte address 0x0 - dummy sync flag']
  #allocation31 [shape = 's32[]', space=sflag, size = 0x4, offset = 0, fixed_abs, tag = 'sflag constant byte address 0x0 - dummy sync flag']
  #allocation32 [shape = 's32[]', space=sflag, size = 0x4, offset = 0, fixed_abs, tag = 'sflag constant byte address 0x0 - dummy sync flag']
  #allocation33 [shape = 's32[]', space=sflag, size = 0x4, offset = 0, fixed_abs, tag = 'sflag constant byte address 0x0 - dummy sync flag']
  #allocation34 [shape = 's32[]', space=sflag, size = 0x4, offset = 0, fixed_abs, tag = 'sflag constant byte address 0x0 - dummy sync flag']
  #allocation35 [shape = 's32[]', space=sflag, size = 0x4, offset = 0, fixed_abs, tag = 'sflag constant byte address 0x0 - dummy sync flag']
  #allocation36 [shape = 's32[]', space=sflag, size = 0x4, offset = 0, fixed_abs, tag = 'sflag constant byte address 0x0 - dummy sync flag']
  %s0 = inlined_call_operand.vmem [shape: s32[16], index: 0, kind: input, shape index: {}]
  %s1 = inlined_call_operand.vmem [shape: f32[100,64], index: 1, kind: input, shape index: {}]
  %s2 = inlined_call_operand.vmem [shape: bf16[64,512], index: 2, kind: input, shape index: {}]
  %s3 = inlined_call_operand.vmem [shape: f32[1,512], index: 3, kind: input, shape index: {}]
  %s4 = inlined_call_operand.hbm [shape: bf16[128,512], index: 4, kind: input, shape index: {}]
  %s5 = inlined_call_operand.hbm [shape: bf16[128,512], index: 5, kind: input, shape index: {}]
  %s6 = inlined_call_operand.hbm [shape: bf16[128,512], index: 6, kind: input, shape index: {}]
  %s7 = inlined_call_operand.vmem [shape: f32[1,512], index: 7, kind: input, shape index: {}]
  %s8 = inlined_call_operand.hbm [shape: bf16[128,512], index: 8, kind: input, shape index: {}]
  %s9 = inlined_call_operand.hbm [shape: f32[128,128], index: 9, kind: input, shape index: {}]
  %s10 = inlined_call_operand.hbm [shape: f32[128,128], index: 10, kind: input, shape index: {}]
  %s11 = inlined_call_operand.vmem [shape: f32[1,128], index: 11, kind: input, shape index: {}]
  %s12 = inlined_call_operand.hbm [shape: f32[32,128], index: 12, kind: output, shape index: {}]
  %s13 = sld [smem:[#allocation0]]
  $region554: #{tpu_custom_call.1} parent=0
    _
  %s15 = ssub.s32 1, %s13
  %s16 = scalar_select 0, %s15, %s13
  %s17 = sshll.u32 %s0, 4
  %s18 = int_to_ptr.vmem [resolvable:$true] %s17
  %20 = dma.vmem_to_smem %s18, 16, [#allocation8], [#allocation7]
  %21 = dma.done [#allocation7], 16
  %22 = sfence
  $region1: #{tpu_custom_call.1} parent=0
    #allocation9 [shape = 'u8[131072]{0}', space=vmem, size = 0x20000, scoped, tag = 'input window, operand 4, single buffered']
    #allocation10 [shape = 's32[1]{0}', space=sflag, size = 0x4, scoped, tag = 'scoped memory for tpu_custom_call.1']
    #allocation11 [shape = 's32[1]{0}', space=sflag, size = 0x4, scoped, tag = 'scoped memory for tpu_custom_call.1']
    #allocation12 [shape = 'u8[131072]{0}', space=vmem, size = 0x20000, scoped, tag = 'input window, operand 5, single buffered']
    #allocation13 [shape = 's32[1]{0}', space=sflag, size = 0x4, scoped, tag = 'scoped memory for tpu_custom_call.1']
    #allocation14 [shape = 'u8[131072]{0}', space=vmem, size = 0x20000, scoped, tag = 'input window, operand 6, single buffered']
    #allocation15 [shape = 'u8[131072]{0}', space=vmem, size = 0x20000, scoped, tag = 'input window, operand 8, single buffered']
    #allocation16 [shape = 's32[1]{0}', space=sflag, size = 0x4, scoped, tag = 'scoped memory for tpu_custom_call.1']
    #allocation17 [shape = 'u8[65536]{0}', space=vmem, size = 0x10000, scoped, tag = 'input window, operand 9, single buffered']
    #allocation18 [shape = 'u8[65536]{0}', space=vmem, size = 0x10000, scoped, tag = 'input window, operand 10, single buffered']
    #allocation19 [shape = 's32[1]{0}', space=sflag, size = 0x4, scoped, tag = 'scoped memory for tpu_custom_call.1']
    #allocation20 [shape = 'u8[16384]{0}', space=vmem, size = 0x4000, scoped, tag = 'output window, operand 0, single buffered']
    %23 = vsyncpa [#allocation10], 0
    %24 = vsyncpa [#allocation13], 0
    %25 = vsyncpa [#allocation16], 0
    %26 = vsyncpa [#allocation19], 0
    %27 = vsyncpa [#allocation11], 0
    // Predicated region
    $region2: #{tpu_custom_call.1} parent=1 // pred_check
      _
    $region3: #{tpu_custom_call.1} parent=1 // pred_check_branch
      %29 = sbr.rel (0) target = $region5
    $region4: #{tpu_custom_call.1} parent=1 // pred_region
      _
    $region5: #{tpu_custom_call.1} parent=1 // pred_fallthru
      _
    // Predicated region
    $region6: #{tpu_custom_call.1} parent=1 // pred_check
      _
    $region7: #{tpu_custom_call.1} parent=1 // pred_check_branch
      %31 = sbr.rel (0) target = $region9
    $region8: #{tpu_custom_call.1} parent=1 // pred_region
      _
    $region9: #{tpu_custom_call.1} parent=1 // pred_fallthru
      _
    // Predicated region
    $region10: #{tpu_custom_call.1} parent=1 // pred_check
      _
    $region11: #{tpu_custom_call.1} parent=1 // pred_check_branch
      %33 = sbr.rel (0) target = $region13
    $region12: #{tpu_custom_call.1} parent=1 // pred_region
      %s35 = ssub.s32 4096, 4096
      %36 = vsyncadd [#allocation10], %s35
      %s37 = sshll.u32 [#allocation9], 4
      %s38 = int_to_ptr.vmem [resolvable:$true] %s37
      %43 = dma.hbm_to_vmem [thread:$0]  %s4, 4096, %s38, [#allocation10], 256, 256, 16
    $region13: #{tpu_custom_call.1} parent=1 // pred_fallthru
      _
    // Predicated region
    $region14: #{tpu_custom_call.1} parent=1 // pred_check
      _
    $region15: #{tpu_custom_call.1} parent=1 // pred_check_branch
      %45 = sbr.rel (0) target = $region17
    $region16: #{tpu_custom_call.1} parent=1 // pred_region
      %s47 = ssub.s32 4096, 4096
      %48 = vsyncadd [#allocation13], %s47
      %s49 = sshll.u32 [#allocation12], 4
      %s50 = int_to_ptr.vmem [resolvable:$true] %s49
      %55 = dma.hbm_to_vmem [thread:$0]  %s5, 4096, %s50, [#allocation13], 256, 256, 16
    $region17: #{tpu_custom_call.1} parent=1 // pred_fallthru
      _
    // Predicated region
    $region18: #{tpu_custom_call.1} parent=1 // pred_check
      _
    $region19: #{tpu_custom_call.1} parent=1 // pred_check_branch
      %57 = sbr.rel (0) target = $region21
    $region20: #{tpu_custom_call.1} parent=1 // pred_region
      %s59 = ssub.s32 4096, 4096
      %60 = vsyncadd [#allocation13], %s59
      %s61 = sshll.u32 [#allocation14], 4
      %s62 = int_to_ptr.vmem [resolvable:$true] %s61
      %67 = dma.hbm_to_vmem [thread:$0]  %s6, 4096, %s62, [#allocation13], 256, 256, 16
    $region21: #{tpu_custom_call.1} parent=1 // pred_fallthru
      _
    // Predicated region
    $region22: #{tpu_custom_call.1} parent=1 // pred_check
      _
    $region23: #{tpu_custom_call.1} parent=1 // pred_check_branch
      %69 = sbr.rel (0) target = $region25
    $region24: #{tpu_custom_call.1} parent=1 // pred_region
      _
    $region25: #{tpu_custom_call.1} parent=1 // pred_fallthru
      _
    // Predicated region
    $region26: #{tpu_custom_call.1} parent=1 // pred_check
      _
    $region27: #{tpu_custom_call.1} parent=1 // pred_check_branch
      %71 = sbr.rel (0) target = $region29
    $region28: #{tpu_custom_call.1} parent=1 // pred_region
      %s73 = ssub.s32 4096, 4096
      %74 = vsyncadd [#allocation16], %s73
      %s75 = sshll.u32 [#allocation15], 4
      %s76 = int_to_ptr.vmem [resolvable:$true] %s75
      %81 = dma.hbm_to_vmem [thread:$0]  %s8, 4096, %s76, [#allocation16], 256, 256, 16
    $region29: #{tpu_custom_call.1} parent=1 // pred_fallthru
      _
    // Predicated region
    $region30: #{tpu_custom_call.1} parent=1 // pred_check
      _
    $region31: #{tpu_custom_call.1} parent=1 // pred_check_branch
      %83 = sbr.rel (0) target = $region33
    $region32: #{tpu_custom_call.1} parent=1 // pred_region
      %s85 = ssub.s32 2048, 2048
      %86 = vsyncadd [#allocation16], %s85
      %s87 = sshll.u32 [#allocation17], 4
      %s88 = int_to_ptr.vmem [resolvable:$true] %s87
      %93 = dma.hbm_to_vmem [thread:$0]  %s9, 2048, %s88, [#allocation16], 128, 128, 8
    $region33: #{tpu_custom_call.1} parent=1 // pred_fallthru
      _
    // Predicated region
    $region34: #{tpu_custom_call.1} parent=1 // pred_check
      _
    $region35: #{tpu_custom_call.1} parent=1 // pred_check_branch
      %95 = sbr.rel (0) target = $region37
    $region36: #{tpu_custom_call.1} parent=1 // pred_region
      %s97 = ssub.s32 2048, 2048
      %98 = vsyncadd [#allocation19], %s97
      %s99 = sshll.u32 [#allocation18], 4
      %s100 = int_to_ptr.vmem [resolvable:$true] %s99
      %105 = dma.hbm_to_vmem [thread:$0]  %s10, 2048, %s100, [#allocation19], 128, 128, 8
    $region37: #{tpu_custom_call.1} parent=1 // pred_fallthru
      _
    // Predicated region
    $region38: #{tpu_custom_call.1} parent=1 // pred_check
      _
    $region39: #{tpu_custom_call.1} parent=1 // pred_check_branch
      %107 = sbr.rel (0) target = $region41
    $region40: #{tpu_custom_call.1} parent=1 // pred_region
      _
    $region41: #{tpu_custom_call.1} parent=1 // pred_fallthru
      _
    // Predicated region
    $region42: #{tpu_custom_call.1} parent=1 // pred_check
      _
    $region43: #{tpu_custom_call.1} parent=1 // pred_check_branch
      %109 = sbr.rel (0) target = $region45
    $region44: #{tpu_custom_call.1} parent=1 // pred_region
      %110 = dma.done [#allocation10], 4096
    $region45: #{tpu_custom_call.1} parent=1 // pred_fallthru
      _
    // Predicated region
    $region46: #{tpu_custom_call.1} parent=1 // pred_check
      _
    $region47: #{tpu_custom_call.1} parent=1 // pred_check_branch
      %112 = sbr.rel (0) target = $region49
    $region48: #{tpu_custom_call.1} parent=1 // pred_region
      %113 = dma.done [#allocation13], 4096
    $region49: #{tpu_custom_call.1} parent=1 // pred_fallthru
      _
    // Predicated region
    $region50: #{tpu_custom_call.1} parent=1 // pred_check
      _
    $region51: #{tpu_custom_call.1} parent=1 // pred_check_branch
      %115 = sbr.rel (0) target = $region53
    $region52: #{tpu_custom_call.1} parent=1 // pred_region
      %116 = dma.done [#allocation13], 4096
    $region53: #{tpu_custom_call.1} parent=1 // pred_fallthru
      _
    // Predicated region
    $region54: #{tpu_custom_call.1} parent=1 // pred_check
      _
    $region55: #{tpu_custom_call.1} parent=1 // pred_check_branch
      %118 = sbr.rel (0) target = $region57
    $region56: #{tpu_custom_call.1} parent=1 // pred_region
      %119 = dma.done [#allocation16], 4096
    $region57: #{tpu_custom_call.1} parent=1 // pred_fallthru
      _
    // Predicated region
    $region58: #{tpu_custom_call.1} parent=1 // pred_check
      _
    $region59: #{tpu_custom_call.1} parent=1 // pred_check_branch
      %121 = sbr.rel (0) target = $region61
    $region60: #{tpu_custom_call.1} parent=1 // pred_region
      %122 = dma.done [#allocation16], 2048
    $region61: #{tpu_custom_call.1} parent=1 // pred_fallthru
      _
    // Predicated region
    $region62: #{tpu_custom_call.1} parent=1 // pred_check
      _
    $region63: #{tpu_custom_call.1} parent=1 // pred_check_branch
      %124 = sbr.rel (0) target = $region65
    $region64: #{tpu_custom_call.1} parent=1 // pred_region
      %125 = dma.done [#allocation19], 2048
    $region65: #{tpu_custom_call.1} parent=1 // pred_fallthru
      _
    %s127 = sld [smem:[#allocation8]]
    %s128 = scalar_lea.vmem %s1, %s127
    %p130 = scmp.lt.u32.totalorder 1, 8
    %p131 = pneg %p130
    // Predicated region
    $region66: #{tpu_custom_call.1} parent=1 // pred_check
      _
    $region67: #{tpu_custom_call.1} parent=1 // pred_check_branch
      %133 = sbr.rel (%p130) target = $region69
    $region68: #{tpu_custom_call.1} parent=1 // pred_region
      %s149 = sand.u32 1, 7
      %p150 = scmp.eq.s32.totalorder %s149, 0
      %p151 = pneg %p150
      // Predicated region
      $region81: #{tpu_custom_call.1} parent=68 // pred_check
        _
      $region82: #{tpu_custom_call.1} parent=68 // pred_check_branch
        %153 = sbr.rel (%p150) target = $region84
      $region83: #{tpu_custom_call.1} parent=68 // pred_region
        %s154 = sand.u32 1, 7
        %s155 = ssub.s32 1, %s154
        %s156 = scalar_lea.vmem %s128, %s155
        %s157 = ssub.s32 1, %s154
        %s158 = scalar_lea.vmem [#allocation2], %s157
        %s159 = sshll.u32 1, %s154
        %s160 = ssub.s32 %s159, 1
        loop: start=0, step=1, limit=1
        $region85: #{tpu_custom_call.1} parent=83 // loop_pre_header
          _
        $region86: #{tpu_custom_call.1} parent=83 // loop_header
          %s162 = sphi 0, %s166
          %p163 = scmp.ge.s32.totalorder %s162, 1
          %s167 = sphi %s156, %s156
          %s168 = sphi %s158, %s158
        $region87: #{tpu_custom_call.1} parent=83 // loop_header_branch
          %165 = sbr.rel (%p163) target = $region91
        $region88: #{tpu_custom_call.1} parent=83 // loop_body
          %v169 = vld [vmem:[%s167] sm:%s160]
          %170 = vst [vmem:[%s168] sm:%s160] %v169
        $region89: #{tpu_custom_call.1} parent=83 // loop_footer
          %s166 = sadd.s32 1, %s162
        $region90: #{tpu_custom_call.1} parent=83 // loop_footer_branch
          %161 = sbr.rel target = $region86
        $region91: #{tpu_custom_call.1} parent=83 // loop_exit
          _
      $region84: #{tpu_custom_call.1} parent=68 // pred_fallthru
        _
    $region69: #{tpu_custom_call.1} parent=1 // pred_fallthru
      _
    // Predicated region
    $region70: #{tpu_custom_call.1} parent=1 // pred_check
      %p134 = pneg %p130
    $region71: #{tpu_custom_call.1} parent=1 // pred_check_branch
      %136 = sbr.rel (%p134) target = $region73
    $region72: #{tpu_custom_call.1} parent=1 // pred_region
      %s137 = sshll.u32 1, 1
      %s138 = ssub.s32 %s137, 1
      loop: start=0, step=1, limit=1
      $region74: #{tpu_custom_call.1} parent=72 // loop_pre_header
        _
      $region75: #{tpu_custom_call.1} parent=72 // loop_header
        %s140 = sphi 0, %s144
        %p141 = scmp.ge.s32.totalorder %s140, 1
        %s145 = sphi %s128, %s128
        %s146 = sphi [#allocation2], [#allocation2]
      $region76: #{tpu_custom_call.1} parent=72 // loop_header_branch
        %143 = sbr.rel (%p141) target = $region80
      $region77: #{tpu_custom_call.1} parent=72 // loop_body
        %v147 = vld [vmem:[%s145] sm:%s138]
        %148 = vst [vmem:[%s146] sm:%s138] %v147
      $region78: #{tpu_custom_call.1} parent=72 // loop_footer
        %s144 = sadd.s32 1, %s140
      $region79: #{tpu_custom_call.1} parent=72 // loop_footer_branch
        %139 = sbr.rel target = $region75
      $region80: #{tpu_custom_call.1} parent=72 // loop_exit
        _
    $region73: #{tpu_custom_call.1} parent=1 // pred_fallthru
      _
    // Predicated region
    $region92: #{tpu_custom_call.1} parent=1 // pred_check
      _
    $region93: #{tpu_custom_call.1} parent=1 // pred_check_branch
      %173 = sbr.rel (0) target = $region95
    $region94: #{tpu_custom_call.1} parent=1 // pred_region
      %174 = vsyncadd [#allocation6], 16
    $region95: #{tpu_custom_call.1} parent=1 // pred_fallthru
      _
    %s175 = sld [smem:[#allocation8 + $0x1]]
    %s176 = scalar_lea.vmem %s1, %s175
    %s177 = scalar_lea.vmem [#allocation2], 1
    %p179 = scmp.lt.u32.totalorder 1, 8
    %p180 = pneg %p179
    // Predicated region
    $region96: #{tpu_custom_call.1} parent=1 // pred_check
      _
    $region97: #{tpu_custom_call.1} parent=1 // pred_check_branch
      %182 = sbr.rel (%p179) target = $region99
    $region98: #{tpu_custom_call.1} parent=1 // pred_region
      %s198 = sand.u32 1, 7
      %p199 = scmp.eq.s32.totalorder %s198, 0
      %p200 = pneg %p199
      // Predicated region
      $region111: #{tpu_custom_call.1} parent=98 // pred_check
        _
      $region112: #{tpu_custom_call.1} parent=98 // pred_check_branch
        %202 = sbr.rel (%p199) target = $region114
      $region113: #{tpu_custom_call.1} parent=98 // pred_region
        %s203 = sand.u32 1, 7
        %s204 = ssub.s32 1, %s203
        %s205 = scalar_lea.vmem %s176, %s204
        %s206 = ssub.s32 1, %s203
        %s207 = scalar_lea.vmem %s177, %s206 [#allocation2]
        %s208 = sshll.u32 1, %s203
        %s209 = ssub.s32 %s208, 1
        loop: start=0, step=1, limit=1
        $region115: #{tpu_custom_call.1} parent=113 // loop_pre_header
          _
        $region116: #{tpu_custom_call.1} parent=113 // loop_header
          %s211 = sphi 0, %s215
          %p212 = scmp.ge.s32.totalorder %s211, 1
          %s216 = sphi %s205, %s205
          %s217 = sphi %s207, %s207
        $region117: #{tpu_custom_call.1} parent=113 // loop_header_branch
          %214 = sbr.rel (%p212) target = $region121
        $region118: #{tpu_custom_call.1} parent=113 // loop_body
          %v218 = vld [vmem:[%s216] sm:%s209]
          %219 = vst [vmem:[%s217] sm:%s209] %v218
        $region119: #{tpu_custom_call.1} parent=113 // loop_footer
          %s215 = sadd.s32 1, %s211
        $region120: #{tpu_custom_call.1} parent=113 // loop_footer_branch
          %210 = sbr.rel target = $region116
        $region121: #{tpu_custom_call.1} parent=113 // loop_exit
          _
      $region114: #{tpu_custom_call.1} parent=98 // pred_fallthru
        _
    $region99: #{tpu_custom_call.1} parent=1 // pred_fallthru
      _
    // Predicated region
    $region100: #{tpu_custom_call.1} parent=1 // pred_check
      %p183 = pneg %p179
    $region101: #{tpu_custom_call.1} parent=1 // pred_check_branch
      %185 = sbr.rel (%p183) target = $region103
    $region102: #{tpu_custom_call.1} parent=1 // pred_region
      %s186 = sshll.u32 1, 1
      %s187 = ssub.s32 %s186, 1
      loop: start=0, step=1, limit=1
      $region104: #{tpu_custom_call.1} parent=102 // loop_pre_header
        _
      $region105: #{tpu_custom_call.1} parent=102 // loop_header
        %s189 = sphi 0, %s193
        %p190 = scmp.ge.s32.totalorder %s189, 1
        %s194 = sphi %s176, %s176
        %s195 = sphi %s177, %s177
      $region106: #{tpu_custom_call.1} parent=102 // loop_header_branch
        %192 = sbr.rel (%p190) target = $region110
      $region107: #{tpu_custom_call.1} parent=102 // loop_body
        %v196 = vld [vmem:[%s194] sm:%s187]
        %197 = vst [vmem:[%s195] sm:%s187] %v196
      $region108: #{tpu_custom_call.1} parent=102 // loop_footer
        %s193 = sadd.s32 1, %s189
      $region109: #{tpu_custom_call.1} parent=102 // loop_footer_branch
        %188 = sbr.rel target = $region105
      $region110: #{tpu_custom_call.1} parent=102 // loop_exit
        _
    $region103: #{tpu_custom_call.1} parent=1 // pred_fallthru
      _
    // Predicated region
    $region122: #{tpu_custom_call.1} parent=1 // pred_check
      _
    $region123: #{tpu_custom_call.1} parent=1 // pred_check_branch
      %222 = sbr.rel (0) target = $region125
    $region124: #{tpu_custom_call.1} parent=1 // pred_region
      %223 = vsyncadd [#allocation6], 16
    $region125: #{tpu_custom_call.1} parent=1 // pred_fallthru
      _
    %s224 = sld [smem:[#allocation8 + $0x2]]
    %s225 = scalar_lea.vmem %s1, %s224
    %s226 = scalar_lea.vmem [#allocation2], 8
    %p228 = scmp.lt.u32.totalorder 1, 8
    %p229 = pneg %p228
    // Predicated region
    $region126: #{tpu_custom_call.1} parent=1 // pred_check
      _
    $region127: #{tpu_custom_call.1} parent=1 // pred_check_branch
      %231 = sbr.rel (%p228) target = $region129
    $region128: #{tpu_custom_call.1} parent=1 // pred_region
      %s247 = sand.u32 1, 7
      %p248 = scmp.eq.s32.totalorder %s247, 0
      %p249 = pneg %p248
      // Predicated region
      $region141: #{tpu_custom_call.1} parent=128 // pred_check
        _
      $region142: #{tpu_custom_call.1} parent=128 // pred_check_branch
        %251 = sbr.rel (%p248) target = $region144
      $region143: #{tpu_custom_call.1} parent=128 // pred_region
        %s252 = sand.u32 1, 7
        %s253 = ssub.s32 1, %s252
        %s254 = scalar_lea.vmem %s225, %s253
        %s255 = ssub.s32 1, %s252
        %s256 = scalar_lea.vmem %s226, %s255 [#allocation2]
        %s257 = sshll.u32 1, %s252
        %s258 = ssub.s32 %s257, 1
        loop: start=0, step=1, limit=1
        $region145: #{tpu_custom_call.1} parent=143 // loop_pre_header
          _
        $region146: #{tpu_custom_call.1} parent=143 // loop_header
          %s260 = sphi 0, %s264
          %p261 = scmp.ge.s32.totalorder %s260, 1
          %s265 = sphi %s254, %s254
          %s266 = sphi %s256, %s256
        $region147: #{tpu_custom_call.1} parent=143 // loop_header_branch
          %263 = sbr.rel (%p261) target = $region151
        $region148: #{tpu_custom_call.1} parent=143 // loop_body
          %v267 = vld [vmem:[%s265] sm:%s258]
          %268 = vst [vmem:[%s266] sm:%s258] %v267
        $region149: #{tpu_custom_call.1} parent=143 // loop_footer
          %s264 = sadd.s32 1, %s260
        $region150: #{tpu_custom_call.1} parent=143 // loop_footer_branch
          %259 = sbr.rel target = $region146
        $region151: #{tpu_custom_call.1} parent=143 // loop_exit
          _
      $region144: #{tpu_custom_call.1} parent=128 // pred_fallthru
        _
    $region129: #{tpu_custom_call.1} parent=1 // pred_fallthru
      _
    // Predicated region
    $region130: #{tpu_custom_call.1} parent=1 // pred_check
      %p232 = pneg %p228
    $region131: #{tpu_custom_call.1} parent=1 // pred_check_branch
      %234 = sbr.rel (%p232) target = $region133
    $region132: #{tpu_custom_call.1} parent=1 // pred_region
      %s235 = sshll.u32 1, 1
      %s236 = ssub.s32 %s235, 1
      loop: start=0, step=1, limit=1
      $region134: #{tpu_custom_call.1} parent=132 // loop_pre_header
        _
      $region135: #{tpu_custom_call.1} parent=132 // loop_header
        %s238 = sphi 0, %s242
        %p239 = scmp.ge.s32.totalorder %s238, 1
        %s243 = sphi %s225, %s225
        %s244 = sphi %s226, %s226
      $region136: #{tpu_custom_call.1} parent=132 // loop_header_branch
        %241 = sbr.rel (%p239) target = $region140
      $region137: #{tpu_custom_call.1} parent=132 // loop_body
        %v245 = vld [vmem:[%s243] sm:%s236]
        %246 = vst [vmem:[%s244] sm:%s236] %v245
      $region138: #{tpu_custom_call.1} parent=132 // loop_footer
        %s242 = sadd.s32 1, %s238
      $region139: #{tpu_custom_call.1} parent=132 // loop_footer_branch
        %237 = sbr.rel target = $region135
      $region140: #{tpu_custom_call.1} parent=132 // loop_exit
        _
    $region133: #{tpu_custom_call.1} parent=1 // pred_fallthru
      _
    // Predicated region
    $region152: #{tpu_custom_call.1} parent=1 // pred_check
      _
    $region153: #{tpu_custom_call.1} parent=1 // pred_check_branch
      %271 = sbr.rel (0) target = $region155
    $region154: #{tpu_custom_call.1} parent=1 // pred_region
      %272 = vsyncadd [#allocation6], 16
    $region155: #{tpu_custom_call.1} parent=1 // pred_fallthru
      _
    %s273 = sld [smem:[#allocation8 + $0x3]]
    %s274 = scalar_lea.vmem %s1, %s273
    %s275 = scalar_lea.vmem [#allocation2], 9
    %p277 = scmp.lt.u32.totalorder 1, 8
    %p278 = pneg %p277
    // Predicated region
    $region156: #{tpu_custom_call.1} parent=1 // pred_check
      _
    $region157: #{tpu_custom_call.1} parent=1 // pred_check_branch
      %280 = sbr.rel (%p277) target = $region159
    $region158: #{tpu_custom_call.1} parent=1 // pred_region
      %s296 = sand.u32 1, 7
      %p297 = scmp.eq.s32.totalorder %s296, 0
      %p298 = pneg %p297
      // Predicated region
      $region171: #{tpu_custom_call.1} parent=158 // pred_check
        _
      $region172: #{tpu_custom_call.1} parent=158 // pred_check_branch
        %300 = sbr.rel (%p297) target = $region174
      $region173: #{tpu_custom_call.1} parent=158 // pred_region
        %s301 = sand.u32 1, 7
        %s302 = ssub.s32 1, %s301
        %s303 = scalar_lea.vmem %s274, %s302
        %s304 = ssub.s32 1, %s301
        %s305 = scalar_lea.vmem %s275, %s304 [#allocation2]
        %s306 = sshll.u32 1, %s301
        %s307 = ssub.s32 %s306, 1
        loop: start=0, step=1, limit=1
        $region175: #{tpu_custom_call.1} parent=173 // loop_pre_header
          _
        $region176: #{tpu_custom_call.1} parent=173 // loop_header
          %s309 = sphi 0, %s313
          %p310 = scmp.ge.s32.totalorder %s309, 1
          %s314 = sphi %s303, %s303
          %s315 = sphi %s305, %s305
        $region177: #{tpu_custom_call.1} parent=173 // loop_header_branch
          %312 = sbr.rel (%p310) target = $region181
        $region178: #{tpu_custom_call.1} parent=173 // loop_body
          %v316 = vld [vmem:[%s314] sm:%s307]
          %317 = vst [vmem:[%s315] sm:%s307] %v316
        $region179: #{tpu_custom_call.1} parent=173 // loop_footer
          %s313 = sadd.s32 1, %s309
        $region180: #{tpu_custom_call.1} parent=173 // loop_footer_branch
          %308 = sbr.rel target = $region176
        $region181: #{tpu_custom_call.1} parent=173 // loop_exit
          _
      $region174: #{tpu_custom_call.1} parent=158 // pred_fallthru
        _
    $region159: #{tpu_custom_call.1} parent=1 // pred_fallthru
      _
    // Predicated region
    $region160: #{tpu_custom_call.1} parent=1 // pred_check
      %p281 = pneg %p277
    $region161: #{tpu_custom_call.1} parent=1 // pred_check_branch
      %283 = sbr.rel (%p281) target = $region163
    $region162: #{tpu_custom_call.1} parent=1 // pred_region
      %s284 = sshll.u32 1, 1
      %s285 = ssub.s32 %s284, 1
      loop: start=0, step=1, limit=1
      $region164: #{tpu_custom_call.1} parent=162 // loop_pre_header
        _
      $region165: #{tpu_custom_call.1} parent=162 // loop_header
        %s287 = sphi 0, %s291
        %p288 = scmp.ge.s32.totalorder %s287, 1
        %s292 = sphi %s274, %s274
        %s293 = sphi %s275, %s275
      $region166: #{tpu_custom_call.1} parent=162 // loop_header_branch
        %290 = sbr.rel (%p288) target = $region170
      $region167: #{tpu_custom_call.1} parent=162 // loop_body
        %v294 = vld [vmem:[%s292] sm:%s285]
        %295 = vst [vmem:[%s293] sm:%s285] %v294
      $region168: #{tpu_custom_call.1} parent=162 // loop_footer
        %s291 = sadd.s32 1, %s287
      $region169: #{tpu_custom_call.1} parent=162 // loop_footer_branch
        %286 = sbr.rel target = $region165
      $region170: #{tpu_custom_call.1} parent=162 // loop_exit
        _
    $region163: #{tpu_custom_call.1} parent=1 // pred_fallthru
      _
    // Predicated region
    $region182: #{tpu_custom_call.1} parent=1 // pred_check
      _
    $region183: #{tpu_custom_call.1} parent=1 // pred_check_branch
      %320 = sbr.rel (0) target = $region185
    $region184: #{tpu_custom_call.1} parent=1 // pred_region
      %321 = vsyncadd [#allocation6], 16
    $region185: #{tpu_custom_call.1} parent=1 // pred_fallthru
      _
    %s322 = sld [smem:[#allocation8 + $0x4]]
    %s323 = scalar_lea.vmem %s1, %s322
    %s324 = scalar_lea.vmem [#allocation2], 16
    %p326 = scmp.lt.u32.totalorder 1, 8
    %p327 = pneg %p326
    // Predicated region
    $region186: #{tpu_custom_call.1} parent=1 // pred_check
      _
    $region187: #{tpu_custom_call.1} parent=1 // pred_check_branch
      %329 = sbr.rel (%p326) target = $region189
    $region188: #{tpu_custom_call.1} parent=1 // pred_region
      %s345 = sand.u32 1, 7
      %p346 = scmp.eq.s32.totalorder %s345, 0
      %p347 = pneg %p346
      // Predicated region
      $region201: #{tpu_custom_call.1} parent=188 // pred_check
        _
      $region202: #{tpu_custom_call.1} parent=188 // pred_check_branch
        %349 = sbr.rel (%p346) target = $region204
      $region203: #{tpu_custom_call.1} parent=188 // pred_region
        %s350 = sand.u32 1, 7
        %s351 = ssub.s32 1, %s350
        %s352 = scalar_lea.vmem %s323, %s351
        %s353 = ssub.s32 1, %s350
        %s354 = scalar_lea.vmem %s324, %s353 [#allocation2]
        %s355 = sshll.u32 1, %s350
        %s356 = ssub.s32 %s355, 1
        loop: start=0, step=1, limit=1
        $region205: #{tpu_custom_call.1} parent=203 // loop_pre_header
          _
        $region206: #{tpu_custom_call.1} parent=203 // loop_header
          %s358 = sphi 0, %s362
          %p359 = scmp.ge.s32.totalorder %s358, 1
          %s363 = sphi %s352, %s352
          %s364 = sphi %s354, %s354
        $region207: #{tpu_custom_call.1} parent=203 // loop_header_branch
          %361 = sbr.rel (%p359) target = $region211
        $region208: #{tpu_custom_call.1} parent=203 // loop_body
          %v365 = vld [vmem:[%s363] sm:%s356]
          %366 = vst [vmem:[%s364] sm:%s356] %v365
        $region209: #{tpu_custom_call.1} parent=203 // loop_footer
          %s362 = sadd.s32 1, %s358
        $region210: #{tpu_custom_call.1} parent=203 // loop_footer_branch
          %357 = sbr.rel target = $region206
        $region211: #{tpu_custom_call.1} parent=203 // loop_exit
          _
      $region204: #{tpu_custom_call.1} parent=188 // pred_fallthru
        _
    $region189: #{tpu_custom_call.1} parent=1 // pred_fallthru
      _
    // Predicated region
    $region190: #{tpu_custom_call.1} parent=1 // pred_check
      %p330 = pneg %p326
    $region191: #{tpu_custom_call.1} parent=1 // pred_check_branch
      %332 = sbr.rel (%p330) target = $region193
    $region192: #{tpu_custom_call.1} parent=1 // pred_region
      %s333 = sshll.u32 1, 1
      %s334 = ssub.s32 %s333, 1
      loop: start=0, step=1, limit=1
      $region194: #{tpu_custom_call.1} parent=192 // loop_pre_header
        _
      $region195: #{tpu_custom_call.1} parent=192 // loop_header
        %s336 = sphi 0, %s340
        %p337 = scmp.ge.s32.totalorder %s336, 1
        %s341 = sphi %s323, %s323
        %s342 = sphi %s324, %s324
      $region196: #{tpu_custom_call.1} parent=192 // loop_header_branch
        %339 = sbr.rel (%p337) target = $region200
      $region197: #{tpu_custom_call.1} parent=192 // loop_body
        %v343 = vld [vmem:[%s341] sm:%s334]
        %344 = vst [vmem:[%s342] sm:%s334] %v343
      $region198: #{tpu_custom_call.1} parent=192 // loop_footer
        %s340 = sadd.s32 1, %s336
      $region199: #{tpu_custom_call.1} parent=192 // loop_footer_branch
        %335 = sbr.rel target = $region195
      $region200: #{tpu_custom_call.1} parent=192 // loop_exit
        _
    $region193: #{tpu_custom_call.1} parent=1 // pred_fallthru
      _
    // Predicated region
    $region212: #{tpu_custom_call.1} parent=1 // pred_check
      _
    $region213: #{tpu_custom_call.1} parent=1 // pred_check_branch
      %369 = sbr.rel (0) target = $region215
    $region214: #{tpu_custom_call.1} parent=1 // pred_region
      %370 = vsyncadd [#allocation6], 16
    $region215: #{tpu_custom_call.1} parent=1 // pred_fallthru
      _
    %s371 = sld [smem:[#allocation8 + $0x5]]
    %s372 = scalar_lea.vmem %s1, %s371
    %s373 = scalar_lea.vmem [#allocation2], 17
    %p375 = scmp.lt.u32.totalorder 1, 8
    %p376 = pneg %p375
    // Predicated region
    $region216: #{tpu_custom_call.1} parent=1 // pred_check
      _
    $region217: #{tpu_custom_call.1} parent=1 // pred_check_branch
      %378 = sbr.rel (%p375) target = $region219
    $region218: #{tpu_custom_call.1} parent=1 // pred_region
      %s394 = sand.u32 1, 7
      %p395 = scmp.eq.s32.totalorder %s394, 0
      %p396 = pneg %p395
      // Predicated region
      $region231: #{tpu_custom_call.1} parent=218 // pred_check
        _
      $region232: #{tpu_custom_call.1} parent=218 // pred_check_branch
        %398 = sbr.rel (%p395) target = $region234
      $region233: #{tpu_custom_call.1} parent=218 // pred_region
        %s399 = sand.u32 1, 7
        %s400 = ssub.s32 1, %s399
        %s401 = scalar_lea.vmem %s372, %s400
        %s402 = ssub.s32 1, %s399
        %s403 = scalar_lea.vmem %s373, %s402 [#allocation2]
        %s404 = sshll.u32 1, %s399
        %s405 = ssub.s32 %s404, 1
        loop: start=0, step=1, limit=1
        $region235: #{tpu_custom_call.1} parent=233 // loop_pre_header
          _
        $region236: #{tpu_custom_call.1} parent=233 // loop_header
          %s407 = sphi 0, %s411
          %p408 = scmp.ge.s32.totalorder %s407, 1
          %s412 = sphi %s401, %s401
          %s413 = sphi %s403, %s403
        $region237: #{tpu_custom_call.1} parent=233 // loop_header_branch
          %410 = sbr.rel (%p408) target = $region241
        $region238: #{tpu_custom_call.1} parent=233 // loop_body
          %v414 = vld [vmem:[%s412] sm:%s405]
          %415 = vst [vmem:[%s413] sm:%s405] %v414
        $region239: #{tpu_custom_call.1} parent=233 // loop_footer
          %s411 = sadd.s32 1, %s407
        $region240: #{tpu_custom_call.1} parent=233 // loop_footer_branch
          %406 = sbr.rel target = $region236
        $region241: #{tpu_custom_call.1} parent=233 // loop_exit
          _
      $region234: #{tpu_custom_call.1} parent=218 // pred_fallthru
        _
    $region219: #{tpu_custom_call.1} parent=1 // pred_fallthru
      _
    // Predicated region
    $region220: #{tpu_custom_call.1} parent=1 // pred_check
      %p379 = pneg %p375
    $region221: #{tpu_custom_call.1} parent=1 // pred_check_branch
      %381 = sbr.rel (%p379) target = $region223
    $region222: #{tpu_custom_call.1} parent=1 // pred_region
      %s382 = sshll.u32 1, 1
      %s383 = ssub.s32 %s382, 1
      loop: start=0, step=1, limit=1
      $region224: #{tpu_custom_call.1} parent=222 // loop_pre_header
        _
      $region225: #{tpu_custom_call.1} parent=222 // loop_header
        %s385 = sphi 0, %s389
        %p386 = scmp.ge.s32.totalorder %s385, 1
        %s390 = sphi %s372, %s372
        %s391 = sphi %s373, %s373
      $region226: #{tpu_custom_call.1} parent=222 // loop_header_branch
        %388 = sbr.rel (%p386) target = $region230
      $region227: #{tpu_custom_call.1} parent=222 // loop_body
        %v392 = vld [vmem:[%s390] sm:%s383]
        %393 = vst [vmem:[%s391] sm:%s383] %v392
      $region228: #{tpu_custom_call.1} parent=222 // loop_footer
        %s389 = sadd.s32 1, %s385
      $region229: #{tpu_custom_call.1} parent=222 // loop_footer_branch
        %384 = sbr.rel target = $region225
      $region230: #{tpu_custom_call.1} parent=222 // loop_exit
        _
    $region223: #{tpu_custom_call.1} parent=1 // pred_fallthru
      _
    // Predicated region
    $region242: #{tpu_custom_call.1} parent=1 // pred_check
      _
    $region243: #{tpu_custom_call.1} parent=1 // pred_check_branch
      %418 = sbr.rel (0) target = $region245
    $region244: #{tpu_custom_call.1} parent=1 // pred_region
      %419 = vsyncadd [#allocation6], 16
    $region245: #{tpu_custom_call.1} parent=1 // pred_fallthru
      _
    %s420 = sld [smem:[#allocation8 + $0x6]]
    %s421 = scalar_lea.vmem %s1, %s420
    %s422 = scalar_lea.vmem [#allocation2], 24
    %p424 = scmp.lt.u32.totalorder 1, 8
    %p425 = pneg %p424
    // Predicated region
    $region246: #{tpu_custom_call.1} parent=1 // pred_check
      _
    $region247: #{tpu_custom_call.1} parent=1 // pred_check_branch
      %427 = sbr.rel (%p424) target = $region249
    $region248: #{tpu_custom_call.1} parent=1 // pred_region
      %s443 = sand.u32 1, 7
      %p444 = scmp.eq.s32.totalorder %s443, 0
      %p445 = pneg %p444
      // Predicated region
      $region261: #{tpu_custom_call.1} parent=248 // pred_check
        _
      $region262: #{tpu_custom_call.1} parent=248 // pred_check_branch
        %447 = sbr.rel (%p444) target = $region264
      $region263: #{tpu_custom_call.1} parent=248 // pred_region
        %s448 = sand.u32 1, 7
        %s449 = ssub.s32 1, %s448
        %s450 = scalar_lea.vmem %s421, %s449
        %s451 = ssub.s32 1, %s448
        %s452 = scalar_lea.vmem %s422, %s451 [#allocation2]
        %s453 = sshll.u32 1, %s448
        %s454 = ssub.s32 %s453, 1
        loop: start=0, step=1, limit=1
        $region265: #{tpu_custom_call.1} parent=263 // loop_pre_header
          _
        $region266: #{tpu_custom_call.1} parent=263 // loop_header
          %s456 = sphi 0, %s460
          %p457 = scmp.ge.s32.totalorder %s456, 1
          %s461 = sphi %s450, %s450
          %s462 = sphi %s452, %s452
        $region267: #{tpu_custom_call.1} parent=263 // loop_header_branch
          %459 = sbr.rel (%p457) target = $region271
        $region268: #{tpu_custom_call.1} parent=263 // loop_body
          %v463 = vld [vmem:[%s461] sm:%s454]
          %464 = vst [vmem:[%s462] sm:%s454] %v463
        $region269: #{tpu_custom_call.1} parent=263 // loop_footer
          %s460 = sadd.s32 1, %s456
        $region270: #{tpu_custom_call.1} parent=263 // loop_footer_branch
          %455 = sbr.rel target = $region266
        $region271: #{tpu_custom_call.1} parent=263 // loop_exit
          _
      $region264: #{tpu_custom_call.1} parent=248 // pred_fallthru
        _
    $region249: #{tpu_custom_call.1} parent=1 // pred_fallthru
      _
    // Predicated region
    $region250: #{tpu_custom_call.1} parent=1 // pred_check
      %p428 = pneg %p424
    $region251: #{tpu_custom_call.1} parent=1 // pred_check_branch
      %430 = sbr.rel (%p428) target = $region253
    $region252: #{tpu_custom_call.1} parent=1 // pred_region
      %s431 = sshll.u32 1, 1
      %s432 = ssub.s32 %s431, 1
      loop: start=0, step=1, limit=1
      $region254: #{tpu_custom_call.1} parent=252 // loop_pre_header
        _
      $region255: #{tpu_custom_call.1} parent=252 // loop_header
        %s434 = sphi 0, %s438
        %p435 = scmp.ge.s32.totalorder %s434, 1
        %s439 = sphi %s421, %s421
        %s440 = sphi %s422, %s422
      $region256: #{tpu_custom_call.1} parent=252 // loop_header_branch
        %437 = sbr.rel (%p435) target = $region260
      $region257: #{tpu_custom_call.1} parent=252 // loop_body
        %v441 = vld [vmem:[%s439] sm:%s432]
        %442 = vst [vmem:[%s440] sm:%s432] %v441
      $region258: #{tpu_custom_call.1} parent=252 // loop_footer
        %s438 = sadd.s32 1, %s434
      $region259: #{tpu_custom_call.1} parent=252 // loop_footer_branch
        %433 = sbr.rel target = $region255
      $region260: #{tpu_custom_call.1} parent=252 // loop_exit
        _
    $region253: #{tpu_custom_call.1} parent=1 // pred_fallthru
      _
    // Predicated region
    $region272: #{tpu_custom_call.1} parent=1 // pred_check
      _
    $region273: #{tpu_custom_call.1} parent=1 // pred_check_branch
      %467 = sbr.rel (0) target = $region275
    $region274: #{tpu_custom_call.1} parent=1 // pred_region
      %468 = vsyncadd [#allocation6], 16
    $region275: #{tpu_custom_call.1} parent=1 // pred_fallthru
      _
    %s469 = sld [smem:[#allocation8 + $0x7]]
    %s470 = scalar_lea.vmem %s1, %s469
    %s471 = scalar_lea.vmem [#allocation2], 25
    %p473 = scmp.lt.u32.totalorder 1, 8
    %p474 = pneg %p473
    // Predicated region
    $region276: #{tpu_custom_call.1} parent=1 // pred_check
      _
    $region277: #{tpu_custom_call.1} parent=1 // pred_check_branch
      %476 = sbr.rel (%p473) target = $region279
    $region278: #{tpu_custom_call.1} parent=1 // pred_region
      %s492 = sand.u32 1, 7
      %p493 = scmp.eq.s32.totalorder %s492, 0
      %p494 = pneg %p493
      // Predicated region
      $region291: #{tpu_custom_call.1} parent=278 // pred_check
        _
      $region292: #{tpu_custom_call.1} parent=278 // pred_check_branch
        %496 = sbr.rel (%p493) target = $region294
      $region293: #{tpu_custom_call.1} parent=278 // pred_region
        %s497 = sand.u32 1, 7
        %s498 = ssub.s32 1, %s497
        %s499 = scalar_lea.vmem %s470, %s498
        %s500 = ssub.s32 1, %s497
        %s501 = scalar_lea.vmem %s471, %s500 [#allocation2]
        %s502 = sshll.u32 1, %s497
        %s503 = ssub.s32 %s502, 1
        loop: start=0, step=1, limit=1
        $region295: #{tpu_custom_call.1} parent=293 // loop_pre_header
          _
        $region296: #{tpu_custom_call.1} parent=293 // loop_header
          %s505 = sphi 0, %s509
          %p506 = scmp.ge.s32.totalorder %s505, 1
          %s510 = sphi %s499, %s499
          %s511 = sphi %s501, %s501
        $region297: #{tpu_custom_call.1} parent=293 // loop_header_branch
          %508 = sbr.rel (%p506) target = $region301
        $region298: #{tpu_custom_call.1} parent=293 // loop_body
          %v512 = vld [vmem:[%s510] sm:%s503]
          %513 = vst [vmem:[%s511] sm:%s503] %v512
        $region299: #{tpu_custom_call.1} parent=293 // loop_footer
          %s509 = sadd.s32 1, %s505
        $region300: #{tpu_custom_call.1} parent=293 // loop_footer_branch
          %504 = sbr.rel target = $region296
        $region301: #{tpu_custom_call.1} parent=293 // loop_exit
          _
      $region294: #{tpu_custom_call.1} parent=278 // pred_fallthru
        _
    $region279: #{tpu_custom_call.1} parent=1 // pred_fallthru
      _
    // Predicated region
    $region280: #{tpu_custom_call.1} parent=1 // pred_check
      %p477 = pneg %p473
    $region281: #{tpu_custom_call.1} parent=1 // pred_check_branch
      %479 = sbr.rel (%p477) target = $region283
    $region282: #{tpu_custom_call.1} parent=1 // pred_region
      %s480 = sshll.u32 1, 1
      %s481 = ssub.s32 %s480, 1
      loop: start=0, step=1, limit=1
      $region284: #{tpu_custom_call.1} parent=282 // loop_pre_header
        _
      $region285: #{tpu_custom_call.1} parent=282 // loop_header
        %s483 = sphi 0, %s487
        %p484 = scmp.ge.s32.totalorder %s483, 1
        %s488 = sphi %s470, %s470
        %s489 = sphi %s471, %s471
      $region286: #{tpu_custom_call.1} parent=282 // loop_header_branch
        %486 = sbr.rel (%p484) target = $region290
      $region287: #{tpu_custom_call.1} parent=282 // loop_body
        %v490 = vld [vmem:[%s488] sm:%s481]
        %491 = vst [vmem:[%s489] sm:%s481] %v490
      $region288: #{tpu_custom_call.1} parent=282 // loop_footer
        %s487 = sadd.s32 1, %s483
      $region289: #{tpu_custom_call.1} parent=282 // loop_footer_branch
        %482 = sbr.rel target = $region285
      $region290: #{tpu_custom_call.1} parent=282 // loop_exit
        _
    $region283: #{tpu_custom_call.1} parent=1 // pred_fallthru
      _
    // Predicated region
    $region302: #{tpu_custom_call.1} parent=1 // pred_check
      _
    $region303: #{tpu_custom_call.1} parent=1 // pred_check_branch
      %516 = sbr.rel (0) target = $region305
    $region304: #{tpu_custom_call.1} parent=1 // pred_region
      %517 = vsyncadd [#allocation6], 16
    $region305: #{tpu_custom_call.1} parent=1 // pred_fallthru
      _
    %s518 = sld [smem:[#allocation8 + $0x8]]
    %s519 = scalar_lea.vmem %s1, %s518
    %s520 = scalar_lea.vmem [#allocation2], 32
    %p522 = scmp.lt.u32.totalorder 1, 8
    %p523 = pneg %p522
    // Predicated region
    $region306: #{tpu_custom_call.1} parent=1 // pred_check
      _
    $region307: #{tpu_custom_call.1} parent=1 // pred_check_branch
      %525 = sbr.rel (%p522) target = $region309
    $region308: #{tpu_custom_call.1} parent=1 // pred_region
      %s541 = sand.u32 1, 7
      %p542 = scmp.eq.s32.totalorder %s541, 0
      %p543 = pneg %p542
      // Predicated region
      $region321: #{tpu_custom_call.1} parent=308 // pred_check
        _
      $region322: #{tpu_custom_call.1} parent=308 // pred_check_branch
        %545 = sbr.rel (%p542) target = $region324
      $region323: #{tpu_custom_call.1} parent=308 // pred_region
        %s546 = sand.u32 1, 7
        %s547 = ssub.s32 1, %s546
        %s548 = scalar_lea.vmem %s519, %s547
        %s549 = ssub.s32 1, %s546
        %s550 = scalar_lea.vmem %s520, %s549 [#allocation2]
        %s551 = sshll.u32 1, %s546
        %s552 = ssub.s32 %s551, 1
        loop: start=0, step=1, limit=1
        $region325: #{tpu_custom_call.1} parent=323 // loop_pre_header
          _
        $region326: #{tpu_custom_call.1} parent=323 // loop_header
          %s554 = sphi 0, %s558
          %p555 = scmp.ge.s32.totalorder %s554, 1
          %s559 = sphi %s548, %s548
          %s560 = sphi %s550, %s550
        $region327: #{tpu_custom_call.1} parent=323 // loop_header_branch
          %557 = sbr.rel (%p555) target = $region331
        $region328: #{tpu_custom_call.1} parent=323 // loop_body
          %v561 = vld [vmem:[%s559] sm:%s552]
          %562 = vst [vmem:[%s560] sm:%s552] %v561
        $region329: #{tpu_custom_call.1} parent=323 // loop_footer
          %s558 = sadd.s32 1, %s554
        $region330: #{tpu_custom_call.1} parent=323 // loop_footer_branch
          %553 = sbr.rel target = $region326
        $region331: #{tpu_custom_call.1} parent=323 // loop_exit
          _
      $region324: #{tpu_custom_call.1} parent=308 // pred_fallthru
        _
    $region309: #{tpu_custom_call.1} parent=1 // pred_fallthru
      _
    // Predicated region
    $region310: #{tpu_custom_call.1} parent=1 // pred_check
      %p526 = pneg %p522
    $region311: #{tpu_custom_call.1} parent=1 // pred_check_branch
      %528 = sbr.rel (%p526) target = $region313
    $region312: #{tpu_custom_call.1} parent=1 // pred_region
      %s529 = sshll.u32 1, 1
      %s530 = ssub.s32 %s529, 1
      loop: start=0, step=1, limit=1
      $region314: #{tpu_custom_call.1} parent=312 // loop_pre_header
        _
      $region315: #{tpu_custom_call.1} parent=312 // loop_header
        %s532 = sphi 0, %s536
        %p533 = scmp.ge.s32.totalorder %s532, 1
        %s537 = sphi %s519, %s519
        %s538 = sphi %s520, %s520
      $region316: #{tpu_custom_call.1} parent=312 // loop_header_branch
        %535 = sbr.rel (%p533) target = $region320
      $region317: #{tpu_custom_call.1} parent=312 // loop_body
        %v539 = vld [vmem:[%s537] sm:%s530]
        %540 = vst [vmem:[%s538] sm:%s530] %v539
      $region318: #{tpu_custom_call.1} parent=312 // loop_footer
        %s536 = sadd.s32 1, %s532
      $region319: #{tpu_custom_call.1} parent=312 // loop_footer_branch
        %531 = sbr.rel target = $region315
      $region320: #{tpu_custom_call.1} parent=312 // loop_exit
        _
    $region313: #{tpu_custom_call.1} parent=1 // pred_fallthru
      _
    // Predicated region
    $region332: #{tpu_custom_call.1} parent=1 // pred_check
      _
    $region333: #{tpu_custom_call.1} parent=1 // pred_check_branch
      %565 = sbr.rel (0) target = $region335
    $region334: #{tpu_custom_call.1} parent=1 // pred_region
      %566 = vsyncadd [#allocation6], 16
    $region335: #{tpu_custom_call.1} parent=1 // pred_fallthru
      _
    %s567 = sld [smem:[#allocation8 + $0x9]]
    %s568 = scalar_lea.vmem %s1, %s567
    %s569 = scalar_lea.vmem [#allocation2], 33
    %p571 = scmp.lt.u32.totalorder 1, 8
    %p572 = pneg %p571
    // Predicated region
    $region336: #{tpu_custom_call.1} parent=1 // pred_check
      _
    $region337: #{tpu_custom_call.1} parent=1 // pred_check_branch
      %574 = sbr.rel (%p571) target = $region339
    $region338: #{tpu_custom_call.1} parent=1 // pred_region
      %s590 = sand.u32 1, 7
      %p591 = scmp.eq.s32.totalorder %s590, 0
      %p592 = pneg %p591
      // Predicated region
      $region351: #{tpu_custom_call.1} parent=338 // pred_check
        _
      $region352: #{tpu_custom_call.1} parent=338 // pred_check_branch
        %594 = sbr.rel (%p591) target = $region354
      $region353: #{tpu_custom_call.1} parent=338 // pred_region
        %s595 = sand.u32 1, 7
        %s596 = ssub.s32 1, %s595
        %s597 = scalar_lea.vmem %s568, %s596
        %s598 = ssub.s32 1, %s595
        %s599 = scalar_lea.vmem %s569, %s598 [#allocation2]
        %s600 = sshll.u32 1, %s595
        %s601 = ssub.s32 %s600, 1
        loop: start=0, step=1, limit=1
        $region355: #{tpu_custom_call.1} parent=353 // loop_pre_header
          _
        $region356: #{tpu_custom_call.1} parent=353 // loop_header
          %s603 = sphi 0, %s607
          %p604 = scmp.ge.s32.totalorder %s603, 1
          %s608 = sphi %s597, %s597
          %s609 = sphi %s599, %s599
        $region357: #{tpu_custom_call.1} parent=353 // loop_header_branch
          %606 = sbr.rel (%p604) target = $region361
        $region358: #{tpu_custom_call.1} parent=353 // loop_body
          %v610 = vld [vmem:[%s608] sm:%s601]
          %611 = vst [vmem:[%s609] sm:%s601] %v610
        $region359: #{tpu_custom_call.1} parent=353 // loop_footer
          %s607 = sadd.s32 1, %s603
        $region360: #{tpu_custom_call.1} parent=353 // loop_footer_branch
          %602 = sbr.rel target = $region356
        $region361: #{tpu_custom_call.1} parent=353 // loop_exit
          _
      $region354: #{tpu_custom_call.1} parent=338 // pred_fallthru
        _
    $region339: #{tpu_custom_call.1} parent=1 // pred_fallthru
      _
    // Predicated region
    $region340: #{tpu_custom_call.1} parent=1 // pred_check
      %p575 = pneg %p571
    $region341: #{tpu_custom_call.1} parent=1 // pred_check_branch
      %577 = sbr.rel (%p575) target = $region343
    $region342: #{tpu_custom_call.1} parent=1 // pred_region
      %s578 = sshll.u32 1, 1
      %s579 = ssub.s32 %s578, 1
      loop: start=0, step=1, limit=1
      $region344: #{tpu_custom_call.1} parent=342 // loop_pre_header
        _
      $region345: #{tpu_custom_call.1} parent=342 // loop_header
        %s581 = sphi 0, %s585
        %p582 = scmp.ge.s32.totalorder %s581, 1
        %s586 = sphi %s568, %s568
        %s587 = sphi %s569, %s569
      $region346: #{tpu_custom_call.1} parent=342 // loop_header_branch
        %584 = sbr.rel (%p582) target = $region350
      $region347: #{tpu_custom_call.1} parent=342 // loop_body
        %v588 = vld [vmem:[%s586] sm:%s579]
        %589 = vst [vmem:[%s587] sm:%s579] %v588
      $region348: #{tpu_custom_call.1} parent=342 // loop_footer
        %s585 = sadd.s32 1, %s581
      $region349: #{tpu_custom_call.1} parent=342 // loop_footer_branch
        %580 = sbr.rel target = $region345
      $region350: #{tpu_custom_call.1} parent=342 // loop_exit
        _
    $region343: #{tpu_custom_call.1} parent=1 // pred_fallthru
      _
    // Predicated region
    $region362: #{tpu_custom_call.1} parent=1 // pred_check
      _
    $region363: #{tpu_custom_call.1} parent=1 // pred_check_branch
      %614 = sbr.rel (0) target = $region365
    $region364: #{tpu_custom_call.1} parent=1 // pred_region
      %615 = vsyncadd [#allocation6], 16
    $region365: #{tpu_custom_call.1} parent=1 // pred_fallthru
      _
    %s616 = sld [smem:[#allocation8 + $0xa]]
    %s617 = scalar_lea.vmem %s1, %s616
    %s618 = scalar_lea.vmem [#allocation2], 40
    %p620 = scmp.lt.u32.totalorder 1, 8
    %p621 = pneg %p620
    // Predicated region
    $region366: #{tpu_custom_call.1} parent=1 // pred_check
      _
    $region367: #{tpu_custom_call.1} parent=1 // pred_check_branch
      %623 = sbr.rel (%p620) target = $region369
    $region368: #{tpu_custom_call.1} parent=1 // pred_region
      %s639 = sand.u32 1, 7
      %p640 = scmp.eq.s32.totalorder %s639, 0
      %p641 = pneg %p640
      // Predicated region
      $region381: #{tpu_custom_call.1} parent=368 // pred_check
        _
      $region382: #{tpu_custom_call.1} parent=368 // pred_check_branch
        %643 = sbr.rel (%p640) target = $region384
      $region383: #{tpu_custom_call.1} parent=368 // pred_region
        %s644 = sand.u32 1, 7
        %s645 = ssub.s32 1, %s644
        %s646 = scalar_lea.vmem %s617, %s645
        %s647 = ssub.s32 1, %s644
        %s648 = scalar_lea.vmem %s618, %s647 [#allocation2]
        %s649 = sshll.u32 1, %s644
        %s650 = ssub.s32 %s649, 1
        loop: start=0, step=1, limit=1
        $region385: #{tpu_custom_call.1} parent=383 // loop_pre_header
          _
        $region386: #{tpu_custom_call.1} parent=383 // loop_header
          %s652 = sphi 0, %s656
          %p653 = scmp.ge.s32.totalorder %s652, 1
          %s657 = sphi %s646, %s646
          %s658 = sphi %s648, %s648
        $region387: #{tpu_custom_call.1} parent=383 // loop_header_branch
          %655 = sbr.rel (%p653) target = $region391
        $region388: #{tpu_custom_call.1} parent=383 // loop_body
          %v659 = vld [vmem:[%s657] sm:%s650]
          %660 = vst [vmem:[%s658] sm:%s650] %v659
        $region389: #{tpu_custom_call.1} parent=383 // loop_footer
          %s656 = sadd.s32 1, %s652
        $region390: #{tpu_custom_call.1} parent=383 // loop_footer_branch
          %651 = sbr.rel target = $region386
        $region391: #{tpu_custom_call.1} parent=383 // loop_exit
          _
      $region384: #{tpu_custom_call.1} parent=368 // pred_fallthru
        _
    $region369: #{tpu_custom_call.1} parent=1 // pred_fallthru
      _
    // Predicated region
    $region370: #{tpu_custom_call.1} parent=1 // pred_check
      %p624 = pneg %p620
    $region371: #{tpu_custom_call.1} parent=1 // pred_check_branch
      %626 = sbr.rel (%p624) target = $region373
    $region372: #{tpu_custom_call.1} parent=1 // pred_region
      %s627 = sshll.u32 1, 1
      %s628 = ssub.s32 %s627, 1
      loop: start=0, step=1, limit=1
      $region374: #{tpu_custom_call.1} parent=372 // loop_pre_header
        _
      $region375: #{tpu_custom_call.1} parent=372 // loop_header
        %s630 = sphi 0, %s634
        %p631 = scmp.ge.s32.totalorder %s630, 1
        %s635 = sphi %s617, %s617
        %s636 = sphi %s618, %s618
      $region376: #{tpu_custom_call.1} parent=372 // loop_header_branch
        %633 = sbr.rel (%p631) target = $region380
      $region377: #{tpu_custom_call.1} parent=372 // loop_body
        %v637 = vld [vmem:[%s635] sm:%s628]
        %638 = vst [vmem:[%s636] sm:%s628] %v637
      $region378: #{tpu_custom_call.1} parent=372 // loop_footer
        %s634 = sadd.s32 1, %s630
      $region379: #{tpu_custom_call.1} parent=372 // loop_footer_branch
        %629 = sbr.rel target = $region375
      $region380: #{tpu_custom_call.1} parent=372 // loop_exit
        _
    $region373: #{tpu_custom_call.1} parent=1 // pred_fallthru
      _
    // Predicated region
    $region392: #{tpu_custom_call.1} parent=1 // pred_check
      _
    $region393: #{tpu_custom_call.1} parent=1 // pred_check_branch
      %663 = sbr.rel (0) target = $region395
    $region394: #{tpu_custom_call.1} parent=1 // pred_region
      %664 = vsyncadd [#allocation6], 16
    $region395: #{tpu_custom_call.1} parent=1 // pred_fallthru
      _
    %s665 = sld [smem:[#allocation8 + $0xb]]
    %s666 = scalar_lea.vmem %s1, %s665
    %s667 = scalar_lea.vmem [#allocation2], 41
    %p669 = scmp.lt.u32.totalorder 1, 8
    %p670 = pneg %p669
    // Predicated region
    $region396: #{tpu_custom_call.1} parent=1 // pred_check
      _
    $region397: #{tpu_custom_call.1} parent=1 // pred_check_branch
      %672 = sbr.rel (%p669) target = $region399
    $region398: #{tpu_custom_call.1} parent=1 // pred_region
      %s688 = sand.u32 1, 7
      %p689 = scmp.eq.s32.totalorder %s688, 0
      %p690 = pneg %p689
      // Predicated region
      $region411: #{tpu_custom_call.1} parent=398 // pred_check
        _
      $region412: #{tpu_custom_call.1} parent=398 // pred_check_branch
        %692 = sbr.rel (%p689) target = $region414
      $region413: #{tpu_custom_call.1} parent=398 // pred_region
        %s693 = sand.u32 1, 7
        %s694 = ssub.s32 1, %s693
        %s695 = scalar_lea.vmem %s666, %s694
        %s696 = ssub.s32 1, %s693
        %s697 = scalar_lea.vmem %s667, %s696 [#allocation2]
        %s698 = sshll.u32 1, %s693
        %s699 = ssub.s32 %s698, 1
        loop: start=0, step=1, limit=1
        $region415: #{tpu_custom_call.1} parent=413 // loop_pre_header
          _
        $region416: #{tpu_custom_call.1} parent=413 // loop_header
          %s701 = sphi 0, %s705
          %p702 = scmp.ge.s32.totalorder %s701, 1
          %s706 = sphi %s695, %s695
          %s707 = sphi %s697, %s697
        $region417: #{tpu_custom_call.1} parent=413 // loop_header_branch
          %704 = sbr.rel (%p702) target = $region421
        $region418: #{tpu_custom_call.1} parent=413 // loop_body
          %v708 = vld [vmem:[%s706] sm:%s699]
          %709 = vst [vmem:[%s707] sm:%s699] %v708
        $region419: #{tpu_custom_call.1} parent=413 // loop_footer
          %s705 = sadd.s32 1, %s701
        $region420: #{tpu_custom_call.1} parent=413 // loop_footer_branch
          %700 = sbr.rel target = $region416
        $region421: #{tpu_custom_call.1} parent=413 // loop_exit
          _
      $region414: #{tpu_custom_call.1} parent=398 // pred_fallthru
        _
    $region399: #{tpu_custom_call.1} parent=1 // pred_fallthru
      _
    // Predicated region
    $region400: #{tpu_custom_call.1} parent=1 // pred_check
      %p673 = pneg %p669
    $region401: #{tpu_custom_call.1} parent=1 // pred_check_branch
      %675 = sbr.rel (%p673) target = $region403
    $region402: #{tpu_custom_call.1} parent=1 // pred_region
      %s676 = sshll.u32 1, 1
      %s677 = ssub.s32 %s676, 1
      loop: start=0, step=1, limit=1
      $region404: #{tpu_custom_call.1} parent=402 // loop_pre_header
        _
      $region405: #{tpu_custom_call.1} parent=402 // loop_header
        %s679 = sphi 0, %s683
        %p680 = scmp.ge.s32.totalorder %s679, 1
        %s684 = sphi %s666, %s666
        %s685 = sphi %s667, %s667
      $region406: #{tpu_custom_call.1} parent=402 // loop_header_branch
        %682 = sbr.rel (%p680) target = $region410
      $region407: #{tpu_custom_call.1} parent=402 // loop_body
        %v686 = vld [vmem:[%s684] sm:%s677]
        %687 = vst [vmem:[%s685] sm:%s677] %v686
      $region408: #{tpu_custom_call.1} parent=402 // loop_footer
        %s683 = sadd.s32 1, %s679
      $region409: #{tpu_custom_call.1} parent=402 // loop_footer_branch
        %678 = sbr.rel target = $region405
      $region410: #{tpu_custom_call.1} parent=402 // loop_exit
        _
    $region403: #{tpu_custom_call.1} parent=1 // pred_fallthru
      _
    // Predicated region
    $region422: #{tpu_custom_call.1} parent=1 // pred_check
      _
    $region423: #{tpu_custom_call.1} parent=1 // pred_check_branch
      %712 = sbr.rel (0) target = $region425
    $region424: #{tpu_custom_call.1} parent=1 // pred_region
      %713 = vsyncadd [#allocation6], 16
    $region425: #{tpu_custom_call.1} parent=1 // pred_fallthru
      _
    %s714 = sld [smem:[#allocation8 + $0xc]]
    %s715 = scalar_lea.vmem %s1, %s714
    %s716 = scalar_lea.vmem [#allocation2], 48
    %p718 = scmp.lt.u32.totalorder 1, 8
    %p719 = pneg %p718
    // Predicated region
    $region426: #{tpu_custom_call.1} parent=1 // pred_check
      _
    $region427: #{tpu_custom_call.1} parent=1 // pred_check_branch
      %721 = sbr.rel (%p718) target = $region429
    $region428: #{tpu_custom_call.1} parent=1 // pred_region
      %s737 = sand.u32 1, 7
      %p738 = scmp.eq.s32.totalorder %s737, 0
      %p739 = pneg %p738
      // Predicated region
      $region441: #{tpu_custom_call.1} parent=428 // pred_check
        _
      $region442: #{tpu_custom_call.1} parent=428 // pred_check_branch
        %741 = sbr.rel (%p738) target = $region444
      $region443: #{tpu_custom_call.1} parent=428 // pred_region
        %s742 = sand.u32 1, 7
        %s743 = ssub.s32 1, %s742
        %s744 = scalar_lea.vmem %s715, %s743
        %s745 = ssub.s32 1, %s742
        %s746 = scalar_lea.vmem %s716, %s745 [#allocation2]
        %s747 = sshll.u32 1, %s742
        %s748 = ssub.s32 %s747, 1
        loop: start=0, step=1, limit=1
        $region445: #{tpu_custom_call.1} parent=443 // loop_pre_header
          _
        $region446: #{tpu_custom_call.1} parent=443 // loop_header
          %s750 = sphi 0, %s754
          %p751 = scmp.ge.s32.totalorder %s750, 1
          %s755 = sphi %s744, %s744
          %s756 = sphi %s746, %s746
        $region447: #{tpu_custom_call.1} parent=443 // loop_header_branch
          %753 = sbr.rel (%p751) target = $region451
        $region448: #{tpu_custom_call.1} parent=443 // loop_body
          %v757 = vld [vmem:[%s755] sm:%s748]
          %758 = vst [vmem:[%s756] sm:%s748] %v757
        $region449: #{tpu_custom_call.1} parent=443 // loop_footer
          %s754 = sadd.s32 1, %s750
        $region450: #{tpu_custom_call.1} parent=443 // loop_footer_branch
          %749 = sbr.rel target = $region446
        $region451: #{tpu_custom_call.1} parent=443 // loop_exit
          _
      $region444: #{tpu_custom_call.1} parent=428 // pred_fallthru
        _
    $region429: #{tpu_custom_call.1} parent=1 // pred_fallthru
      _
    // Predicated region
    $region430: #{tpu_custom_call.1} parent=1 // pred_check
      %p722 = pneg %p718
    $region431: #{tpu_custom_call.1} parent=1 // pred_check_branch
      %724 = sbr.rel (%p722) target = $region433
    $region432: #{tpu_custom_call.1} parent=1 // pred_region
      %s725 = sshll.u32 1, 1
      %s726 = ssub.s32 %s725, 1
      loop: start=0, step=1, limit=1
      $region434: #{tpu_custom_call.1} parent=432 // loop_pre_header
        _
      $region435: #{tpu_custom_call.1} parent=432 // loop_header
        %s728 = sphi 0, %s732
        %p729 = scmp.ge.s32.totalorder %s728, 1
        %s733 = sphi %s715, %s715
        %s734 = sphi %s716, %s716
      $region436: #{tpu_custom_call.1} parent=432 // loop_header_branch
        %731 = sbr.rel (%p729) target = $region440
      $region437: #{tpu_custom_call.1} parent=432 // loop_body
        %v735 = vld [vmem:[%s733] sm:%s726]
        %736 = vst [vmem:[%s734] sm:%s726] %v735
      $region438: #{tpu_custom_call.1} parent=432 // loop_footer
        %s732 = sadd.s32 1, %s728
      $region439: #{tpu_custom_call.1} parent=432 // loop_footer_branch
        %727 = sbr.rel target = $region435
      $region440: #{tpu_custom_call.1} parent=432 // loop_exit
        _
    $region433: #{tpu_custom_call.1} parent=1 // pred_fallthru
      _
    // Predicated region
    $region452: #{tpu_custom_call.1} parent=1 // pred_check
      _
    $region453: #{tpu_custom_call.1} parent=1 // pred_check_branch
      %761 = sbr.rel (0) target = $region455
    $region454: #{tpu_custom_call.1} parent=1 // pred_region
      %762 = vsyncadd [#allocation6], 16
    $region455: #{tpu_custom_call.1} parent=1 // pred_fallthru
      _
    %s763 = sld [smem:[#allocation8 + $0xd]]
    %s764 = scalar_lea.vmem %s1, %s763
    %s765 = scalar_lea.vmem [#allocation2], 49
    %p767 = scmp.lt.u32.totalorder 1, 8
    %p768 = pneg %p767
    // Predicated region
    $region456: #{tpu_custom_call.1} parent=1 // pred_check
      _
    $region457: #{tpu_custom_call.1} parent=1 // pred_check_branch
      %770 = sbr.rel (%p767) target = $region459
    $region458: #{tpu_custom_call.1} parent=1 // pred_region
      %s786 = sand.u32 1, 7
      %p787 = scmp.eq.s32.totalorder %s786, 0
      %p788 = pneg %p787
      // Predicated region
      $region471: #{tpu_custom_call.1} parent=458 // pred_check
        _
      $region472: #{tpu_custom_call.1} parent=458 // pred_check_branch
        %790 = sbr.rel (%p787) target = $region474
      $region473: #{tpu_custom_call.1} parent=458 // pred_region
        %s791 = sand.u32 1, 7
        %s792 = ssub.s32 1, %s791
        %s793 = scalar_lea.vmem %s764, %s792
        %s794 = ssub.s32 1, %s791
        %s795 = scalar_lea.vmem %s765, %s794 [#allocation2]
        %s796 = sshll.u32 1, %s791
        %s797 = ssub.s32 %s796, 1
        loop: start=0, step=1, limit=1
        $region475: #{tpu_custom_call.1} parent=473 // loop_pre_header
          _
        $region476: #{tpu_custom_call.1} parent=473 // loop_header
          %s799 = sphi 0, %s803
          %p800 = scmp.ge.s32.totalorder %s799, 1
          %s804 = sphi %s793, %s793
          %s805 = sphi %s795, %s795
        $region477: #{tpu_custom_call.1} parent=473 // loop_header_branch
          %802 = sbr.rel (%p800) target = $region481
        $region478: #{tpu_custom_call.1} parent=473 // loop_body
          %v806 = vld [vmem:[%s804] sm:%s797]
          %807 = vst [vmem:[%s805] sm:%s797] %v806
        $region479: #{tpu_custom_call.1} parent=473 // loop_footer
          %s803 = sadd.s32 1, %s799
        $region480: #{tpu_custom_call.1} parent=473 // loop_footer_branch
          %798 = sbr.rel target = $region476
        $region481: #{tpu_custom_call.1} parent=473 // loop_exit
          _
      $region474: #{tpu_custom_call.1} parent=458 // pred_fallthru
        _
    $region459: #{tpu_custom_call.1} parent=1 // pred_fallthru
      _
    // Predicated region
    $region460: #{tpu_custom_call.1} parent=1 // pred_check
      %p771 = pneg %p767
    $region461: #{tpu_custom_call.1} parent=1 // pred_check_branch
      %773 = sbr.rel (%p771) target = $region463
    $region462: #{tpu_custom_call.1} parent=1 // pred_region
      %s774 = sshll.u32 1, 1
      %s775 = ssub.s32 %s774, 1
      loop: start=0, step=1, limit=1
      $region464: #{tpu_custom_call.1} parent=462 // loop_pre_header
        _
      $region465: #{tpu_custom_call.1} parent=462 // loop_header
        %s777 = sphi 0, %s781
        %p778 = scmp.ge.s32.totalorder %s777, 1
        %s782 = sphi %s764, %s764
        %s783 = sphi %s765, %s765
      $region466: #{tpu_custom_call.1} parent=462 // loop_header_branch
        %780 = sbr.rel (%p778) target = $region470
      $region467: #{tpu_custom_call.1} parent=462 // loop_body
        %v784 = vld [vmem:[%s782] sm:%s775]
        %785 = vst [vmem:[%s783] sm:%s775] %v784
      $region468: #{tpu_custom_call.1} parent=462 // loop_footer
        %s781 = sadd.s32 1, %s777
      $region469: #{tpu_custom_call.1} parent=462 // loop_footer_branch
        %776 = sbr.rel target = $region465
      $region470: #{tpu_custom_call.1} parent=462 // loop_exit
        _
    $region463: #{tpu_custom_call.1} parent=1 // pred_fallthru
      _
    // Predicated region
    $region482: #{tpu_custom_call.1} parent=1 // pred_check
      _
    $region483: #{tpu_custom_call.1} parent=1 // pred_check_branch
      %810 = sbr.rel (0) target = $region485
    $region484: #{tpu_custom_call.1} parent=1 // pred_region
      %811 = vsyncadd [#allocation6], 16
    $region485: #{tpu_custom_call.1} parent=1 // pred_fallthru
      _
    %s812 = sld [smem:[#allocation8 + $0xe]]
    %s813 = scalar_lea.vmem %s1, %s812
    %s814 = scalar_lea.vmem [#allocation2], 56
    %p816 = scmp.lt.u32.totalorder 1, 8
    %p817 = pneg %p816
    // Predicated region
    $region486: #{tpu_custom_call.1} parent=1 // pred_check
      _
    $region487: #{tpu_custom_call.1} parent=1 // pred_check_branch
      %819 = sbr.rel (%p816) target = $region489
    $region488: #{tpu_custom_call.1} parent=1 // pred_region
      %s835 = sand.u32 1, 7
      %p836 = scmp.eq.s32.totalorder %s835, 0
      %p837 = pneg %p836
      // Predicated region
      $region501: #{tpu_custom_call.1} parent=488 // pred_check
        _
      $region502: #{tpu_custom_call.1} parent=488 // pred_check_branch
        %839 = sbr.rel (%p836) target = $region504
      $region503: #{tpu_custom_call.1} parent=488 // pred_region
        %s840 = sand.u32 1, 7
        %s841 = ssub.s32 1, %s840
        %s842 = scalar_lea.vmem %s813, %s841
        %s843 = ssub.s32 1, %s840
        %s844 = scalar_lea.vmem %s814, %s843 [#allocation2]
        %s845 = sshll.u32 1, %s840
        %s846 = ssub.s32 %s845, 1
        loop: start=0, step=1, limit=1
        $region505: #{tpu_custom_call.1} parent=503 // loop_pre_header
          _
        $region506: #{tpu_custom_call.1} parent=503 // loop_header
          %s848 = sphi 0, %s852
          %p849 = scmp.ge.s32.totalorder %s848, 1
          %s853 = sphi %s842, %s842
          %s854 = sphi %s844, %s844
        $region507: #{tpu_custom_call.1} parent=503 // loop_header_branch
          %851 = sbr.rel (%p849) target = $region511
        $region508: #{tpu_custom_call.1} parent=503 // loop_body
          %v855 = vld [vmem:[%s853] sm:%s846]
          %856 = vst [vmem:[%s854] sm:%s846] %v855
        $region509: #{tpu_custom_call.1} parent=503 // loop_footer
          %s852 = sadd.s32 1, %s848
        $region510: #{tpu_custom_call.1} parent=503 // loop_footer_branch
          %847 = sbr.rel target = $region506
        $region511: #{tpu_custom_call.1} parent=503 // loop_exit
          _
      $region504: #{tpu_custom_call.1} parent=488 // pred_fallthru
        _
    $region489: #{tpu_custom_call.1} parent=1 // pred_fallthru
      _
    // Predicated region
    $region490: #{tpu_custom_call.1} parent=1 // pred_check
      %p820 = pneg %p816
    $region491: #{tpu_custom_call.1} parent=1 // pred_check_branch
      %822 = sbr.rel (%p820) target = $region493
    $region492: #{tpu_custom_call.1} parent=1 // pred_region
      %s823 = sshll.u32 1, 1
      %s824 = ssub.s32 %s823, 1
      loop: start=0, step=1, limit=1
      $region494: #{tpu_custom_call.1} parent=492 // loop_pre_header
        _
      $region495: #{tpu_custom_call.1} parent=492 // loop_header
        %s826 = sphi 0, %s830
        %p827 = scmp.ge.s32.totalorder %s826, 1
        %s831 = sphi %s813, %s813
        %s832 = sphi %s814, %s814
      $region496: #{tpu_custom_call.1} parent=492 // loop_header_branch
        %829 = sbr.rel (%p827) target = $region500
      $region497: #{tpu_custom_call.1} parent=492 // loop_body
        %v833 = vld [vmem:[%s831] sm:%s824]
        %834 = vst [vmem:[%s832] sm:%s824] %v833
      $region498: #{tpu_custom_call.1} parent=492 // loop_footer
        %s830 = sadd.s32 1, %s826
      $region499: #{tpu_custom_call.1} parent=492 // loop_footer_branch
        %825 = sbr.rel target = $region495
      $region500: #{tpu_custom_call.1} parent=492 // loop_exit
        _
    $region493: #{tpu_custom_call.1} parent=1 // pred_fallthru
      _
    // Predicated region
    $region512: #{tpu_custom_call.1} parent=1 // pred_check
      _
    $region513: #{tpu_custom_call.1} parent=1 // pred_check_branch
      %859 = sbr.rel (0) target = $region515
    $region514: #{tpu_custom_call.1} parent=1 // pred_region
      %860 = vsyncadd [#allocation6], 16
    $region515: #{tpu_custom_call.1} parent=1 // pred_fallthru
      _
    %s861 = sld [smem:[#allocation8 + $0xf]]
    %s862 = scalar_lea.vmem %s1, %s861
    %s863 = scalar_lea.vmem [#allocation2], 57
    %p865 = scmp.lt.u32.totalorder 1, 8
    %p866 = pneg %p865
    // Predicated region
    $region516: #{tpu_custom_call.1} parent=1 // pred_check
      _
    $region517: #{tpu_custom_call.1} parent=1 // pred_check_branch
      %868 = sbr.rel (%p865) target = $region519
    $region518: #{tpu_custom_call.1} parent=1 // pred_region
      %s884 = sand.u32 1, 7
      %p885 = scmp.eq.s32.totalorder %s884, 0
      %p886 = pneg %p885
      // Predicated region
      $region531: #{tpu_custom_call.1} parent=518 // pred_check
        _
      $region532: #{tpu_custom_call.1} parent=518 // pred_check_branch
        %888 = sbr.rel (%p885) target = $region534
      $region533: #{tpu_custom_call.1} parent=518 // pred_region
        %s889 = sand.u32 1, 7
        %s890 = ssub.s32 1, %s889
        %s891 = scalar_lea.vmem %s862, %s890
        %s892 = ssub.s32 1, %s889
        %s893 = scalar_lea.vmem %s863, %s892 [#allocation2]
        %s894 = sshll.u32 1, %s889
        %s895 = ssub.s32 %s894, 1
        loop: start=0, step=1, limit=1
        $region535: #{tpu_custom_call.1} parent=533 // loop_pre_header
          _
        $region536: #{tpu_custom_call.1} parent=533 // loop_header
          %s897 = sphi 0, %s901
          %p898 = scmp.ge.s32.totalorder %s897, 1
          %s902 = sphi %s891, %s891
          %s903 = sphi %s893, %s893
        $region537: #{tpu_custom_call.1} parent=533 // loop_header_branch
          %900 = sbr.rel (%p898) target = $region541
        $region538: #{tpu_custom_call.1} parent=533 // loop_body
          %v904 = vld [vmem:[%s902] sm:%s895]
          %905 = vst [vmem:[%s903] sm:%s895] %v904
        $region539: #{tpu_custom_call.1} parent=533 // loop_footer
          %s901 = sadd.s32 1, %s897
        $region540: #{tpu_custom_call.1} parent=533 // loop_footer_branch
          %896 = sbr.rel target = $region536
        $region541: #{tpu_custom_call.1} parent=533 // loop_exit
          _
      $region534: #{tpu_custom_call.1} parent=518 // pred_fallthru
        _
    $region519: #{tpu_custom_call.1} parent=1 // pred_fallthru
      _
    // Predicated region
    $region520: #{tpu_custom_call.1} parent=1 // pred_check
      %p869 = pneg %p865
    $region521: #{tpu_custom_call.1} parent=1 // pred_check_branch
      %871 = sbr.rel (%p869) target = $region523
    $region522: #{tpu_custom_call.1} parent=1 // pred_region
      %s872 = sshll.u32 1, 1
      %s873 = ssub.s32 %s872, 1
      loop: start=0, step=1, limit=1
      $region524: #{tpu_custom_call.1} parent=522 // loop_pre_header
        _
      $region525: #{tpu_custom_call.1} parent=522 // loop_header
        %s875 = sphi 0, %s879
        %p876 = scmp.ge.s32.totalorder %s875, 1
        %s880 = sphi %s862, %s862
        %s881 = sphi %s863, %s863
      $region526: #{tpu_custom_call.1} parent=522 // loop_header_branch
        %878 = sbr.rel (%p876) target = $region530
      $region527: #{tpu_custom_call.1} parent=522 // loop_body
        %v882 = vld [vmem:[%s880] sm:%s873]
        %883 = vst [vmem:[%s881] sm:%s873] %v882
      $region528: #{tpu_custom_call.1} parent=522 // loop_footer
        %s879 = sadd.s32 1, %s875
      $region529: #{tpu_custom_call.1} parent=522 // loop_footer_branch
        %874 = sbr.rel target = $region525
      $region530: #{tpu_custom_call.1} parent=522 // loop_exit
        _
    $region523: #{tpu_custom_call.1} parent=1 // pred_fallthru
      _
    // Predicated region
    $region542: #{tpu_custom_call.1} parent=1 // pred_check
      _
    $region543: #{tpu_custom_call.1} parent=1 // pred_check_branch
      %908 = sbr.rel (0) target = $region545
    $region544: #{tpu_custom_call.1} parent=1 // pred_region
      %909 = vsyncadd [#allocation6], 16
    $region545: #{tpu_custom_call.1} parent=1 // pred_fallthru
      _
    %s910 = smul.u32 1, 1
    %s911 = sshll.u32 %s910, 4
    %912 = dma.done [#allocation6], %s911
    %s913 = sshll.u32 %s910, 4
    %914 = dma.done [#allocation6], %s913
    %s915 = sshll.u32 %s910, 4
    %916 = dma.done [#allocation6], %s915
    %s917 = sshll.u32 %s910, 4
    %918 = dma.done [#allocation6], %s917
    %s919 = sshll.u32 %s910, 4
    %920 = dma.done [#allocation6], %s919
    %s921 = sshll.u32 %s910, 4
    %922 = dma.done [#allocation6], %s921
    %s923 = sshll.u32 %s910, 4
    %924 = dma.done [#allocation6], %s923
    %s925 = sshll.u32 %s910, 4
    %926 = dma.done [#allocation6], %s925
    %s927 = sshll.u32 %s910, 4
    %928 = dma.done [#allocation6], %s927
    %s929 = sshll.u32 %s910, 4
    %930 = dma.done [#allocation6], %s929
    %s931 = sshll.u32 %s910, 4
    %932 = dma.done [#allocation6], %s931
    %s933 = sshll.u32 %s910, 4
    %934 = dma.done [#allocation6], %s933
    %s935 = sshll.u32 %s910, 4
    %936 = dma.done [#allocation6], %s935
    %s937 = sshll.u32 %s910, 4
    %938 = dma.done [#allocation6], %s937
    %s939 = sshll.u32 %s910, 4
    %940 = dma.done [#allocation6], %s939
    %s941 = sshll.u32 %s910, 4
    %942 = dma.done [#allocation6], %s941
    %vm943 = vcmask 521216
    %944 = vst.msk [vmem:[#allocation2 + $0x2] sm:$0x3f] %vm943, 0.0
    %945 = vst.msk [vmem:[#allocation2 + $0xa] sm:$0x3f] %vm943, 0.0
    %946 = vst.msk [vmem:[#allocation2 + $0x12] sm:$0x3f] %vm943, 0.0
    %947 = vst.msk [vmem:[#allocation2 + $0x1a] sm:$0x3f] %vm943, 0.0
    %948 = vst.msk [vmem:[#allocation2 + $0x22] sm:$0x3f] %vm943, 0.0
    %949 = vst.msk [vmem:[#allocation2 + $0x2a] sm:$0x3f] %vm943, 0.0
    %950 = vst.msk [vmem:[#allocation2 + $0x32] sm:$0x3f] %vm943, 0.0
    %951 = vst.msk [vmem:[#allocation2 + $0x3a] sm:$0x3f] %vm943, 0.0
    %v952 = vlaneseq
    %v953 = vand.u32 %v952, 127
    %v954 = vadd.s32 %v953, 128
    %v955 = vadd.s32 %v953, 256
    %v956 = vadd.s32 %v953, 384
    %vm957 = vcmp.lt.s32.totalorder %v953, 0
    %v958 = vsub.s32 0, %v953
    %v959 = vsel %vm957, %v958, %v953
    %v960 = vshrl.u32 %v959, 7
    %v961 = vand.u32 %v959, 127
    %v962 = vsub.s32 0, %v961
    %v963 = vsel %vm957, %v962, %v961
    %vm964 = vcmp.lt.s32.totalorder %v954, 0
    %v965 = vsub.s32 0, %v954
    %v966 = vsel %vm964, %v965, %v954
    %v967 = vshrl.u32 %v966, 7
    %v968 = vand.u32 %v966, 127
    %v969 = vsub.s32 0, %v968
    %v970 = vsel %vm964, %v969, %v968
    %vm971 = vcmp.lt.s32.totalorder %v955, 0
    %v972 = vsub.s32 0, %v955
    %v973 = vsel %vm971, %v972, %v955
    %v974 = vshrl.u32 %v973, 7
    %v975 = vand.u32 %v973, 127
    %v976 = vsub.s32 0, %v975
    %v977 = vsel %vm971, %v976, %v975
    %vm978 = vcmp.lt.s32.totalorder %v956, 0
    %v979 = vsub.s32 0, %v956
    %v980 = vsel %vm978, %v979, %v956
    %v981 = vshrl.u32 %v980, 7
    %v982 = vand.u32 %v980, 127
    %v983 = vsub.s32 0, %v982
    %v984 = vsel %vm978, %v983, %v982
    %vm985 = vcmp.ne.s32.totalorder %v963, 0
    %vm986 = vcmp.ne.s32.totalorder %v970, 0
    %vm987 = vcmp.ne.s32.totalorder %v977, 0
    %vm988 = vcmp.ne.s32.totalorder %v984, 0
    %vm989 = vcmp.lt.s32.totalorder %v963, 0
    %vm990 = vcmp.lt.s32.totalorder %v970, 0
    %vm991 = vcmp.lt.s32.totalorder %v977, 0
    %vm992 = vcmp.lt.s32.totalorder %v984, 0
    %vm993 = vmand %vm989, %vm985
    %vm994 = vmand %vm990, %vm986
    %vm995 = vmand %vm991, %vm987
    %vm996 = vmand %vm992, %vm988
    %v997 = vadd.s32 %v963, 128
    %v998 = vadd.s32 %v970, 128
    %v999 = vadd.s32 %v977, 128
    %v1000 = vadd.s32 %v984, 128
    %v1001 = vsel %vm993, %v997, %v963
    %v1002 = vsel %vm994, %v998, %v970
    %v1003 = vsel %vm995, %v999, %v977
    %v1004 = vsel %vm996, %v1000, %v984
    %vm1005 = vcmp.lt.s32.totalorder %v1001, 64
    %vm1006 = vcmp.lt.s32.totalorder %v1002, 64
    %vm1007 = vcmp.lt.s32.totalorder %v1003, 64
    %vm1008 = vcmp.lt.s32.totalorder %v1004, 64
    %v1009 = vld [vmem:[#allocation2] sm:$0xff]
    %v1010 = vld [vmem:[#allocation2 + $0x8] sm:$0xff]
    %v1011 = vld [vmem:[#allocation2 + $0x10] sm:$0xff]
    %v1012 = vld [vmem:[#allocation2 + $0x18] sm:$0xff]
    %v1013 = vld [vmem:[#allocation2 + $0x20] sm:$0xff]
    %v1014 = vld [vmem:[#allocation2 + $0x28] sm:$0xff]
    %v1015 = vld [vmem:[#allocation2 + $0x30] sm:$0xff]
    %v1016 = vld [vmem:[#allocation2 + $0x38] sm:$0xff]
    %v1017 = vpack.c.bf16 %v1010, %v1009
    %v1018 = vpack.c.bf16 %v1012, %v1011
    %v1019 = vpack.c.bf16 %v1014, %v1013
    %v1020 = vpack.c.bf16 %v1016, %v1015
    %v1021 = vld [vmem:[%s2] sm:$0xff]
    %v1022 = vld [vmem:[%s2 + $0x8] sm:$0xff]
    %v1023 = vld [vmem:[%s2 + $0x10] sm:$0xff]
    %v1024 = vld [vmem:[%s2 + $0x18] sm:$0xff]
    %v1025 = vld [vmem:[%s2 + $0x20] sm:$0xff]
    %v1026 = vld [vmem:[%s2 + $0x28] sm:$0xff]
    %v1027 = vld [vmem:[%s2 + $0x30] sm:$0xff]
    %v1028 = vld [vmem:[%s2 + $0x38] sm:$0xff]
    %v1029 = vld [vmem:[%s2 + $0x40] sm:$0xff]
    %v1030 = vld [vmem:[%s2 + $0x48] sm:$0xff]
    %v1031 = vld [vmem:[%s2 + $0x50] sm:$0xff]
    %v1032 = vld [vmem:[%s2 + $0x58] sm:$0xff]
    %v1033 = vld [vmem:[%s2 + $0x60] sm:$0xff]
    %v1034 = vld [vmem:[%s2 + $0x68] sm:$0xff]
    %v1035 = vld [vmem:[%s2 + $0x70] sm:$0xff]
    %v1036 = vld [vmem:[%s2 + $0x78] sm:$0xff]
    %v1037 = vld [vmem:[%s3] sm:$0xf]
    %v1039 = vlaneseq
    %v1040 = vshrl.u32 %v1039, 7
    %v1041 = vsub.s32 0, %v1040
    %v1042 = vrot.slane %v1037, %v1041
    %v1043 = vlaneseq
    %v1044 = vshrl.u32 %v1043, 7
    %v1045 = vsub.s32 1, %v1044
    %v1046 = vrot.slane %v1037, %v1045
    %v1047 = vlaneseq
    %v1048 = vshrl.u32 %v1047, 7
    %v1049 = vsub.s32 2, %v1048
    %v1050 = vrot.slane %v1037, %v1049
    %v1051 = vlaneseq
    %v1052 = vshrl.u32 %v1051, 7
    %v1053 = vsub.s32 3, %v1052
    %v1054 = vrot.slane %v1037, %v1053
    %v1075 = vunpack.c.l.b16 %v1021
    %v1076 = vunpack.c.h.b16 %v1021
    %v1077 = vunpack.c.l.b16 %v1022
    %v1078 = vunpack.c.h.b16 %v1022
    %v1079 = vunpack.c.l.b16 %v1023
    %v1080 = vunpack.c.h.b16 %v1023
    %v1081 = vunpack.c.l.b16 %v1024
    %v1082 = vunpack.c.h.b16 %v1024
    %v1083 = vunpack.c.l.b16 %v1025
    %v1084 = vunpack.c.h.b16 %v1025
    %v1085 = vunpack.c.l.b16 %v1026
    %v1086 = vunpack.c.h.b16 %v1026
    %v1087 = vunpack.c.l.b16 %v1027
    %v1088 = vunpack.c.h.b16 %v1027
    %v1089 = vunpack.c.l.b16 %v1028
    %v1090 = vunpack.c.h.b16 %v1028
    %v1091 = vunpack.c.l.b16 %v1029
    %v1092 = vunpack.c.h.b16 %v1029
    %v1093 = vunpack.c.l.b16 %v1030
    %v1094 = vunpack.c.h.b16 %v1030
    %v1095 = vunpack.c.l.b16 %v1031
    %v1096 = vunpack.c.h.b16 %v1031
    %v1097 = vunpack.c.l.b16 %v1032
    %v1098 = vunpack.c.h.b16 %v1032
    %v1099 = vunpack.c.l.b16 %v1033
    %v1100 = vunpack.c.h.b16 %v1033
    %v1101 = vunpack.c.l.b16 %v1034
    %v1102 = vunpack.c.h.b16 %v1034
    %v1103 = vunpack.c.l.b16 %v1035
    %v1104 = vunpack.c.h.b16 %v1035
    %v1105 = vunpack.c.l.b16 %v1036
    %v1106 = vunpack.c.h.b16 %v1036
    %v1107 = vpack.c.b16 %v1079, %v1075
    %v1108 = vpack.c.b16 %v1080, %v1076
    %v1109 = vpack.c.b16 %v1081, %v1077
    %v1110 = vpack.c.b16 %v1082, %v1078
    %v1111 = vpack.c.b16 %v1087, %v1083
    %v1112 = vpack.c.b16 %v1088, %v1084
    %v1113 = vpack.c.b16 %v1089, %v1085
    %v1114 = vpack.c.b16 %v1090, %v1086
    %v1115 = vpack.c.b16 %v1095, %v1091
    %v1116 = vpack.c.b16 %v1096, %v1092
    %v1117 = vpack.c.b16 %v1097, %v1093
    %v1118 = vpack.c.b16 %v1098, %v1094
    %v1119 = vpack.c.b16 %v1103, %v1099
    %v1120 = vpack.c.b16 %v1104, %v1100
    %v1121 = vpack.c.b16 %v1105, %v1101
    %v1122 = vpack.c.b16 %v1106, %v1102
    %vm1139 = vcmask 523264
    %v1141 = vsel %vm1139, %v1017, 0
    %v1144 = vsel %vm1139, %v1018, 0
    %v1147 = vsel %vm1139, %v1019, 0
    %v1150 = vsel %vm1139, %v1020, 0
    %1152 = vmatprep.subr.bf16.mxu0 0
    %1153 = vmatpush1.bf16.msra.mxu0 0
    %1154 = vmatprep.subr.bf16.mxu0 0
    %1155 = vmatpush1.bf16.msra.mxu0 0
    %1156 = vmatprep.subr.bf16.mxu0 0
    %1157 = vmatpush1.bf16.msra.mxu0 0
    %1158 = vmatprep.subr.bf16.mxu0 0
    %1159 = vmatpush1.bf16.msra.mxu0 0
    %1160 = vmatprep.subr.bf16.mxu0 %v1120
    %1161 = vmatpush1.bf16.msra.mxu0 %v1119
    %1162 = vmatprep.subr.bf16.mxu0 %v1116
    %1163 = vmatpush1.bf16.msra.mxu0 %v1115
    %1164 = vmatprep.subr.bf16.mxu0 %v1112
    %1165 = vmatpush1.bf16.msra.mxu0 %v1111
    %1166 = vmatprep.subr.bf16.mxu0 %v1108
    %1167 = vmatpush1.bf16.msra.mxu0 %v1107
    %1168 = vmatprep.subr.bf16.mxu0 0
    %1169 = vmatpush2.bf16.msra.mxu0 0
    %1170 = vmatprep.subr.bf16.mxu0 0
    %1171 = vmatpush2.bf16.msra.mxu0 0
    %1172 = vmatprep.subr.bf16.mxu0 0
    %1173 = vmatpush2.bf16.msra.mxu0 0
    %1174 = vmatprep.subr.bf16.mxu0 0
    %1175 = vmatpush2.bf16.msra.mxu0 0
    %1176 = vmatprep.subr.bf16.mxu0 0
    %1177 = vmatpush2.bf16.msra.mxu0 0
    %1178 = vmatprep.subr.bf16.mxu0 0
    %1179 = vmatpush2.bf16.msra.mxu0 0
    %1180 = vmatprep.subr.bf16.mxu0 0
    %1181 = vmatpush2.bf16.msra.mxu0 0
    %1182 = vmatprep.subr.bf16.mxu0 0
    %1183 = vmatpush2.bf16.msra.mxu0 0
    %1184 = vmatprep.mubr.bf16.mxu0 0
    %1185 = vmatmul.mubr.bf16.gmra.mxu0 %v1141
    %v1186 = vpop.f32.mrf.mxu0
    %v1187 = vadd.f32 %v1042, %v1186
    %v1188 = vpop.f32.mrf.mxu0
    %v1189 = vadd.f32 %v1046, %v1188
    %v1190 = vpop.f32.mrf.mxu0
    %v1191 = vadd.f32 %v1042, %v1190
    %v1192 = vpop.f32.mrf.mxu0
    %v1193 = vadd.f32 %v1046, %v1192
    %1194 = vmatprep.mubr.bf16.mxu0 0
    %1195 = vmatmul.mubr.bf16.gmra.mxu0 %v1144
    %v1196 = vpop.f32.mrf.mxu0
    %v1197 = vadd.f32 %v1042, %v1196
    %v1198 = vpop.f32.mrf.mxu0
    %v1199 = vadd.f32 %v1046, %v1198
    %v1200 = vpop.f32.mrf.mxu0
    %v1201 = vadd.f32 %v1042, %v1200
    %v1202 = vpop.f32.mrf.mxu0
    %v1203 = vadd.f32 %v1046, %v1202
    %1204 = vmatprep.mubr.bf16.mxu0 0
    %1205 = vmatmul.mubr.bf16.gmra.mxu0 %v1147
    %v1206 = vpop.f32.mrf.mxu0
    %v1207 = vadd.f32 %v1042, %v1206
    %v1208 = vpop.f32.mrf.mxu0
    %v1209 = vadd.f32 %v1046, %v1208
    %v1210 = vpop.f32.mrf.mxu0
    %v1211 = vadd.f32 %v1042, %v1210
    %v1212 = vpop.f32.mrf.mxu0
    %v1213 = vadd.f32 %v1046, %v1212
    %1214 = vmatprep.mubr.bf16.mxu0 0
    %1215 = vmatmul.mubr.bf16.gmra.mxu0 %v1150
    %v1216 = vpop.f32.mrf.mxu0
    %v1217 = vadd.f32 %v1042, %v1216
    %v1218 = vpop.f32.mrf.mxu0
    %v1219 = vadd.f32 %v1046, %v1218
    %v1220 = vpop.f32.mrf.mxu0
    %v1221 = vadd.f32 %v1042, %v1220
    %v1222 = vpop.f32.mrf.mxu0
    %v1223 = vadd.f32 %v1046, %v1222
    %1224 = vdwg.mxu0
    %1225 = vmatprep.subr.bf16.mxu0 0
    %1226 = vmatpush1.bf16.msra.mxu0 0
    %1227 = vmatprep.subr.bf16.mxu0 0
    %1228 = vmatpush1.bf16.msra.mxu0 0
    %1229 = vmatprep.subr.bf16.mxu0 0
    %1230 = vmatpush1.bf16.msra.mxu0 0
    %1231 = vmatprep.subr.bf16.mxu0 0
    %1232 = vmatpush1.bf16.msra.mxu0 0
    %1233 = vmatprep.subr.bf16.mxu0 %v1122
    %1234 = vmatpush1.bf16.msra.mxu0 %v1121
    %1235 = vmatprep.subr.bf16.mxu0 %v1118
    %1236 = vmatpush1.bf16.msra.mxu0 %v1117
    %1237 = vmatprep.subr.bf16.mxu0 %v1114
    %1238 = vmatpush1.bf16.msra.mxu0 %v1113
    %1239 = vmatprep.subr.bf16.mxu0 %v1110
    %1240 = vmatpush1.bf16.msra.mxu0 %v1109
    %1241 = vmatprep.subr.bf16.mxu0 0
    %1242 = vmatpush2.bf16.msra.mxu0 0
    %1243 = vmatprep.subr.bf16.mxu0 0
    %1244 = vmatpush2.bf16.msra.mxu0 0
    %1245 = vmatprep.subr.bf16.mxu0 0
    %1246 = vmatpush2.bf16.msra.mxu0 0
    %1247 = vmatprep.subr.bf16.mxu0 0
    %1248 = vmatpush2.bf16.msra.mxu0 0
    %1249 = vmatprep.subr.bf16.mxu0 0
    %1250 = vmatpush2.bf16.msra.mxu0 0
    %1251 = vmatprep.subr.bf16.mxu0 0
    %1252 = vmatpush2.bf16.msra.mxu0 0
    %1253 = vmatprep.subr.bf16.mxu0 0
    %1254 = vmatpush2.bf16.msra.mxu0 0
    %1255 = vmatprep.subr.bf16.mxu0 0
    %1256 = vmatpush2.bf16.msra.mxu0 0
    %1257 = vmatprep.mubr.bf16.mxu0 0
    %1258 = vmatmul.mubr.bf16.gmra.mxu0 %v1141
    %v1259 = vpop.f32.mrf.mxu0
    %v1260 = vadd.f32 %v1050, %v1259
    %v1261 = vpop.f32.mrf.mxu0
    %v1262 = vadd.f32 %v1054, %v1261
    %v1263 = vpop.f32.mrf.mxu0
    %v1264 = vadd.f32 %v1050, %v1263
    %v1265 = vpop.f32.mrf.mxu0
    %v1266 = vadd.f32 %v1054, %v1265
    %1267 = vmatprep.mubr.bf16.mxu0 0
    %1268 = vmatmul.mubr.bf16.gmra.mxu0 %v1144
    %v1269 = vpop.f32.mrf.mxu0
    %v1270 = vadd.f32 %v1050, %v1269
    %v1271 = vpop.f32.mrf.mxu0
    %v1272 = vadd.f32 %v1054, %v1271
    %v1273 = vpop.f32.mrf.mxu0
    %v1274 = vadd.f32 %v1050, %v1273
    %v1275 = vpop.f32.mrf.mxu0
    %v1276 = vadd.f32 %v1054, %v1275
    %1277 = vmatprep.mubr.bf16.mxu0 0
    %1278 = vmatmul.mubr.bf16.gmra.mxu0 %v1147
    %v1279 = vpop.f32.mrf.mxu0
    %v1280 = vadd.f32 %v1050, %v1279
    %v1281 = vpop.f32.mrf.mxu0
    %v1282 = vadd.f32 %v1054, %v1281
    %v1283 = vpop.f32.mrf.mxu0
    %v1284 = vadd.f32 %v1050, %v1283
    %v1285 = vpop.f32.mrf.mxu0
    %v1286 = vadd.f32 %v1054, %v1285
    %1287 = vmatprep.mubr.bf16.mxu0 0
    %1288 = vmatmul.mubr.bf16.gmra.mxu0 %v1150
    %v1289 = vpop.f32.mrf.mxu0
    %v1290 = vadd.f32 %v1050, %v1289
    %v1291 = vpop.f32.mrf.mxu0
    %v1292 = vadd.f32 %v1054, %v1291
    %v1293 = vpop.f32.mrf.mxu0
    %v1294 = vadd.f32 %v1050, %v1293
    %v1295 = vpop.f32.mrf.mxu0
    %v1296 = vadd.f32 %v1054, %v1295
    %1297 = vdwg.mxu0
    %1298 = vst [vmem:[#allocation3] sm:$0xff] %v1187
    %1299 = vst [vmem:[#allocation3 + $0x8] sm:$0xff] %v1189
    %1300 = vst [vmem:[#allocation3 + $0x10] sm:$0xff] %v1260
    %1301 = vst [vmem:[#allocation3 + $0x18] sm:$0xff] %v1262
    %1302 = vst [vmem:[#allocation3 + $0x20] sm:$0xff] %v1191
    %1303 = vst [vmem:[#allocation3 + $0x28] sm:$0xff] %v1193
    %1304 = vst [vmem:[#allocation3 + $0x30] sm:$0xff] %v1264
    %1305 = vst [vmem:[#allocation3 + $0x38] sm:$0xff] %v1266
    %1306 = vst [vmem:[#allocation3 + $0x40] sm:$0xff] %v1197
    %1307 = vst [vmem:[#allocation3 + $0x48] sm:$0xff] %v1199
    %1308 = vst [vmem:[#allocation3 + $0x50] sm:$0xff] %v1270
    %1309 = vst [vmem:[#allocation3 + $0x58] sm:$0xff] %v1272
    %1310 = vst [vmem:[#allocation3 + $0x60] sm:$0xff] %v1201
    %1311 = vst [vmem:[#allocation3 + $0x68] sm:$0xff] %v1203
    %1312 = vst [vmem:[#allocation3 + $0x70] sm:$0xff] %v1274
    %1313 = vst [vmem:[#allocation3 + $0x78] sm:$0xff] %v1276
    %1314 = vst [vmem:[#allocation3 + $0x80] sm:$0xff] %v1207
    %1315 = vst [vmem:[#allocation3 + $0x88] sm:$0xff] %v1209
    %1316 = vst [vmem:[#allocation3 + $0x90] sm:$0xff] %v1280
    %1317 = vst [vmem:[#allocation3 + $0x98] sm:$0xff] %v1282
    %1318 = vst [vmem:[#allocation3 + $0xa0] sm:$0xff] %v1211
    %1319 = vst [vmem:[#allocation3 + $0xa8] sm:$0xff] %v1213
    %1320 = vst [vmem:[#allocation3 + $0xb0] sm:$0xff] %v1284
    %1321 = vst [vmem:[#allocation3 + $0xb8] sm:$0xff] %v1286
    %1322 = vst [vmem:[#allocation3 + $0xc0] sm:$0xff] %v1217
    %1323 = vst [vmem:[#allocation3 + $0xc8] sm:$0xff] %v1219
    %1324 = vst [vmem:[#allocation3 + $0xd0] sm:$0xff] %v1290
    %1325 = vst [vmem:[#allocation3 + $0xd8] sm:$0xff] %v1292
    %1326 = vst [vmem:[#allocation3 + $0xe0] sm:$0xff] %v1221
    %1327 = vst [vmem:[#allocation3 + $0xe8] sm:$0xff] %v1223
    %1328 = vst [vmem:[#allocation3 + $0xf0] sm:$0xff] %v1294
    %1329 = vst [vmem:[#allocation3 + $0xf8] sm:$0xff] %v1296
    %v1330 = vld [vmem:[#allocation3] sm:$0xff]
    %v1331 = vld [vmem:[#allocation3 + $0x8] sm:$0xff]
    %v1332 = vld [vmem:[#allocation3 + $0x10] sm:$0xff]
    %v1333 = vld [vmem:[#allocation3 + $0x18] sm:$0xff]
    %v1334 = vld [vmem:[#allocation3 + $0xe0] sm:$0xff]
    %v1335 = vld [vmem:[#allocation3 + $0xe8] sm:$0xff]
    %v1336 = vld [vmem:[#allocation3 + $0xf0] sm:$0xff]
    %v1337 = vld [vmem:[#allocation3 + $0xf8] sm:$0xff]
    %v1338 = vsel %vm1005, %v1330, %v1334
    %v1339 = vsel %vm1006, %v1331, %v1335
    %v1340 = vsel %vm1007, %v1332, %v1336
    %v1341 = vsel %vm1008, %v1333, %v1337
    %v1342 = vld [vmem:[#allocation9] sm:$0xff]
    %v1343 = vld [vmem:[#allocation9 + $0x8] sm:$0xff]
    %v1344 = vld [vmem:[#allocation9 + $0x10] sm:$0xff]
    %v1345 = vld [vmem:[#allocation9 + $0x18] sm:$0xff]
    %v1346 = vld [vmem:[#allocation9 + $0x20] sm:$0xff]
    %v1347 = vld [vmem:[#allocation9 + $0x28] sm:$0xff]
    %v1348 = vld [vmem:[#allocation9 + $0x30] sm:$0xff]
    %v1349 = vld [vmem:[#allocation9 + $0x38] sm:$0xff]
    %v1350 = vld [vmem:[#allocation9 + $0x40] sm:$0xff]
    %v1351 = vld [vmem:[#allocation9 + $0x48] sm:$0xff]
    %v1352 = vld [vmem:[#allocation9 + $0x50] sm:$0xff]
    %v1353 = vld [vmem:[#allocation9 + $0x58] sm:$0xff]
    %v1354 = vld [vmem:[#allocation9 + $0x60] sm:$0xff]
    %v1355 = vld [vmem:[#allocation9 + $0x68] sm:$0xff]
    %v1356 = vld [vmem:[#allocation9 + $0x70] sm:$0xff]
    %v1357 = vld [vmem:[#allocation9 + $0x78] sm:$0xff]
    %v1358 = vld [vmem:[#allocation9 + $0x80] sm:$0xff]
    %v1359 = vld [vmem:[#allocation9 + $0x88] sm:$0xff]
    %v1360 = vld [vmem:[#allocation9 + $0x90] sm:$0xff]
    %v1361 = vld [vmem:[#allocation9 + $0x98] sm:$0xff]
    %v1362 = vld [vmem:[#allocation9 + $0xa0] sm:$0xff]
    %v1363 = vld [vmem:[#allocation9 + $0xa8] sm:$0xff]
    %v1364 = vld [vmem:[#allocation9 + $0xb0] sm:$0xff]
    %v1365 = vld [vmem:[#allocation9 + $0xb8] sm:$0xff]
    %v1366 = vld [vmem:[#allocation9 + $0xc0] sm:$0xff]
    %v1367 = vld [vmem:[#allocation9 + $0xc8] sm:$0xff]
    %v1368 = vld [vmem:[#allocation9 + $0xd0] sm:$0xff]
    %v1369 = vld [vmem:[#allocation9 + $0xd8] sm:$0xff]
    %v1370 = vld [vmem:[#allocation9 + $0xe0] sm:$0xff]
    %v1371 = vld [vmem:[#allocation9 + $0xe8] sm:$0xff]
    %v1372 = vld [vmem:[#allocation9 + $0xf0] sm:$0xff]
    %v1373 = vld [vmem:[#allocation9 + $0xf8] sm:$0xff]
    %v1406 = vunpack.c.l.b16 %v1342
    %v1407 = vunpack.c.h.b16 %v1342
    %v1408 = vunpack.c.l.b16 %v1343
    %v1409 = vunpack.c.h.b16 %v1343
    %v1410 = vunpack.c.l.b16 %v1344
    %v1411 = vunpack.c.h.b16 %v1344
    %v1412 = vunpack.c.l.b16 %v1345
    %v1413 = vunpack.c.h.b16 %v1345
    %v1414 = vunpack.c.l.b16 %v1346
    %v1415 = vunpack.c.h.b16 %v1346
    %v1416 = vunpack.c.l.b16 %v1347
    %v1417 = vunpack.c.h.b16 %v1347
    %v1418 = vunpack.c.l.b16 %v1348
    %v1419 = vunpack.c.h.b16 %v1348
    %v1420 = vunpack.c.l.b16 %v1349
    %v1421 = vunpack.c.h.b16 %v1349
    %v1422 = vunpack.c.l.b16 %v1350
    %v1423 = vunpack.c.h.b16 %v1350
    %v1424 = vunpack.c.l.b16 %v1351
    %v1425 = vunpack.c.h.b16 %v1351
    %v1426 = vunpack.c.l.b16 %v1352
    %v1427 = vunpack.c.h.b16 %v1352
    %v1428 = vunpack.c.l.b16 %v1353
    %v1429 = vunpack.c.h.b16 %v1353
    %v1430 = vunpack.c.l.b16 %v1354
    %v1431 = vunpack.c.h.b16 %v1354
    %v1432 = vunpack.c.l.b16 %v1355
    %v1433 = vunpack.c.h.b16 %v1355
    %v1434 = vunpack.c.l.b16 %v1356
    %v1435 = vunpack.c.h.b16 %v1356
    %v1436 = vunpack.c.l.b16 %v1357
    %v1437 = vunpack.c.h.b16 %v1357
    %v1438 = vunpack.c.l.b16 %v1358
    %v1439 = vunpack.c.h.b16 %v1358
    %v1440 = vunpack.c.l.b16 %v1359
    %v1441 = vunpack.c.h.b16 %v1359
    %v1442 = vunpack.c.l.b16 %v1360
    %v1443 = vunpack.c.h.b16 %v1360
    %v1444 = vunpack.c.l.b16 %v1361
    %v1445 = vunpack.c.h.b16 %v1361
    %v1446 = vunpack.c.l.b16 %v1362
    %v1447 = vunpack.c.h.b16 %v1362
    %v1448 = vunpack.c.l.b16 %v1363
    %v1449 = vunpack.c.h.b16 %v1363
    %v1450 = vunpack.c.l.b16 %v1364
    %v1451 = vunpack.c.h.b16 %v1364
    %v1452 = vunpack.c.l.b16 %v1365
    %v1453 = vunpack.c.h.b16 %v1365
    %v1454 = vunpack.c.l.b16 %v1366
    %v1455 = vunpack.c.h.b16 %v1366
    %v1456 = vunpack.c.l.b16 %v1367
    %v1457 = vunpack.c.h.b16 %v1367
    %v1458 = vunpack.c.l.b16 %v1368
    %v1459 = vunpack.c.h.b16 %v1368
    %v1460 = vunpack.c.l.b16 %v1369
    %v1461 = vunpack.c.h.b16 %v1369
    %v1462 = vunpack.c.l.b16 %v1370
    %v1463 = vunpack.c.h.b16 %v1370
    %v1464 = vunpack.c.l.b16 %v1371
    %v1465 = vunpack.c.h.b16 %v1371
    %v1466 = vunpack.c.l.b16 %v1372
    %v1467 = vunpack.c.h.b16 %v1372
    %v1468 = vunpack.c.l.b16 %v1373
    %v1469 = vunpack.c.h.b16 %v1373
    %v1470 = vpack.c.b16 %v1410, %v1406
    %v1471 = vpack.c.b16 %v1411, %v1407
    %v1472 = vpack.c.b16 %v1412, %v1408
    %v1473 = vpack.c.b16 %v1413, %v1409
    %v1474 = vpack.c.b16 %v1418, %v1414
    %v1475 = vpack.c.b16 %v1419, %v1415
    %v1476 = vpack.c.b16 %v1420, %v1416
    %v1477 = vpack.c.b16 %v1421, %v1417
    %v1478 = vpack.c.b16 %v1426, %v1422
    %v1479 = vpack.c.b16 %v1427, %v1423
    %v1480 = vpack.c.b16 %v1428, %v1424
    %v1481 = vpack.c.b16 %v1429, %v1425
    %v1482 = vpack.c.b16 %v1434, %v1430
    %v1483 = vpack.c.b16 %v1435, %v1431
    %v1484 = vpack.c.b16 %v1436, %v1432
    %v1485 = vpack.c.b16 %v1437, %v1433
    %v1486 = vpack.c.b16 %v1442, %v1438
    %v1487 = vpack.c.b16 %v1443, %v1439
    %v1488 = vpack.c.b16 %v1444, %v1440
    %v1489 = vpack.c.b16 %v1445, %v1441
    %v1490 = vpack.c.b16 %v1450, %v1446
    %v1491 = vpack.c.b16 %v1451, %v1447
    %v1492 = vpack.c.b16 %v1452, %v1448
    %v1493 = vpack.c.b16 %v1453, %v1449
    %v1494 = vpack.c.b16 %v1458, %v1454
    %v1495 = vpack.c.b16 %v1459, %v1455
    %v1496 = vpack.c.b16 %v1460, %v1456
    %v1497 = vpack.c.b16 %v1461, %v1457
    %v1498 = vpack.c.b16 %v1466, %v1462
    %v1499 = vpack.c.b16 %v1467, %v1463
    %v1500 = vpack.c.b16 %v1468, %v1464
    %v1501 = vpack.c.b16 %v1469, %v1465
    %1534 = vmatprep.subr.bf16.mxu0 %v1499
    %1535 = vmatpush1.bf16.msra.mxu0 %v1498
    %1536 = vmatprep.subr.bf16.mxu0 %v1495
    %1537 = vmatpush1.bf16.msra.mxu0 %v1494
    %1538 = vmatprep.subr.bf16.mxu0 %v1491
    %1539 = vmatpush1.bf16.msra.mxu0 %v1490
    %1540 = vmatprep.subr.bf16.mxu0 %v1487
    %1541 = vmatpush1.bf16.msra.mxu0 %v1486
    %1542 = vmatprep.subr.bf16.mxu0 %v1483
    %1543 = vmatpush1.bf16.msra.mxu0 %v1482
    %1544 = vmatprep.subr.bf16.mxu0 %v1479
    %1545 = vmatpush1.bf16.msra.mxu0 %v1478
    %1546 = vmatprep.subr.bf16.mxu0 %v1475
    %1547 = vmatpush1.bf16.msra.mxu0 %v1474
    %1548 = vmatprep.subr.bf16.mxu0 %v1471
    %1549 = vmatpush1.bf16.msra.mxu0 %v1470
    %1550 = vmatprep.subr.bf16.mxu0 0
    %1551 = vmatpush2.bf16.msra.mxu0 0
    %1552 = vmatprep.subr.bf16.mxu0 0
    %1553 = vmatpush2.bf16.msra.mxu0 0
    %1554 = vmatprep.subr.bf16.mxu0 0
    %1555 = vmatpush2.bf16.msra.mxu0 0
    %1556 = vmatprep.subr.bf16.mxu0 0
    %1557 = vmatpush2.bf16.msra.mxu0 0
    %1558 = vmatprep.subr.bf16.mxu0 0
    %1559 = vmatpush2.bf16.msra.mxu0 0
    %1560 = vmatprep.subr.bf16.mxu0 0
    %1561 = vmatpush2.bf16.msra.mxu0 0
    %1562 = vmatprep.subr.bf16.mxu0 0
    %1563 = vmatpush2.bf16.msra.mxu0 0
    %1564 = vmatprep.subr.bf16.mxu0 0
    %1565 = vmatpush2.bf16.msra.mxu0 0
    %1566 = vmatprep.mubr.bf16.mxu0 0
    %1567 = vmatmul.mubr.bf16.gmra.mxu0 0
    %v1568 = vpop.f32.mrf.mxu0
    %v1569 = vadd.f32 0.0, %v1568
    %v1570 = vpop.f32.mrf.mxu0
    %v1571 = vadd.f32 0.0, %v1570
    %v1572 = vpop.f32.mrf.mxu0
    %v1573 = vpop.f32.mrf.mxu0
    %1574 = vdwg.mxu0
    %1575 = vmatprep.subr.bf16.mxu0 %v1501
    %1576 = vmatpush1.bf16.msra.mxu0 %v1500
    %1577 = vmatprep.subr.bf16.mxu0 %v1497
    %1578 = vmatpush1.bf16.msra.mxu0 %v1496
    %1579 = vmatprep.subr.bf16.mxu0 %v1493
    %1580 = vmatpush1.bf16.msra.mxu0 %v1492
    %1581 = vmatprep.subr.bf16.mxu0 %v1489
    %1582 = vmatpush1.bf16.msra.mxu0 %v1488
    %1583 = vmatprep.subr.bf16.mxu0 %v1485
    %1584 = vmatpush1.bf16.msra.mxu0 %v1484
    %1585 = vmatprep.subr.bf16.mxu0 %v1481
    %1586 = vmatpush1.bf16.msra.mxu0 %v1480
    %1587 = vmatprep.subr.bf16.mxu0 %v1477
    %1588 = vmatpush1.bf16.msra.mxu0 %v1476
    %1589 = vmatprep.subr.bf16.mxu0 %v1473
    %1590 = vmatpush1.bf16.msra.mxu0 %v1472
    %1591 = vmatprep.subr.bf16.mxu0 0
    %1592 = vmatpush2.bf16.msra.mxu0 0
    %1593 = vmatprep.subr.bf16.mxu0 0
    %1594 = vmatpush2.bf16.msra.mxu0 0
    %1595 = vmatprep.subr.bf16.mxu0 0
    %1596 = vmatpush2.bf16.msra.mxu0 0
    %1597 = vmatprep.subr.bf16.mxu0 0
    %1598 = vmatpush2.bf16.msra.mxu0 0
    %1599 = vmatprep.subr.bf16.mxu0 0
    %1600 = vmatpush2.bf16.msra.mxu0 0
    %1601 = vmatprep.subr.bf16.mxu0 0
    %1602 = vmatpush2.bf16.msra.mxu0 0
    %1603 = vmatprep.subr.bf16.mxu0 0
    %1604 = vmatpush2.bf16.msra.mxu0 0
    %1605 = vmatprep.subr.bf16.mxu0 0
    %1606 = vmatpush2.bf16.msra.mxu0 0
    %1607 = vmatprep.mubr.bf16.mxu0 0
    %1608 = vmatmul.mubr.bf16.gmra.mxu0 0
    %v1609 = vpop.f32.mrf.mxu0
    %v1610 = vadd.f32 0.0, %v1609
    %v1611 = vpop.f32.mrf.mxu0
    %v1612 = vadd.f32 0.0, %v1611
    %v1613 = vpop.f32.mrf.mxu0
    %v1614 = vpop.f32.mrf.mxu0
    %1615 = vdwg.mxu0
    %v1616 = vadd.f32 %v1338, %v1569
    %v1617 = vadd.f32 %v1339, %v1571
    %v1618 = vadd.f32 %v1340, %v1610
    %v1619 = vadd.f32 %v1341, %v1612
    %v1620 = vxor.u32 %v1616, 2147483648
    %v1621 = vmul.f32 %v1620, 1.442695
    %v1622 = vpow.pop %v1621
    %v1623 = vadd.f32 %v1622, 1.0
    %v1624 = vrcp.pop %v1623
    %v1625 = vmul.f32 1.0, %v1624
    %v1626 = vxor.u32 %v1617, 2147483648
    %v1627 = vmul.f32 %v1626, 1.442695
    %v1628 = vpow.pop %v1627
    %v1629 = vadd.f32 %v1628, 1.0
    %v1630 = vrcp.pop %v1629
    %v1631 = vmul.f32 1.0, %v1630
    %v1632 = vtanh.pop %v1618
    %v1633 = vxor.u32 %v1619, 2147483648
    %v1634 = vmul.f32 %v1633, 1.442695
    %v1635 = vpow.pop %v1634
    %v1636 = vadd.f32 %v1635, 1.0
    %v1637 = vrcp.pop %v1636
    %v1638 = vmul.f32 1.0, %v1637
    %v1639 = vmul.f32 %v1631, 0.0
    %v1640 = vmul.f32 %v1625, %v1632
    %v1641 = vadd.f32 %v1639, %v1640
    %v1642 = vtanh.pop %v1641
    %v1643 = vmul.f32 %v1638, %v1642
    %1644 = vst [vmem:[#allocation4] sm:$0xff] %v1643
    %1645 = vst [vmem:[#allocation5 + $0x38] sm:$0xff] %v1643
    %v1646 = vld [vmem:[#allocation3 + $0x20] sm:$0xff]
    %v1647 = vld [vmem:[#allocation3 + $0x28] sm:$0xff]
    %v1648 = vld [vmem:[#allocation3 + $0x30] sm:$0xff]
    %v1649 = vld [vmem:[#allocation3 + $0x38] sm:$0xff]
    %v1650 = vld [vmem:[#allocation3 + $0xc0] sm:$0xff]
    %v1651 = vld [vmem:[#allocation3 + $0xc8] sm:$0xff]
    %v1652 = vld [vmem:[#allocation3 + $0xd0] sm:$0xff]
    %v1653 = vld [vmem:[#allocation3 + $0xd8] sm:$0xff]
    %v1654 = vsel %vm1005, %v1646, %v1650
    %v1655 = vsel %vm1006, %v1647, %v1651
    %v1656 = vsel %vm1007, %v1648, %v1652
    %v1657 = vsel %vm1008, %v1649, %v1653
    %v1658 = vpack.c.bf16 %v1643, %v1643
    %v1659 = vld [vmem:[#allocation9] sm:$0xff]
    %v1660 = vld [vmem:[#allocation9 + $0x8] sm:$0xff]
    %v1661 = vld [vmem:[#allocation9 + $0x10] sm:$0xff]
    %v1662 = vld [vmem:[#allocation9 + $0x18] sm:$0xff]
    %v1663 = vld [vmem:[#allocation9 + $0x20] sm:$0xff]
    %v1664 = vld [vmem:[#allocation9 + $0x28] sm:$0xff]
    %v1665 = vld [vmem:[#allocation9 + $0x30] sm:$0xff]
    %v1666 = vld [vmem:[#allocation9 + $0x38] sm:$0xff]
    %v1667 = vld [vmem:[#allocation9 + $0x40] sm:$0xff]
    %v1668 = vld [vmem:[#allocation9 + $0x48] sm:$0xff]
    %v1669 = vld [vmem:[#allocation9 + $0x50] sm:$0xff]
    %v1670 = vld [vmem:[#allocation9 + $0x58] sm:$0xff]
    %v1671 = vld [vmem:[#allocation9 + $0x60] sm:$0xff]
    %v1672 = vld [vmem:[#allocation9 + $0x68] sm:$0xff]
    %v1673 = vld [vmem:[#allocation9 + $0x70] sm:$0xff]
    %v1674 = vld [vmem:[#allocation9 + $0x78] sm:$0xff]
    %v1675 = vld [vmem:[#allocation9 + $0x80] sm:$0xff]
    %v1676 = vld [vmem:[#allocation9 + $0x88] sm:$0xff]
    %v1677 = vld [vmem:[#allocation9 + $0x90] sm:$0xff]
    %v1678 = vld [vmem:[#allocation9 + $0x98] sm:$0xff]
    %v1679 = vld [vmem:[#allocation9 + $0xa0] sm:$0xff]
    %v1680 = vld [vmem:[#allocation9 + $0xa8] sm:$0xff]
    %v1681 = vld [vmem:[#allocation9 + $0xb0] sm:$0xff]
    %v1682 = vld [vmem:[#allocation9 + $0xb8] sm:$0xff]
    %v1683 = vld [vmem:[#allocation9 + $0xc0] sm:$0xff]
    %v1684 = vld [vmem:[#allocation9 + $0xc8] sm:$0xff]
    %v1685 = vld [vmem:[#allocation9 + $0xd0] sm:$0xff]
    %v1686 = vld [vmem:[#allocation9 + $0xd8] sm:$0xff]
    %v1687 = vld [vmem:[#allocation9 + $0xe0] sm:$0xff]
    %v1688 = vld [vmem:[#allocation9 + $0xe8] sm:$0xff]
    %v1689 = vld [vmem:[#allocation9 + $0xf0] sm:$0xff]
    %v1690 = vld [vmem:[#allocation9 + $0xf8] sm:$0xff]
    %v1723 = vunpack.c.l.b16 %v1659
    %v1724 = vunpack.c.h.b16 %v1659
    %v1725 = vunpack.c.l.b16 %v1660
    %v1726 = vunpack.c.h.b16 %v1660
    %v1727 = vunpack.c.l.b16 %v1661
    %v1728 = vunpack.c.h.b16 %v1661
    %v1729 = vunpack.c.l.b16 %v1662
    %v1730 = vunpack.c.h.b16 %v1662
    %v1731 = vunpack.c.l.b16 %v1663
    %v1732 = vunpack.c.h.b16 %v1663
    %v1733 = vunpack.c.l.b16 %v1664
    %v1734 = vunpack.c.h.b16 %v1664
    %v1735 = vunpack.c.l.b16 %v1665
    %v1736 = vunpack.c.h.b16 %v1665
    %v1737 = vunpack.c.l.b16 %v1666
    %v1738 = vunpack.c.h.b16 %v1666
    %v1739 = vunpack.c.l.b16 %v1667
    %v1740 = vunpack.c.h.b16 %v1667
    %v1741 = vunpack.c.l.b16 %v1668
    %v1742 = vunpack.c.h.b16 %v1668
    %v1743 = vunpack.c.l.b16 %v1669
    %v1744 = vunpack.c.h.b16 %v1669
    %v1745 = vunpack.c.l.b16 %v1670
    %v1746 = vunpack.c.h.b16 %v1670
    %v1747 = vunpack.c.l.b16 %v1671
    %v1748 = vunpack.c.h.b16 %v1671
    %v1749 = vunpack.c.l.b16 %v1672
    %v1750 = vunpack.c.h.b16 %v1672
    %v1751 = vunpack.c.l.b16 %v1673
    %v1752 = vunpack.c.h.b16 %v1673
    %v1753 = vunpack.c.l.b16 %v1674
    %v1754 = vunpack.c.h.b16 %v1674
    %v1755 = vunpack.c.l.b16 %v1675
    %v1756 = vunpack.c.h.b16 %v1675
    %v1757 = vunpack.c.l.b16 %v1676
    %v1758 = vunpack.c.h.b16 %v1676
    %v1759 = vunpack.c.l.b16 %v1677
    %v1760 = vunpack.c.h.b16 %v1677
    %v1761 = vunpack.c.l.b16 %v1678
    %v1762 = vunpack.c.h.b16 %v1678
    %v1763 = vunpack.c.l.b16 %v1679
    %v1764 = vunpack.c.h.b16 %v1679
    %v1765 = vunpack.c.l.b16 %v1680
    %v1766 = vunpack.c.h.b16 %v1680
    %v1767 = vunpack.c.l.b16 %v1681
    %v1768 = vunpack.c.h.b16 %v1681
    %v1769 = vunpack.c.l.b16 %v1682
    %v1770 = vunpack.c.h.b16 %v1682
    %v1771 = vunpack.c.l.b16 %v1683
    %v1772 = vunpack.c.h.b16 %v1683
    %v1773 = vunpack.c.l.b16 %v1684
    %v1774 = vunpack.c.h.b16 %v1684
    %v1775 = vunpack.c.l.b16 %v1685
    %v1776 = vunpack.c.h.b16 %v1685
    %v1777 = vunpack.c.l.b16 %v1686
    %v1778 = vunpack.c.h.b16 %v1686
    %v1779 = vunpack.c.l.b16 %v1687
    %v1780 = vunpack.c.h.b16 %v1687
    %v1781 = vunpack.c.l.b16 %v1688
    %v1782 = vunpack.c.h.b16 %v1688
    %v1783 = vunpack.c.l.b16 %v1689
    %v1784 = vunpack.c.h.b16 %v1689
    %v1785 = vunpack.c.l.b16 %v1690
    %v1786 = vunpack.c.h.b16 %v1690
    %v1787 = vpack.c.b16 %v1727, %v1723
    %v1788 = vpack.c.b16 %v1728, %v1724
    %v1789 = vpack.c.b16 %v1729, %v1725
    %v1790 = vpack.c.b16 %v1730, %v1726
    %v1791 = vpack.c.b16 %v1735, %v1731
    %v1792 = vpack.c.b16 %v1736, %v1732
    %v1793 = vpack.c.b16 %v1737, %v1733
    %v1794 = vpack.c.b16 %v1738, %v1734
    %v1795 = vpack.c.b16 %v1743, %v1739
    %v1796 = vpack.c.b16 %v1744, %v1740
    %v1797 = vpack.c.b16 %v1745, %v1741
    %v1798 = vpack.c.b16 %v1746, %v1742
    %v1799 = vpack.c.b16 %v1751, %v1747
    %v1800 = vpack.c.b16 %v1752, %v1748
    %v1801 = vpack.c.b16 %v1753, %v1749
    %v1802 = vpack.c.b16 %v1754, %v1750
    %v1803 = vpack.c.b16 %v1759, %v1755
    %v1804 = vpack.c.b16 %v1760, %v1756
    %v1805 = vpack.c.b16 %v1761, %v1757
    %v1806 = vpack.c.b16 %v1762, %v1758
    %v1807 = vpack.c.b16 %v1767, %v1763
    %v1808 = vpack.c.b16 %v1768, %v1764
    %v1809 = vpack.c.b16 %v1769, %v1765
    %v1810 = vpack.c.b16 %v1770, %v1766
    %v1811 = vpack.c.b16 %v1775, %v1771
    %v1812 = vpack.c.b16 %v1776, %v1772
    %v1813 = vpack.c.b16 %v1777, %v1773
    %v1814 = vpack.c.b16 %v1778, %v1774
    %v1815 = vpack.c.b16 %v1783, %v1779
    %v1816 = vpack.c.b16 %v1784, %v1780
    %v1817 = vpack.c.b16 %v1785, %v1781
    %v1818 = vpack.c.b16 %v1786, %v1782
    %1851 = vmatprep.subr.bf16.mxu0 %v1816
    %1852 = vmatpush1.bf16.msra.mxu0 %v1815
    %1853 = vmatprep.subr.bf16.mxu0 %v1812
    %1854 = vmatpush1.bf16.msra.mxu0 %v1811
    %1855 = vmatprep.subr.bf16.mxu0 %v1808
    %1856 = vmatpush1.bf16.msra.mxu0 %v1807
    %1857 = vmatprep.subr.bf16.mxu0 %v1804
    %1858 = vmatpush1.bf16.msra.mxu0 %v1803
    %1859 = vmatprep.subr.bf16.mxu0 %v1800
    %1860 = vmatpush1.bf16.msra.mxu0 %v1799
    %1861 = vmatprep.subr.bf16.mxu0 %v1796
    %1862 = vmatpush1.bf16.msra.mxu0 %v1795
    %1863 = vmatprep.subr.bf16.mxu0 %v1792
    %1864 = vmatpush1.bf16.msra.mxu0 %v1791
    %1865 = vmatprep.subr.bf16.mxu0 %v1788
    %1866 = vmatpush1.bf16.msra.mxu0 %v1787
    %1867 = vmatprep.subr.bf16.mxu0 0
    %1868 = vmatpush2.bf16.msra.mxu0 0
    %1869 = vmatprep.subr.bf16.mxu0 0
    %1870 = vmatpush2.bf16.msra.mxu0 0
    %1871 = vmatprep.subr.bf16.mxu0 0
    %1872 = vmatpush2.bf16.msra.mxu0 0
    %1873 = vmatprep.subr.bf16.mxu0 0
    %1874 = vmatpush2.bf16.msra.mxu0 0
    %1875 = vmatprep.subr.bf16.mxu0 0
    %1876 = vmatpush2.bf16.msra.mxu0 0
    %1877 = vmatprep.subr.bf16.mxu0 0
    %1878 = vmatpush2.bf16.msra.mxu0 0
    %1879 = vmatprep.subr.bf16.mxu0 0
    %1880 = vmatpush2.bf16.msra.mxu0 0
    %1881 = vmatprep.subr.bf16.mxu0 0
    %1882 = vmatpush2.bf16.msra.mxu0 0
    %1883 = vmatprep.mubr.bf16.mxu0 0
    %1884 = vmatmul.mubr.bf16.gmra.mxu0 %v1658
    %v1885 = vpop.f32.mrf.mxu0
    %v1886 = vadd.f32 0.0, %v1885
    %v1887 = vpop.f32.mrf.mxu0
    %v1888 = vadd.f32 0.0, %v1887
    %v1889 = vpop.f32.mrf.mxu0
    %v1890 = vpop.f32.mrf.mxu0
    %1891 = vdwg.mxu0
    %1892 = vmatprep.subr.bf16.mxu0 %v1818
    %1893 = vmatpush1.bf16.msra.mxu0 %v1817
    %1894 = vmatprep.subr.bf16.mxu0 %v1814
    %1895 = vmatpush1.bf16.msra.mxu0 %v1813
    %1896 = vmatprep.subr.bf16.mxu0 %v1810
    %1897 = vmatpush1.bf16.msra.mxu0 %v1809
    %1898 = vmatprep.subr.bf16.mxu0 %v1806
    %1899 = vmatpush1.bf16.msra.mxu0 %v1805
    %1900 = vmatprep.subr.bf16.mxu0 %v1802
    %1901 = vmatpush1.bf16.msra.mxu0 %v1801
    %1902 = vmatprep.subr.bf16.mxu0 %v1798
    %1903 = vmatpush1.bf16.msra.mxu0 %v1797
    %1904 = vmatprep.subr.bf16.mxu0 %v1794
    %1905 = vmatpush1.bf16.msra.mxu0 %v1793
    %1906 = vmatprep.subr.bf16.mxu0 %v1790
    %1907 = vmatpush1.bf16.msra.mxu0 %v1789
    %1908 = vmatprep.subr.bf16.mxu0 0
    %1909 = vmatpush2.bf16.msra.mxu0 0
    %1910 = vmatprep.subr.bf16.mxu0 0
    %1911 = vmatpush2.bf16.msra.mxu0 0
    %1912 = vmatprep.subr.bf16.mxu0 0
    %1913 = vmatpush2.bf16.msra.mxu0 0
    %1914 = vmatprep.subr.bf16.mxu0 0
    %1915 = vmatpush2.bf16.msra.mxu0 0
    %1916 = vmatprep.subr.bf16.mxu0 0
    %1917 = vmatpush2.bf16.msra.mxu0 0
    %1918 = vmatprep.subr.bf16.mxu0 0
    %1919 = vmatpush2.bf16.msra.mxu0 0
    %1920 = vmatprep.subr.bf16.mxu0 0
    %1921 = vmatpush2.bf16.msra.mxu0 0
    %1922 = vmatprep.subr.bf16.mxu0 0
    %1923 = vmatpush2.bf16.msra.mxu0 0
    %1924 = vmatprep.mubr.bf16.mxu0 0
    %1925 = vmatmul.mubr.bf16.gmra.mxu0 %v1658
    %v1926 = vpop.f32.mrf.mxu0
    %v1927 = vadd.f32 0.0, %v1926
    %v1928 = vpop.f32.mrf.mxu0
    %v1929 = vadd.f32 0.0, %v1928
    %v1930 = vpop.f32.mrf.mxu0
    %v1931 = vpop.f32.mrf.mxu0
    %1932 = vdwg.mxu0
    %v1933 = vadd.f32 %v1654, %v1886
    %v1934 = vadd.f32 %v1655, %v1888
    %v1935 = vadd.f32 %v1656, %v1927
    %v1936 = vadd.f32 %v1657, %v1929
    %v1937 = vxor.u32 %v1933, 2147483648
    %v1938 = vmul.f32 %v1937, 1.442695
    %v1939 = vpow.pop %v1938
    %v1940 = vadd.f32 %v1939, 1.0
    %v1941 = vrcp.pop %v1940
    %v1942 = vmul.f32 1.0, %v1941
    %v1943 = vxor.u32 %v1934, 2147483648
    %v1944 = vmul.f32 %v1943, 1.442695
    %v1945 = vpow.pop %v1944
    %v1946 = vadd.f32 %v1945, 1.0
    %v1947 = vrcp.pop %v1946
    %v1948 = vmul.f32 1.0, %v1947
    %v1949 = vtanh.pop %v1935
    %v1950 = vxor.u32 %v1936, 2147483648
    %v1951 = vmul.f32 %v1950, 1.442695
    %v1952 = vpow.pop %v1951
    %v1953 = vadd.f32 %v1952, 1.0
    %v1954 = vrcp.pop %v1953
    %v1955 = vmul.f32 1.0, %v1954
    %v1956 = vmul.f32 %v1948, %v1641
    %v1957 = vmul.f32 %v1942, %v1949
    %v1958 = vadd.f32 %v1956, %v1957
    %v1959 = vtanh.pop %v1958
    %v1960 = vmul.f32 %v1955, %v1959
    %1961 = vst [vmem:[#allocation4 + $0x8] sm:$0xff] %v1960
    %1962 = vst [vmem:[#allocation5 + $0x30] sm:$0xff] %v1960
    %v1963 = vld [vmem:[#allocation3 + $0x40] sm:$0xff]
    %v1964 = vld [vmem:[#allocation3 + $0x48] sm:$0xff]
    %v1965 = vld [vmem:[#allocation3 + $0x50] sm:$0xff]
    %v1966 = vld [vmem:[#allocation3 + $0x58] sm:$0xff]
    %v1967 = vld [vmem:[#allocation3 + $0xa0] sm:$0xff]
    %v1968 = vld [vmem:[#allocation3 + $0xa8] sm:$0xff]
    %v1969 = vld [vmem:[#allocation3 + $0xb0] sm:$0xff]
    %v1970 = vld [vmem:[#allocation3 + $0xb8] sm:$0xff]
    %v1971 = vsel %vm1005, %v1963, %v1967
    %v1972 = vsel %vm1006, %v1964, %v1968
    %v1973 = vsel %vm1007, %v1965, %v1969
    %v1974 = vsel %vm1008, %v1966, %v1970
    %v1975 = vpack.c.bf16 %v1960, %v1960
    %v1976 = vld [vmem:[#allocation9] sm:$0xff]
    %v1977 = vld [vmem:[#allocation9 + $0x8] sm:$0xff]
    %v1978 = vld [vmem:[#allocation9 + $0x10] sm:$0xff]
    %v1979 = vld [vmem:[#allocation9 + $0x18] sm:$0xff]
    %v1980 = vld [vmem:[#allocation9 + $0x20] sm:$0xff]
    %v1981 = vld [vmem:[#allocation9 + $0x28] sm:$0xff]
    %v1982 = vld [vmem:[#allocation9 + $0x30] sm:$0xff]
    %v1983 = vld [vmem:[#allocation9 + $0x38] sm:$0xff]
    %v1984 = vld [vmem:[#allocation9 + $0x40] sm:$0xff]
    %v1985 = vld [vmem:[#allocation9 + $0x48] sm:$0xff]
    %v1986 = vld [vmem:[#allocation9 + $0x50] sm:$0xff]
    %v1987 = vld [vmem:[#allocation9 + $0x58] sm:$0xff]
    %v1988 = vld [vmem:[#allocation9 + $0x60] sm:$0xff]
    %v1989 = vld [vmem:[#allocation9 + $0x68] sm:$0xff]
    %v1990 = vld [vmem:[#allocation9 + $0x70] sm:$0xff]
    %v1991 = vld [vmem:[#allocation9 + $0x78] sm:$0xff]
    %v1992 = vld [vmem:[#allocation9 + $0x80] sm:$0xff]
    %v1993 = vld [vmem:[#allocation9 + $0x88] sm:$0xff]
    %v1994 = vld [vmem:[#allocation9 + $0x90] sm:$0xff]
    %v1995 = vld [vmem:[#allocation9 + $0x98] sm:$0xff]
    %v1996 = vld [vmem:[#allocation9 + $0xa0] sm:$0xff]
    %v1997 = vld [vmem:[#allocation9 + $0xa8] sm:$0xff]
    %v1998 = vld [vmem:[#allocation9 + $0xb0] sm:$0xff]
    %v1999 = vld [vmem:[#allocation9 + $0xb8] sm:$0xff]
    %v2000 = vld [vmem:[#allocation9 + $0xc0] sm:$0xff]
    %v2001 = vld [vmem:[#allocation9 + $0xc8] sm:$0xff]
    %v2002 = vld [vmem:[#allocation9 + $0xd0] sm:$0xff]
    %v2003 = vld [vmem:[#allocation9 + $0xd8] sm:$0xff]
    %v2004 = vld [vmem:[#allocation9 + $0xe0] sm:$0xff]
    %v2005 = vld [vmem:[#allocation9 + $0xe8] sm:$0xff]
    %v2006 = vld [vmem:[#allocation9 + $0xf0] sm:$0xff]
    %v2007 = vld [vmem:[#allocation9 + $0xf8] sm:$0xff]
    %v2040 = vunpack.c.l.b16 %v1976
    %v2041 = vunpack.c.h.b16 %v1976
    %v2042 = vunpack.c.l.b16 %v1977
    %v2043 = vunpack.c.h.b16 %v1977
    %v2044 = vunpack.c.l.b16 %v1978
    %v2045 = vunpack.c.h.b16 %v1978
    %v2046 = vunpack.c.l.b16 %v1979
    %v2047 = vunpack.c.h.b16 %v1979
    %v2048 = vunpack.c.l.b16 %v1980
    %v2049 = vunpack.c.h.b16 %v1980
    %v2050 = vunpack.c.l.b16 %v1981
    %v2051 = vunpack.c.h.b16 %v1981
    %v2052 = vunpack.c.l.b16 %v1982
    %v2053 = vunpack.c.h.b16 %v1982
    %v2054 = vunpack.c.l.b16 %v1983
    %v2055 = vunpack.c.h.b16 %v1983
    %v2056 = vunpack.c.l.b16 %v1984
    %v2057 = vunpack.c.h.b16 %v1984
    %v2058 = vunpack.c.l.b16 %v1985
    %v2059 = vunpack.c.h.b16 %v1985
    %v2060 = vunpack.c.l.b16 %v1986
    %v2061 = vunpack.c.h.b16 %v1986
    %v2062 = vunpack.c.l.b16 %v1987
    %v2063 = vunpack.c.h.b16 %v1987
    %v2064 = vunpack.c.l.b16 %v1988
    %v2065 = vunpack.c.h.b16 %v1988
    %v2066 = vunpack.c.l.b16 %v1989
    %v2067 = vunpack.c.h.b16 %v1989
    %v2068 = vunpack.c.l.b16 %v1990
    %v2069 = vunpack.c.h.b16 %v1990
    %v2070 = vunpack.c.l.b16 %v1991
    %v2071 = vunpack.c.h.b16 %v1991
    %v2072 = vunpack.c.l.b16 %v1992
    %v2073 = vunpack.c.h.b16 %v1992
    %v2074 = vunpack.c.l.b16 %v1993
    %v2075 = vunpack.c.h.b16 %v1993
    %v2076 = vunpack.c.l.b16 %v1994
    %v2077 = vunpack.c.h.b16 %v1994
    %v2078 = vunpack.c.l.b16 %v1995
    %v2079 = vunpack.c.h.b16 %v1995
    %v2080 = vunpack.c.l.b16 %v1996
    %v2081 = vunpack.c.h.b16 %v1996
    %v2082 = vunpack.c.l.b16 %v1997
    %v2083 = vunpack.c.h.b16 %v1997
    %v2084 = vunpack.c.l.b16 %v1998
    %v2085 = vunpack.c.h.b16 %v1998
    %v2086 = vunpack.c.l.b16 %v1999
    %v2087 = vunpack.c.h.b16 %v1999
    %v2088 = vunpack.c.l.b16 %v2000
    %v2089 = vunpack.c.h.b16 %v2000
    %v2090 = vunpack.c.l.b16 %v2001
    %v2091 = vunpack.c.h.b16 %v2001
    %v2092 = vunpack.c.l.b16 %v2002
    %v2093 = vunpack.c.h.b16 %v2002
    %v2094 = vunpack.c.l.b16 %v2003
    %v2095 = vunpack.c.h.b16 %v2003
    %v2096 = vunpack.c.l.b16 %v2004
    %v2097 = vunpack.c.h.b16 %v2004
    %v2098 = vunpack.c.l.b16 %v2005
    %v2099 = vunpack.c.h.b16 %v2005
    %v2100 = vunpack.c.l.b16 %v2006
    %v2101 = vunpack.c.h.b16 %v2006
    %v2102 = vunpack.c.l.b16 %v2007
    %v2103 = vunpack.c.h.b16 %v2007
    %v2104 = vpack.c.b16 %v2044, %v2040
    %v2105 = vpack.c.b16 %v2045, %v2041
    %v2106 = vpack.c.b16 %v2046, %v2042
    %v2107 = vpack.c.b16 %v2047, %v2043
    %v2108 = vpack.c.b16 %v2052, %v2048
    %v2109 = vpack.c.b16 %v2053, %v2049
    %v2110 = vpack.c.b16 %v2054, %v2050
    %v2111 = vpack.c.b16 %v2055, %v2051
    %v2112 = vpack.c.b16 %v2060, %v2056
    %v2113 = vpack.c.b16 %v2061, %v2057
    %v2114 = vpack.c.b16 %v2062, %v2058
    %v2115 = vpack.c.b16 %v2063, %v2059
    %v2116 = vpack.c.b16 %v2068, %v2064
    %v2117 = vpack.c.b16 %v2069, %v2065
    %v2118 = vpack.c.b16 %v2070, %v2066
    %v2119 = vpack.c.b16 %v2071, %v2067
    %v2120 = vpack.c.b16 %v2076, %v2072
    %v2121 = vpack.c.b16 %v2077, %v2073
    %v2122 = vpack.c.b16 %v2078, %v2074
    %v2123 = vpack.c.b16 %v2079, %v2075
    %v2124 = vpack.c.b16 %v2084, %v2080
    %v2125 = vpack.c.b16 %v2085, %v2081
    %v2126 = vpack.c.b16 %v2086, %v2082
    %v2127 = vpack.c.b16 %v2087, %v2083
    %v2128 = vpack.c.b16 %v2092, %v2088
    %v2129 = vpack.c.b16 %v2093, %v2089
    %v2130 = vpack.c.b16 %v2094, %v2090
    %v2131 = vpack.c.b16 %v2095, %v2091
    %v2132 = vpack.c.b16 %v2100, %v2096
    %v2133 = vpack.c.b16 %v2101, %v2097
    %v2134 = vpack.c.b16 %v2102, %v2098
    %v2135 = vpack.c.b16 %v2103, %v2099
    %2168 = vmatprep.subr.bf16.mxu0 %v2133
    %2169 = vmatpush1.bf16.msra.mxu0 %v2132
    %2170 = vmatprep.subr.bf16.mxu0 %v2129
    %2171 = vmatpush1.bf16.msra.mxu0 %v2128
    %2172 = vmatprep.subr.bf16.mxu0 %v2125
    %2173 = vmatpush1.bf16.msra.mxu0 %v2124
    %2174 = vmatprep.subr.bf16.mxu0 %v2121
    %2175 = vmatpush1.bf16.msra.mxu0 %v2120
    %2176 = vmatprep.subr.bf16.mxu0 %v2117
    %2177 = vmatpush1.bf16.msra.mxu0 %v2116
    %2178 = vmatprep.subr.bf16.mxu0 %v2113
    %2179 = vmatpush1.bf16.msra.mxu0 %v2112
    %2180 = vmatprep.subr.bf16.mxu0 %v2109
    %2181 = vmatpush1.bf16.msra.mxu0 %v2108
    %2182 = vmatprep.subr.bf16.mxu0 %v2105
    %2183 = vmatpush1.bf16.msra.mxu0 %v2104
    %2184 = vmatprep.subr.bf16.mxu0 0
    %2185 = vmatpush2.bf16.msra.mxu0 0
    %2186 = vmatprep.subr.bf16.mxu0 0
    %2187 = vmatpush2.bf16.msra.mxu0 0
    %2188 = vmatprep.subr.bf16.mxu0 0
    %2189 = vmatpush2.bf16.msra.mxu0 0
    %2190 = vmatprep.subr.bf16.mxu0 0
    %2191 = vmatpush2.bf16.msra.mxu0 0
    %2192 = vmatprep.subr.bf16.mxu0 0
    %2193 = vmatpush2.bf16.msra.mxu0 0
    %2194 = vmatprep.subr.bf16.mxu0 0
    %2195 = vmatpush2.bf16.msra.mxu0 0
    %2196 = vmatprep.subr.bf16.mxu0 0
    %2197 = vmatpush2.bf16.msra.mxu0 0
    %2198 = vmatprep.subr.bf16.mxu0 0
    %2199 = vmatpush2.bf16.msra.mxu0 0
    %2200 = vmatprep.mubr.bf16.mxu0 0
    %2201 = vmatmul.mubr.bf16.gmra.mxu0 %v1975
    %v2202 = vpop.f32.mrf.mxu0
    %v2203 = vadd.f32 0.0, %v2202
    %v2204 = vpop.f32.mrf.mxu0
    %v2205 = vadd.f32 0.0, %v2204
    %v2206 = vpop.f32.mrf.mxu0
    %v2207 = vpop.f32.mrf.mxu0
    %2208 = vdwg.mxu0
    %2209 = vmatprep.subr.bf16.mxu0 %v2135
    %2210 = vmatpush1.bf16.msra.mxu0 %v2134
    %2211 = vmatprep.subr.bf16.mxu0 %v2131
    %2212 = vmatpush1.bf16.msra.mxu0 %v2130
    %2213 = vmatprep.subr.bf16.mxu0 %v2127
    %2214 = vmatpush1.bf16.msra.mxu0 %v2126
    %2215 = vmatprep.subr.bf16.mxu0 %v2123
    %2216 = vmatpush1.bf16.msra.mxu0 %v2122
    %2217 = vmatprep.subr.bf16.mxu0 %v2119
    %2218 = vmatpush1.bf16.msra.mxu0 %v2118
    %2219 = vmatprep.subr.bf16.mxu0 %v2115
    %2220 = vmatpush1.bf16.msra.mxu0 %v2114
    %2221 = vmatprep.subr.bf16.mxu0 %v2111
    %2222 = vmatpush1.bf16.msra.mxu0 %v2110
    %2223 = vmatprep.subr.bf16.mxu0 %v2107
    %2224 = vmatpush1.bf16.msra.mxu0 %v2106
    %2225 = vmatprep.subr.bf16.mxu0 0
    %2226 = vmatpush2.bf16.msra.mxu0 0
    %2227 = vmatprep.subr.bf16.mxu0 0
    %2228 = vmatpush2.bf16.msra.mxu0 0
    %2229 = vmatprep.subr.bf16.mxu0 0
    %2230 = vmatpush2.bf16.msra.mxu0 0
    %2231 = vmatprep.subr.bf16.mxu0 0
    %2232 = vmatpush2.bf16.msra.mxu0 0
    %2233 = vmatprep.subr.bf16.mxu0 0
    %2234 = vmatpush2.bf16.msra.mxu0 0
    %2235 = vmatprep.subr.bf16.mxu0 0
    %2236 = vmatpush2.bf16.msra.mxu0 0
    %2237 = vmatprep.subr.bf16.mxu0 0
    %2238 = vmatpush2.bf16.msra.mxu0 0
    %2239 = vmatprep.subr.bf16.mxu0 0
    %2240 = vmatpush2.bf16.msra.mxu0 0
    %2241 = vmatprep.mubr.bf16.mxu0 0
    %2242 = vmatmul.mubr.bf16.gmra.mxu0 %v1975
    %v2243 = vpop.f32.mrf.mxu0
    %v2244 = vadd.f32 0.0, %v2243
    %v2245 = vpop.f32.mrf.mxu0
    %v2246 = vadd.f32 0.0, %v2245
    %v2247 = vpop.f32.mrf.mxu0
    %v2248 = vpop.f32.mrf.mxu0
    %2249 = vdwg.mxu0
    %v2250 = vadd.f32 %v1971, %v2203
    %v2251 = vadd.f32 %v1972, %v2205
    %v2252 = vadd.f32 %v1973, %v2244
    %v2253 = vadd.f32 %v1974, %v2246
    %v2254 = vxor.u32 %v2250, 2147483648
    %v2255 = vmul.f32 %v2254, 1.442695
    %v2256 = vpow.pop %v2255
    %v2257 = vadd.f32 %v2256, 1.0
    %v2258 = vrcp.pop %v2257
    %v2259 = vmul.f32 1.0, %v2258
    %v2260 = vxor.u32 %v2251, 2147483648
    %v2261 = vmul.f32 %v2260, 1.442695
    %v2262 = vpow.pop %v2261
    %v2263 = vadd.f32 %v2262, 1.0
    %v2264 = vrcp.pop %v2263
    %v2265 = vmul.f32 1.0, %v2264
    %v2266 = vtanh.pop %v2252
    %v2267 = vxor.u32 %v2253, 2147483648
    %v2268 = vmul.f32 %v2267, 1.442695
    %v2269 = vpow.pop %v2268
    %v2270 = vadd.f32 %v2269, 1.0
    %v2271 = vrcp.pop %v2270
    %v2272 = vmul.f32 1.0, %v2271
    %v2273 = vmul.f32 %v2265, %v1958
    %v2274 = vmul.f32 %v2259, %v2266
    %v2275 = vadd.f32 %v2273, %v2274
    %v2276 = vtanh.pop %v2275
    %v2277 = vmul.f32 %v2272, %v2276
    %2278 = vst [vmem:[#allocation4 + $0x10] sm:$0xff] %v2277
    %2279 = vst [vmem:[#allocation5 + $0x28] sm:$0xff] %v2277
    %v2280 = vld [vmem:[#allocation3 + $0x60] sm:$0xff]
    %v2281 = vld [vmem:[#allocation3 + $0x68] sm:$0xff]
    %v2282 = vld [vmem:[#allocation3 + $0x70] sm:$0xff]
    %v2283 = vld [vmem:[#allocation3 + $0x78] sm:$0xff]
    %v2284 = vld [vmem:[#allocation3 + $0x80] sm:$0xff]
    %v2285 = vld [vmem:[#allocation3 + $0x88] sm:$0xff]
    %v2286 = vld [vmem:[#allocation3 + $0x90] sm:$0xff]
    %v2287 = vld [vmem:[#allocation3 + $0x98] sm:$0xff]
    %v2288 = vsel %vm1005, %v2280, %v2284
    %v2289 = vsel %vm1006, %v2281, %v2285
    %v2290 = vsel %vm1007, %v2282, %v2286
    %v2291 = vsel %vm1008, %v2283, %v2287
    %v2292 = vpack.c.bf16 %v2277, %v2277
    %v2293 = vld [vmem:[#allocation9] sm:$0xff]
    %v2294 = vld [vmem:[#allocation9 + $0x8] sm:$0xff]
    %v2295 = vld [vmem:[#allocation9 + $0x10] sm:$0xff]
    %v2296 = vld [vmem:[#allocation9 + $0x18] sm:$0xff]
    %v2297 = vld [vmem:[#allocation9 + $0x20] sm:$0xff]
    %v2298 = vld [vmem:[#allocation9 + $0x28] sm:$0xff]
    %v2299 = vld [vmem:[#allocation9 + $0x30] sm:$0xff]
    %v2300 = vld [vmem:[#allocation9 + $0x38] sm:$0xff]
    %v2301 = vld [vmem:[#allocation9 + $0x40] sm:$0xff]
    %v2302 = vld [vmem:[#allocation9 + $0x48] sm:$0xff]
    %v2303 = vld [vmem:[#allocation9 + $0x50] sm:$0xff]
    %v2304 = vld [vmem:[#allocation9 + $0x58] sm:$0xff]
    %v2305 = vld [vmem:[#allocation9 + $0x60] sm:$0xff]
    %v2306 = vld [vmem:[#allocation9 + $0x68] sm:$0xff]
    %v2307 = vld [vmem:[#allocation9 + $0x70] sm:$0xff]
    %v2308 = vld [vmem:[#allocation9 + $0x78] sm:$0xff]
    %v2309 = vld [vmem:[#allocation9 + $0x80] sm:$0xff]
    %v2310 = vld [vmem:[#allocation9 + $0x88] sm:$0xff]
    %v2311 = vld [vmem:[#allocation9 + $0x90] sm:$0xff]
    %v2312 = vld [vmem:[#allocation9 + $0x98] sm:$0xff]
    %v2313 = vld [vmem:[#allocation9 + $0xa0] sm:$0xff]
    %v2314 = vld [vmem:[#allocation9 + $0xa8] sm:$0xff]
    %v2315 = vld [vmem:[#allocation9 + $0xb0] sm:$0xff]
    %v2316 = vld [vmem:[#allocation9 + $0xb8] sm:$0xff]
    %v2317 = vld [vmem:[#allocation9 + $0xc0] sm:$0xff]
    %v2318 = vld [vmem:[#allocation9 + $0xc8] sm:$0xff]
    %v2319 = vld [vmem:[#allocation9 + $0xd0] sm:$0xff]
    %v2320 = vld [vmem:[#allocation9 + $0xd8] sm:$0xff]
    %v2321 = vld [vmem:[#allocation9 + $0xe0] sm:$0xff]
    %v2322 = vld [vmem:[#allocation9 + $0xe8] sm:$0xff]
    %v2323 = vld [vmem:[#allocation9 + $0xf0] sm:$0xff]
    %v2324 = vld [vmem:[#allocation9 + $0xf8] sm:$0xff]
    %v2357 = vunpack.c.l.b16 %v2293
    %v2358 = vunpack.c.h.b16 %v2293
    %v2359 = vunpack.c.l.b16 %v2294
    %v2360 = vunpack.c.h.b16 %v2294
    %v2361 = vunpack.c.l.b16 %v2295
    %v2362 = vunpack.c.h.b16 %v2295
    %v2363 = vunpack.c.l.b16 %v2296
    %v2364 = vunpack.c.h.b16 %v2296
    %v2365 = vunpack.c.l.b16 %v2297
    %v2366 = vunpack.c.h.b16 %v2297
    %v2367 = vunpack.c.l.b16 %v2298
    %v2368 = vunpack.c.h.b16 %v2298
    %v2369 = vunpack.c.l.b16 %v2299
    %v2370 = vunpack.c.h.b16 %v2299
    %v2371 = vunpack.c.l.b16 %v2300
    %v2372 = vunpack.c.h.b16 %v2300
    %v2373 = vunpack.c.l.b16 %v2301
    %v2374 = vunpack.c.h.b16 %v2301
    %v2375 = vunpack.c.l.b16 %v2302
    %v2376 = vunpack.c.h.b16 %v2302
    %v2377 = vunpack.c.l.b16 %v2303
    %v2378 = vunpack.c.h.b16 %v2303
    %v2379 = vunpack.c.l.b16 %v2304
    %v2380 = vunpack.c.h.b16 %v2304
    %v2381 = vunpack.c.l.b16 %v2305
    %v2382 = vunpack.c.h.b16 %v2305
    %v2383 = vunpack.c.l.b16 %v2306
    %v2384 = vunpack.c.h.b16 %v2306
    %v2385 = vunpack.c.l.b16 %v2307
    %v2386 = vunpack.c.h.b16 %v2307
    %v2387 = vunpack.c.l.b16 %v2308
    %v2388 = vunpack.c.h.b16 %v2308
    %v2389 = vunpack.c.l.b16 %v2309
    %v2390 = vunpack.c.h.b16 %v2309
    %v2391 = vunpack.c.l.b16 %v2310
    %v2392 = vunpack.c.h.b16 %v2310
    %v2393 = vunpack.c.l.b16 %v2311
    %v2394 = vunpack.c.h.b16 %v2311
    %v2395 = vunpack.c.l.b16 %v2312
    %v2396 = vunpack.c.h.b16 %v2312
    %v2397 = vunpack.c.l.b16 %v2313
    %v2398 = vunpack.c.h.b16 %v2313
    %v2399 = vunpack.c.l.b16 %v2314
    %v2400 = vunpack.c.h.b16 %v2314
    %v2401 = vunpack.c.l.b16 %v2315
    %v2402 = vunpack.c.h.b16 %v2315
    %v2403 = vunpack.c.l.b16 %v2316
    %v2404 = vunpack.c.h.b16 %v2316
    %v2405 = vunpack.c.l.b16 %v2317
    %v2406 = vunpack.c.h.b16 %v2317
    %v2407 = vunpack.c.l.b16 %v2318
    %v2408 = vunpack.c.h.b16 %v2318
    %v2409 = vunpack.c.l.b16 %v2319
    %v2410 = vunpack.c.h.b16 %v2319
    %v2411 = vunpack.c.l.b16 %v2320
    %v2412 = vunpack.c.h.b16 %v2320
    %v2413 = vunpack.c.l.b16 %v2321
    %v2414 = vunpack.c.h.b16 %v2321
    %v2415 = vunpack.c.l.b16 %v2322
    %v2416 = vunpack.c.h.b16 %v2322
    %v2417 = vunpack.c.l.b16 %v2323
    %v2418 = vunpack.c.h.b16 %v2323
    %v2419 = vunpack.c.l.b16 %v2324
    %v2420 = vunpack.c.h.b16 %v2324
    %v2421 = vpack.c.b16 %v2361, %v2357
    %v2422 = vpack.c.b16 %v2362, %v2358
    %v2423 = vpack.c.b16 %v2363, %v2359
    %v2424 = vpack.c.b16 %v2364, %v2360
    %v2425 = vpack.c.b16 %v2369, %v2365
    %v2426 = vpack.c.b16 %v2370, %v2366
    %v2427 = vpack.c.b16 %v2371, %v2367
    %v2428 = vpack.c.b16 %v2372, %v2368
    %v2429 = vpack.c.b16 %v2377, %v2373
    %v2430 = vpack.c.b16 %v2378, %v2374
    %v2431 = vpack.c.b16 %v2379, %v2375
    %v2432 = vpack.c.b16 %v2380, %v2376
    %v2433 = vpack.c.b16 %v2385, %v2381
    %v2434 = vpack.c.b16 %v2386, %v2382
    %v2435 = vpack.c.b16 %v2387, %v2383
    %v2436 = vpack.c.b16 %v2388, %v2384
    %v2437 = vpack.c.b16 %v2393, %v2389
    %v2438 = vpack.c.b16 %v2394, %v2390
    %v2439 = vpack.c.b16 %v2395, %v2391
    %v2440 = vpack.c.b16 %v2396, %v2392
    %v2441 = vpack.c.b16 %v2401, %v2397
    %v2442 = vpack.c.b16 %v2402, %v2398
    %v2443 = vpack.c.b16 %v2403, %v2399
    %v2444 = vpack.c.b16 %v2404, %v2400
    %v2445 = vpack.c.b16 %v2409, %v2405
    %v2446 = vpack.c.b16 %v2410, %v2406
    %v2447 = vpack.c.b16 %v2411, %v2407
    %v2448 = vpack.c.b16 %v2412, %v2408
    %v2449 = vpack.c.b16 %v2417, %v2413
    %v2450 = vpack.c.b16 %v2418, %v2414
    %v2451 = vpack.c.b16 %v2419, %v2415
    %v2452 = vpack.c.b16 %v2420, %v2416
    %2485 = vmatprep.subr.bf16.mxu0 %v2450
    %2486 = vmatpush1.bf16.msra.mxu0 %v2449
    %2487 = vmatprep.subr.bf16.mxu0 %v2446
    %2488 = vmatpush1.bf16.msra.mxu0 %v2445
    %2489 = vmatprep.subr.bf16.mxu0 %v2442
    %2490 = vmatpush1.bf16.msra.mxu0 %v2441
    %2491 = vmatprep.subr.bf16.mxu0 %v2438
    %2492 = vmatpush1.bf16.msra.mxu0 %v2437
    %2493 = vmatprep.subr.bf16.mxu0 %v2434
    %2494 = vmatpush1.bf16.msra.mxu0 %v2433
    %2495 = vmatprep.subr.bf16.mxu0 %v2430
    %2496 = vmatpush1.bf16.msra.mxu0 %v2429
    %2497 = vmatprep.subr.bf16.mxu0 %v2426
    %2498 = vmatpush1.bf16.msra.mxu0 %v2425
    %2499 = vmatprep.subr.bf16.mxu0 %v2422
    %2500 = vmatpush1.bf16.msra.mxu0 %v2421
    %2501 = vmatprep.subr.bf16.mxu0 0
    %2502 = vmatpush2.bf16.msra.mxu0 0
    %2503 = vmatprep.subr.bf16.mxu0 0
    %2504 = vmatpush2.bf16.msra.mxu0 0
    %2505 = vmatprep.subr.bf16.mxu0 0
    %2506 = vmatpush2.bf16.msra.mxu0 0
    %2507 = vmatprep.subr.bf16.mxu0 0
    %2508 = vmatpush2.bf16.msra.mxu0 0
    %2509 = vmatprep.subr.bf16.mxu0 0
    %2510 = vmatpush2.bf16.msra.mxu0 0
    %2511 = vmatprep.subr.bf16.mxu0 0
    %2512 = vmatpush2.bf16.msra.mxu0 0
    %2513 = vmatprep.subr.bf16.mxu0 0
    %2514 = vmatpush2.bf16.msra.mxu0 0
    %2515 = vmatprep.subr.bf16.mxu0 0
    %2516 = vmatpush2.bf16.msra.mxu0 0
    %2517 = vmatprep.mubr.bf16.mxu0 0
    %2518 = vmatmul.mubr.bf16.gmra.mxu0 %v2292
    %v2519 = vpop.f32.mrf.mxu0
    %v2520 = vadd.f32 0.0, %v2519
    %v2521 = vpop.f32.mrf.mxu0
    %v2522 = vadd.f32 0.0, %v2521
    %v2523 = vpop.f32.mrf.mxu0
    %v2524 = vpop.f32.mrf.mxu0
    %2525 = vdwg.mxu0
    %2526 = vmatprep.subr.bf16.mxu0 %v2452
    %2527 = vmatpush1.bf16.msra.mxu0 %v2451
    %2528 = vmatprep.subr.bf16.mxu0 %v2448
    %2529 = vmatpush1.bf16.msra.mxu0 %v2447
    %2530 = vmatprep.subr.bf16.mxu0 %v2444
    %2531 = vmatpush1.bf16.msra.mxu0 %v2443
    %2532 = vmatprep.subr.bf16.mxu0 %v2440
    %2533 = vmatpush1.bf16.msra.mxu0 %v2439
    %2534 = vmatprep.subr.bf16.mxu0 %v2436
    %2535 = vmatpush1.bf16.msra.mxu0 %v2435
    %2536 = vmatprep.subr.bf16.mxu0 %v2432
    %2537 = vmatpush1.bf16.msra.mxu0 %v2431
    %2538 = vmatprep.subr.bf16.mxu0 %v2428
    %2539 = vmatpush1.bf16.msra.mxu0 %v2427
    %2540 = vmatprep.subr.bf16.mxu0 %v2424
    %2541 = vmatpush1.bf16.msra.mxu0 %v2423
    %2542 = vmatprep.subr.bf16.mxu0 0
    %2543 = vmatpush2.bf16.msra.mxu0 0
    %2544 = vmatprep.subr.bf16.mxu0 0
    %2545 = vmatpush2.bf16.msra.mxu0 0
    %2546 = vmatprep.subr.bf16.mxu0 0
    %2547 = vmatpush2.bf16.msra.mxu0 0
    %2548 = vmatprep.subr.bf16.mxu0 0
    %2549 = vmatpush2.bf16.msra.mxu0 0
    %2550 = vmatprep.subr.bf16.mxu0 0
    %2551 = vmatpush2.bf16.msra.mxu0 0
    %2552 = vmatprep.subr.bf16.mxu0 0
    %2553 = vmatpush2.bf16.msra.mxu0 0
    %2554 = vmatprep.subr.bf16.mxu0 0
    %2555 = vmatpush2.bf16.msra.mxu0 0
    %2556 = vmatprep.subr.bf16.mxu0 0
    %2557 = vmatpush2.bf16.msra.mxu0 0
    %2558 = vmatprep.mubr.bf16.mxu0 0
    %2559 = vmatmul.mubr.bf16.gmra.mxu0 %v2292
    %v2560 = vpop.f32.mrf.mxu0
    %v2561 = vadd.f32 0.0, %v2560
    %v2562 = vpop.f32.mrf.mxu0
    %v2563 = vadd.f32 0.0, %v2562
    %v2564 = vpop.f32.mrf.mxu0
    %v2565 = vpop.f32.mrf.mxu0
    %2566 = vdwg.mxu0
    %v2567 = vadd.f32 %v2288, %v2520
    %v2568 = vadd.f32 %v2289, %v2522
    %v2569 = vadd.f32 %v2290, %v2561
    %v2570 = vadd.f32 %v2291, %v2563
    %v2571 = vxor.u32 %v2567, 2147483648
    %v2572 = vmul.f32 %v2571, 1.442695
    %v2573 = vpow.pop %v2572
    %v2574 = vadd.f32 %v2573, 1.0
    %v2575 = vrcp.pop %v2574
    %v2576 = vmul.f32 1.0, %v2575
    %v2577 = vxor.u32 %v2568, 2147483648
    %v2578 = vmul.f32 %v2577, 1.442695
    %v2579 = vpow.pop %v2578
    %v2580 = vadd.f32 %v2579, 1.0
    %v2581 = vrcp.pop %v2580
    %v2582 = vmul.f32 1.0, %v2581
    %v2583 = vtanh.pop %v2569
    %v2584 = vxor.u32 %v2570, 2147483648
    %v2585 = vmul.f32 %v2584, 1.442695
    %v2586 = vpow.pop %v2585
    %v2587 = vadd.f32 %v2586, 1.0
    %v2588 = vrcp.pop %v2587
    %v2589 = vmul.f32 1.0, %v2588
    %v2590 = vmul.f32 %v2582, %v2275
    %v2591 = vmul.f32 %v2576, %v2583
    %v2592 = vadd.f32 %v2590, %v2591
    %v2593 = vtanh.pop %v2592
    %v2594 = vmul.f32 %v2589, %v2593
    %2595 = vst [vmem:[#allocation4 + $0x18] sm:$0xff] %v2594
    %2596 = vst [vmem:[#allocation5 + $0x20] sm:$0xff] %v2594
    %v2597 = vld [vmem:[#allocation3 + $0x80] sm:$0xff]
    %v2598 = vld [vmem:[#allocation3 + $0x88] sm:$0xff]
    %v2599 = vld [vmem:[#allocation3 + $0x90] sm:$0xff]
    %v2600 = vld [vmem:[#allocation3 + $0x98] sm:$0xff]
    %v2601 = vld [vmem:[#allocation3 + $0x60] sm:$0xff]
    %v2602 = vld [vmem:[#allocation3 + $0x68] sm:$0xff]
    %v2603 = vld [vmem:[#allocation3 + $0x70] sm:$0xff]
    %v2604 = vld [vmem:[#allocation3 + $0x78] sm:$0xff]
    %v2605 = vsel %vm1005, %v2597, %v2601
    %v2606 = vsel %vm1006, %v2598, %v2602
    %v2607 = vsel %vm1007, %v2599, %v2603
    %v2608 = vsel %vm1008, %v2600, %v2604
    %v2609 = vpack.c.bf16 %v2594, %v2594
    %v2610 = vld [vmem:[#allocation9] sm:$0xff]
    %v2611 = vld [vmem:[#allocation9 + $0x8] sm:$0xff]
    %v2612 = vld [vmem:[#allocation9 + $0x10] sm:$0xff]
    %v2613 = vld [vmem:[#allocation9 + $0x18] sm:$0xff]
    %v2614 = vld [vmem:[#allocation9 + $0x20] sm:$0xff]
    %v2615 = vld [vmem:[#allocation9 + $0x28] sm:$0xff]
    %v2616 = vld [vmem:[#allocation9 + $0x30] sm:$0xff]
    %v2617 = vld [vmem:[#allocation9 + $0x38] sm:$0xff]
    %v2618 = vld [vmem:[#allocation9 + $0x40] sm:$0xff]
    %v2619 = vld [vmem:[#allocation9 + $0x48] sm:$0xff]
    %v2620 = vld [vmem:[#allocation9 + $0x50] sm:$0xff]
    %v2621 = vld [vmem:[#allocation9 + $0x58] sm:$0xff]
    %v2622 = vld [vmem:[#allocation9 + $0x60] sm:$0xff]
    %v2623 = vld [vmem:[#allocation9 + $0x68] sm:$0xff]
    %v2624 = vld [vmem:[#allocation9 + $0x70] sm:$0xff]
    %v2625 = vld [vmem:[#allocation9 + $0x78] sm:$0xff]
    %v2626 = vld [vmem:[#allocation9 + $0x80] sm:$0xff]
    %v2627 = vld [vmem:[#allocation9 + $0x88] sm:$0xff]
    %v2628 = vld [vmem:[#allocation9 + $0x90] sm:$0xff]
    %v2629 = vld [vmem:[#allocation9 + $0x98] sm:$0xff]
    %v2630 = vld [vmem:[#allocation9 + $0xa0] sm:$0xff]
    %v2631 = vld [vmem:[#allocation9 + $0xa8] sm:$0xff]
    %v2632 = vld [vmem:[#allocation9 + $0xb0] sm:$0xff]
    %v2633 = vld [vmem:[#allocation9 + $0xb8] sm:$0xff]
    %v2634 = vld [vmem:[#allocation9 + $0xc0] sm:$0xff]
    %v2635 = vld [vmem:[#allocation9 + $0xc8] sm:$0xff]
    %v2636 = vld [vmem:[#allocation9 + $0xd0] sm:$0xff]
    %v2637 = vld [vmem:[#allocation9 + $0xd8] sm:$0xff]
    %v2638 = vld [vmem:[#allocation9 + $0xe0] sm:$0xff]
    %v2639 = vld [vmem:[#allocation9 + $0xe8] sm:$0xff]
    %v2640 = vld [vmem:[#allocation9 + $0xf0] sm:$0xff]
    %v2641 = vld [vmem:[#allocation9 + $0xf8] sm:$0xff]
    %v2674 = vunpack.c.l.b16 %v2610
    %v2675 = vunpack.c.h.b16 %v2610
    %v2676 = vunpack.c.l.b16 %v2611
    %v2677 = vunpack.c.h.b16 %v2611
    %v2678 = vunpack.c.l.b16 %v2612
    %v2679 = vunpack.c.h.b16 %v2612
    %v2680 = vunpack.c.l.b16 %v2613
    %v2681 = vunpack.c.h.b16 %v2613
    %v2682 = vunpack.c.l.b16 %v2614
    %v2683 = vunpack.c.h.b16 %v2614
    %v2684 = vunpack.c.l.b16 %v2615
    %v2685 = vunpack.c.h.b16 %v2615
    %v2686 = vunpack.c.l.b16 %v2616
    %v2687 = vunpack.c.h.b16 %v2616
    %v2688 = vunpack.c.l.b16 %v2617
    %v2689 = vunpack.c.h.b16 %v2617
    %v2690 = vunpack.c.l.b16 %v2618
    %v2691 = vunpack.c.h.b16 %v2618
    %v2692 = vunpack.c.l.b16 %v2619
    %v2693 = vunpack.c.h.b16 %v2619
    %v2694 = vunpack.c.l.b16 %v2620
    %v2695 = vunpack.c.h.b16 %v2620
    %v2696 = vunpack.c.l.b16 %v2621
    %v2697 = vunpack.c.h.b16 %v2621
    %v2698 = vunpack.c.l.b16 %v2622
    %v2699 = vunpack.c.h.b16 %v2622
    %v2700 = vunpack.c.l.b16 %v2623
    %v2701 = vunpack.c.h.b16 %v2623
    %v2702 = vunpack.c.l.b16 %v2624
    %v2703 = vunpack.c.h.b16 %v2624
    %v2704 = vunpack.c.l.b16 %v2625
    %v2705 = vunpack.c.h.b16 %v2625
    %v2706 = vunpack.c.l.b16 %v2626
    %v2707 = vunpack.c.h.b16 %v2626
    %v2708 = vunpack.c.l.b16 %v2627
    %v2709 = vunpack.c.h.b16 %v2627
    %v2710 = vunpack.c.l.b16 %v2628
    %v2711 = vunpack.c.h.b16 %v2628
    %v2712 = vunpack.c.l.b16 %v2629
    %v2713 = vunpack.c.h.b16 %v2629
    %v2714 = vunpack.c.l.b16 %v2630
    %v2715 = vunpack.c.h.b16 %v2630
    %v2716 = vunpack.c.l.b16 %v2631
    %v2717 = vunpack.c.h.b16 %v2631
    %v2718 = vunpack.c.l.b16 %v2632
    %v2719 = vunpack.c.h.b16 %v2632
    %v2720 = vunpack.c.l.b16 %v2633
    %v2721 = vunpack.c.h.b16 %v2633
    %v2722 = vunpack.c.l.b16 %v2634
    %v2723 = vunpack.c.h.b16 %v2634
    %v2724 = vunpack.c.l.b16 %v2635
    %v2725 = vunpack.c.h.b16 %v2635
    %v2726 = vunpack.c.l.b16 %v2636
    %v2727 = vunpack.c.h.b16 %v2636
    %v2728 = vunpack.c.l.b16 %v2637
    %v2729 = vunpack.c.h.b16 %v2637
    %v2730 = vunpack.c.l.b16 %v2638
    %v2731 = vunpack.c.h.b16 %v2638
    %v2732 = vunpack.c.l.b16 %v2639
    %v2733 = vunpack.c.h.b16 %v2639
    %v2734 = vunpack.c.l.b16 %v2640
    %v2735 = vunpack.c.h.b16 %v2640
    %v2736 = vunpack.c.l.b16 %v2641
    %v2737 = vunpack.c.h.b16 %v2641
    %v2738 = vpack.c.b16 %v2678, %v2674
    %v2739 = vpack.c.b16 %v2679, %v2675
    %v2740 = vpack.c.b16 %v2680, %v2676
    %v2741 = vpack.c.b16 %v2681, %v2677
    %v2742 = vpack.c.b16 %v2686, %v2682
    %v2743 = vpack.c.b16 %v2687, %v2683
    %v2744 = vpack.c.b16 %v2688, %v2684
    %v2745 = vpack.c.b16 %v2689, %v2685
    %v2746 = vpack.c.b16 %v2694, %v2690
    %v2747 = vpack.c.b16 %v2695, %v2691
    %v2748 = vpack.c.b16 %v2696, %v2692
    %v2749 = vpack.c.b16 %v2697, %v2693
    %v2750 = vpack.c.b16 %v2702, %v2698
    %v2751 = vpack.c.b16 %v2703, %v2699
    %v2752 = vpack.c.b16 %v2704, %v2700
    %v2753 = vpack.c.b16 %v2705, %v2701
    %v2754 = vpack.c.b16 %v2710, %v2706
    %v2755 = vpack.c.b16 %v2711, %v2707
    %v2756 = vpack.c.b16 %v2712, %v2708
    %v2757 = vpack.c.b16 %v2713, %v2709
    %v2758 = vpack.c.b16 %v2718, %v2714
    %v2759 = vpack.c.b16 %v2719, %v2715
    %v2760 = vpack.c.b16 %v2720, %v2716
    %v2761 = vpack.c.b16 %v2721, %v2717
    %v2762 = vpack.c.b16 %v2726, %v2722
    %v2763 = vpack.c.b16 %v2727, %v2723
    %v2764 = vpack.c.b16 %v2728, %v2724
    %v2765 = vpack.c.b16 %v2729, %v2725
    %v2766 = vpack.c.b16 %v2734, %v2730
    %v2767 = vpack.c.b16 %v2735, %v2731
    %v2768 = vpack.c.b16 %v2736, %v2732
    %v2769 = vpack.c.b16 %v2737, %v2733
    %2802 = vmatprep.subr.bf16.mxu0 %v2767
    %2803 = vmatpush1.bf16.msra.mxu0 %v2766
    %2804 = vmatprep.subr.bf16.mxu0 %v2763
    %2805 = vmatpush1.bf16.msra.mxu0 %v2762
    %2806 = vmatprep.subr.bf16.mxu0 %v2759
    %2807 = vmatpush1.bf16.msra.mxu0 %v2758
    %2808 = vmatprep.subr.bf16.mxu0 %v2755
    %2809 = vmatpush1.bf16.msra.mxu0 %v2754
    %2810 = vmatprep.subr.bf16.mxu0 %v2751
    %2811 = vmatpush1.bf16.msra.mxu0 %v2750
    %2812 = vmatprep.subr.bf16.mxu0 %v2747
    %2813 = vmatpush1.bf16.msra.mxu0 %v2746
    %2814 = vmatprep.subr.bf16.mxu0 %v2743
    %2815 = vmatpush1.bf16.msra.mxu0 %v2742
    %2816 = vmatprep.subr.bf16.mxu0 %v2739
    %2817 = vmatpush1.bf16.msra.mxu0 %v2738
    %2818 = vmatprep.subr.bf16.mxu0 0
    %2819 = vmatpush2.bf16.msra.mxu0 0
    %2820 = vmatprep.subr.bf16.mxu0 0
    %2821 = vmatpush2.bf16.msra.mxu0 0
    %2822 = vmatprep.subr.bf16.mxu0 0
    %2823 = vmatpush2.bf16.msra.mxu0 0
    %2824 = vmatprep.subr.bf16.mxu0 0
    %2825 = vmatpush2.bf16.msra.mxu0 0
    %2826 = vmatprep.subr.bf16.mxu0 0
    %2827 = vmatpush2.bf16.msra.mxu0 0
    %2828 = vmatprep.subr.bf16.mxu0 0
    %2829 = vmatpush2.bf16.msra.mxu0 0
    %2830 = vmatprep.subr.bf16.mxu0 0
    %2831 = vmatpush2.bf16.msra.mxu0 0
    %2832 = vmatprep.subr.bf16.mxu0 0
    %2833 = vmatpush2.bf16.msra.mxu0 0
    %2834 = vmatprep.mubr.bf16.mxu0 0
    %2835 = vmatmul.mubr.bf16.gmra.mxu0 %v2609
    %v2836 = vpop.f32.mrf.mxu0
    %v2837 = vadd.f32 0.0, %v2836
    %v2838 = vpop.f32.mrf.mxu0
    %v2839 = vadd.f32 0.0, %v2838
    %v2840 = vpop.f32.mrf.mxu0
    %v2841 = vpop.f32.mrf.mxu0
    %2842 = vdwg.mxu0
    %2843 = vmatprep.subr.bf16.mxu0 %v2769
    %2844 = vmatpush1.bf16.msra.mxu0 %v2768
    %2845 = vmatprep.subr.bf16.mxu0 %v2765
    %2846 = vmatpush1.bf16.msra.mxu0 %v2764
    %2847 = vmatprep.subr.bf16.mxu0 %v2761
    %2848 = vmatpush1.bf16.msra.mxu0 %v2760
    %2849 = vmatprep.subr.bf16.mxu0 %v2757
    %2850 = vmatpush1.bf16.msra.mxu0 %v2756
    %2851 = vmatprep.subr.bf16.mxu0 %v2753
    %2852 = vmatpush1.bf16.msra.mxu0 %v2752
    %2853 = vmatprep.subr.bf16.mxu0 %v2749
    %2854 = vmatpush1.bf16.msra.mxu0 %v2748
    %2855 = vmatprep.subr.bf16.mxu0 %v2745
    %2856 = vmatpush1.bf16.msra.mxu0 %v2744
    %2857 = vmatprep.subr.bf16.mxu0 %v2741
    %2858 = vmatpush1.bf16.msra.mxu0 %v2740
    %2859 = vmatprep.subr.bf16.mxu0 0
    %2860 = vmatpush2.bf16.msra.mxu0 0
    %2861 = vmatprep.subr.bf16.mxu0 0
    %2862 = vmatpush2.bf16.msra.mxu0 0
    %2863 = vmatprep.subr.bf16.mxu0 0
    %2864 = vmatpush2.bf16.msra.mxu0 0
    %2865 = vmatprep.subr.bf16.mxu0 0
    %2866 = vmatpush2.bf16.msra.mxu0 0
    %2867 = vmatprep.subr.bf16.mxu0 0
    %2868 = vmatpush2.bf16.msra.mxu0 0
    %2869 = vmatprep.subr.bf16.mxu0 0
    %2870 = vmatpush2.bf16.msra.mxu0 0
    %2871 = vmatprep.subr.bf16.mxu0 0
    %2872 = vmatpush2.bf16.msra.mxu0 0
    %2873 = vmatprep.subr.bf16.mxu0 0
    %2874 = vmatpush2.bf16.msra.mxu0 0
    %2875 = vmatprep.mubr.bf16.mxu0 0
    %2876 = vmatmul.mubr.bf16.gmra.mxu0 %v2609
    %v2877 = vpop.f32.mrf.mxu0
    %v2878 = vadd.f32 0.0, %v2877
    %v2879 = vpop.f32.mrf.mxu0
    %v2880 = vadd.f32 0.0, %v2879
    %v2881 = vpop.f32.mrf.mxu0
    %v2882 = vpop.f32.mrf.mxu0
    %2883 = vdwg.mxu0
    %v2884 = vadd.f32 %v2605, %v2837
    %v2885 = vadd.f32 %v2606, %v2839
    %v2886 = vadd.f32 %v2607, %v2878
    %v2887 = vadd.f32 %v2608, %v2880
    %v2888 = vxor.u32 %v2884, 2147483648
    %v2889 = vmul.f32 %v2888, 1.442695
    %v2890 = vpow.pop %v2889
    %v2891 = vadd.f32 %v2890, 1.0
    %v2892 = vrcp.pop %v2891
    %v2893 = vmul.f32 1.0, %v2892
    %v2894 = vxor.u32 %v2885, 2147483648
    %v2895 = vmul.f32 %v2894, 1.442695
    %v2896 = vpow.pop %v2895
    %v2897 = vadd.f32 %v2896, 1.0
    %v2898 = vrcp.pop %v2897
    %v2899 = vmul.f32 1.0, %v2898
    %v2900 = vtanh.pop %v2886
    %v2901 = vxor.u32 %v2887, 2147483648
    %v2902 = vmul.f32 %v2901, 1.442695
    %v2903 = vpow.pop %v2902
    %v2904 = vadd.f32 %v2903, 1.0
    %v2905 = vrcp.pop %v2904
    %v2906 = vmul.f32 1.0, %v2905
    %v2907 = vmul.f32 %v2899, %v2592
    %v2908 = vmul.f32 %v2893, %v2900
    %v2909 = vadd.f32 %v2907, %v2908
    %v2910 = vtanh.pop %v2909
    %v2911 = vmul.f32 %v2906, %v2910
    %2912 = vst [vmem:[#allocation4 + $0x20] sm:$0xff] %v2911
    %2913 = vst [vmem:[#allocation5 + $0x18] sm:$0xff] %v2911
    %v2914 = vld [vmem:[#allocation3 + $0xa0] sm:$0xff]
    %v2915 = vld [vmem:[#allocation3 + $0xa8] sm:$0xff]
    %v2916 = vld [vmem:[#allocation3 + $0xb0] sm:$0xff]
    %v2917 = vld [vmem:[#allocation3 + $0xb8] sm:$0xff]
    %v2918 = vld [vmem:[#allocation3 + $0x40] sm:$0xff]
    %v2919 = vld [vmem:[#allocation3 + $0x48] sm:$0xff]
    %v2920 = vld [vmem:[#allocation3 + $0x50] sm:$0xff]
    %v2921 = vld [vmem:[#allocation3 + $0x58] sm:$0xff]
    %v2922 = vsel %vm1005, %v2914, %v2918
    %v2923 = vsel %vm1006, %v2915, %v2919
    %v2924 = vsel %vm1007, %v2916, %v2920
    %v2925 = vsel %vm1008, %v2917, %v2921
    %v2926 = vpack.c.bf16 %v2911, %v2911
    %v2927 = vld [vmem:[#allocation9] sm:$0xff]
    %v2928 = vld [vmem:[#allocation9 + $0x8] sm:$0xff]
    %v2929 = vld [vmem:[#allocation9 + $0x10] sm:$0xff]
    %v2930 = vld [vmem:[#allocation9 + $0x18] sm:$0xff]
    %v2931 = vld [vmem:[#allocation9 + $0x20] sm:$0xff]
    %v2932 = vld [vmem:[#allocation9 + $0x28] sm:$0xff]
    %v2933 = vld [vmem:[#allocation9 + $0x30] sm:$0xff]
    %v2934 = vld [vmem:[#allocation9 + $0x38] sm:$0xff]
    %v2935 = vld [vmem:[#allocation9 + $0x40] sm:$0xff]
    %v2936 = vld [vmem:[#allocation9 + $0x48] sm:$0xff]
    %v2937 = vld [vmem:[#allocation9 + $0x50] sm:$0xff]
    %v2938 = vld [vmem:[#allocation9 + $0x58] sm:$0xff]
    %v2939 = vld [vmem:[#allocation9 + $0x60] sm:$0xff]
    %v2940 = vld [vmem:[#allocation9 + $0x68] sm:$0xff]
    %v2941 = vld [vmem:[#allocation9 + $0x70] sm:$0xff]
    %v2942 = vld [vmem:[#allocation9 + $0x78] sm:$0xff]
    %v2943 = vld [vmem:[#allocation9 + $0x80] sm:$0xff]
    %v2944 = vld [vmem:[#allocation9 + $0x88] sm:$0xff]
    %v2945 = vld [vmem:[#allocation9 + $0x90] sm:$0xff]
    %v2946 = vld [vmem:[#allocation9 + $0x98] sm:$0xff]
    %v2947 = vld [vmem:[#allocation9 + $0xa0] sm:$0xff]
    %v2948 = vld [vmem:[#allocation9 + $0xa8] sm:$0xff]
    %v2949 = vld [vmem:[#allocation9 + $0xb0] sm:$0xff]
    %v2950 = vld [vmem:[#allocation9 + $0xb8] sm:$0xff]
    %v2951 = vld [vmem:[#allocation9 + $0xc0] sm:$0xff]
    %v2952 = vld [vmem:[#allocation9 + $0xc8] sm:$0xff]
    %v2953 = vld [vmem:[#allocation9 + $0xd0] sm:$0xff]
    %v2954 = vld [vmem:[#allocation9 + $0xd8] sm:$0xff]
    %v2955 = vld [vmem:[#allocation9 + $0xe0] sm:$0xff]
    %v2956 = vld [vmem:[#allocation9 + $0xe8] sm:$0xff]
    %v2957 = vld [vmem:[#allocation9 + $0xf0] sm:$0xff]
    %v2958 = vld [vmem:[#allocation9 + $0xf8] sm:$0xff]
    %v2991 = vunpack.c.l.b16 %v2927
    %v2992 = vunpack.c.h.b16 %v2927
    %v2993 = vunpack.c.l.b16 %v2928
    %v2994 = vunpack.c.h.b16 %v2928
    %v2995 = vunpack.c.l.b16 %v2929
    %v2996 = vunpack.c.h.b16 %v2929
    %v2997 = vunpack.c.l.b16 %v2930
    %v2998 = vunpack.c.h.b16 %v2930
    %v2999 = vunpack.c.l.b16 %v2931
    %v3000 = vunpack.c.h.b16 %v2931
    %v3001 = vunpack.c.l.b16 %v2932
    %v3002 = vunpack.c.h.b16 %v2932
    %v3003 = vunpack.c.l.b16 %v2933
    %v3004 = vunpack.c.h.b16 %v2933
    %v3005 = vunpack.c.l.b16 %v2934
    %v3006 = vunpack.c.h.b16 %v2934
    %v3007 = vunpack.c.l.b16 %v2935
    %v3008 = vunpack.c.h.b16 %v2935
    %v3009 = vunpack.c.l.b16 %v2936
    %v3010 = vunpack.c.h.b16 %v2936
    %v3011 = vunpack.c.l.b16 %v2937
    %v3012 = vunpack.c.h.b16 %v2937
    %v3013 = vunpack.c.l.b16 %v2938
    %v3014 = vunpack.c.h.b16 %v2938
    %v3015 = vunpack.c.l.b16 %v2939
    %v3016 = vunpack.c.h.b16 %v2939
    %v3017 = vunpack.c.l.b16 %v2940
    %v3018 = vunpack.c.h.b16 %v2940
    %v3019 = vunpack.c.l.b16 %v2941
    %v3020 = vunpack.c.h.b16 %v2941
    %v3021 = vunpack.c.l.b16 %v2942
    %v3022 = vunpack.c.h.b16 %v2942
    %v3023 = vunpack.c.l.b16 %v2943
    %v3024 = vunpack.c.h.b16 %v2943
    %v3025 = vunpack.c.l.b16 %v2944
    %v3026 = vunpack.c.h.b16 %v2944
    %v3027 = vunpack.c.l.b16 %v2945
    %v3028 = vunpack.c.h.b16 %v2945
    %v3029 = vunpack.c.l.b16 %v2946
    %v3030 = vunpack.c.h.b16 %v2946
    %v3031 = vunpack.c.l.b16 %v2947
    %v3032 = vunpack.c.h.b16 %v2947
    %v3033 = vunpack.c.l.b16 %v2948
    %v3034 = vunpack.c.h.b16 %v2948
    %v3035 = vunpack.c.l.b16 %v2949
    %v3036 = vunpack.c.h.b16 %v2949
    %v3037 = vunpack.c.l.b16 %v2950
    %v3038 = vunpack.c.h.b16 %v2950
    %v3039 = vunpack.c.l.b16 %v2951
    %v3040 = vunpack.c.h.b16 %v2951
    %v3041 = vunpack.c.l.b16 %v2952
    %v3042 = vunpack.c.h.b16 %v2952
    %v3043 = vunpack.c.l.b16 %v2953
    %v3044 = vunpack.c.h.b16 %v2953
    %v3045 = vunpack.c.l.b16 %v2954
    %v3046 = vunpack.c.h.b16 %v2954
    %v3047 = vunpack.c.l.b16 %v2955
    %v3048 = vunpack.c.h.b16 %v2955
    %v3049 = vunpack.c.l.b16 %v2956
    %v3050 = vunpack.c.h.b16 %v2956
    %v3051 = vunpack.c.l.b16 %v2957
    %v3052 = vunpack.c.h.b16 %v2957
    %v3053 = vunpack.c.l.b16 %v2958
    %v3054 = vunpack.c.h.b16 %v2958
    %v3055 = vpack.c.b16 %v2995, %v2991
    %v3056 = vpack.c.b16 %v2996, %v2992
    %v3057 = vpack.c.b16 %v2997, %v2993
    %v3058 = vpack.c.b16 %v2998, %v2994
    %v3059 = vpack.c.b16 %v3003, %v2999
    %v3060 = vpack.c.b16 %v3004, %v3000
    %v3061 = vpack.c.b16 %v3005, %v3001
    %v3062 = vpack.c.b16 %v3006, %v3002
    %v3063 = vpack.c.b16 %v3011, %v3007
    %v3064 = vpack.c.b16 %v3012, %v3008
    %v3065 = vpack.c.b16 %v3013, %v3009
    %v3066 = vpack.c.b16 %v3014, %v3010
    %v3067 = vpack.c.b16 %v3019, %v3015
    %v3068 = vpack.c.b16 %v3020, %v3016
    %v3069 = vpack.c.b16 %v3021, %v3017
    %v3070 = vpack.c.b16 %v3022, %v3018
    %v3071 = vpack.c.b16 %v3027, %v3023
    %v3072 = vpack.c.b16 %v3028, %v3024
    %v3073 = vpack.c.b16 %v3029, %v3025
    %v3074 = vpack.c.b16 %v3030, %v3026
    %v3075 = vpack.c.b16 %v3035, %v3031
    %v3076 = vpack.c.b16 %v3036, %v3032
    %v3077 = vpack.c.b16 %v3037, %v3033
    %v3078 = vpack.c.b16 %v3038, %v3034
    %v3079 = vpack.c.b16 %v3043, %v3039
    %v3080 = vpack.c.b16 %v3044, %v3040
    %v3081 = vpack.c.b16 %v3045, %v3041
    %v3082 = vpack.c.b16 %v3046, %v3042
    %v3083 = vpack.c.b16 %v3051, %v3047
    %v3084 = vpack.c.b16 %v3052, %v3048
    %v3085 = vpack.c.b16 %v3053, %v3049
    %v3086 = vpack.c.b16 %v3054, %v3050
    %3119 = vmatprep.subr.bf16.mxu0 %v3084
    %3120 = vmatpush1.bf16.msra.mxu0 %v3083
    %3121 = vmatprep.subr.bf16.mxu0 %v3080
    %3122 = vmatpush1.bf16.msra.mxu0 %v3079
    %3123 = vmatprep.subr.bf16.mxu0 %v3076
    %3124 = vmatpush1.bf16.msra.mxu0 %v3075
    %3125 = vmatprep.subr.bf16.mxu0 %v3072
    %3126 = vmatpush1.bf16.msra.mxu0 %v3071
    %3127 = vmatprep.subr.bf16.mxu0 %v3068
    %3128 = vmatpush1.bf16.msra.mxu0 %v3067
    %3129 = vmatprep.subr.bf16.mxu0 %v3064
    %3130 = vmatpush1.bf16.msra.mxu0 %v3063
    %3131 = vmatprep.subr.bf16.mxu0 %v3060
    %3132 = vmatpush1.bf16.msra.mxu0 %v3059
    %3133 = vmatprep.subr.bf16.mxu0 %v3056
    %3134 = vmatpush1.bf16.msra.mxu0 %v3055
    %3135 = vmatprep.subr.bf16.mxu0 0
    %3136 = vmatpush2.bf16.msra.mxu0 0
    %3137 = vmatprep.subr.bf16.mxu0 0
    %3138 = vmatpush2.bf16.msra.mxu0 0
    %3139 = vmatprep.subr.bf16.mxu0 0
    %3140 = vmatpush2.bf16.msra.mxu0 0
    %3141 = vmatprep.subr.bf16.mxu0 0
    %3142 = vmatpush2.bf16.msra.mxu0 0
    %3143 = vmatprep.subr.bf16.mxu0 0
    %3144 = vmatpush2.bf16.msra.mxu0 0
    %3145 = vmatprep.subr.bf16.mxu0 0
    %3146 = vmatpush2.bf16.msra.mxu0 0
    %3147 = vmatprep.subr.bf16.mxu0 0
    %3148 = vmatpush2.bf16.msra.mxu0 0
    %3149 = vmatprep.subr.bf16.mxu0 0
    %3150 = vmatpush2.bf16.msra.mxu0 0
    %3151 = vmatprep.mubr.bf16.mxu0 0
    %3152 = vmatmul.mubr.bf16.gmra.mxu0 %v2926
    %v3153 = vpop.f32.mrf.mxu0
    %v3154 = vadd.f32 0.0, %v3153
    %v3155 = vpop.f32.mrf.mxu0
    %v3156 = vadd.f32 0.0, %v3155
    %v3157 = vpop.f32.mrf.mxu0
    %v3158 = vpop.f32.mrf.mxu0
    %3159 = vdwg.mxu0
    %3160 = vmatprep.subr.bf16.mxu0 %v3086
    %3161 = vmatpush1.bf16.msra.mxu0 %v3085
    %3162 = vmatprep.subr.bf16.mxu0 %v3082
    %3163 = vmatpush1.bf16.msra.mxu0 %v3081
    %3164 = vmatprep.subr.bf16.mxu0 %v3078
    %3165 = vmatpush1.bf16.msra.mxu0 %v3077
    %3166 = vmatprep.subr.bf16.mxu0 %v3074
    %3167 = vmatpush1.bf16.msra.mxu0 %v3073
    %3168 = vmatprep.subr.bf16.mxu0 %v3070
    %3169 = vmatpush1.bf16.msra.mxu0 %v3069
    %3170 = vmatprep.subr.bf16.mxu0 %v3066
    %3171 = vmatpush1.bf16.msra.mxu0 %v3065
    %3172 = vmatprep.subr.bf16.mxu0 %v3062
    %3173 = vmatpush1.bf16.msra.mxu0 %v3061
    %3174 = vmatprep.subr.bf16.mxu0 %v3058
    %3175 = vmatpush1.bf16.msra.mxu0 %v3057
    %3176 = vmatprep.subr.bf16.mxu0 0
    %3177 = vmatpush2.bf16.msra.mxu0 0
    %3178 = vmatprep.subr.bf16.mxu0 0
    %3179 = vmatpush2.bf16.msra.mxu0 0
    %3180 = vmatprep.subr.bf16.mxu0 0
    %3181 = vmatpush2.bf16.msra.mxu0 0
    %3182 = vmatprep.subr.bf16.mxu0 0
    %3183 = vmatpush2.bf16.msra.mxu0 0
    %3184 = vmatprep.subr.bf16.mxu0 0
    %3185 = vmatpush2.bf16.msra.mxu0 0
    %3186 = vmatprep.subr.bf16.mxu0 0
    %3187 = vmatpush2.bf16.msra.mxu0 0
    %3188 = vmatprep.subr.bf16.mxu0 0
    %3189 = vmatpush2.bf16.msra.mxu0 0
    %3190 = vmatprep.subr.bf16.mxu0 0
    %3191 = vmatpush2.bf16.msra.mxu0 0
    %3192 = vmatprep.mubr.bf16.mxu0 0
    %3193 = vmatmul.mubr.bf16.gmra.mxu0 %v2926
    %v3194 = vpop.f32.mrf.mxu0
    %v3195 = vadd.f32 0.0, %v3194
    %v3196 = vpop.f32.mrf.mxu0
    %v3197 = vadd.f32 0.0, %v3196
    %v3198 = vpop.f32.mrf.mxu0
    %v3199 = vpop.f32.mrf.mxu0
    %3200 = vdwg.mxu0
    %v3201 = vadd.f32 %v2922, %v3154
    %v3202 = vadd.f32 %v2923, %v3156
    %v3203 = vadd.f32 %v2924, %v3195
    %v3204 = vadd.f32 %v2925, %v3197
    %v3205 = vxor.u32 %v3201, 2147483648
    %v3206 = vmul.f32 %v3205, 1.442695
    %v3207 = vpow.pop %v3206
    %v3208 = vadd.f32 %v3207, 1.0
    %v3209 = vrcp.pop %v3208
    %v3210 = vmul.f32 1.0, %v3209
    %v3211 = vxor.u32 %v3202, 2147483648
    %v3212 = vmul.f32 %v3211, 1.442695
    %v3213 = vpow.pop %v3212
    %v3214 = vadd.f32 %v3213, 1.0
    %v3215 = vrcp.pop %v3214
    %v3216 = vmul.f32 1.0, %v3215
    %v3217 = vtanh.pop %v3203
    %v3218 = vxor.u32 %v3204, 2147483648
    %v3219 = vmul.f32 %v3218, 1.442695
    %v3220 = vpow.pop %v3219
    %v3221 = vadd.f32 %v3220, 1.0
    %v3222 = vrcp.pop %v3221
    %v3223 = vmul.f32 1.0, %v3222
    %v3224 = vmul.f32 %v3216, %v2909
    %v3225 = vmul.f32 %v3210, %v3217
    %v3226 = vadd.f32 %v3224, %v3225
    %v3227 = vtanh.pop %v3226
    %v3228 = vmul.f32 %v3223, %v3227
    %3229 = vst [vmem:[#allocation4 + $0x28] sm:$0xff] %v3228
    %3230 = vst [vmem:[#allocation5 + $0x10] sm:$0xff] %v3228
    %v3231 = vld [vmem:[#allocation3 + $0xc0] sm:$0xff]
    %v3232 = vld [vmem:[#allocation3 + $0xc8] sm:$0xff]
    %v3233 = vld [vmem:[#allocation3 + $0xd0] sm:$0xff]
    %v3234 = vld [vmem:[#allocation3 + $0xd8] sm:$0xff]
    %v3235 = vld [vmem:[#allocation3 + $0x20] sm:$0xff]
    %v3236 = vld [vmem:[#allocation3 + $0x28] sm:$0xff]
    %v3237 = vld [vmem:[#allocation3 + $0x30] sm:$0xff]
    %v3238 = vld [vmem:[#allocation3 + $0x38] sm:$0xff]
    %v3239 = vsel %vm1005, %v3231, %v3235
    %v3240 = vsel %vm1006, %v3232, %v3236
    %v3241 = vsel %vm1007, %v3233, %v3237
    %v3242 = vsel %vm1008, %v3234, %v3238
    %v3243 = vpack.c.bf16 %v3228, %v3228
    %v3244 = vld [vmem:[#allocation9] sm:$0xff]
    %v3245 = vld [vmem:[#allocation9 + $0x8] sm:$0xff]
    %v3246 = vld [vmem:[#allocation9 + $0x10] sm:$0xff]
    %v3247 = vld [vmem:[#allocation9 + $0x18] sm:$0xff]
    %v3248 = vld [vmem:[#allocation9 + $0x20] sm:$0xff]
    %v3249 = vld [vmem:[#allocation9 + $0x28] sm:$0xff]
    %v3250 = vld [vmem:[#allocation9 + $0x30] sm:$0xff]
    %v3251 = vld [vmem:[#allocation9 + $0x38] sm:$0xff]
    %v3252 = vld [vmem:[#allocation9 + $0x40] sm:$0xff]
    %v3253 = vld [vmem:[#allocation9 + $0x48] sm:$0xff]
    %v3254 = vld [vmem:[#allocation9 + $0x50] sm:$0xff]
    %v3255 = vld [vmem:[#allocation9 + $0x58] sm:$0xff]
    %v3256 = vld [vmem:[#allocation9 + $0x60] sm:$0xff]
    %v3257 = vld [vmem:[#allocation9 + $0x68] sm:$0xff]
    %v3258 = vld [vmem:[#allocation9 + $0x70] sm:$0xff]
    %v3259 = vld [vmem:[#allocation9 + $0x78] sm:$0xff]
    %v3260 = vld [vmem:[#allocation9 + $0x80] sm:$0xff]
    %v3261 = vld [vmem:[#allocation9 + $0x88] sm:$0xff]
    %v3262 = vld [vmem:[#allocation9 + $0x90] sm:$0xff]
    %v3263 = vld [vmem:[#allocation9 + $0x98] sm:$0xff]
    %v3264 = vld [vmem:[#allocation9 + $0xa0] sm:$0xff]
    %v3265 = vld [vmem:[#allocation9 + $0xa8] sm:$0xff]
    %v3266 = vld [vmem:[#allocation9 + $0xb0] sm:$0xff]
    %v3267 = vld [vmem:[#allocation9 + $0xb8] sm:$0xff]
    %v3268 = vld [vmem:[#allocation9 + $0xc0] sm:$0xff]
    %v3269 = vld [vmem:[#allocation9 + $0xc8] sm:$0xff]
    %v3270 = vld [vmem:[#allocation9 + $0xd0] sm:$0xff]
    %v3271 = vld [vmem:[#allocation9 + $0xd8] sm:$0xff]
    %v3272 = vld [vmem:[#allocation9 + $0xe0] sm:$0xff]
    %v3273 = vld [vmem:[#allocation9 + $0xe8] sm:$0xff]
    %v3274 = vld [vmem:[#allocation9 + $0xf0] sm:$0xff]
    %v3275 = vld [vmem:[#allocation9 + $0xf8] sm:$0xff]
    %v3308 = vunpack.c.l.b16 %v3244
    %v3309 = vunpack.c.h.b16 %v3244
    %v3310 = vunpack.c.l.b16 %v3245
    %v3311 = vunpack.c.h.b16 %v3245
    %v3312 = vunpack.c.l.b16 %v3246
    %v3313 = vunpack.c.h.b16 %v3246
    %v3314 = vunpack.c.l.b16 %v3247
    %v3315 = vunpack.c.h.b16 %v3247
    %v3316 = vunpack.c.l.b16 %v3248
    %v3317 = vunpack.c.h.b16 %v3248
    %v3318 = vunpack.c.l.b16 %v3249
    %v3319 = vunpack.c.h.b16 %v3249
    %v3320 = vunpack.c.l.b16 %v3250
    %v3321 = vunpack.c.h.b16 %v3250
    %v3322 = vunpack.c.l.b16 %v3251
    %v3323 = vunpack.c.h.b16 %v3251
    %v3324 = vunpack.c.l.b16 %v3252
    %v3325 = vunpack.c.h.b16 %v3252
    %v3326 = vunpack.c.l.b16 %v3253
    %v3327 = vunpack.c.h.b16 %v3253
    %v3328 = vunpack.c.l.b16 %v3254
    %v3329 = vunpack.c.h.b16 %v3254
    %v3330 = vunpack.c.l.b16 %v3255
    %v3331 = vunpack.c.h.b16 %v3255
    %v3332 = vunpack.c.l.b16 %v3256
    %v3333 = vunpack.c.h.b16 %v3256
    %v3334 = vunpack.c.l.b16 %v3257
    %v3335 = vunpack.c.h.b16 %v3257
    %v3336 = vunpack.c.l.b16 %v3258
    %v3337 = vunpack.c.h.b16 %v3258
    %v3338 = vunpack.c.l.b16 %v3259
    %v3339 = vunpack.c.h.b16 %v3259
    %v3340 = vunpack.c.l.b16 %v3260
    %v3341 = vunpack.c.h.b16 %v3260
    %v3342 = vunpack.c.l.b16 %v3261
    %v3343 = vunpack.c.h.b16 %v3261
    %v3344 = vunpack.c.l.b16 %v3262
    %v3345 = vunpack.c.h.b16 %v3262
    %v3346 = vunpack.c.l.b16 %v3263
    %v3347 = vunpack.c.h.b16 %v3263
    %v3348 = vunpack.c.l.b16 %v3264
    %v3349 = vunpack.c.h.b16 %v3264
    %v3350 = vunpack.c.l.b16 %v3265
    %v3351 = vunpack.c.h.b16 %v3265
    %v3352 = vunpack.c.l.b16 %v3266
    %v3353 = vunpack.c.h.b16 %v3266
    %v3354 = vunpack.c.l.b16 %v3267
    %v3355 = vunpack.c.h.b16 %v3267
    %v3356 = vunpack.c.l.b16 %v3268
    %v3357 = vunpack.c.h.b16 %v3268
    %v3358 = vunpack.c.l.b16 %v3269
    %v3359 = vunpack.c.h.b16 %v3269
    %v3360 = vunpack.c.l.b16 %v3270
    %v3361 = vunpack.c.h.b16 %v3270
    %v3362 = vunpack.c.l.b16 %v3271
    %v3363 = vunpack.c.h.b16 %v3271
    %v3364 = vunpack.c.l.b16 %v3272
    %v3365 = vunpack.c.h.b16 %v3272
    %v3366 = vunpack.c.l.b16 %v3273
    %v3367 = vunpack.c.h.b16 %v3273
    %v3368 = vunpack.c.l.b16 %v3274
    %v3369 = vunpack.c.h.b16 %v3274
    %v3370 = vunpack.c.l.b16 %v3275
    %v3371 = vunpack.c.h.b16 %v3275
    %v3372 = vpack.c.b16 %v3312, %v3308
    %v3373 = vpack.c.b16 %v3313, %v3309
    %v3374 = vpack.c.b16 %v3314, %v3310
    %v3375 = vpack.c.b16 %v3315, %v3311
    %v3376 = vpack.c.b16 %v3320, %v3316
    %v3377 = vpack.c.b16 %v3321, %v3317
    %v3378 = vpack.c.b16 %v3322, %v3318
    %v3379 = vpack.c.b16 %v3323, %v3319
    %v3380 = vpack.c.b16 %v3328, %v3324
    %v3381 = vpack.c.b16 %v3329, %v3325
    %v3382 = vpack.c.b16 %v3330, %v3326
    %v3383 = vpack.c.b16 %v3331, %v3327
    %v3384 = vpack.c.b16 %v3336, %v3332
    %v3385 = vpack.c.b16 %v3337, %v3333
    %v3386 = vpack.c.b16 %v3338, %v3334
    %v3387 = vpack.c.b16 %v3339, %v3335
    %v3388 = vpack.c.b16 %v3344, %v3340
    %v3389 = vpack.c.b16 %v3345, %v3341
    %v3390 = vpack.c.b16 %v3346, %v3342
    %v3391 = vpack.c.b16 %v3347, %v3343
    %v3392 = vpack.c.b16 %v3352, %v3348
    %v3393 = vpack.c.b16 %v3353, %v3349
    %v3394 = vpack.c.b16 %v3354, %v3350
    %v3395 = vpack.c.b16 %v3355, %v3351
    %v3396 = vpack.c.b16 %v3360, %v3356
    %v3397 = vpack.c.b16 %v3361, %v3357
    %v3398 = vpack.c.b16 %v3362, %v3358
    %v3399 = vpack.c.b16 %v3363, %v3359
    %v3400 = vpack.c.b16 %v3368, %v3364
    %v3401 = vpack.c.b16 %v3369, %v3365
    %v3402 = vpack.c.b16 %v3370, %v3366
    %v3403 = vpack.c.b16 %v3371, %v3367
    %3436 = vmatprep.subr.bf16.mxu0 %v3401
    %3437 = vmatpush1.bf16.msra.mxu0 %v3400
    %3438 = vmatprep.subr.bf16.mxu0 %v3397
    %3439 = vmatpush1.bf16.msra.mxu0 %v3396
    %3440 = vmatprep.subr.bf16.mxu0 %v3393
    %3441 = vmatpush1.bf16.msra.mxu0 %v3392
    %3442 = vmatprep.subr.bf16.mxu0 %v3389
    %3443 = vmatpush1.bf16.msra.mxu0 %v3388
    %3444 = vmatprep.subr.bf16.mxu0 %v3385
    %3445 = vmatpush1.bf16.msra.mxu0 %v3384
    %3446 = vmatprep.subr.bf16.mxu0 %v3381
    %3447 = vmatpush1.bf16.msra.mxu0 %v3380
    %3448 = vmatprep.subr.bf16.mxu0 %v3377
    %3449 = vmatpush1.bf16.msra.mxu0 %v3376
    %3450 = vmatprep.subr.bf16.mxu0 %v3373
    %3451 = vmatpush1.bf16.msra.mxu0 %v3372
    %3452 = vmatprep.subr.bf16.mxu0 0
    %3453 = vmatpush2.bf16.msra.mxu0 0
    %3454 = vmatprep.subr.bf16.mxu0 0
    %3455 = vmatpush2.bf16.msra.mxu0 0
    %3456 = vmatprep.subr.bf16.mxu0 0
    %3457 = vmatpush2.bf16.msra.mxu0 0
    %3458 = vmatprep.subr.bf16.mxu0 0
    %3459 = vmatpush2.bf16.msra.mxu0 0
    %3460 = vmatprep.subr.bf16.mxu0 0
    %3461 = vmatpush2.bf16.msra.mxu0 0
    %3462 = vmatprep.subr.bf16.mxu0 0
    %3463 = vmatpush2.bf16.msra.mxu0 0
    %3464 = vmatprep.subr.bf16.mxu0 0
    %3465 = vmatpush2.bf16.msra.mxu0 0
    %3466 = vmatprep.subr.bf16.mxu0 0
    %3467 = vmatpush2.bf16.msra.mxu0 0
    %3468 = vmatprep.mubr.bf16.mxu0 0
    %3469 = vmatmul.mubr.bf16.gmra.mxu0 %v3243
    %v3470 = vpop.f32.mrf.mxu0
    %v3471 = vadd.f32 0.0, %v3470
    %v3472 = vpop.f32.mrf.mxu0
    %v3473 = vadd.f32 0.0, %v3472
    %v3474 = vpop.f32.mrf.mxu0
    %v3475 = vpop.f32.mrf.mxu0
    %3476 = vdwg.mxu0
    %3477 = vmatprep.subr.bf16.mxu0 %v3403
    %3478 = vmatpush1.bf16.msra.mxu0 %v3402
    %3479 = vmatprep.subr.bf16.mxu0 %v3399
    %3480 = vmatpush1.bf16.msra.mxu0 %v3398
    %3481 = vmatprep.subr.bf16.mxu0 %v3395
    %3482 = vmatpush1.bf16.msra.mxu0 %v3394
    %3483 = vmatprep.subr.bf16.mxu0 %v3391
    %3484 = vmatpush1.bf16.msra.mxu0 %v3390
    %3485 = vmatprep.subr.bf16.mxu0 %v3387
    %3486 = vmatpush1.bf16.msra.mxu0 %v3386
    %3487 = vmatprep.subr.bf16.mxu0 %v3383
    %3488 = vmatpush1.bf16.msra.mxu0 %v3382
    %3489 = vmatprep.subr.bf16.mxu0 %v3379
    %3490 = vmatpush1.bf16.msra.mxu0 %v3378
    %3491 = vmatprep.subr.bf16.mxu0 %v3375
    %3492 = vmatpush1.bf16.msra.mxu0 %v3374
    %3493 = vmatprep.subr.bf16.mxu0 0
    %3494 = vmatpush2.bf16.msra.mxu0 0
    %3495 = vmatprep.subr.bf16.mxu0 0
    %3496 = vmatpush2.bf16.msra.mxu0 0
    %3497 = vmatprep.subr.bf16.mxu0 0
    %3498 = vmatpush2.bf16.msra.mxu0 0
    %3499 = vmatprep.subr.bf16.mxu0 0
    %3500 = vmatpush2.bf16.msra.mxu0 0
    %3501 = vmatprep.subr.bf16.mxu0 0
    %3502 = vmatpush2.bf16.msra.mxu0 0
    %3503 = vmatprep.subr.bf16.mxu0 0
    %3504 = vmatpush2.bf16.msra.mxu0 0
    %3505 = vmatprep.subr.bf16.mxu0 0
    %3506 = vmatpush2.bf16.msra.mxu0 0
    %3507 = vmatprep.subr.bf16.mxu0 0
    %3508 = vmatpush2.bf16.msra.mxu0 0
    %3509 = vmatprep.mubr.bf16.mxu0 0
    %3510 = vmatmul.mubr.bf16.gmra.mxu0 %v3243
    %v3511 = vpop.f32.mrf.mxu0
    %v3512 = vadd.f32 0.0, %v3511
    %v3513 = vpop.f32.mrf.mxu0
    %v3514 = vadd.f32 0.0, %v3513
    %v3515 = vpop.f32.mrf.mxu0
    %v3516 = vpop.f32.mrf.mxu0
    %3517 = vdwg.mxu0
    %v3518 = vadd.f32 %v3239, %v3471
    %v3519 = vadd.f32 %v3240, %v3473
    %v3520 = vadd.f32 %v3241, %v3512
    %v3521 = vadd.f32 %v3242, %v3514
    %v3522 = vxor.u32 %v3518, 2147483648
    %v3523 = vmul.f32 %v3522, 1.442695
    %v3524 = vpow.pop %v3523
    %v3525 = vadd.f32 %v3524, 1.0
    %v3526 = vrcp.pop %v3525
    %v3527 = vmul.f32 1.0, %v3526
    %v3528 = vxor.u32 %v3519, 2147483648
    %v3529 = vmul.f32 %v3528, 1.442695
    %v3530 = vpow.pop %v3529
    %v3531 = vadd.f32 %v3530, 1.0
    %v3532 = vrcp.pop %v3531
    %v3533 = vmul.f32 1.0, %v3532
    %v3534 = vtanh.pop %v3520
    %v3535 = vxor.u32 %v3521, 2147483648
    %v3536 = vmul.f32 %v3535, 1.442695
    %v3537 = vpow.pop %v3536
    %v3538 = vadd.f32 %v3537, 1.0
    %v3539 = vrcp.pop %v3538
    %v3540 = vmul.f32 1.0, %v3539
    %v3541 = vmul.f32 %v3533, %v3226
    %v3542 = vmul.f32 %v3527, %v3534
    %v3543 = vadd.f32 %v3541, %v3542
    %v3544 = vtanh.pop %v3543
    %v3545 = vmul.f32 %v3540, %v3544
    %3546 = vst [vmem:[#allocation4 + $0x30] sm:$0xff] %v3545
    %3547 = vst [vmem:[#allocation5 + $0x8] sm:$0xff] %v3545
    %v3548 = vld [vmem:[#allocation3 + $0xe0] sm:$0xff]
    %v3549 = vld [vmem:[#allocation3 + $0xe8] sm:$0xff]
    %v3550 = vld [vmem:[#allocation3 + $0xf0] sm:$0xff]
    %v3551 = vld [vmem:[#allocation3 + $0xf8] sm:$0xff]
    %v3552 = vld [vmem:[#allocation3] sm:$0xff]
    %v3553 = vld [vmem:[#allocation3 + $0x8] sm:$0xff]
    %v3554 = vld [vmem:[#allocation3 + $0x10] sm:$0xff]
    %v3555 = vld [vmem:[#allocation3 + $0x18] sm:$0xff]
    %v3556 = vsel %vm1005, %v3548, %v3552
    %v3557 = vsel %vm1006, %v3549, %v3553
    %v3558 = vsel %vm1007, %v3550, %v3554
    %v3559 = vsel %vm1008, %v3551, %v3555
    %v3560 = vpack.c.bf16 %v3545, %v3545
    %v3561 = vld [vmem:[#allocation9] sm:$0xff]
    %v3562 = vld [vmem:[#allocation9 + $0x8] sm:$0xff]
    %v3563 = vld [vmem:[#allocation9 + $0x10] sm:$0xff]
    %v3564 = vld [vmem:[#allocation9 + $0x18] sm:$0xff]
    %v3565 = vld [vmem:[#allocation9 + $0x20] sm:$0xff]
    %v3566 = vld [vmem:[#allocation9 + $0x28] sm:$0xff]
    %v3567 = vld [vmem:[#allocation9 + $0x30] sm:$0xff]
    %v3568 = vld [vmem:[#allocation9 + $0x38] sm:$0xff]
    %v3569 = vld [vmem:[#allocation9 + $0x40] sm:$0xff]
    %v3570 = vld [vmem:[#allocation9 + $0x48] sm:$0xff]
    %v3571 = vld [vmem:[#allocation9 + $0x50] sm:$0xff]
    %v3572 = vld [vmem:[#allocation9 + $0x58] sm:$0xff]
    %v3573 = vld [vmem:[#allocation9 + $0x60] sm:$0xff]
    %v3574 = vld [vmem:[#allocation9 + $0x68] sm:$0xff]
    %v3575 = vld [vmem:[#allocation9 + $0x70] sm:$0xff]
    %v3576 = vld [vmem:[#allocation9 + $0x78] sm:$0xff]
    %v3577 = vld [vmem:[#allocation9 + $0x80] sm:$0xff]
    %v3578 = vld [vmem:[#allocation9 + $0x88] sm:$0xff]
    %v3579 = vld [vmem:[#allocation9 + $0x90] sm:$0xff]
    %v3580 = vld [vmem:[#allocation9 + $0x98] sm:$0xff]
    %v3581 = vld [vmem:[#allocation9 + $0xa0] sm:$0xff]
    %v3582 = vld [vmem:[#allocation9 + $0xa8] sm:$0xff]
    %v3583 = vld [vmem:[#allocation9 + $0xb0] sm:$0xff]
    %v3584 = vld [vmem:[#allocation9 + $0xb8] sm:$0xff]
    %v3585 = vld [vmem:[#allocation9 + $0xc0] sm:$0xff]
    %v3586 = vld [vmem:[#allocation9 + $0xc8] sm:$0xff]
    %v3587 = vld [vmem:[#allocation9 + $0xd0] sm:$0xff]
    %v3588 = vld [vmem:[#allocation9 + $0xd8] sm:$0xff]
    %v3589 = vld [vmem:[#allocation9 + $0xe0] sm:$0xff]
    %v3590 = vld [vmem:[#allocation9 + $0xe8] sm:$0xff]
    %v3591 = vld [vmem:[#allocation9 + $0xf0] sm:$0xff]
    %v3592 = vld [vmem:[#allocation9 + $0xf8] sm:$0xff]
    %v3625 = vunpack.c.l.b16 %v3561
    %v3626 = vunpack.c.h.b16 %v3561
    %v3627 = vunpack.c.l.b16 %v3562
    %v3628 = vunpack.c.h.b16 %v3562
    %v3629 = vunpack.c.l.b16 %v3563
    %v3630 = vunpack.c.h.b16 %v3563
    %v3631 = vunpack.c.l.b16 %v3564
    %v3632 = vunpack.c.h.b16 %v3564
    %v3633 = vunpack.c.l.b16 %v3565
    %v3634 = vunpack.c.h.b16 %v3565
    %v3635 = vunpack.c.l.b16 %v3566
    %v3636 = vunpack.c.h.b16 %v3566
    %v3637 = vunpack.c.l.b16 %v3567
    %v3638 = vunpack.c.h.b16 %v3567
    %v3639 = vunpack.c.l.b16 %v3568
    %v3640 = vunpack.c.h.b16 %v3568
    %v3641 = vunpack.c.l.b16 %v3569
    %v3642 = vunpack.c.h.b16 %v3569
    %v3643 = vunpack.c.l.b16 %v3570
    %v3644 = vunpack.c.h.b16 %v3570
    %v3645 = vunpack.c.l.b16 %v3571
    %v3646 = vunpack.c.h.b16 %v3571
    %v3647 = vunpack.c.l.b16 %v3572
    %v3648 = vunpack.c.h.b16 %v3572
    %v3649 = vunpack.c.l.b16 %v3573
    %v3650 = vunpack.c.h.b16 %v3573
    %v3651 = vunpack.c.l.b16 %v3574
    %v3652 = vunpack.c.h.b16 %v3574
    %v3653 = vunpack.c.l.b16 %v3575
    %v3654 = vunpack.c.h.b16 %v3575
    %v3655 = vunpack.c.l.b16 %v3576
    %v3656 = vunpack.c.h.b16 %v3576
    %v3657 = vunpack.c.l.b16 %v3577
    %v3658 = vunpack.c.h.b16 %v3577
    %v3659 = vunpack.c.l.b16 %v3578
    %v3660 = vunpack.c.h.b16 %v3578
    %v3661 = vunpack.c.l.b16 %v3579
    %v3662 = vunpack.c.h.b16 %v3579
    %v3663 = vunpack.c.l.b16 %v3580
    %v3664 = vunpack.c.h.b16 %v3580
    %v3665 = vunpack.c.l.b16 %v3581
    %v3666 = vunpack.c.h.b16 %v3581
    %v3667 = vunpack.c.l.b16 %v3582
    %v3668 = vunpack.c.h.b16 %v3582
    %v3669 = vunpack.c.l.b16 %v3583
    %v3670 = vunpack.c.h.b16 %v3583
    %v3671 = vunpack.c.l.b16 %v3584
    %v3672 = vunpack.c.h.b16 %v3584
    %v3673 = vunpack.c.l.b16 %v3585
    %v3674 = vunpack.c.h.b16 %v3585
    %v3675 = vunpack.c.l.b16 %v3586
    %v3676 = vunpack.c.h.b16 %v3586
    %v3677 = vunpack.c.l.b16 %v3587
    %v3678 = vunpack.c.h.b16 %v3587
    %v3679 = vunpack.c.l.b16 %v3588
    %v3680 = vunpack.c.h.b16 %v3588
    %v3681 = vunpack.c.l.b16 %v3589
    %v3682 = vunpack.c.h.b16 %v3589
    %v3683 = vunpack.c.l.b16 %v3590
    %v3684 = vunpack.c.h.b16 %v3590
    %v3685 = vunpack.c.l.b16 %v3591
    %v3686 = vunpack.c.h.b16 %v3591
    %v3687 = vunpack.c.l.b16 %v3592
    %v3688 = vunpack.c.h.b16 %v3592
    %v3689 = vpack.c.b16 %v3629, %v3625
    %v3690 = vpack.c.b16 %v3630, %v3626
    %v3691 = vpack.c.b16 %v3631, %v3627
    %v3692 = vpack.c.b16 %v3632, %v3628
    %v3693 = vpack.c.b16 %v3637, %v3633
    %v3694 = vpack.c.b16 %v3638, %v3634
    %v3695 = vpack.c.b16 %v3639, %v3635
    %v3696 = vpack.c.b16 %v3640, %v3636
    %v3697 = vpack.c.b16 %v3645, %v3641
    %v3698 = vpack.c.b16 %v3646, %v3642
    %v3699 = vpack.c.b16 %v3647, %v3643
    %v3700 = vpack.c.b16 %v3648, %v3644
    %v3701 = vpack.c.b16 %v3653, %v3649
    %v3702 = vpack.c.b16 %v3654, %v3650
    %v3703 = vpack.c.b16 %v3655, %v3651
    %v3704 = vpack.c.b16 %v3656, %v3652
    %v3705 = vpack.c.b16 %v3661, %v3657
    %v3706 = vpack.c.b16 %v3662, %v3658
    %v3707 = vpack.c.b16 %v3663, %v3659
    %v3708 = vpack.c.b16 %v3664, %v3660
    %v3709 = vpack.c.b16 %v3669, %v3665
    %v3710 = vpack.c.b16 %v3670, %v3666
    %v3711 = vpack.c.b16 %v3671, %v3667
    %v3712 = vpack.c.b16 %v3672, %v3668
    %v3713 = vpack.c.b16 %v3677, %v3673
    %v3714 = vpack.c.b16 %v3678, %v3674
    %v3715 = vpack.c.b16 %v3679, %v3675
    %v3716 = vpack.c.b16 %v3680, %v3676
    %v3717 = vpack.c.b16 %v3685, %v3681
    %v3718 = vpack.c.b16 %v3686, %v3682
    %v3719 = vpack.c.b16 %v3687, %v3683
    %v3720 = vpack.c.b16 %v3688, %v3684
    %3753 = vmatprep.subr.bf16.mxu0 %v3718
    %3754 = vmatpush1.bf16.msra.mxu0 %v3717
    %3755 = vmatprep.subr.bf16.mxu0 %v3714
    %3756 = vmatpush1.bf16.msra.mxu0 %v3713
    %3757 = vmatprep.subr.bf16.mxu0 %v3710
    %3758 = vmatpush1.bf16.msra.mxu0 %v3709
    %3759 = vmatprep.subr.bf16.mxu0 %v3706
    %3760 = vmatpush1.bf16.msra.mxu0 %v3705
    %3761 = vmatprep.subr.bf16.mxu0 %v3702
    %3762 = vmatpush1.bf16.msra.mxu0 %v3701
    %3763 = vmatprep.subr.bf16.mxu0 %v3698
    %3764 = vmatpush1.bf16.msra.mxu0 %v3697
    %3765 = vmatprep.subr.bf16.mxu0 %v3694
    %3766 = vmatpush1.bf16.msra.mxu0 %v3693
    %3767 = vmatprep.subr.bf16.mxu0 %v3690
    %3768 = vmatpush1.bf16.msra.mxu0 %v3689
    %3769 = vmatprep.subr.bf16.mxu0 0
    %3770 = vmatpush2.bf16.msra.mxu0 0
    %3771 = vmatprep.subr.bf16.mxu0 0
    %3772 = vmatpush2.bf16.msra.mxu0 0
    %3773 = vmatprep.subr.bf16.mxu0 0
    %3774 = vmatpush2.bf16.msra.mxu0 0
    %3775 = vmatprep.subr.bf16.mxu0 0
    %3776 = vmatpush2.bf16.msra.mxu0 0
    %3777 = vmatprep.subr.bf16.mxu0 0
    %3778 = vmatpush2.bf16.msra.mxu0 0
    %3779 = vmatprep.subr.bf16.mxu0 0
    %3780 = vmatpush2.bf16.msra.mxu0 0
    %3781 = vmatprep.subr.bf16.mxu0 0
    %3782 = vmatpush2.bf16.msra.mxu0 0
    %3783 = vmatprep.subr.bf16.mxu0 0
    %3784 = vmatpush2.bf16.msra.mxu0 0
    %3785 = vmatprep.mubr.bf16.mxu0 0
    %3786 = vmatmul.mubr.bf16.gmra.mxu0 %v3560
    %v3787 = vpop.f32.mrf.mxu0
    %v3788 = vadd.f32 0.0, %v3787
    %v3789 = vpop.f32.mrf.mxu0
    %v3790 = vadd.f32 0.0, %v3789
    %v3791 = vpop.f32.mrf.mxu0
    %v3792 = vpop.f32.mrf.mxu0
    %3793 = vdwg.mxu0
    %3794 = vmatprep.subr.bf16.mxu0 %v3720
    %3795 = vmatpush1.bf16.msra.mxu0 %v3719
    %3796 = vmatprep.subr.bf16.mxu0 %v3716
    %3797 = vmatpush1.bf16.msra.mxu0 %v3715
    %3798 = vmatprep.subr.bf16.mxu0 %v3712
    %3799 = vmatpush1.bf16.msra.mxu0 %v3711
    %3800 = vmatprep.subr.bf16.mxu0 %v3708
    %3801 = vmatpush1.bf16.msra.mxu0 %v3707
    %3802 = vmatprep.subr.bf16.mxu0 %v3704
    %3803 = vmatpush1.bf16.msra.mxu0 %v3703
    %3804 = vmatprep.subr.bf16.mxu0 %v3700
    %3805 = vmatpush1.bf16.msra.mxu0 %v3699
    %3806 = vmatprep.subr.bf16.mxu0 %v3696
    %3807 = vmatpush1.bf16.msra.mxu0 %v3695
    %3808 = vmatprep.subr.bf16.mxu0 %v3692
    %3809 = vmatpush1.bf16.msra.mxu0 %v3691
    %3810 = vmatprep.subr.bf16.mxu0 0
    %3811 = vmatpush2.bf16.msra.mxu0 0
    %3812 = vmatprep.subr.bf16.mxu0 0
    %3813 = vmatpush2.bf16.msra.mxu0 0
    %3814 = vmatprep.subr.bf16.mxu0 0
    %3815 = vmatpush2.bf16.msra.mxu0 0
    %3816 = vmatprep.subr.bf16.mxu0 0
    %3817 = vmatpush2.bf16.msra.mxu0 0
    %3818 = vmatprep.subr.bf16.mxu0 0
    %3819 = vmatpush2.bf16.msra.mxu0 0
    %3820 = vmatprep.subr.bf16.mxu0 0
    %3821 = vmatpush2.bf16.msra.mxu0 0
    %3822 = vmatprep.subr.bf16.mxu0 0
    %3823 = vmatpush2.bf16.msra.mxu0 0
    %3824 = vmatprep.subr.bf16.mxu0 0
    %3825 = vmatpush2.bf16.msra.mxu0 0
    %3826 = vmatprep.mubr.bf16.mxu0 0
    %3827 = vmatmul.mubr.bf16.gmra.mxu0 %v3560
    %v3828 = vpop.f32.mrf.mxu0
    %v3829 = vadd.f32 0.0, %v3828
    %v3830 = vpop.f32.mrf.mxu0
    %v3831 = vadd.f32 0.0, %v3830
    %v3832 = vpop.f32.mrf.mxu0
    %v3833 = vpop.f32.mrf.mxu0
    %3834 = vdwg.mxu0
    %v3835 = vadd.f32 %v3556, %v3788
    %v3836 = vadd.f32 %v3557, %v3790
    %v3837 = vadd.f32 %v3558, %v3829
    %v3838 = vadd.f32 %v3559, %v3831
    %v3839 = vxor.u32 %v3835, 2147483648
    %v3840 = vmul.f32 %v3839, 1.442695
    %v3841 = vpow.pop %v3840
    %v3842 = vadd.f32 %v3841, 1.0
    %v3843 = vrcp.pop %v3842
    %v3844 = vmul.f32 1.0, %v3843
    %v3845 = vxor.u32 %v3836, 2147483648
    %v3846 = vmul.f32 %v3845, 1.442695
    %v3847 = vpow.pop %v3846
    %v3848 = vadd.f32 %v3847, 1.0
    %v3849 = vrcp.pop %v3848
    %v3850 = vmul.f32 1.0, %v3849
    %v3851 = vtanh.pop %v3837
    %v3852 = vxor.u32 %v3838, 2147483648
    %v3853 = vmul.f32 %v3852, 1.442695
    %v3854 = vpow.pop %v3853
    %v3855 = vadd.f32 %v3854, 1.0
    %v3856 = vrcp.pop %v3855
    %v3857 = vmul.f32 1.0, %v3856
    %v3858 = vmul.f32 %v3850, %v3543
    %v3859 = vmul.f32 %v3844, %v3851
    %v3860 = vadd.f32 %v3858, %v3859
    %v3861 = vtanh.pop %v3860
    %v3862 = vmul.f32 %v3857, %v3861
    %3863 = vst [vmem:[#allocation4 + $0x38] sm:$0xff] %v3862
    %3864 = vst [vmem:[#allocation5] sm:$0xff] %v3862
    %v3865 = vld [vmem:[#allocation4] sm:$0xff]
    %v3866 = vld [vmem:[#allocation4 + $0x8] sm:$0xff]
    %v3867 = vld [vmem:[#allocation4 + $0x10] sm:$0xff]
    %v3868 = vld [vmem:[#allocation4 + $0x18] sm:$0xff]
    %v3869 = vld [vmem:[#allocation4 + $0x20] sm:$0xff]
    %v3870 = vld [vmem:[#allocation4 + $0x28] sm:$0xff]
    %v3871 = vld [vmem:[#allocation4 + $0x30] sm:$0xff]
    %v3872 = vld [vmem:[#allocation4 + $0x38] sm:$0xff]
    %v3873 = vpack.c.bf16 %v3866, %v3865
    %v3874 = vpack.c.bf16 %v3868, %v3867
    %v3875 = vpack.c.bf16 %v3870, %v3869
    %v3876 = vpack.c.bf16 %v3872, %v3871
    %v3877 = vld [vmem:[#allocation12] sm:$0xff]
    %v3878 = vld [vmem:[#allocation12 + $0x8] sm:$0xff]
    %v3879 = vld [vmem:[#allocation12 + $0x10] sm:$0xff]
    %v3880 = vld [vmem:[#allocation12 + $0x18] sm:$0xff]
    %v3881 = vld [vmem:[#allocation12 + $0x20] sm:$0xff]
    %v3882 = vld [vmem:[#allocation12 + $0x28] sm:$0xff]
    %v3883 = vld [vmem:[#allocation12 + $0x30] sm:$0xff]
    %v3884 = vld [vmem:[#allocation12 + $0x38] sm:$0xff]
    %v3885 = vld [vmem:[#allocation12 + $0x40] sm:$0xff]
    %v3886 = vld [vmem:[#allocation12 + $0x48] sm:$0xff]
    %v3887 = vld [vmem:[#allocation12 + $0x50] sm:$0xff]
    %v3888 = vld [vmem:[#allocation12 + $0x58] sm:$0xff]
    %v3889 = vld [vmem:[#allocation12 + $0x60] sm:$0xff]
    %v3890 = vld [vmem:[#allocation12 + $0x68] sm:$0xff]
    %v3891 = vld [vmem:[#allocation12 + $0x70] sm:$0xff]
    %v3892 = vld [vmem:[#allocation12 + $0x78] sm:$0xff]
    %v3893 = vld [vmem:[#allocation12 + $0x80] sm:$0xff]
    %v3894 = vld [vmem:[#allocation12 + $0x88] sm:$0xff]
    %v3895 = vld [vmem:[#allocation12 + $0x90] sm:$0xff]
    %v3896 = vld [vmem:[#allocation12 + $0x98] sm:$0xff]
    %v3897 = vld [vmem:[#allocation12 + $0xa0] sm:$0xff]
    %v3898 = vld [vmem:[#allocation12 + $0xa8] sm:$0xff]
    %v3899 = vld [vmem:[#allocation12 + $0xb0] sm:$0xff]
    %v3900 = vld [vmem:[#allocation12 + $0xb8] sm:$0xff]
    %v3901 = vld [vmem:[#allocation12 + $0xc0] sm:$0xff]
    %v3902 = vld [vmem:[#allocation12 + $0xc8] sm:$0xff]
    %v3903 = vld [vmem:[#allocation12 + $0xd0] sm:$0xff]
    %v3904 = vld [vmem:[#allocation12 + $0xd8] sm:$0xff]
    %v3905 = vld [vmem:[#allocation12 + $0xe0] sm:$0xff]
    %v3906 = vld [vmem:[#allocation12 + $0xe8] sm:$0xff]
    %v3907 = vld [vmem:[#allocation12 + $0xf0] sm:$0xff]
    %v3908 = vld [vmem:[#allocation12 + $0xf8] sm:$0xff]
    %v3909 = vld [vmem:[%s7] sm:$0xf]
    %v3911 = vlaneseq
    %v3912 = vshrl.u32 %v3911, 7
    %v3913 = vsub.s32 0, %v3912
    %v3914 = vrot.slane %v3909, %v3913
    %v3915 = vlaneseq
    %v3916 = vshrl.u32 %v3915, 7
    %v3917 = vsub.s32 1, %v3916
    %v3918 = vrot.slane %v3909, %v3917
    %v3919 = vlaneseq
    %v3920 = vshrl.u32 %v3919, 7
    %v3921 = vsub.s32 2, %v3920
    %v3922 = vrot.slane %v3909, %v3921
    %v3923 = vlaneseq
    %v3924 = vshrl.u32 %v3923, 7
    %v3925 = vsub.s32 3, %v3924
    %v3926 = vrot.slane %v3909, %v3925
    %v3963 = vunpack.c.l.b16 %v3877
    %v3964 = vunpack.c.h.b16 %v3877
    %v3965 = vunpack.c.l.b16 %v3878
    %v3966 = vunpack.c.h.b16 %v3878
    %v3967 = vunpack.c.l.b16 %v3879
    %v3968 = vunpack.c.h.b16 %v3879
    %v3969 = vunpack.c.l.b16 %v3880
    %v3970 = vunpack.c.h.b16 %v3880
    %v3971 = vunpack.c.l.b16 %v3881
    %v3972 = vunpack.c.h.b16 %v3881
    %v3973 = vunpack.c.l.b16 %v3882
    %v3974 = vunpack.c.h.b16 %v3882
    %v3975 = vunpack.c.l.b16 %v3883
    %v3976 = vunpack.c.h.b16 %v3883
    %v3977 = vunpack.c.l.b16 %v3884
    %v3978 = vunpack.c.h.b16 %v3884
    %v3979 = vunpack.c.l.b16 %v3885
    %v3980 = vunpack.c.h.b16 %v3885
    %v3981 = vunpack.c.l.b16 %v3886
    %v3982 = vunpack.c.h.b16 %v3886
    %v3983 = vunpack.c.l.b16 %v3887
    %v3984 = vunpack.c.h.b16 %v3887
    %v3985 = vunpack.c.l.b16 %v3888
    %v3986 = vunpack.c.h.b16 %v3888
    %v3987 = vunpack.c.l.b16 %v3889
    %v3988 = vunpack.c.h.b16 %v3889
    %v3989 = vunpack.c.l.b16 %v3890
    %v3990 = vunpack.c.h.b16 %v3890
    %v3991 = vunpack.c.l.b16 %v3891
    %v3992 = vunpack.c.h.b16 %v3891
    %v3993 = vunpack.c.l.b16 %v3892
    %v3994 = vunpack.c.h.b16 %v3892
    %v3995 = vunpack.c.l.b16 %v3893
    %v3996 = vunpack.c.h.b16 %v3893
    %v3997 = vunpack.c.l.b16 %v3894
    %v3998 = vunpack.c.h.b16 %v3894
    %v3999 = vunpack.c.l.b16 %v3895
    %v4000 = vunpack.c.h.b16 %v3895
    %v4001 = vunpack.c.l.b16 %v3896
    %v4002 = vunpack.c.h.b16 %v3896
    %v4003 = vunpack.c.l.b16 %v3897
    %v4004 = vunpack.c.h.b16 %v3897
    %v4005 = vunpack.c.l.b16 %v3898
    %v4006 = vunpack.c.h.b16 %v3898
    %v4007 = vunpack.c.l.b16 %v3899
    %v4008 = vunpack.c.h.b16 %v3899
    %v4009 = vunpack.c.l.b16 %v3900
    %v4010 = vunpack.c.h.b16 %v3900
    %v4011 = vunpack.c.l.b16 %v3901
    %v4012 = vunpack.c.h.b16 %v3901
    %v4013 = vunpack.c.l.b16 %v3902
    %v4014 = vunpack.c.h.b16 %v3902
    %v4015 = vunpack.c.l.b16 %v3903
    %v4016 = vunpack.c.h.b16 %v3903
    %v4017 = vunpack.c.l.b16 %v3904
    %v4018 = vunpack.c.h.b16 %v3904
    %v4019 = vunpack.c.l.b16 %v3905
    %v4020 = vunpack.c.h.b16 %v3905
    %v4021 = vunpack.c.l.b16 %v3906
    %v4022 = vunpack.c.h.b16 %v3906
    %v4023 = vunpack.c.l.b16 %v3907
    %v4024 = vunpack.c.h.b16 %v3907
    %v4025 = vunpack.c.l.b16 %v3908
    %v4026 = vunpack.c.h.b16 %v3908
    %v4027 = vpack.c.b16 %v3967, %v3963
    %v4028 = vpack.c.b16 %v3968, %v3964
    %v4029 = vpack.c.b16 %v3969, %v3965
    %v4030 = vpack.c.b16 %v3970, %v3966
    %v4031 = vpack.c.b16 %v3975, %v3971
    %v4032 = vpack.c.b16 %v3976, %v3972
    %v4033 = vpack.c.b16 %v3977, %v3973
    %v4034 = vpack.c.b16 %v3978, %v3974
    %v4035 = vpack.c.b16 %v3983, %v3979
    %v4036 = vpack.c.b16 %v3984, %v3980
    %v4037 = vpack.c.b16 %v3985, %v3981
    %v4038 = vpack.c.b16 %v3986, %v3982
    %v4039 = vpack.c.b16 %v3991, %v3987
    %v4040 = vpack.c.b16 %v3992, %v3988
    %v4041 = vpack.c.b16 %v3993, %v3989
    %v4042 = vpack.c.b16 %v3994, %v3990
    %v4043 = vpack.c.b16 %v3999, %v3995
    %v4044 = vpack.c.b16 %v4000, %v3996
    %v4045 = vpack.c.b16 %v4001, %v3997
    %v4046 = vpack.c.b16 %v4002, %v3998
    %v4047 = vpack.c.b16 %v4007, %v4003
    %v4048 = vpack.c.b16 %v4008, %v4004
    %v4049 = vpack.c.b16 %v4009, %v4005
    %v4050 = vpack.c.b16 %v4010, %v4006
    %v4051 = vpack.c.b16 %v4015, %v4011
    %v4052 = vpack.c.b16 %v4016, %v4012
    %v4053 = vpack.c.b16 %v4017, %v4013
    %v4054 = vpack.c.b16 %v4018, %v4014
    %v4055 = vpack.c.b16 %v4023, %v4019
    %v4056 = vpack.c.b16 %v4024, %v4020
    %v4057 = vpack.c.b16 %v4025, %v4021
    %v4058 = vpack.c.b16 %v4026, %v4022
    %4091 = vmatprep.subr.bf16.mxu0 %v4056
    %4092 = vmatpush1.bf16.msra.mxu0 %v4055
    %4093 = vmatprep.subr.bf16.mxu0 %v4052
    %4094 = vmatpush1.bf16.msra.mxu0 %v4051
    %4095 = vmatprep.subr.bf16.mxu0 %v4048
    %4096 = vmatpush1.bf16.msra.mxu0 %v4047
    %4097 = vmatprep.subr.bf16.mxu0 %v4044
    %4098 = vmatpush1.bf16.msra.mxu0 %v4043
    %4099 = vmatprep.subr.bf16.mxu0 %v4040
    %4100 = vmatpush1.bf16.msra.mxu0 %v4039
    %4101 = vmatprep.subr.bf16.mxu0 %v4036
    %4102 = vmatpush1.bf16.msra.mxu0 %v4035
    %4103 = vmatprep.subr.bf16.mxu0 %v4032
    %4104 = vmatpush1.bf16.msra.mxu0 %v4031
    %4105 = vmatprep.subr.bf16.mxu0 %v4028
    %4106 = vmatpush1.bf16.msra.mxu0 %v4027
    %4107 = vmatprep.subr.bf16.mxu0 0
    %4108 = vmatpush2.bf16.msra.mxu0 0
    %4109 = vmatprep.subr.bf16.mxu0 0
    %4110 = vmatpush2.bf16.msra.mxu0 0
    %4111 = vmatprep.subr.bf16.mxu0 0
    %4112 = vmatpush2.bf16.msra.mxu0 0
    %4113 = vmatprep.subr.bf16.mxu0 0
    %4114 = vmatpush2.bf16.msra.mxu0 0
    %4115 = vmatprep.subr.bf16.mxu0 0
    %4116 = vmatpush2.bf16.msra.mxu0 0
    %4117 = vmatprep.subr.bf16.mxu0 0
    %4118 = vmatpush2.bf16.msra.mxu0 0
    %4119 = vmatprep.subr.bf16.mxu0 0
    %4120 = vmatpush2.bf16.msra.mxu0 0
    %4121 = vmatprep.subr.bf16.mxu0 0
    %4122 = vmatpush2.bf16.msra.mxu0 0
    %4123 = vmatprep.mubr.bf16.mxu0 0
    %4124 = vmatmul.mubr.bf16.gmra.mxu0 %v3873
    %v4125 = vpop.f32.mrf.mxu0
    %v4126 = vadd.f32 %v3914, %v4125
    %v4127 = vpop.f32.mrf.mxu0
    %v4128 = vadd.f32 %v3918, %v4127
    %v4129 = vpop.f32.mrf.mxu0
    %v4130 = vadd.f32 %v3914, %v4129
    %v4131 = vpop.f32.mrf.mxu0
    %v4132 = vadd.f32 %v3918, %v4131
    %4133 = vmatprep.mubr.bf16.mxu0 0
    %4134 = vmatmul.mubr.bf16.gmra.mxu0 %v3874
    %v4135 = vpop.f32.mrf.mxu0
    %v4136 = vadd.f32 %v3914, %v4135
    %v4137 = vpop.f32.mrf.mxu0
    %v4138 = vadd.f32 %v3918, %v4137
    %v4139 = vpop.f32.mrf.mxu0
    %v4140 = vadd.f32 %v3914, %v4139
    %v4141 = vpop.f32.mrf.mxu0
    %v4142 = vadd.f32 %v3918, %v4141
    %4143 = vmatprep.mubr.bf16.mxu0 0
    %4144 = vmatmul.mubr.bf16.gmra.mxu0 %v3875
    %v4145 = vpop.f32.mrf.mxu0
    %v4146 = vadd.f32 %v3914, %v4145
    %v4147 = vpop.f32.mrf.mxu0
    %v4148 = vadd.f32 %v3918, %v4147
    %v4149 = vpop.f32.mrf.mxu0
    %v4150 = vadd.f32 %v3914, %v4149
    %v4151 = vpop.f32.mrf.mxu0
    %v4152 = vadd.f32 %v3918, %v4151
    %4153 = vmatprep.mubr.bf16.mxu0 0
    %4154 = vmatmul.mubr.bf16.gmra.mxu0 %v3876
    %v4155 = vpop.f32.mrf.mxu0
    %v4156 = vadd.f32 %v3914, %v4155
    %v4157 = vpop.f32.mrf.mxu0
    %v4158 = vadd.f32 %v3918, %v4157
    %v4159 = vpop.f32.mrf.mxu0
    %v4160 = vadd.f32 %v3914, %v4159
    %v4161 = vpop.f32.mrf.mxu0
    %v4162 = vadd.f32 %v3918, %v4161
    %4163 = vdwg.mxu0
    %4164 = vmatprep.subr.bf16.mxu0 %v4058
    %4165 = vmatpush1.bf16.msra.mxu0 %v4057
    %4166 = vmatprep.subr.bf16.mxu0 %v4054
    %4167 = vmatpush1.bf16.msra.mxu0 %v4053
    %4168 = vmatprep.subr.bf16.mxu0 %v4050
    %4169 = vmatpush1.bf16.msra.mxu0 %v4049
    %4170 = vmatprep.subr.bf16.mxu0 %v4046
    %4171 = vmatpush1.bf16.msra.mxu0 %v4045
    %4172 = vmatprep.subr.bf16.mxu0 %v4042
    %4173 = vmatpush1.bf16.msra.mxu0 %v4041
    %4174 = vmatprep.subr.bf16.mxu0 %v4038
    %4175 = vmatpush1.bf16.msra.mxu0 %v4037
    %4176 = vmatprep.subr.bf16.mxu0 %v4034
    %4177 = vmatpush1.bf16.msra.mxu0 %v4033
    %4178 = vmatprep.subr.bf16.mxu0 %v4030
    %4179 = vmatpush1.bf16.msra.mxu0 %v4029
    %4180 = vmatprep.subr.bf16.mxu0 0
    %4181 = vmatpush2.bf16.msra.mxu0 0
    %4182 = vmatprep.subr.bf16.mxu0 0
    %4183 = vmatpush2.bf16.msra.mxu0 0
    %4184 = vmatprep.subr.bf16.mxu0 0
    %4185 = vmatpush2.bf16.msra.mxu0 0
    %4186 = vmatprep.subr.bf16.mxu0 0
    %4187 = vmatpush2.bf16.msra.mxu0 0
    %4188 = vmatprep.subr.bf16.mxu0 0
    %4189 = vmatpush2.bf16.msra.mxu0 0
    %4190 = vmatprep.subr.bf16.mxu0 0
    %4191 = vmatpush2.bf16.msra.mxu0 0
    %4192 = vmatprep.subr.bf16.mxu0 0
    %4193 = vmatpush2.bf16.msra.mxu0 0
    %4194 = vmatprep.subr.bf16.mxu0 0
    %4195 = vmatpush2.bf16.msra.mxu0 0
    %4196 = vmatprep.mubr.bf16.mxu0 0
    %4197 = vmatmul.mubr.bf16.gmra.mxu0 %v3873
    %v4198 = vpop.f32.mrf.mxu0
    %v4199 = vadd.f32 %v3922, %v4198
    %v4200 = vpop.f32.mrf.mxu0
    %v4201 = vadd.f32 %v3926, %v4200
    %v4202 = vpop.f32.mrf.mxu0
    %v4203 = vadd.f32 %v3922, %v4202
    %v4204 = vpop.f32.mrf.mxu0
    %v4205 = vadd.f32 %v3926, %v4204
    %4206 = vmatprep.mubr.bf16.mxu0 0
    %4207 = vmatmul.mubr.bf16.gmra.mxu0 %v3874
    %v4208 = vpop.f32.mrf.mxu0
    %v4209 = vadd.f32 %v3922, %v4208
    %v4210 = vpop.f32.mrf.mxu0
    %v4211 = vadd.f32 %v3926, %v4210
    %v4212 = vpop.f32.mrf.mxu0
    %v4213 = vadd.f32 %v3922, %v4212
    %v4214 = vpop.f32.mrf.mxu0
    %v4215 = vadd.f32 %v3926, %v4214
    %4216 = vmatprep.mubr.bf16.mxu0 0
    %4217 = vmatmul.mubr.bf16.gmra.mxu0 %v3875
    %v4218 = vpop.f32.mrf.mxu0
    %v4219 = vadd.f32 %v3922, %v4218
    %v4220 = vpop.f32.mrf.mxu0
    %v4221 = vadd.f32 %v3926, %v4220
    %v4222 = vpop.f32.mrf.mxu0
    %v4223 = vadd.f32 %v3922, %v4222
    %v4224 = vpop.f32.mrf.mxu0
    %v4225 = vadd.f32 %v3926, %v4224
    %4226 = vmatprep.mubr.bf16.mxu0 0
    %4227 = vmatmul.mubr.bf16.gmra.mxu0 %v3876
    %v4228 = vpop.f32.mrf.mxu0
    %v4229 = vadd.f32 %v3922, %v4228
    %v4230 = vpop.f32.mrf.mxu0
    %v4231 = vadd.f32 %v3926, %v4230
    %v4232 = vpop.f32.mrf.mxu0
    %v4233 = vadd.f32 %v3922, %v4232
    %v4234 = vpop.f32.mrf.mxu0
    %v4235 = vadd.f32 %v3926, %v4234
    %4236 = vdwg.mxu0
    %4237 = vst [vmem:[#allocation3] sm:$0xff] %v4126
    %4238 = vst [vmem:[#allocation3 + $0x8] sm:$0xff] %v4128
    %4239 = vst [vmem:[#allocation3 + $0x10] sm:$0xff] %v4199
    %4240 = vst [vmem:[#allocation3 + $0x18] sm:$0xff] %v4201
    %4241 = vst [vmem:[#allocation3 + $0x20] sm:$0xff] %v4130
    %4242 = vst [vmem:[#allocation3 + $0x28] sm:$0xff] %v4132
    %4243 = vst [vmem:[#allocation3 + $0x30] sm:$0xff] %v4203
    %4244 = vst [vmem:[#allocation3 + $0x38] sm:$0xff] %v4205
    %4245 = vst [vmem:[#allocation3 + $0x40] sm:$0xff] %v4136
    %4246 = vst [vmem:[#allocation3 + $0x48] sm:$0xff] %v4138
    %4247 = vst [vmem:[#allocation3 + $0x50] sm:$0xff] %v4209
    %4248 = vst [vmem:[#allocation3 + $0x58] sm:$0xff] %v4211
    %4249 = vst [vmem:[#allocation3 + $0x60] sm:$0xff] %v4140
    %4250 = vst [vmem:[#allocation3 + $0x68] sm:$0xff] %v4142
    %4251 = vst [vmem:[#allocation3 + $0x70] sm:$0xff] %v4213
    %4252 = vst [vmem:[#allocation3 + $0x78] sm:$0xff] %v4215
    %4253 = vst [vmem:[#allocation3 + $0x80] sm:$0xff] %v4146
    %4254 = vst [vmem:[#allocation3 + $0x88] sm:$0xff] %v4148
    %4255 = vst [vmem:[#allocation3 + $0x90] sm:$0xff] %v4219
    %4256 = vst [vmem:[#allocation3 + $0x98] sm:$0xff] %v4221
    %4257 = vst [vmem:[#allocation3 + $0xa0] sm:$0xff] %v4150
    %4258 = vst [vmem:[#allocation3 + $0xa8] sm:$0xff] %v4152
    %4259 = vst [vmem:[#allocation3 + $0xb0] sm:$0xff] %v4223
    %4260 = vst [vmem:[#allocation3 + $0xb8] sm:$0xff] %v4225
    %4261 = vst [vmem:[#allocation3 + $0xc0] sm:$0xff] %v4156
    %4262 = vst [vmem:[#allocation3 + $0xc8] sm:$0xff] %v4158
    %4263 = vst [vmem:[#allocation3 + $0xd0] sm:$0xff] %v4229
    %4264 = vst [vmem:[#allocation3 + $0xd8] sm:$0xff] %v4231
    %4265 = vst [vmem:[#allocation3 + $0xe0] sm:$0xff] %v4160
    %4266 = vst [vmem:[#allocation3 + $0xe8] sm:$0xff] %v4162
    %4267 = vst [vmem:[#allocation3 + $0xf0] sm:$0xff] %v4233
    %4268 = vst [vmem:[#allocation3 + $0xf8] sm:$0xff] %v4235
    %v4269 = vld [vmem:[#allocation3] sm:$0xff]
    %v4270 = vld [vmem:[#allocation3 + $0x8] sm:$0xff]
    %v4271 = vld [vmem:[#allocation3 + $0x10] sm:$0xff]
    %v4272 = vld [vmem:[#allocation3 + $0x18] sm:$0xff]
    %v4273 = vld [vmem:[#allocation3 + $0x20] sm:$0xff]
    %v4274 = vld [vmem:[#allocation3 + $0x28] sm:$0xff]
    %v4275 = vld [vmem:[#allocation3 + $0x30] sm:$0xff]
    %v4276 = vld [vmem:[#allocation3 + $0x38] sm:$0xff]
    %v4277 = vld [vmem:[#allocation3 + $0x40] sm:$0xff]
    %v4278 = vld [vmem:[#allocation3 + $0x48] sm:$0xff]
    %v4279 = vld [vmem:[#allocation3 + $0x50] sm:$0xff]
    %v4280 = vld [vmem:[#allocation3 + $0x58] sm:$0xff]
    %v4281 = vld [vmem:[#allocation3 + $0x60] sm:$0xff]
    %v4282 = vld [vmem:[#allocation3 + $0x68] sm:$0xff]
    %v4283 = vld [vmem:[#allocation3 + $0x70] sm:$0xff]
    %v4284 = vld [vmem:[#allocation3 + $0x78] sm:$0xff]
    %v4285 = vld [vmem:[#allocation3 + $0x80] sm:$0xff]
    %v4286 = vld [vmem:[#allocation3 + $0x88] sm:$0xff]
    %v4287 = vld [vmem:[#allocation3 + $0x90] sm:$0xff]
    %v4288 = vld [vmem:[#allocation3 + $0x98] sm:$0xff]
    %v4289 = vld [vmem:[#allocation3 + $0xa0] sm:$0xff]
    %v4290 = vld [vmem:[#allocation3 + $0xa8] sm:$0xff]
    %v4291 = vld [vmem:[#allocation3 + $0xb0] sm:$0xff]
    %v4292 = vld [vmem:[#allocation3 + $0xb8] sm:$0xff]
    %v4293 = vld [vmem:[#allocation3 + $0xc0] sm:$0xff]
    %v4294 = vld [vmem:[#allocation3 + $0xc8] sm:$0xff]
    %v4295 = vld [vmem:[#allocation3 + $0xd0] sm:$0xff]
    %v4296 = vld [vmem:[#allocation3 + $0xd8] sm:$0xff]
    %v4297 = vld [vmem:[#allocation3 + $0xe0] sm:$0xff]
    %v4298 = vld [vmem:[#allocation3 + $0xe8] sm:$0xff]
    %v4299 = vld [vmem:[#allocation3 + $0xf0] sm:$0xff]
    %v4300 = vld [vmem:[#allocation3 + $0xf8] sm:$0xff]
    %v4301 = vld [vmem:[#allocation5] sm:$0xff]
    %v4302 = vld [vmem:[#allocation5 + $0x8] sm:$0xff]
    %v4303 = vld [vmem:[#allocation5 + $0x10] sm:$0xff]
    %v4304 = vld [vmem:[#allocation5 + $0x18] sm:$0xff]
    %v4305 = vld [vmem:[#allocation5 + $0x20] sm:$0xff]
    %v4306 = vld [vmem:[#allocation5 + $0x28] sm:$0xff]
    %v4307 = vld [vmem:[#allocation5 + $0x30] sm:$0xff]
    %v4308 = vld [vmem:[#allocation5 + $0x38] sm:$0xff]
    %v4309 = vpack.c.bf16 %v4302, %v4301
    %v4310 = vpack.c.bf16 %v4304, %v4303
    %v4311 = vpack.c.bf16 %v4306, %v4305
    %v4312 = vpack.c.bf16 %v4308, %v4307
    %v4313 = vld [vmem:[#allocation14] sm:$0xff]
    %v4314 = vld [vmem:[#allocation14 + $0x8] sm:$0xff]
    %v4315 = vld [vmem:[#allocation14 + $0x10] sm:$0xff]
    %v4316 = vld [vmem:[#allocation14 + $0x18] sm:$0xff]
    %v4317 = vld [vmem:[#allocation14 + $0x20] sm:$0xff]
    %v4318 = vld [vmem:[#allocation14 + $0x28] sm:$0xff]
    %v4319 = vld [vmem:[#allocation14 + $0x30] sm:$0xff]
    %v4320 = vld [vmem:[#allocation14 + $0x38] sm:$0xff]
    %v4321 = vld [vmem:[#allocation14 + $0x40] sm:$0xff]
    %v4322 = vld [vmem:[#allocation14 + $0x48] sm:$0xff]
    %v4323 = vld [vmem:[#allocation14 + $0x50] sm:$0xff]
    %v4324 = vld [vmem:[#allocation14 + $0x58] sm:$0xff]
    %v4325 = vld [vmem:[#allocation14 + $0x60] sm:$0xff]
    %v4326 = vld [vmem:[#allocation14 + $0x68] sm:$0xff]
    %v4327 = vld [vmem:[#allocation14 + $0x70] sm:$0xff]
    %v4328 = vld [vmem:[#allocation14 + $0x78] sm:$0xff]
    %v4329 = vld [vmem:[#allocation14 + $0x80] sm:$0xff]
    %v4330 = vld [vmem:[#allocation14 + $0x88] sm:$0xff]
    %v4331 = vld [vmem:[#allocation14 + $0x90] sm:$0xff]
    %v4332 = vld [vmem:[#allocation14 + $0x98] sm:$0xff]
    %v4333 = vld [vmem:[#allocation14 + $0xa0] sm:$0xff]
    %v4334 = vld [vmem:[#allocation14 + $0xa8] sm:$0xff]
    %v4335 = vld [vmem:[#allocation14 + $0xb0] sm:$0xff]
    %v4336 = vld [vmem:[#allocation14 + $0xb8] sm:$0xff]
    %v4337 = vld [vmem:[#allocation14 + $0xc0] sm:$0xff]
    %v4338 = vld [vmem:[#allocation14 + $0xc8] sm:$0xff]
    %v4339 = vld [vmem:[#allocation14 + $0xd0] sm:$0xff]
    %v4340 = vld [vmem:[#allocation14 + $0xd8] sm:$0xff]
    %v4341 = vld [vmem:[#allocation14 + $0xe0] sm:$0xff]
    %v4342 = vld [vmem:[#allocation14 + $0xe8] sm:$0xff]
    %v4343 = vld [vmem:[#allocation14 + $0xf0] sm:$0xff]
    %v4344 = vld [vmem:[#allocation14 + $0xf8] sm:$0xff]
    %v4377 = vunpack.c.l.b16 %v4313
    %v4378 = vunpack.c.h.b16 %v4313
    %v4379 = vunpack.c.l.b16 %v4314
    %v4380 = vunpack.c.h.b16 %v4314
    %v4381 = vunpack.c.l.b16 %v4315
    %v4382 = vunpack.c.h.b16 %v4315
    %v4383 = vunpack.c.l.b16 %v4316
    %v4384 = vunpack.c.h.b16 %v4316
    %v4385 = vunpack.c.l.b16 %v4317
    %v4386 = vunpack.c.h.b16 %v4317
    %v4387 = vunpack.c.l.b16 %v4318
    %v4388 = vunpack.c.h.b16 %v4318
    %v4389 = vunpack.c.l.b16 %v4319
    %v4390 = vunpack.c.h.b16 %v4319
    %v4391 = vunpack.c.l.b16 %v4320
    %v4392 = vunpack.c.h.b16 %v4320
    %v4393 = vunpack.c.l.b16 %v4321
    %v4394 = vunpack.c.h.b16 %v4321
    %v4395 = vunpack.c.l.b16 %v4322
    %v4396 = vunpack.c.h.b16 %v4322
    %v4397 = vunpack.c.l.b16 %v4323
    %v4398 = vunpack.c.h.b16 %v4323
    %v4399 = vunpack.c.l.b16 %v4324
    %v4400 = vunpack.c.h.b16 %v4324
    %v4401 = vunpack.c.l.b16 %v4325
    %v4402 = vunpack.c.h.b16 %v4325
    %v4403 = vunpack.c.l.b16 %v4326
    %v4404 = vunpack.c.h.b16 %v4326
    %v4405 = vunpack.c.l.b16 %v4327
    %v4406 = vunpack.c.h.b16 %v4327
    %v4407 = vunpack.c.l.b16 %v4328
    %v4408 = vunpack.c.h.b16 %v4328
    %v4409 = vunpack.c.l.b16 %v4329
    %v4410 = vunpack.c.h.b16 %v4329
    %v4411 = vunpack.c.l.b16 %v4330
    %v4412 = vunpack.c.h.b16 %v4330
    %v4413 = vunpack.c.l.b16 %v4331
    %v4414 = vunpack.c.h.b16 %v4331
    %v4415 = vunpack.c.l.b16 %v4332
    %v4416 = vunpack.c.h.b16 %v4332
    %v4417 = vunpack.c.l.b16 %v4333
    %v4418 = vunpack.c.h.b16 %v4333
    %v4419 = vunpack.c.l.b16 %v4334
    %v4420 = vunpack.c.h.b16 %v4334
    %v4421 = vunpack.c.l.b16 %v4335
    %v4422 = vunpack.c.h.b16 %v4335
    %v4423 = vunpack.c.l.b16 %v4336
    %v4424 = vunpack.c.h.b16 %v4336
    %v4425 = vunpack.c.l.b16 %v4337
    %v4426 = vunpack.c.h.b16 %v4337
    %v4427 = vunpack.c.l.b16 %v4338
    %v4428 = vunpack.c.h.b16 %v4338
    %v4429 = vunpack.c.l.b16 %v4339
    %v4430 = vunpack.c.h.b16 %v4339
    %v4431 = vunpack.c.l.b16 %v4340
    %v4432 = vunpack.c.h.b16 %v4340
    %v4433 = vunpack.c.l.b16 %v4341
    %v4434 = vunpack.c.h.b16 %v4341
    %v4435 = vunpack.c.l.b16 %v4342
    %v4436 = vunpack.c.h.b16 %v4342
    %v4437 = vunpack.c.l.b16 %v4343
    %v4438 = vunpack.c.h.b16 %v4343
    %v4439 = vunpack.c.l.b16 %v4344
    %v4440 = vunpack.c.h.b16 %v4344
    %v4441 = vpack.c.b16 %v4381, %v4377
    %v4442 = vpack.c.b16 %v4382, %v4378
    %v4443 = vpack.c.b16 %v4383, %v4379
    %v4444 = vpack.c.b16 %v4384, %v4380
    %v4445 = vpack.c.b16 %v4389, %v4385
    %v4446 = vpack.c.b16 %v4390, %v4386
    %v4447 = vpack.c.b16 %v4391, %v4387
    %v4448 = vpack.c.b16 %v4392, %v4388
    %v4449 = vpack.c.b16 %v4397, %v4393
    %v4450 = vpack.c.b16 %v4398, %v4394
    %v4451 = vpack.c.b16 %v4399, %v4395
    %v4452 = vpack.c.b16 %v4400, %v4396
    %v4453 = vpack.c.b16 %v4405, %v4401
    %v4454 = vpack.c.b16 %v4406, %v4402
    %v4455 = vpack.c.b16 %v4407, %v4403
    %v4456 = vpack.c.b16 %v4408, %v4404
    %v4457 = vpack.c.b16 %v4413, %v4409
    %v4458 = vpack.c.b16 %v4414, %v4410
    %v4459 = vpack.c.b16 %v4415, %v4411
    %v4460 = vpack.c.b16 %v4416, %v4412
    %v4461 = vpack.c.b16 %v4421, %v4417
    %v4462 = vpack.c.b16 %v4422, %v4418
    %v4463 = vpack.c.b16 %v4423, %v4419
    %v4464 = vpack.c.b16 %v4424, %v4420
    %v4465 = vpack.c.b16 %v4429, %v4425
    %v4466 = vpack.c.b16 %v4430, %v4426
    %v4467 = vpack.c.b16 %v4431, %v4427
    %v4468 = vpack.c.b16 %v4432, %v4428
    %v4469 = vpack.c.b16 %v4437, %v4433
    %v4470 = vpack.c.b16 %v4438, %v4434
    %v4471 = vpack.c.b16 %v4439, %v4435
    %v4472 = vpack.c.b16 %v4440, %v4436
    %4505 = vmatprep.subr.bf16.mxu0 %v4470
    %4506 = vmatpush1.bf16.msra.mxu0 %v4469
    %4507 = vmatprep.subr.bf16.mxu0 %v4466
    %4508 = vmatpush1.bf16.msra.mxu0 %v4465
    %4509 = vmatprep.subr.bf16.mxu0 %v4462
    %4510 = vmatpush1.bf16.msra.mxu0 %v4461
    %4511 = vmatprep.subr.bf16.mxu0 %v4458
    %4512 = vmatpush1.bf16.msra.mxu0 %v4457
    %4513 = vmatprep.subr.bf16.mxu0 %v4454
    %4514 = vmatpush1.bf16.msra.mxu0 %v4453
    %4515 = vmatprep.subr.bf16.mxu0 %v4450
    %4516 = vmatpush1.bf16.msra.mxu0 %v4449
    %4517 = vmatprep.subr.bf16.mxu0 %v4446
    %4518 = vmatpush1.bf16.msra.mxu0 %v4445
    %4519 = vmatprep.subr.bf16.mxu0 %v4442
    %4520 = vmatpush1.bf16.msra.mxu0 %v4441
    %4521 = vmatprep.subr.bf16.mxu0 0
    %4522 = vmatpush2.bf16.msra.mxu0 0
    %4523 = vmatprep.subr.bf16.mxu0 0
    %4524 = vmatpush2.bf16.msra.mxu0 0
    %4525 = vmatprep.subr.bf16.mxu0 0
    %4526 = vmatpush2.bf16.msra.mxu0 0
    %4527 = vmatprep.subr.bf16.mxu0 0
    %4528 = vmatpush2.bf16.msra.mxu0 0
    %4529 = vmatprep.subr.bf16.mxu0 0
    %4530 = vmatpush2.bf16.msra.mxu0 0
    %4531 = vmatprep.subr.bf16.mxu0 0
    %4532 = vmatpush2.bf16.msra.mxu0 0
    %4533 = vmatprep.subr.bf16.mxu0 0
    %4534 = vmatpush2.bf16.msra.mxu0 0
    %4535 = vmatprep.subr.bf16.mxu0 0
    %4536 = vmatpush2.bf16.msra.mxu0 0
    %4537 = vmatprep.mubr.bf16.mxu0 0
    %4538 = vmatmul.mubr.bf16.gmra.mxu0 %v4309
    %v4539 = vpop.f32.mrf.mxu0
    %v4540 = vadd.f32 0.0, %v4539
    %v4541 = vpop.f32.mrf.mxu0
    %v4542 = vadd.f32 0.0, %v4541
    %v4543 = vpop.f32.mrf.mxu0
    %v4544 = vadd.f32 0.0, %v4543
    %v4545 = vpop.f32.mrf.mxu0
    %v4546 = vadd.f32 0.0, %v4545
    %4547 = vmatprep.mubr.bf16.mxu0 0
    %4548 = vmatmul.mubr.bf16.gmra.mxu0 %v4310
    %v4549 = vpop.f32.mrf.mxu0
    %v4550 = vadd.f32 0.0, %v4549
    %v4551 = vpop.f32.mrf.mxu0
    %v4552 = vadd.f32 0.0, %v4551
    %v4553 = vpop.f32.mrf.mxu0
    %v4554 = vadd.f32 0.0, %v4553
    %v4555 = vpop.f32.mrf.mxu0
    %v4556 = vadd.f32 0.0, %v4555
    %4557 = vmatprep.mubr.bf16.mxu0 0
    %4558 = vmatmul.mubr.bf16.gmra.mxu0 %v4311
    %v4559 = vpop.f32.mrf.mxu0
    %v4560 = vadd.f32 0.0, %v4559
    %v4561 = vpop.f32.mrf.mxu0
    %v4562 = vadd.f32 0.0, %v4561
    %v4563 = vpop.f32.mrf.mxu0
    %v4564 = vadd.f32 0.0, %v4563
    %v4565 = vpop.f32.mrf.mxu0
    %v4566 = vadd.f32 0.0, %v4565
    %4567 = vmatprep.mubr.bf16.mxu0 0
    %4568 = vmatmul.mubr.bf16.gmra.mxu0 %v4312
    %v4569 = vpop.f32.mrf.mxu0
    %v4570 = vadd.f32 0.0, %v4569
    %v4571 = vpop.f32.mrf.mxu0
    %v4572 = vadd.f32 0.0, %v4571
    %v4573 = vpop.f32.mrf.mxu0
    %v4574 = vadd.f32 0.0, %v4573
    %v4575 = vpop.f32.mrf.mxu0
    %v4576 = vadd.f32 0.0, %v4575
    %4577 = vdwg.mxu0
    %4578 = vmatprep.subr.bf16.mxu0 %v4472
    %4579 = vmatpush1.bf16.msra.mxu0 %v4471
    %4580 = vmatprep.subr.bf16.mxu0 %v4468
    %4581 = vmatpush1.bf16.msra.mxu0 %v4467
    %4582 = vmatprep.subr.bf16.mxu0 %v4464
    %4583 = vmatpush1.bf16.msra.mxu0 %v4463
    %4584 = vmatprep.subr.bf16.mxu0 %v4460
    %4585 = vmatpush1.bf16.msra.mxu0 %v4459
    %4586 = vmatprep.subr.bf16.mxu0 %v4456
    %4587 = vmatpush1.bf16.msra.mxu0 %v4455
    %4588 = vmatprep.subr.bf16.mxu0 %v4452
    %4589 = vmatpush1.bf16.msra.mxu0 %v4451
    %4590 = vmatprep.subr.bf16.mxu0 %v4448
    %4591 = vmatpush1.bf16.msra.mxu0 %v4447
    %4592 = vmatprep.subr.bf16.mxu0 %v4444
    %4593 = vmatpush1.bf16.msra.mxu0 %v4443
    %4594 = vmatprep.subr.bf16.mxu0 0
    %4595 = vmatpush2.bf16.msra.mxu0 0
    %4596 = vmatprep.subr.bf16.mxu0 0
    %4597 = vmatpush2.bf16.msra.mxu0 0
    %4598 = vmatprep.subr.bf16.mxu0 0
    %4599 = vmatpush2.bf16.msra.mxu0 0
    %4600 = vmatprep.subr.bf16.mxu0 0
    %4601 = vmatpush2.bf16.msra.mxu0 0
    %4602 = vmatprep.subr.bf16.mxu0 0
    %4603 = vmatpush2.bf16.msra.mxu0 0
    %4604 = vmatprep.subr.bf16.mxu0 0
    %4605 = vmatpush2.bf16.msra.mxu0 0
    %4606 = vmatprep.subr.bf16.mxu0 0
    %4607 = vmatpush2.bf16.msra.mxu0 0
    %4608 = vmatprep.subr.bf16.mxu0 0
    %4609 = vmatpush2.bf16.msra.mxu0 0
    %4610 = vmatprep.mubr.bf16.mxu0 0
    %4611 = vmatmul.mubr.bf16.gmra.mxu0 %v4309
    %v4612 = vpop.f32.mrf.mxu0
    %v4613 = vadd.f32 0.0, %v4612
    %v4614 = vpop.f32.mrf.mxu0
    %v4615 = vadd.f32 0.0, %v4614
    %v4616 = vpop.f32.mrf.mxu0
    %v4617 = vadd.f32 0.0, %v4616
    %v4618 = vpop.f32.mrf.mxu0
    %v4619 = vadd.f32 0.0, %v4618
    %4620 = vmatprep.mubr.bf16.mxu0 0
    %4621 = vmatmul.mubr.bf16.gmra.mxu0 %v4310
    %v4622 = vpop.f32.mrf.mxu0
    %v4623 = vadd.f32 0.0, %v4622
    %v4624 = vpop.f32.mrf.mxu0
    %v4625 = vadd.f32 0.0, %v4624
    %v4626 = vpop.f32.mrf.mxu0
    %v4627 = vadd.f32 0.0, %v4626
    %v4628 = vpop.f32.mrf.mxu0
    %v4629 = vadd.f32 0.0, %v4628
    %4630 = vmatprep.mubr.bf16.mxu0 0
    %4631 = vmatmul.mubr.bf16.gmra.mxu0 %v4311
    %v4632 = vpop.f32.mrf.mxu0
    %v4633 = vadd.f32 0.0, %v4632
    %v4634 = vpop.f32.mrf.mxu0
    %v4635 = vadd.f32 0.0, %v4634
    %v4636 = vpop.f32.mrf.mxu0
    %v4637 = vadd.f32 0.0, %v4636
    %v4638 = vpop.f32.mrf.mxu0
    %v4639 = vadd.f32 0.0, %v4638
    %4640 = vmatprep.mubr.bf16.mxu0 0
    %4641 = vmatmul.mubr.bf16.gmra.mxu0 %v4312
    %v4642 = vpop.f32.mrf.mxu0
    %v4643 = vadd.f32 0.0, %v4642
    %v4644 = vpop.f32.mrf.mxu0
    %v4645 = vadd.f32 0.0, %v4644
    %v4646 = vpop.f32.mrf.mxu0
    %v4647 = vadd.f32 0.0, %v4646
    %v4648 = vpop.f32.mrf.mxu0
    %v4649 = vadd.f32 0.0, %v4648
    %4650 = vdwg.mxu0
    %v4651 = vadd.f32 %v4269, %v4540
    %v4652 = vadd.f32 %v4270, %v4542
    %v4653 = vadd.f32 %v4271, %v4613
    %v4654 = vadd.f32 %v4272, %v4615
    %v4655 = vadd.f32 %v4273, %v4544
    %v4656 = vadd.f32 %v4274, %v4546
    %v4657 = vadd.f32 %v4275, %v4617
    %v4658 = vadd.f32 %v4276, %v4619
    %v4659 = vadd.f32 %v4277, %v4550
    %v4660 = vadd.f32 %v4278, %v4552
    %v4661 = vadd.f32 %v4279, %v4623
    %v4662 = vadd.f32 %v4280, %v4625
    %v4663 = vadd.f32 %v4281, %v4554
    %v4664 = vadd.f32 %v4282, %v4556
    %v4665 = vadd.f32 %v4283, %v4627
    %v4666 = vadd.f32 %v4284, %v4629
    %v4667 = vadd.f32 %v4285, %v4560
    %v4668 = vadd.f32 %v4286, %v4562
    %v4669 = vadd.f32 %v4287, %v4633
    %v4670 = vadd.f32 %v4288, %v4635
    %v4671 = vadd.f32 %v4289, %v4564
    %v4672 = vadd.f32 %v4290, %v4566
    %v4673 = vadd.f32 %v4291, %v4637
    %v4674 = vadd.f32 %v4292, %v4639
    %v4675 = vadd.f32 %v4293, %v4570
    %v4676 = vadd.f32 %v4294, %v4572
    %v4677 = vadd.f32 %v4295, %v4643
    %v4678 = vadd.f32 %v4296, %v4645
    %v4679 = vadd.f32 %v4297, %v4574
    %v4680 = vadd.f32 %v4298, %v4576
    %v4681 = vadd.f32 %v4299, %v4647
    %v4682 = vadd.f32 %v4300, %v4649
    %4683 = vst [vmem:[#allocation3] sm:$0xff] %v4651
    %4684 = vst [vmem:[#allocation3 + $0x8] sm:$0xff] %v4652
    %4685 = vst [vmem:[#allocation3 + $0x10] sm:$0xff] %v4653
    %4686 = vst [vmem:[#allocation3 + $0x18] sm:$0xff] %v4654
    %4687 = vst [vmem:[#allocation3 + $0x20] sm:$0xff] %v4655
    %4688 = vst [vmem:[#allocation3 + $0x28] sm:$0xff] %v4656
    %4689 = vst [vmem:[#allocation3 + $0x30] sm:$0xff] %v4657
    %4690 = vst [vmem:[#allocation3 + $0x38] sm:$0xff] %v4658
    %4691 = vst [vmem:[#allocation3 + $0x40] sm:$0xff] %v4659
    %4692 = vst [vmem:[#allocation3 + $0x48] sm:$0xff] %v4660
    %4693 = vst [vmem:[#allocation3 + $0x50] sm:$0xff] %v4661
    %4694 = vst [vmem:[#allocation3 + $0x58] sm:$0xff] %v4662
    %4695 = vst [vmem:[#allocation3 + $0x60] sm:$0xff] %v4663
    %4696 = vst [vmem:[#allocation3 + $0x68] sm:$0xff] %v4664
    %4697 = vst [vmem:[#allocation3 + $0x70] sm:$0xff] %v4665
    %4698 = vst [vmem:[#allocation3 + $0x78] sm:$0xff] %v4666
    %4699 = vst [vmem:[#allocation3 + $0x80] sm:$0xff] %v4667
    %4700 = vst [vmem:[#allocation3 + $0x88] sm:$0xff] %v4668
    %4701 = vst [vmem:[#allocation3 + $0x90] sm:$0xff] %v4669
    %4702 = vst [vmem:[#allocation3 + $0x98] sm:$0xff] %v4670
    %4703 = vst [vmem:[#allocation3 + $0xa0] sm:$0xff] %v4671
    %4704 = vst [vmem:[#allocation3 + $0xa8] sm:$0xff] %v4672
    %4705 = vst [vmem:[#allocation3 + $0xb0] sm:$0xff] %v4673
    %4706 = vst [vmem:[#allocation3 + $0xb8] sm:$0xff] %v4674
    %4707 = vst [vmem:[#allocation3 + $0xc0] sm:$0xff] %v4675
    %4708 = vst [vmem:[#allocation3 + $0xc8] sm:$0xff] %v4676
    %4709 = vst [vmem:[#allocation3 + $0xd0] sm:$0xff] %v4677
    %4710 = vst [vmem:[#allocation3 + $0xd8] sm:$0xff] %v4678
    %4711 = vst [vmem:[#allocation3 + $0xe0] sm:$0xff] %v4679
    %4712 = vst [vmem:[#allocation3 + $0xe8] sm:$0xff] %v4680
    %4713 = vst [vmem:[#allocation3 + $0xf0] sm:$0xff] %v4681
    %4714 = vst [vmem:[#allocation3 + $0xf8] sm:$0xff] %v4682
    %v4715 = vld [vmem:[#allocation3] sm:$0xff]
    %v4716 = vld [vmem:[#allocation3 + $0x8] sm:$0xff]
    %v4717 = vld [vmem:[#allocation3 + $0x10] sm:$0xff]
    %v4718 = vld [vmem:[#allocation3 + $0x18] sm:$0xff]
    %v4719 = vld [vmem:[#allocation3 + $0xe0] sm:$0xff]
    %v4720 = vld [vmem:[#allocation3 + $0xe8] sm:$0xff]
    %v4721 = vld [vmem:[#allocation3 + $0xf0] sm:$0xff]
    %v4722 = vld [vmem:[#allocation3 + $0xf8] sm:$0xff]
    %v4723 = vsel %vm1005, %v4715, %v4719
    %v4724 = vsel %vm1006, %v4716, %v4720
    %v4725 = vsel %vm1007, %v4717, %v4721
    %v4726 = vsel %vm1008, %v4718, %v4722
    %v4727 = vld [vmem:[#allocation15] sm:$0xff]
    %v4728 = vld [vmem:[#allocation15 + $0x8] sm:$0xff]
    %v4729 = vld [vmem:[#allocation15 + $0x10] sm:$0xff]
    %v4730 = vld [vmem:[#allocation15 + $0x18] sm:$0xff]
    %v4731 = vld [vmem:[#allocation15 + $0x20] sm:$0xff]
    %v4732 = vld [vmem:[#allocation15 + $0x28] sm:$0xff]
    %v4733 = vld [vmem:[#allocation15 + $0x30] sm:$0xff]
    %v4734 = vld [vmem:[#allocation15 + $0x38] sm:$0xff]
    %v4735 = vld [vmem:[#allocation15 + $0x40] sm:$0xff]
    %v4736 = vld [vmem:[#allocation15 + $0x48] sm:$0xff]
    %v4737 = vld [vmem:[#allocation15 + $0x50] sm:$0xff]
    %v4738 = vld [vmem:[#allocation15 + $0x58] sm:$0xff]
    %v4739 = vld [vmem:[#allocation15 + $0x60] sm:$0xff]
    %v4740 = vld [vmem:[#allocation15 + $0x68] sm:$0xff]
    %v4741 = vld [vmem:[#allocation15 + $0x70] sm:$0xff]
    %v4742 = vld [vmem:[#allocation15 + $0x78] sm:$0xff]
    %v4743 = vld [vmem:[#allocation15 + $0x80] sm:$0xff]
    %v4744 = vld [vmem:[#allocation15 + $0x88] sm:$0xff]
    %v4745 = vld [vmem:[#allocation15 + $0x90] sm:$0xff]
    %v4746 = vld [vmem:[#allocation15 + $0x98] sm:$0xff]
    %v4747 = vld [vmem:[#allocation15 + $0xa0] sm:$0xff]
    %v4748 = vld [vmem:[#allocation15 + $0xa8] sm:$0xff]
    %v4749 = vld [vmem:[#allocation15 + $0xb0] sm:$0xff]
    %v4750 = vld [vmem:[#allocation15 + $0xb8] sm:$0xff]
    %v4751 = vld [vmem:[#allocation15 + $0xc0] sm:$0xff]
    %v4752 = vld [vmem:[#allocation15 + $0xc8] sm:$0xff]
    %v4753 = vld [vmem:[#allocation15 + $0xd0] sm:$0xff]
    %v4754 = vld [vmem:[#allocation15 + $0xd8] sm:$0xff]
    %v4755 = vld [vmem:[#allocation15 + $0xe0] sm:$0xff]
    %v4756 = vld [vmem:[#allocation15 + $0xe8] sm:$0xff]
    %v4757 = vld [vmem:[#allocation15 + $0xf0] sm:$0xff]
    %v4758 = vld [vmem:[#allocation15 + $0xf8] sm:$0xff]
    %v4791 = vunpack.c.l.b16 %v4727
    %v4792 = vunpack.c.h.b16 %v4727
    %v4793 = vunpack.c.l.b16 %v4728
    %v4794 = vunpack.c.h.b16 %v4728
    %v4795 = vunpack.c.l.b16 %v4729
    %v4796 = vunpack.c.h.b16 %v4729
    %v4797 = vunpack.c.l.b16 %v4730
    %v4798 = vunpack.c.h.b16 %v4730
    %v4799 = vunpack.c.l.b16 %v4731
    %v4800 = vunpack.c.h.b16 %v4731
    %v4801 = vunpack.c.l.b16 %v4732
    %v4802 = vunpack.c.h.b16 %v4732
    %v4803 = vunpack.c.l.b16 %v4733
    %v4804 = vunpack.c.h.b16 %v4733
    %v4805 = vunpack.c.l.b16 %v4734
    %v4806 = vunpack.c.h.b16 %v4734
    %v4807 = vunpack.c.l.b16 %v4735
    %v4808 = vunpack.c.h.b16 %v4735
    %v4809 = vunpack.c.l.b16 %v4736
    %v4810 = vunpack.c.h.b16 %v4736
    %v4811 = vunpack.c.l.b16 %v4737
    %v4812 = vunpack.c.h.b16 %v4737
    %v4813 = vunpack.c.l.b16 %v4738
    %v4814 = vunpack.c.h.b16 %v4738
    %v4815 = vunpack.c.l.b16 %v4739
    %v4816 = vunpack.c.h.b16 %v4739
    %v4817 = vunpack.c.l.b16 %v4740
    %v4818 = vunpack.c.h.b16 %v4740
    %v4819 = vunpack.c.l.b16 %v4741
    %v4820 = vunpack.c.h.b16 %v4741
    %v4821 = vunpack.c.l.b16 %v4742
    %v4822 = vunpack.c.h.b16 %v4742
    %v4823 = vunpack.c.l.b16 %v4743
    %v4824 = vunpack.c.h.b16 %v4743
    %v4825 = vunpack.c.l.b16 %v4744
    %v4826 = vunpack.c.h.b16 %v4744
    %v4827 = vunpack.c.l.b16 %v4745
    %v4828 = vunpack.c.h.b16 %v4745
    %v4829 = vunpack.c.l.b16 %v4746
    %v4830 = vunpack.c.h.b16 %v4746
    %v4831 = vunpack.c.l.b16 %v4747
    %v4832 = vunpack.c.h.b16 %v4747
    %v4833 = vunpack.c.l.b16 %v4748
    %v4834 = vunpack.c.h.b16 %v4748
    %v4835 = vunpack.c.l.b16 %v4749
    %v4836 = vunpack.c.h.b16 %v4749
    %v4837 = vunpack.c.l.b16 %v4750
    %v4838 = vunpack.c.h.b16 %v4750
    %v4839 = vunpack.c.l.b16 %v4751
    %v4840 = vunpack.c.h.b16 %v4751
    %v4841 = vunpack.c.l.b16 %v4752
    %v4842 = vunpack.c.h.b16 %v4752
    %v4843 = vunpack.c.l.b16 %v4753
    %v4844 = vunpack.c.h.b16 %v4753
    %v4845 = vunpack.c.l.b16 %v4754
    %v4846 = vunpack.c.h.b16 %v4754
    %v4847 = vunpack.c.l.b16 %v4755
    %v4848 = vunpack.c.h.b16 %v4755
    %v4849 = vunpack.c.l.b16 %v4756
    %v4850 = vunpack.c.h.b16 %v4756
    %v4851 = vunpack.c.l.b16 %v4757
    %v4852 = vunpack.c.h.b16 %v4757
    %v4853 = vunpack.c.l.b16 %v4758
    %v4854 = vunpack.c.h.b16 %v4758
    %v4855 = vpack.c.b16 %v4795, %v4791
    %v4856 = vpack.c.b16 %v4796, %v4792
    %v4857 = vpack.c.b16 %v4797, %v4793
    %v4858 = vpack.c.b16 %v4798, %v4794
    %v4859 = vpack.c.b16 %v4803, %v4799
    %v4860 = vpack.c.b16 %v4804, %v4800
    %v4861 = vpack.c.b16 %v4805, %v4801
    %v4862 = vpack.c.b16 %v4806, %v4802
    %v4863 = vpack.c.b16 %v4811, %v4807
    %v4864 = vpack.c.b16 %v4812, %v4808
    %v4865 = vpack.c.b16 %v4813, %v4809
    %v4866 = vpack.c.b16 %v4814, %v4810
    %v4867 = vpack.c.b16 %v4819, %v4815
    %v4868 = vpack.c.b16 %v4820, %v4816
    %v4869 = vpack.c.b16 %v4821, %v4817
    %v4870 = vpack.c.b16 %v4822, %v4818
    %v4871 = vpack.c.b16 %v4827, %v4823
    %v4872 = vpack.c.b16 %v4828, %v4824
    %v4873 = vpack.c.b16 %v4829, %v4825
    %v4874 = vpack.c.b16 %v4830, %v4826
    %v4875 = vpack.c.b16 %v4835, %v4831
    %v4876 = vpack.c.b16 %v4836, %v4832
    %v4877 = vpack.c.b16 %v4837, %v4833
    %v4878 = vpack.c.b16 %v4838, %v4834
    %v4879 = vpack.c.b16 %v4843, %v4839
    %v4880 = vpack.c.b16 %v4844, %v4840
    %v4881 = vpack.c.b16 %v4845, %v4841
    %v4882 = vpack.c.b16 %v4846, %v4842
    %v4883 = vpack.c.b16 %v4851, %v4847
    %v4884 = vpack.c.b16 %v4852, %v4848
    %v4885 = vpack.c.b16 %v4853, %v4849
    %v4886 = vpack.c.b16 %v4854, %v4850
    %4919 = vmatprep.subr.bf16.mxu0 %v4884
    %4920 = vmatpush1.bf16.msra.mxu0 %v4883
    %4921 = vmatprep.subr.bf16.mxu0 %v4880
    %4922 = vmatpush1.bf16.msra.mxu0 %v4879
    %4923 = vmatprep.subr.bf16.mxu0 %v4876
    %4924 = vmatpush1.bf16.msra.mxu0 %v4875
    %4925 = vmatprep.subr.bf16.mxu0 %v4872
    %4926 = vmatpush1.bf16.msra.mxu0 %v4871
    %4927 = vmatprep.subr.bf16.mxu0 %v4868
    %4928 = vmatpush1.bf16.msra.mxu0 %v4867
    %4929 = vmatprep.subr.bf16.mxu0 %v4864
    %4930 = vmatpush1.bf16.msra.mxu0 %v4863
    %4931 = vmatprep.subr.bf16.mxu0 %v4860
    %4932 = vmatpush1.bf16.msra.mxu0 %v4859
    %4933 = vmatprep.subr.bf16.mxu0 %v4856
    %4934 = vmatpush1.bf16.msra.mxu0 %v4855
    %4935 = vmatprep.subr.bf16.mxu0 0
    %4936 = vmatpush2.bf16.msra.mxu0 0
    %4937 = vmatprep.subr.bf16.mxu0 0
    %4938 = vmatpush2.bf16.msra.mxu0 0
    %4939 = vmatprep.subr.bf16.mxu0 0
    %4940 = vmatpush2.bf16.msra.mxu0 0
    %4941 = vmatprep.subr.bf16.mxu0 0
    %4942 = vmatpush2.bf16.msra.mxu0 0
    %4943 = vmatprep.subr.bf16.mxu0 0
    %4944 = vmatpush2.bf16.msra.mxu0 0
    %4945 = vmatprep.subr.bf16.mxu0 0
    %4946 = vmatpush2.bf16.msra.mxu0 0
    %4947 = vmatprep.subr.bf16.mxu0 0
    %4948 = vmatpush2.bf16.msra.mxu0 0
    %4949 = vmatprep.subr.bf16.mxu0 0
    %4950 = vmatpush2.bf16.msra.mxu0 0
    %4951 = vmatprep.mubr.bf16.mxu0 0
    %4952 = vmatmul.mubr.bf16.gmra.mxu0 0
    %v4953 = vpop.f32.mrf.mxu0
    %v4954 = vadd.f32 0.0, %v4953
    %v4955 = vpop.f32.mrf.mxu0
    %v4956 = vadd.f32 0.0, %v4955
    %v4957 = vpop.f32.mrf.mxu0
    %v4958 = vpop.f32.mrf.mxu0
    %4959 = vdwg.mxu0
    %4960 = vmatprep.subr.bf16.mxu0 %v4886
    %4961 = vmatpush1.bf16.msra.mxu0 %v4885
    %4962 = vmatprep.subr.bf16.mxu0 %v4882
    %4963 = vmatpush1.bf16.msra.mxu0 %v4881
    %4964 = vmatprep.subr.bf16.mxu0 %v4878
    %4965 = vmatpush1.bf16.msra.mxu0 %v4877
    %4966 = vmatprep.subr.bf16.mxu0 %v4874
    %4967 = vmatpush1.bf16.msra.mxu0 %v4873
    %4968 = vmatprep.subr.bf16.mxu0 %v4870
    %4969 = vmatpush1.bf16.msra.mxu0 %v4869
    %4970 = vmatprep.subr.bf16.mxu0 %v4866
    %4971 = vmatpush1.bf16.msra.mxu0 %v4865
    %4972 = vmatprep.subr.bf16.mxu0 %v4862
    %4973 = vmatpush1.bf16.msra.mxu0 %v4861
    %4974 = vmatprep.subr.bf16.mxu0 %v4858
    %4975 = vmatpush1.bf16.msra.mxu0 %v4857
    %4976 = vmatprep.subr.bf16.mxu0 0
    %4977 = vmatpush2.bf16.msra.mxu0 0
    %4978 = vmatprep.subr.bf16.mxu0 0
    %4979 = vmatpush2.bf16.msra.mxu0 0
    %4980 = vmatprep.subr.bf16.mxu0 0
    %4981 = vmatpush2.bf16.msra.mxu0 0
    %4982 = vmatprep.subr.bf16.mxu0 0
    %4983 = vmatpush2.bf16.msra.mxu0 0
    %4984 = vmatprep.subr.bf16.mxu0 0
    %4985 = vmatpush2.bf16.msra.mxu0 0
    %4986 = vmatprep.subr.bf16.mxu0 0
    %4987 = vmatpush2.bf16.msra.mxu0 0
    %4988 = vmatprep.subr.bf16.mxu0 0
    %4989 = vmatpush2.bf16.msra.mxu0 0
    %4990 = vmatprep.subr.bf16.mxu0 0
    %4991 = vmatpush2.bf16.msra.mxu0 0
    %4992 = vmatprep.mubr.bf16.mxu0 0
    %4993 = vmatmul.mubr.bf16.gmra.mxu0 0
    %v4994 = vpop.f32.mrf.mxu0
    %v4995 = vadd.f32 0.0, %v4994
    %v4996 = vpop.f32.mrf.mxu0
    %v4997 = vadd.f32 0.0, %v4996
    %v4998 = vpop.f32.mrf.mxu0
    %v4999 = vpop.f32.mrf.mxu0
    %5000 = vdwg.mxu0
    %v5001 = vadd.f32 %v4723, %v4954
    %v5002 = vadd.f32 %v4724, %v4956
    %v5003 = vadd.f32 %v4725, %v4995
    %v5004 = vadd.f32 %v4726, %v4997
    %v5005 = vxor.u32 %v5001, 2147483648
    %v5006 = vmul.f32 %v5005, 1.442695
    %v5007 = vpow.pop %v5006
    %v5008 = vadd.f32 %v5007, 1.0
    %v5009 = vrcp.pop %v5008
    %v5010 = vmul.f32 1.0, %v5009
    %v5011 = vxor.u32 %v5002, 2147483648
    %v5012 = vmul.f32 %v5011, 1.442695
    %v5013 = vpow.pop %v5012
    %v5014 = vadd.f32 %v5013, 1.0
    %v5015 = vrcp.pop %v5014
    %v5016 = vmul.f32 1.0, %v5015
    %v5017 = vtanh.pop %v5003
    %v5018 = vxor.u32 %v5004, 2147483648
    %v5019 = vmul.f32 %v5018, 1.442695
    %v5020 = vpow.pop %v5019
    %v5021 = vadd.f32 %v5020, 1.0
    %v5022 = vrcp.pop %v5021
    %v5023 = vmul.f32 1.0, %v5022
    %v5024 = vmul.f32 %v5016, 0.0
    %v5025 = vmul.f32 %v5010, %v5017
    %v5026 = vadd.f32 %v5024, %v5025
    %v5027 = vtanh.pop %v5026
    %v5028 = vmul.f32 %v5023, %v5027
    %v5029 = vld [vmem:[#allocation3 + $0x20] sm:$0xff]
    %v5030 = vld [vmem:[#allocation3 + $0x28] sm:$0xff]
    %v5031 = vld [vmem:[#allocation3 + $0x30] sm:$0xff]
    %v5032 = vld [vmem:[#allocation3 + $0x38] sm:$0xff]
    %v5033 = vld [vmem:[#allocation3 + $0xc0] sm:$0xff]
    %v5034 = vld [vmem:[#allocation3 + $0xc8] sm:$0xff]
    %v5035 = vld [vmem:[#allocation3 + $0xd0] sm:$0xff]
    %v5036 = vld [vmem:[#allocation3 + $0xd8] sm:$0xff]
    %v5037 = vsel %vm1005, %v5029, %v5033
    %v5038 = vsel %vm1006, %v5030, %v5034
    %v5039 = vsel %vm1007, %v5031, %v5035
    %v5040 = vsel %vm1008, %v5032, %v5036
    %v5041 = vpack.c.bf16 %v5028, %v5028
    %5042 = vmatprep.subr.bf16.mxu0 %v4884
    %5043 = vmatpush1.bf16.msra.mxu0 %v4883
    %5044 = vmatprep.subr.bf16.mxu0 %v4880
    %5045 = vmatpush1.bf16.msra.mxu0 %v4879
    %5046 = vmatprep.subr.bf16.mxu0 %v4876
    %5047 = vmatpush1.bf16.msra.mxu0 %v4875
    %5048 = vmatprep.subr.bf16.mxu0 %v4872
    %5049 = vmatpush1.bf16.msra.mxu0 %v4871
    %5050 = vmatprep.subr.bf16.mxu0 %v4868
    %5051 = vmatpush1.bf16.msra.mxu0 %v4867
    %5052 = vmatprep.subr.bf16.mxu0 %v4864
    %5053 = vmatpush1.bf16.msra.mxu0 %v4863
    %5054 = vmatprep.subr.bf16.mxu0 %v4860
    %5055 = vmatpush1.bf16.msra.mxu0 %v4859
    %5056 = vmatprep.subr.bf16.mxu0 %v4856
    %5057 = vmatpush1.bf16.msra.mxu0 %v4855
    %5058 = vmatprep.subr.bf16.mxu0 0
    %5059 = vmatpush2.bf16.msra.mxu0 0
    %5060 = vmatprep.subr.bf16.mxu0 0
    %5061 = vmatpush2.bf16.msra.mxu0 0
    %5062 = vmatprep.subr.bf16.mxu0 0
    %5063 = vmatpush2.bf16.msra.mxu0 0
    %5064 = vmatprep.subr.bf16.mxu0 0
    %5065 = vmatpush2.bf16.msra.mxu0 0
    %5066 = vmatprep.subr.bf16.mxu0 0
    %5067 = vmatpush2.bf16.msra.mxu0 0
    %5068 = vmatprep.subr.bf16.mxu0 0
    %5069 = vmatpush2.bf16.msra.mxu0 0
    %5070 = vmatprep.subr.bf16.mxu0 0
    %5071 = vmatpush2.bf16.msra.mxu0 0
    %5072 = vmatprep.subr.bf16.mxu0 0
    %5073 = vmatpush2.bf16.msra.mxu0 0
    %5074 = vmatprep.mubr.bf16.mxu0 0
    %5075 = vmatmul.mubr.bf16.gmra.mxu0 %v5041
    %v5076 = vpop.f32.mrf.mxu0
    %v5077 = vadd.f32 0.0, %v5076
    %v5078 = vpop.f32.mrf.mxu0
    %v5079 = vadd.f32 0.0, %v5078
    %v5080 = vpop.f32.mrf.mxu0
    %v5081 = vpop.f32.mrf.mxu0
    %5082 = vdwg.mxu0
    %5083 = vmatprep.subr.bf16.mxu0 %v4886
    %5084 = vmatpush1.bf16.msra.mxu0 %v4885
    %5085 = vmatprep.subr.bf16.mxu0 %v4882
    %5086 = vmatpush1.bf16.msra.mxu0 %v4881
    %5087 = vmatprep.subr.bf16.mxu0 %v4878
    %5088 = vmatpush1.bf16.msra.mxu0 %v4877
    %5089 = vmatprep.subr.bf16.mxu0 %v4874
    %5090 = vmatpush1.bf16.msra.mxu0 %v4873
    %5091 = vmatprep.subr.bf16.mxu0 %v4870
    %5092 = vmatpush1.bf16.msra.mxu0 %v4869
    %5093 = vmatprep.subr.bf16.mxu0 %v4866
    %5094 = vmatpush1.bf16.msra.mxu0 %v4865
    %5095 = vmatprep.subr.bf16.mxu0 %v4862
    %5096 = vmatpush1.bf16.msra.mxu0 %v4861
    %5097 = vmatprep.subr.bf16.mxu0 %v4858
    %5098 = vmatpush1.bf16.msra.mxu0 %v4857
    %5099 = vmatprep.subr.bf16.mxu0 0
    %5100 = vmatpush2.bf16.msra.mxu0 0
    %5101 = vmatprep.subr.bf16.mxu0 0
    %5102 = vmatpush2.bf16.msra.mxu0 0
    %5103 = vmatprep.subr.bf16.mxu0 0
    %5104 = vmatpush2.bf16.msra.mxu0 0
    %5105 = vmatprep.subr.bf16.mxu0 0
    %5106 = vmatpush2.bf16.msra.mxu0 0
    %5107 = vmatprep.subr.bf16.mxu0 0
    %5108 = vmatpush2.bf16.msra.mxu0 0
    %5109 = vmatprep.subr.bf16.mxu0 0
    %5110 = vmatpush2.bf16.msra.mxu0 0
    %5111 = vmatprep.subr.bf16.mxu0 0
    %5112 = vmatpush2.bf16.msra.mxu0 0
    %5113 = vmatprep.subr.bf16.mxu0 0
    %5114 = vmatpush2.bf16.msra.mxu0 0
    %5115 = vmatprep.mubr.bf16.mxu0 0
    %5116 = vmatmul.mubr.bf16.gmra.mxu0 %v5041
    %v5117 = vpop.f32.mrf.mxu0
    %v5118 = vadd.f32 0.0, %v5117
    %v5119 = vpop.f32.mrf.mxu0
    %v5120 = vadd.f32 0.0, %v5119
    %v5121 = vpop.f32.mrf.mxu0
    %v5122 = vpop.f32.mrf.mxu0
    %5123 = vdwg.mxu0
    %v5124 = vadd.f32 %v5037, %v5077
    %v5125 = vadd.f32 %v5038, %v5079
    %v5126 = vadd.f32 %v5039, %v5118
    %v5127 = vadd.f32 %v5040, %v5120
    %v5128 = vxor.u32 %v5124, 2147483648
    %v5129 = vmul.f32 %v5128, 1.442695
    %v5130 = vpow.pop %v5129
    %v5131 = vadd.f32 %v5130, 1.0
    %v5132 = vrcp.pop %v5131
    %v5133 = vmul.f32 1.0, %v5132
    %v5134 = vxor.u32 %v5125, 2147483648
    %v5135 = vmul.f32 %v5134, 1.442695
    %v5136 = vpow.pop %v5135
    %v5137 = vadd.f32 %v5136, 1.0
    %v5138 = vrcp.pop %v5137
    %v5139 = vmul.f32 1.0, %v5138
    %v5140 = vtanh.pop %v5126
    %v5141 = vxor.u32 %v5127, 2147483648
    %v5142 = vmul.f32 %v5141, 1.442695
    %v5143 = vpow.pop %v5142
    %v5144 = vadd.f32 %v5143, 1.0
    %v5145 = vrcp.pop %v5144
    %v5146 = vmul.f32 1.0, %v5145
    %v5147 = vmul.f32 %v5139, %v5026
    %v5148 = vmul.f32 %v5133, %v5140
    %v5149 = vadd.f32 %v5147, %v5148
    %v5150 = vtanh.pop %v5149
    %v5151 = vmul.f32 %v5146, %v5150
    %v5152 = vld [vmem:[#allocation3 + $0x40] sm:$0xff]
    %v5153 = vld [vmem:[#allocation3 + $0x48] sm:$0xff]
    %v5154 = vld [vmem:[#allocation3 + $0x50] sm:$0xff]
    %v5155 = vld [vmem:[#allocation3 + $0x58] sm:$0xff]
    %v5156 = vld [vmem:[#allocation3 + $0xa0] sm:$0xff]
    %v5157 = vld [vmem:[#allocation3 + $0xa8] sm:$0xff]
    %v5158 = vld [vmem:[#allocation3 + $0xb0] sm:$0xff]
    %v5159 = vld [vmem:[#allocation3 + $0xb8] sm:$0xff]
    %v5160 = vsel %vm1005, %v5152, %v5156
    %v5161 = vsel %vm1006, %v5153, %v5157
    %v5162 = vsel %vm1007, %v5154, %v5158
    %v5163 = vsel %vm1008, %v5155, %v5159
    %v5164 = vpack.c.bf16 %v5151, %v5151
    %5165 = vmatprep.subr.bf16.mxu0 %v4884
    %5166 = vmatpush1.bf16.msra.mxu0 %v4883
    %5167 = vmatprep.subr.bf16.mxu0 %v4880
    %5168 = vmatpush1.bf16.msra.mxu0 %v4879
    %5169 = vmatprep.subr.bf16.mxu0 %v4876
    %5170 = vmatpush1.bf16.msra.mxu0 %v4875
    %5171 = vmatprep.subr.bf16.mxu0 %v4872
    %5172 = vmatpush1.bf16.msra.mxu0 %v4871
    %5173 = vmatprep.subr.bf16.mxu0 %v4868
    %5174 = vmatpush1.bf16.msra.mxu0 %v4867
    %5175 = vmatprep.subr.bf16.mxu0 %v4864
    %5176 = vmatpush1.bf16.msra.mxu0 %v4863
    %5177 = vmatprep.subr.bf16.mxu0 %v4860
    %5178 = vmatpush1.bf16.msra.mxu0 %v4859
    %5179 = vmatprep.subr.bf16.mxu0 %v4856
    %5180 = vmatpush1.bf16.msra.mxu0 %v4855
    %5181 = vmatprep.subr.bf16.mxu0 0
    %5182 = vmatpush2.bf16.msra.mxu0 0
    %5183 = vmatprep.subr.bf16.mxu0 0
    %5184 = vmatpush2.bf16.msra.mxu0 0
    %5185 = vmatprep.subr.bf16.mxu0 0
    %5186 = vmatpush2.bf16.msra.mxu0 0
    %5187 = vmatprep.subr.bf16.mxu0 0
    %5188 = vmatpush2.bf16.msra.mxu0 0
    %5189 = vmatprep.subr.bf16.mxu0 0
    %5190 = vmatpush2.bf16.msra.mxu0 0
    %5191 = vmatprep.subr.bf16.mxu0 0
    %5192 = vmatpush2.bf16.msra.mxu0 0
    %5193 = vmatprep.subr.bf16.mxu0 0
    %5194 = vmatpush2.bf16.msra.mxu0 0
    %5195 = vmatprep.subr.bf16.mxu0 0
    %5196 = vmatpush2.bf16.msra.mxu0 0
    %5197 = vmatprep.mubr.bf16.mxu0 0
    %5198 = vmatmul.mubr.bf16.gmra.mxu0 %v5164
    %v5199 = vpop.f32.mrf.mxu0
    %v5200 = vadd.f32 0.0, %v5199
    %v5201 = vpop.f32.mrf.mxu0
    %v5202 = vadd.f32 0.0, %v5201
    %v5203 = vpop.f32.mrf.mxu0
    %v5204 = vpop.f32.mrf.mxu0
    %5205 = vdwg.mxu0
    %5206 = vmatprep.subr.bf16.mxu0 %v4886
    %5207 = vmatpush1.bf16.msra.mxu0 %v4885
    %5208 = vmatprep.subr.bf16.mxu0 %v4882
    %5209 = vmatpush1.bf16.msra.mxu0 %v4881
    %5210 = vmatprep.subr.bf16.mxu0 %v4878
    %5211 = vmatpush1.bf16.msra.mxu0 %v4877
    %5212 = vmatprep.subr.bf16.mxu0 %v4874
    %5213 = vmatpush1.bf16.msra.mxu0 %v4873
    %5214 = vmatprep.subr.bf16.mxu0 %v4870
    %5215 = vmatpush1.bf16.msra.mxu0 %v4869
    %5216 = vmatprep.subr.bf16.mxu0 %v4866
    %5217 = vmatpush1.bf16.msra.mxu0 %v4865
    %5218 = vmatprep.subr.bf16.mxu0 %v4862
    %5219 = vmatpush1.bf16.msra.mxu0 %v4861
    %5220 = vmatprep.subr.bf16.mxu0 %v4858
    %5221 = vmatpush1.bf16.msra.mxu0 %v4857
    %5222 = vmatprep.subr.bf16.mxu0 0
    %5223 = vmatpush2.bf16.msra.mxu0 0
    %5224 = vmatprep.subr.bf16.mxu0 0
    %5225 = vmatpush2.bf16.msra.mxu0 0
    %5226 = vmatprep.subr.bf16.mxu0 0
    %5227 = vmatpush2.bf16.msra.mxu0 0
    %5228 = vmatprep.subr.bf16.mxu0 0
    %5229 = vmatpush2.bf16.msra.mxu0 0
    %5230 = vmatprep.subr.bf16.mxu0 0
    %5231 = vmatpush2.bf16.msra.mxu0 0
    %5232 = vmatprep.subr.bf16.mxu0 0
    %5233 = vmatpush2.bf16.msra.mxu0 0
    %5234 = vmatprep.subr.bf16.mxu0 0
    %5235 = vmatpush2.bf16.msra.mxu0 0
    %5236 = vmatprep.subr.bf16.mxu0 0
    %5237 = vmatpush2.bf16.msra.mxu0 0
    %5238 = vmatprep.mubr.bf16.mxu0 0
    %5239 = vmatmul.mubr.bf16.gmra.mxu0 %v5164
    %v5240 = vpop.f32.mrf.mxu0
    %v5241 = vadd.f32 0.0, %v5240
    %v5242 = vpop.f32.mrf.mxu0
    %v5243 = vadd.f32 0.0, %v5242
    %v5244 = vpop.f32.mrf.mxu0
    %v5245 = vpop.f32.mrf.mxu0
    %5246 = vdwg.mxu0
    %v5247 = vadd.f32 %v5160, %v5200
    %v5248 = vadd.f32 %v5161, %v5202
    %v5249 = vadd.f32 %v5162, %v5241
    %v5250 = vadd.f32 %v5163, %v5243
    %v5251 = vxor.u32 %v5247, 2147483648
    %v5252 = vmul.f32 %v5251, 1.442695
    %v5253 = vpow.pop %v5252
    %v5254 = vadd.f32 %v5253, 1.0
    %v5255 = vrcp.pop %v5254
    %v5256 = vmul.f32 1.0, %v5255
    %v5257 = vxor.u32 %v5248, 2147483648
    %v5258 = vmul.f32 %v5257, 1.442695
    %v5259 = vpow.pop %v5258
    %v5260 = vadd.f32 %v5259, 1.0
    %v5261 = vrcp.pop %v5260
    %v5262 = vmul.f32 1.0, %v5261
    %v5263 = vtanh.pop %v5249
    %v5264 = vxor.u32 %v5250, 2147483648
    %v5265 = vmul.f32 %v5264, 1.442695
    %v5266 = vpow.pop %v5265
    %v5267 = vadd.f32 %v5266, 1.0
    %v5268 = vrcp.pop %v5267
    %v5269 = vmul.f32 1.0, %v5268
    %v5270 = vmul.f32 %v5262, %v5149
    %v5271 = vmul.f32 %v5256, %v5263
    %v5272 = vadd.f32 %v5270, %v5271
    %v5273 = vtanh.pop %v5272
    %v5274 = vmul.f32 %v5269, %v5273
    %v5275 = vld [vmem:[#allocation3 + $0x60] sm:$0xff]
    %v5276 = vld [vmem:[#allocation3 + $0x68] sm:$0xff]
    %v5277 = vld [vmem:[#allocation3 + $0x70] sm:$0xff]
    %v5278 = vld [vmem:[#allocation3 + $0x78] sm:$0xff]
    %v5279 = vld [vmem:[#allocation3 + $0x80] sm:$0xff]
    %v5280 = vld [vmem:[#allocation3 + $0x88] sm:$0xff]
    %v5281 = vld [vmem:[#allocation3 + $0x90] sm:$0xff]
    %v5282 = vld [vmem:[#allocation3 + $0x98] sm:$0xff]
    %v5283 = vsel %vm1005, %v5275, %v5279
    %v5284 = vsel %vm1006, %v5276, %v5280
    %v5285 = vsel %vm1007, %v5277, %v5281
    %v5286 = vsel %vm1008, %v5278, %v5282
    %v5287 = vpack.c.bf16 %v5274, %v5274
    %5288 = vmatprep.subr.bf16.mxu0 %v4884
    %5289 = vmatpush1.bf16.msra.mxu0 %v4883
    %5290 = vmatprep.subr.bf16.mxu0 %v4880
    %5291 = vmatpush1.bf16.msra.mxu0 %v4879
    %5292 = vmatprep.subr.bf16.mxu0 %v4876
    %5293 = vmatpush1.bf16.msra.mxu0 %v4875
    %5294 = vmatprep.subr.bf16.mxu0 %v4872
    %5295 = vmatpush1.bf16.msra.mxu0 %v4871
    %5296 = vmatprep.subr.bf16.mxu0 %v4868
    %5297 = vmatpush1.bf16.msra.mxu0 %v4867
    %5298 = vmatprep.subr.bf16.mxu0 %v4864
    %5299 = vmatpush1.bf16.msra.mxu0 %v4863
    %5300 = vmatprep.subr.bf16.mxu0 %v4860
    %5301 = vmatpush1.bf16.msra.mxu0 %v4859
    %5302 = vmatprep.subr.bf16.mxu0 %v4856
    %5303 = vmatpush1.bf16.msra.mxu0 %v4855
    %5304 = vmatprep.subr.bf16.mxu0 0
    %5305 = vmatpush2.bf16.msra.mxu0 0
    %5306 = vmatprep.subr.bf16.mxu0 0
    %5307 = vmatpush2.bf16.msra.mxu0 0
    %5308 = vmatprep.subr.bf16.mxu0 0
    %5309 = vmatpush2.bf16.msra.mxu0 0
    %5310 = vmatprep.subr.bf16.mxu0 0
    %5311 = vmatpush2.bf16.msra.mxu0 0
    %5312 = vmatprep.subr.bf16.mxu0 0
    %5313 = vmatpush2.bf16.msra.mxu0 0
    %5314 = vmatprep.subr.bf16.mxu0 0
    %5315 = vmatpush2.bf16.msra.mxu0 0
    %5316 = vmatprep.subr.bf16.mxu0 0
    %5317 = vmatpush2.bf16.msra.mxu0 0
    %5318 = vmatprep.subr.bf16.mxu0 0
    %5319 = vmatpush2.bf16.msra.mxu0 0
    %5320 = vmatprep.mubr.bf16.mxu0 0
    %5321 = vmatmul.mubr.bf16.gmra.mxu0 %v5287
    %v5322 = vpop.f32.mrf.mxu0
    %v5323 = vadd.f32 0.0, %v5322
    %v5324 = vpop.f32.mrf.mxu0
    %v5325 = vadd.f32 0.0, %v5324
    %v5326 = vpop.f32.mrf.mxu0
    %v5327 = vpop.f32.mrf.mxu0
    %5328 = vdwg.mxu0
    %5329 = vmatprep.subr.bf16.mxu0 %v4886
    %5330 = vmatpush1.bf16.msra.mxu0 %v4885
    %5331 = vmatprep.subr.bf16.mxu0 %v4882
    %5332 = vmatpush1.bf16.msra.mxu0 %v4881
    %5333 = vmatprep.subr.bf16.mxu0 %v4878
    %5334 = vmatpush1.bf16.msra.mxu0 %v4877
    %5335 = vmatprep.subr.bf16.mxu0 %v4874
    %5336 = vmatpush1.bf16.msra.mxu0 %v4873
    %5337 = vmatprep.subr.bf16.mxu0 %v4870
    %5338 = vmatpush1.bf16.msra.mxu0 %v4869
    %5339 = vmatprep.subr.bf16.mxu0 %v4866
    %5340 = vmatpush1.bf16.msra.mxu0 %v4865
    %5341 = vmatprep.subr.bf16.mxu0 %v4862
    %5342 = vmatpush1.bf16.msra.mxu0 %v4861
    %5343 = vmatprep.subr.bf16.mxu0 %v4858
    %5344 = vmatpush1.bf16.msra.mxu0 %v4857
    %5345 = vmatprep.subr.bf16.mxu0 0
    %5346 = vmatpush2.bf16.msra.mxu0 0
    %5347 = vmatprep.subr.bf16.mxu0 0
    %5348 = vmatpush2.bf16.msra.mxu0 0
    %5349 = vmatprep.subr.bf16.mxu0 0
    %5350 = vmatpush2.bf16.msra.mxu0 0
    %5351 = vmatprep.subr.bf16.mxu0 0
    %5352 = vmatpush2.bf16.msra.mxu0 0
    %5353 = vmatprep.subr.bf16.mxu0 0
    %5354 = vmatpush2.bf16.msra.mxu0 0
    %5355 = vmatprep.subr.bf16.mxu0 0
    %5356 = vmatpush2.bf16.msra.mxu0 0
    %5357 = vmatprep.subr.bf16.mxu0 0
    %5358 = vmatpush2.bf16.msra.mxu0 0
    %5359 = vmatprep.subr.bf16.mxu0 0
    %5360 = vmatpush2.bf16.msra.mxu0 0
    %5361 = vmatprep.mubr.bf16.mxu0 0
    %5362 = vmatmul.mubr.bf16.gmra.mxu0 %v5287
    %v5363 = vpop.f32.mrf.mxu0
    %v5364 = vadd.f32 0.0, %v5363
    %v5365 = vpop.f32.mrf.mxu0
    %v5366 = vadd.f32 0.0, %v5365
    %v5367 = vpop.f32.mrf.mxu0
    %v5368 = vpop.f32.mrf.mxu0
    %5369 = vdwg.mxu0
    %v5370 = vadd.f32 %v5283, %v5323
    %v5371 = vadd.f32 %v5284, %v5325
    %v5372 = vadd.f32 %v5285, %v5364
    %v5373 = vadd.f32 %v5286, %v5366
    %v5374 = vxor.u32 %v5370, 2147483648
    %v5375 = vmul.f32 %v5374, 1.442695
    %v5376 = vpow.pop %v5375
    %v5377 = vadd.f32 %v5376, 1.0
    %v5378 = vrcp.pop %v5377
    %v5379 = vmul.f32 1.0, %v5378
    %v5380 = vxor.u32 %v5371, 2147483648
    %v5381 = vmul.f32 %v5380, 1.442695
    %v5382 = vpow.pop %v5381
    %v5383 = vadd.f32 %v5382, 1.0
    %v5384 = vrcp.pop %v5383
    %v5385 = vmul.f32 1.0, %v5384
    %v5386 = vtanh.pop %v5372
    %v5387 = vxor.u32 %v5373, 2147483648
    %v5388 = vmul.f32 %v5387, 1.442695
    %v5389 = vpow.pop %v5388
    %v5390 = vadd.f32 %v5389, 1.0
    %v5391 = vrcp.pop %v5390
    %v5392 = vmul.f32 1.0, %v5391
    %v5393 = vmul.f32 %v5385, %v5272
    %v5394 = vmul.f32 %v5379, %v5386
    %v5395 = vadd.f32 %v5393, %v5394
    %v5396 = vtanh.pop %v5395
    %v5397 = vmul.f32 %v5392, %v5396
    %v5398 = vsel %vm1005, %v5279, %v5275
    %v5399 = vsel %vm1006, %v5280, %v5276
    %v5400 = vsel %vm1007, %v5281, %v5277
    %v5401 = vsel %vm1008, %v5282, %v5278
    %v5402 = vpack.c.bf16 %v5397, %v5397
    %5403 = vmatprep.subr.bf16.mxu0 %v4884
    %5404 = vmatpush1.bf16.msra.mxu0 %v4883
    %5405 = vmatprep.subr.bf16.mxu0 %v4880
    %5406 = vmatpush1.bf16.msra.mxu0 %v4879
    %5407 = vmatprep.subr.bf16.mxu0 %v4876
    %5408 = vmatpush1.bf16.msra.mxu0 %v4875
    %5409 = vmatprep.subr.bf16.mxu0 %v4872
    %5410 = vmatpush1.bf16.msra.mxu0 %v4871
    %5411 = vmatprep.subr.bf16.mxu0 %v4868
    %5412 = vmatpush1.bf16.msra.mxu0 %v4867
    %5413 = vmatprep.subr.bf16.mxu0 %v4864
    %5414 = vmatpush1.bf16.msra.mxu0 %v4863
    %5415 = vmatprep.subr.bf16.mxu0 %v4860
    %5416 = vmatpush1.bf16.msra.mxu0 %v4859
    %5417 = vmatprep.subr.bf16.mxu0 %v4856
    %5418 = vmatpush1.bf16.msra.mxu0 %v4855
    %5419 = vmatprep.subr.bf16.mxu0 0
    %5420 = vmatpush2.bf16.msra.mxu0 0
    %5421 = vmatprep.subr.bf16.mxu0 0
    %5422 = vmatpush2.bf16.msra.mxu0 0
    %5423 = vmatprep.subr.bf16.mxu0 0
    %5424 = vmatpush2.bf16.msra.mxu0 0
    %5425 = vmatprep.subr.bf16.mxu0 0
    %5426 = vmatpush2.bf16.msra.mxu0 0
    %5427 = vmatprep.subr.bf16.mxu0 0
    %5428 = vmatpush2.bf16.msra.mxu0 0
    %5429 = vmatprep.subr.bf16.mxu0 0
    %5430 = vmatpush2.bf16.msra.mxu0 0
    %5431 = vmatprep.subr.bf16.mxu0 0
    %5432 = vmatpush2.bf16.msra.mxu0 0
    %5433 = vmatprep.subr.bf16.mxu0 0
    %5434 = vmatpush2.bf16.msra.mxu0 0
    %5435 = vmatprep.mubr.bf16.mxu0 0
    %5436 = vmatmul.mubr.bf16.gmra.mxu0 %v5402
    %v5437 = vpop.f32.mrf.mxu0
    %v5438 = vadd.f32 0.0, %v5437
    %v5439 = vpop.f32.mrf.mxu0
    %v5440 = vadd.f32 0.0, %v5439
    %v5441 = vpop.f32.mrf.mxu0
    %v5442 = vpop.f32.mrf.mxu0
    %5443 = vdwg.mxu0
    %5444 = vmatprep.subr.bf16.mxu0 %v4886
    %5445 = vmatpush1.bf16.msra.mxu0 %v4885
    %5446 = vmatprep.subr.bf16.mxu0 %v4882
    %5447 = vmatpush1.bf16.msra.mxu0 %v4881
    %5448 = vmatprep.subr.bf16.mxu0 %v4878
    %5449 = vmatpush1.bf16.msra.mxu0 %v4877
    %5450 = vmatprep.subr.bf16.mxu0 %v4874
    %5451 = vmatpush1.bf16.msra.mxu0 %v4873
    %5452 = vmatprep.subr.bf16.mxu0 %v4870
    %5453 = vmatpush1.bf16.msra.mxu0 %v4869
    %5454 = vmatprep.subr.bf16.mxu0 %v4866
    %5455 = vmatpush1.bf16.msra.mxu0 %v4865
    %5456 = vmatprep.subr.bf16.mxu0 %v4862
    %5457 = vmatpush1.bf16.msra.mxu0 %v4861
    %5458 = vmatprep.subr.bf16.mxu0 %v4858
    %5459 = vmatpush1.bf16.msra.mxu0 %v4857
    %5460 = vmatprep.subr.bf16.mxu0 0
    %5461 = vmatpush2.bf16.msra.mxu0 0
    %5462 = vmatprep.subr.bf16.mxu0 0
    %5463 = vmatpush2.bf16.msra.mxu0 0
    %5464 = vmatprep.subr.bf16.mxu0 0
    %5465 = vmatpush2.bf16.msra.mxu0 0
    %5466 = vmatprep.subr.bf16.mxu0 0
    %5467 = vmatpush2.bf16.msra.mxu0 0
    %5468 = vmatprep.subr.bf16.mxu0 0
    %5469 = vmatpush2.bf16.msra.mxu0 0
    %5470 = vmatprep.subr.bf16.mxu0 0
    %5471 = vmatpush2.bf16.msra.mxu0 0
    %5472 = vmatprep.subr.bf16.mxu0 0
    %5473 = vmatpush2.bf16.msra.mxu0 0
    %5474 = vmatprep.subr.bf16.mxu0 0
    %5475 = vmatpush2.bf16.msra.mxu0 0
    %5476 = vmatprep.mubr.bf16.mxu0 0
    %5477 = vmatmul.mubr.bf16.gmra.mxu0 %v5402
    %v5478 = vpop.f32.mrf.mxu0
    %v5479 = vadd.f32 0.0, %v5478
    %v5480 = vpop.f32.mrf.mxu0
    %v5481 = vadd.f32 0.0, %v5480
    %v5482 = vpop.f32.mrf.mxu0
    %v5483 = vpop.f32.mrf.mxu0
    %5484 = vdwg.mxu0
    %v5485 = vadd.f32 %v5398, %v5438
    %v5486 = vadd.f32 %v5399, %v5440
    %v5487 = vadd.f32 %v5400, %v5479
    %v5488 = vadd.f32 %v5401, %v5481
    %v5489 = vxor.u32 %v5485, 2147483648
    %v5490 = vmul.f32 %v5489, 1.442695
    %v5491 = vpow.pop %v5490
    %v5492 = vadd.f32 %v5491, 1.0
    %v5493 = vrcp.pop %v5492
    %v5494 = vmul.f32 1.0, %v5493
    %v5495 = vxor.u32 %v5486, 2147483648
    %v5496 = vmul.f32 %v5495, 1.442695
    %v5497 = vpow.pop %v5496
    %v5498 = vadd.f32 %v5497, 1.0
    %v5499 = vrcp.pop %v5498
    %v5500 = vmul.f32 1.0, %v5499
    %v5501 = vtanh.pop %v5487
    %v5502 = vxor.u32 %v5488, 2147483648
    %v5503 = vmul.f32 %v5502, 1.442695
    %v5504 = vpow.pop %v5503
    %v5505 = vadd.f32 %v5504, 1.0
    %v5506 = vrcp.pop %v5505
    %v5507 = vmul.f32 1.0, %v5506
    %v5508 = vmul.f32 %v5500, %v5395
    %v5509 = vmul.f32 %v5494, %v5501
    %v5510 = vadd.f32 %v5508, %v5509
    %v5511 = vtanh.pop %v5510
    %v5512 = vmul.f32 %v5507, %v5511
    %v5513 = vsel %vm1005, %v5156, %v5152
    %v5514 = vsel %vm1006, %v5157, %v5153
    %v5515 = vsel %vm1007, %v5158, %v5154
    %v5516 = vsel %vm1008, %v5159, %v5155
    %v5517 = vpack.c.bf16 %v5512, %v5512
    %5518 = vmatprep.subr.bf16.mxu0 %v4884
    %5519 = vmatpush1.bf16.msra.mxu0 %v4883
    %5520 = vmatprep.subr.bf16.mxu0 %v4880
    %5521 = vmatpush1.bf16.msra.mxu0 %v4879
    %5522 = vmatprep.subr.bf16.mxu0 %v4876
    %5523 = vmatpush1.bf16.msra.mxu0 %v4875
    %5524 = vmatprep.subr.bf16.mxu0 %v4872
    %5525 = vmatpush1.bf16.msra.mxu0 %v4871
    %5526 = vmatprep.subr.bf16.mxu0 %v4868
    %5527 = vmatpush1.bf16.msra.mxu0 %v4867
    %5528 = vmatprep.subr.bf16.mxu0 %v4864
    %5529 = vmatpush1.bf16.msra.mxu0 %v4863
    %5530 = vmatprep.subr.bf16.mxu0 %v4860
    %5531 = vmatpush1.bf16.msra.mxu0 %v4859
    %5532 = vmatprep.subr.bf16.mxu0 %v4856
    %5533 = vmatpush1.bf16.msra.mxu0 %v4855
    %5534 = vmatprep.subr.bf16.mxu0 0
    %5535 = vmatpush2.bf16.msra.mxu0 0
    %5536 = vmatprep.subr.bf16.mxu0 0
    %5537 = vmatpush2.bf16.msra.mxu0 0
    %5538 = vmatprep.subr.bf16.mxu0 0
    %5539 = vmatpush2.bf16.msra.mxu0 0
    %5540 = vmatprep.subr.bf16.mxu0 0
    %5541 = vmatpush2.bf16.msra.mxu0 0
    %5542 = vmatprep.subr.bf16.mxu0 0
    %5543 = vmatpush2.bf16.msra.mxu0 0
    %5544 = vmatprep.subr.bf16.mxu0 0
    %5545 = vmatpush2.bf16.msra.mxu0 0
    %5546 = vmatprep.subr.bf16.mxu0 0
    %5547 = vmatpush2.bf16.msra.mxu0 0
    %5548 = vmatprep.subr.bf16.mxu0 0
    %5549 = vmatpush2.bf16.msra.mxu0 0
    %5550 = vmatprep.mubr.bf16.mxu0 0
    %5551 = vmatmul.mubr.bf16.gmra.mxu0 %v5517
    %v5552 = vpop.f32.mrf.mxu0
    %v5553 = vadd.f32 0.0, %v5552
    %v5554 = vpop.f32.mrf.mxu0
    %v5555 = vadd.f32 0.0, %v5554
    %v5556 = vpop.f32.mrf.mxu0
    %v5557 = vpop.f32.mrf.mxu0
    %5558 = vdwg.mxu0
    %5559 = vmatprep.subr.bf16.mxu0 %v4886
    %5560 = vmatpush1.bf16.msra.mxu0 %v4885
    %5561 = vmatprep.subr.bf16.mxu0 %v4882
    %5562 = vmatpush1.bf16.msra.mxu0 %v4881
    %5563 = vmatprep.subr.bf16.mxu0 %v4878
    %5564 = vmatpush1.bf16.msra.mxu0 %v4877
    %5565 = vmatprep.subr.bf16.mxu0 %v4874
    %5566 = vmatpush1.bf16.msra.mxu0 %v4873
    %5567 = vmatprep.subr.bf16.mxu0 %v4870
    %5568 = vmatpush1.bf16.msra.mxu0 %v4869
    %5569 = vmatprep.subr.bf16.mxu0 %v4866
    %5570 = vmatpush1.bf16.msra.mxu0 %v4865
    %5571 = vmatprep.subr.bf16.mxu0 %v4862
    %5572 = vmatpush1.bf16.msra.mxu0 %v4861
    %5573 = vmatprep.subr.bf16.mxu0 %v4858
    %5574 = vmatpush1.bf16.msra.mxu0 %v4857
    %5575 = vmatprep.subr.bf16.mxu0 0
    %5576 = vmatpush2.bf16.msra.mxu0 0
    %5577 = vmatprep.subr.bf16.mxu0 0
    %5578 = vmatpush2.bf16.msra.mxu0 0
    %5579 = vmatprep.subr.bf16.mxu0 0
    %5580 = vmatpush2.bf16.msra.mxu0 0
    %5581 = vmatprep.subr.bf16.mxu0 0
    %5582 = vmatpush2.bf16.msra.mxu0 0
    %5583 = vmatprep.subr.bf16.mxu0 0
    %5584 = vmatpush2.bf16.msra.mxu0 0
    %5585 = vmatprep.subr.bf16.mxu0 0
    %5586 = vmatpush2.bf16.msra.mxu0 0
    %5587 = vmatprep.subr.bf16.mxu0 0
    %5588 = vmatpush2.bf16.msra.mxu0 0
    %5589 = vmatprep.subr.bf16.mxu0 0
    %5590 = vmatpush2.bf16.msra.mxu0 0
    %5591 = vmatprep.mubr.bf16.mxu0 0
    %5592 = vmatmul.mubr.bf16.gmra.mxu0 %v5517
    %v5593 = vpop.f32.mrf.mxu0
    %v5594 = vadd.f32 0.0, %v5593
    %v5595 = vpop.f32.mrf.mxu0
    %v5596 = vadd.f32 0.0, %v5595
    %v5597 = vpop.f32.mrf.mxu0
    %v5598 = vpop.f32.mrf.mxu0
    %5599 = vdwg.mxu0
    %v5600 = vadd.f32 %v5513, %v5553
    %v5601 = vadd.f32 %v5514, %v5555
    %v5602 = vadd.f32 %v5515, %v5594
    %v5603 = vadd.f32 %v5516, %v5596
    %v5604 = vxor.u32 %v5600, 2147483648
    %v5605 = vmul.f32 %v5604, 1.442695
    %v5606 = vpow.pop %v5605
    %v5607 = vadd.f32 %v5606, 1.0
    %v5608 = vrcp.pop %v5607
    %v5609 = vmul.f32 1.0, %v5608
    %v5610 = vxor.u32 %v5601, 2147483648
    %v5611 = vmul.f32 %v5610, 1.442695
    %v5612 = vpow.pop %v5611
    %v5613 = vadd.f32 %v5612, 1.0
    %v5614 = vrcp.pop %v5613
    %v5615 = vmul.f32 1.0, %v5614
    %v5616 = vtanh.pop %v5602
    %v5617 = vxor.u32 %v5603, 2147483648
    %v5618 = vmul.f32 %v5617, 1.442695
    %v5619 = vpow.pop %v5618
    %v5620 = vadd.f32 %v5619, 1.0
    %v5621 = vrcp.pop %v5620
    %v5622 = vmul.f32 1.0, %v5621
    %v5623 = vmul.f32 %v5615, %v5510
    %v5624 = vmul.f32 %v5609, %v5616
    %v5625 = vadd.f32 %v5623, %v5624
    %v5626 = vtanh.pop %v5625
    %v5627 = vmul.f32 %v5622, %v5626
    %v5628 = vsel %vm1005, %v5033, %v5029
    %v5629 = vsel %vm1006, %v5034, %v5030
    %v5630 = vsel %vm1007, %v5035, %v5031
    %v5631 = vsel %vm1008, %v5036, %v5032
    %v5632 = vpack.c.bf16 %v5627, %v5627
    %5633 = vmatprep.subr.bf16.mxu0 %v4884
    %5634 = vmatpush1.bf16.msra.mxu0 %v4883
    %5635 = vmatprep.subr.bf16.mxu0 %v4880
    %5636 = vmatpush1.bf16.msra.mxu0 %v4879
    %5637 = vmatprep.subr.bf16.mxu0 %v4876
    %5638 = vmatpush1.bf16.msra.mxu0 %v4875
    %5639 = vmatprep.subr.bf16.mxu0 %v4872
    %5640 = vmatpush1.bf16.msra.mxu0 %v4871
    %5641 = vmatprep.subr.bf16.mxu0 %v4868
    %5642 = vmatpush1.bf16.msra.mxu0 %v4867
    %5643 = vmatprep.subr.bf16.mxu0 %v4864
    %5644 = vmatpush1.bf16.msra.mxu0 %v4863
    %5645 = vmatprep.subr.bf16.mxu0 %v4860
    %5646 = vmatpush1.bf16.msra.mxu0 %v4859
    %5647 = vmatprep.subr.bf16.mxu0 %v4856
    %5648 = vmatpush1.bf16.msra.mxu0 %v4855
    %5649 = vmatprep.subr.bf16.mxu0 0
    %5650 = vmatpush2.bf16.msra.mxu0 0
    %5651 = vmatprep.subr.bf16.mxu0 0
    %5652 = vmatpush2.bf16.msra.mxu0 0
    %5653 = vmatprep.subr.bf16.mxu0 0
    %5654 = vmatpush2.bf16.msra.mxu0 0
    %5655 = vmatprep.subr.bf16.mxu0 0
    %5656 = vmatpush2.bf16.msra.mxu0 0
    %5657 = vmatprep.subr.bf16.mxu0 0
    %5658 = vmatpush2.bf16.msra.mxu0 0
    %5659 = vmatprep.subr.bf16.mxu0 0
    %5660 = vmatpush2.bf16.msra.mxu0 0
    %5661 = vmatprep.subr.bf16.mxu0 0
    %5662 = vmatpush2.bf16.msra.mxu0 0
    %5663 = vmatprep.subr.bf16.mxu0 0
    %5664 = vmatpush2.bf16.msra.mxu0 0
    %5665 = vmatprep.mubr.bf16.mxu0 0
    %5666 = vmatmul.mubr.bf16.gmra.mxu0 %v5632
    %v5667 = vpop.f32.mrf.mxu0
    %v5668 = vadd.f32 0.0, %v5667
    %v5669 = vpop.f32.mrf.mxu0
    %v5670 = vadd.f32 0.0, %v5669
    %v5671 = vpop.f32.mrf.mxu0
    %v5672 = vpop.f32.mrf.mxu0
    %5673 = vdwg.mxu0
    %5674 = vmatprep.subr.bf16.mxu0 %v4886
    %5675 = vmatpush1.bf16.msra.mxu0 %v4885
    %5676 = vmatprep.subr.bf16.mxu0 %v4882
    %5677 = vmatpush1.bf16.msra.mxu0 %v4881
    %5678 = vmatprep.subr.bf16.mxu0 %v4878
    %5679 = vmatpush1.bf16.msra.mxu0 %v4877
    %5680 = vmatprep.subr.bf16.mxu0 %v4874
    %5681 = vmatpush1.bf16.msra.mxu0 %v4873
    %5682 = vmatprep.subr.bf16.mxu0 %v4870
    %5683 = vmatpush1.bf16.msra.mxu0 %v4869
    %5684 = vmatprep.subr.bf16.mxu0 %v4866
    %5685 = vmatpush1.bf16.msra.mxu0 %v4865
    %5686 = vmatprep.subr.bf16.mxu0 %v4862
    %5687 = vmatpush1.bf16.msra.mxu0 %v4861
    %5688 = vmatprep.subr.bf16.mxu0 %v4858
    %5689 = vmatpush1.bf16.msra.mxu0 %v4857
    %5690 = vmatprep.subr.bf16.mxu0 0
    %5691 = vmatpush2.bf16.msra.mxu0 0
    %5692 = vmatprep.subr.bf16.mxu0 0
    %5693 = vmatpush2.bf16.msra.mxu0 0
    %5694 = vmatprep.subr.bf16.mxu0 0
    %5695 = vmatpush2.bf16.msra.mxu0 0
    %5696 = vmatprep.subr.bf16.mxu0 0
    %5697 = vmatpush2.bf16.msra.mxu0 0
    %5698 = vmatprep.subr.bf16.mxu0 0
    %5699 = vmatpush2.bf16.msra.mxu0 0
    %5700 = vmatprep.subr.bf16.mxu0 0
    %5701 = vmatpush2.bf16.msra.mxu0 0
    %5702 = vmatprep.subr.bf16.mxu0 0
    %5703 = vmatpush2.bf16.msra.mxu0 0
    %5704 = vmatprep.subr.bf16.mxu0 0
    %5705 = vmatpush2.bf16.msra.mxu0 0
    %5706 = vmatprep.mubr.bf16.mxu0 0
    %5707 = vmatmul.mubr.bf16.gmra.mxu0 %v5632
    %v5708 = vpop.f32.mrf.mxu0
    %v5709 = vadd.f32 0.0, %v5708
    %v5710 = vpop.f32.mrf.mxu0
    %v5711 = vadd.f32 0.0, %v5710
    %v5712 = vpop.f32.mrf.mxu0
    %v5713 = vpop.f32.mrf.mxu0
    %5714 = vdwg.mxu0
    %v5715 = vadd.f32 %v5628, %v5668
    %v5716 = vadd.f32 %v5629, %v5670
    %v5717 = vadd.f32 %v5630, %v5709
    %v5718 = vadd.f32 %v5631, %v5711
    %v5719 = vxor.u32 %v5715, 2147483648
    %v5720 = vmul.f32 %v5719, 1.442695
    %v5721 = vpow.pop %v5720
    %v5722 = vadd.f32 %v5721, 1.0
    %v5723 = vrcp.pop %v5722
    %v5724 = vmul.f32 1.0, %v5723
    %v5725 = vxor.u32 %v5716, 2147483648
    %v5726 = vmul.f32 %v5725, 1.442695
    %v5727 = vpow.pop %v5726
    %v5728 = vadd.f32 %v5727, 1.0
    %v5729 = vrcp.pop %v5728
    %v5730 = vmul.f32 1.0, %v5729
    %v5731 = vtanh.pop %v5717
    %v5732 = vxor.u32 %v5718, 2147483648
    %v5733 = vmul.f32 %v5732, 1.442695
    %v5734 = vpow.pop %v5733
    %v5735 = vadd.f32 %v5734, 1.0
    %v5736 = vrcp.pop %v5735
    %v5737 = vmul.f32 1.0, %v5736
    %v5738 = vmul.f32 %v5730, %v5625
    %v5739 = vmul.f32 %v5724, %v5731
    %v5740 = vadd.f32 %v5738, %v5739
    %v5741 = vtanh.pop %v5740
    %v5742 = vmul.f32 %v5737, %v5741
    %v5743 = vsel %vm1005, %v4719, %v4715
    %v5744 = vsel %vm1006, %v4720, %v4716
    %v5745 = vsel %vm1007, %v4721, %v4717
    %v5746 = vsel %vm1008, %v4722, %v4718
    %v5747 = vpack.c.bf16 %v5742, %v5742
    %5748 = vmatprep.subr.bf16.mxu0 %v4884
    %5749 = vmatpush1.bf16.msra.mxu0 %v4883
    %5750 = vmatprep.subr.bf16.mxu0 %v4880
    %5751 = vmatpush1.bf16.msra.mxu0 %v4879
    %5752 = vmatprep.subr.bf16.mxu0 %v4876
    %5753 = vmatpush1.bf16.msra.mxu0 %v4875
    %5754 = vmatprep.subr.bf16.mxu0 %v4872
    %5755 = vmatpush1.bf16.msra.mxu0 %v4871
    %5756 = vmatprep.subr.bf16.mxu0 %v4868
    %5757 = vmatpush1.bf16.msra.mxu0 %v4867
    %5758 = vmatprep.subr.bf16.mxu0 %v4864
    %5759 = vmatpush1.bf16.msra.mxu0 %v4863
    %5760 = vmatprep.subr.bf16.mxu0 %v4860
    %5761 = vmatpush1.bf16.msra.mxu0 %v4859
    %5762 = vmatprep.subr.bf16.mxu0 %v4856
    %5763 = vmatpush1.bf16.msra.mxu0 %v4855
    %5764 = vmatprep.subr.bf16.mxu0 0
    %5765 = vmatpush2.bf16.msra.mxu0 0
    %5766 = vmatprep.subr.bf16.mxu0 0
    %5767 = vmatpush2.bf16.msra.mxu0 0
    %5768 = vmatprep.subr.bf16.mxu0 0
    %5769 = vmatpush2.bf16.msra.mxu0 0
    %5770 = vmatprep.subr.bf16.mxu0 0
    %5771 = vmatpush2.bf16.msra.mxu0 0
    %5772 = vmatprep.subr.bf16.mxu0 0
    %5773 = vmatpush2.bf16.msra.mxu0 0
    %5774 = vmatprep.subr.bf16.mxu0 0
    %5775 = vmatpush2.bf16.msra.mxu0 0
    %5776 = vmatprep.subr.bf16.mxu0 0
    %5777 = vmatpush2.bf16.msra.mxu0 0
    %5778 = vmatprep.subr.bf16.mxu0 0
    %5779 = vmatpush2.bf16.msra.mxu0 0
    %5780 = vmatprep.mubr.bf16.mxu0 0
    %5781 = vmatmul.mubr.bf16.gmra.mxu0 %v5747
    %v5782 = vpop.f32.mrf.mxu0
    %v5783 = vadd.f32 0.0, %v5782
    %v5784 = vpop.f32.mrf.mxu0
    %v5785 = vadd.f32 0.0, %v5784
    %v5786 = vpop.f32.mrf.mxu0
    %v5787 = vpop.f32.mrf.mxu0
    %5788 = vdwg.mxu0
    %5789 = vmatprep.subr.bf16.mxu0 %v4886
    %5790 = vmatpush1.bf16.msra.mxu0 %v4885
    %5791 = vmatprep.subr.bf16.mxu0 %v4882
    %5792 = vmatpush1.bf16.msra.mxu0 %v4881
    %5793 = vmatprep.subr.bf16.mxu0 %v4878
    %5794 = vmatpush1.bf16.msra.mxu0 %v4877
    %5795 = vmatprep.subr.bf16.mxu0 %v4874
    %5796 = vmatpush1.bf16.msra.mxu0 %v4873
    %5797 = vmatprep.subr.bf16.mxu0 %v4870
    %5798 = vmatpush1.bf16.msra.mxu0 %v4869
    %5799 = vmatprep.subr.bf16.mxu0 %v4866
    %5800 = vmatpush1.bf16.msra.mxu0 %v4865
    %5801 = vmatprep.subr.bf16.mxu0 %v4862
    %5802 = vmatpush1.bf16.msra.mxu0 %v4861
    %5803 = vmatprep.subr.bf16.mxu0 %v4858
    %5804 = vmatpush1.bf16.msra.mxu0 %v4857
    %5805 = vmatprep.subr.bf16.mxu0 0
    %5806 = vmatpush2.bf16.msra.mxu0 0
    %5807 = vmatprep.subr.bf16.mxu0 0
    %5808 = vmatpush2.bf16.msra.mxu0 0
    %5809 = vmatprep.subr.bf16.mxu0 0
    %5810 = vmatpush2.bf16.msra.mxu0 0
    %5811 = vmatprep.subr.bf16.mxu0 0
    %5812 = vmatpush2.bf16.msra.mxu0 0
    %5813 = vmatprep.subr.bf16.mxu0 0
    %5814 = vmatpush2.bf16.msra.mxu0 0
    %5815 = vmatprep.subr.bf16.mxu0 0
    %5816 = vmatpush2.bf16.msra.mxu0 0
    %5817 = vmatprep.subr.bf16.mxu0 0
    %5818 = vmatpush2.bf16.msra.mxu0 0
    %5819 = vmatprep.subr.bf16.mxu0 0
    %5820 = vmatpush2.bf16.msra.mxu0 0
    %5821 = vmatprep.mubr.bf16.mxu0 0
    %5822 = vmatmul.mubr.bf16.gmra.mxu0 %v5747
    %v5823 = vpop.f32.mrf.mxu0
    %v5824 = vadd.f32 0.0, %v5823
    %v5825 = vpop.f32.mrf.mxu0
    %v5826 = vadd.f32 0.0, %v5825
    %v5827 = vpop.f32.mrf.mxu0
    %v5828 = vpop.f32.mrf.mxu0
    %5829 = vdwg.mxu0
    %v5830 = vadd.f32 %v5743, %v5783
    %v5831 = vadd.f32 %v5744, %v5785
    %v5832 = vadd.f32 %v5745, %v5824
    %v5833 = vadd.f32 %v5746, %v5826
    %v5834 = vxor.u32 %v5830, 2147483648
    %v5835 = vmul.f32 %v5834, 1.442695
    %v5836 = vpow.pop %v5835
    %v5837 = vadd.f32 %v5836, 1.0
    %v5838 = vrcp.pop %v5837
    %v5839 = vmul.f32 1.0, %v5838
    %v5840 = vxor.u32 %v5831, 2147483648
    %v5841 = vmul.f32 %v5840, 1.442695
    %v5842 = vpow.pop %v5841
    %v5843 = vadd.f32 %v5842, 1.0
    %v5844 = vrcp.pop %v5843
    %v5845 = vmul.f32 1.0, %v5844
    %v5846 = vtanh.pop %v5832
    %v5847 = vxor.u32 %v5833, 2147483648
    %v5848 = vmul.f32 %v5847, 1.442695
    %v5849 = vpow.pop %v5848
    %v5850 = vadd.f32 %v5849, 1.0
    %v5851 = vrcp.pop %v5850
    %v5852 = vmul.f32 1.0, %v5851
    %v5853 = vmul.f32 %v5845, %v5740
    %v5854 = vmul.f32 %v5839, %v5846
    %v5855 = vadd.f32 %v5853, %v5854
    %v5856 = vtanh.pop %v5855
    %v5857 = vmul.f32 %v5852, %v5856
    %v5858 = vld [vmem:[%s11] sm:$0x1]
    %v5859 = vld [vmem:[#allocation17] sm:$0xff]
    %v5860 = vld [vmem:[#allocation17 + $0x8] sm:$0xff]
    %v5861 = vld [vmem:[#allocation17 + $0x10] sm:$0xff]
    %v5862 = vld [vmem:[#allocation17 + $0x18] sm:$0xff]
    %v5863 = vld [vmem:[#allocation17 + $0x20] sm:$0xff]
    %v5864 = vld [vmem:[#allocation17 + $0x28] sm:$0xff]
    %v5865 = vld [vmem:[#allocation17 + $0x30] sm:$0xff]
    %v5866 = vld [vmem:[#allocation17 + $0x38] sm:$0xff]
    %v5867 = vld [vmem:[#allocation17 + $0x40] sm:$0xff]
    %v5868 = vld [vmem:[#allocation17 + $0x48] sm:$0xff]
    %v5869 = vld [vmem:[#allocation17 + $0x50] sm:$0xff]
    %v5870 = vld [vmem:[#allocation17 + $0x58] sm:$0xff]
    %v5871 = vld [vmem:[#allocation17 + $0x60] sm:$0xff]
    %v5872 = vld [vmem:[#allocation17 + $0x68] sm:$0xff]
    %v5873 = vld [vmem:[#allocation17 + $0x70] sm:$0xff]
    %v5874 = vld [vmem:[#allocation17 + $0x78] sm:$0xff]
    %v5876 = vlaneseq
    %v5877 = vshrl.u32 %v5876, 7
    %v5878 = vsub.s32 0, %v5877
    %v5879 = vrot.slane %v5858, %v5878
    %5881 = vmatprep.subr.mxu0 0.0
    %5882 = vmatpush1.msra.mxu0 %v5874
    %5883 = vmatprep.subr.mxu0 0.0
    %5884 = vmatpush1.msra.mxu0 %v5873
    %5885 = vmatprep.subr.mxu0 0.0
    %5886 = vmatpush1.msra.mxu0 %v5872
    %5887 = vmatprep.subr.mxu0 0.0
    %5888 = vmatpush1.msra.mxu0 %v5871
    %5889 = vmatprep.subr.mxu0 0.0
    %5890 = vmatpush1.msra.mxu0 %v5870
    %5891 = vmatprep.subr.mxu0 0.0
    %5892 = vmatpush1.msra.mxu0 %v5869
    %5893 = vmatprep.subr.mxu0 0.0
    %5894 = vmatpush1.msra.mxu0 %v5868
    %5895 = vmatprep.subr.mxu0 0.0
    %5896 = vmatpush1.msra.mxu0 %v5867
    %5897 = vmatprep.subr.mxu0 0.0
    %5898 = vmatpush1.msra.mxu0 %v5866
    %5899 = vmatprep.subr.mxu0 0.0
    %5900 = vmatpush1.msra.mxu0 %v5865
    %5901 = vmatprep.subr.mxu0 0.0
    %5902 = vmatpush1.msra.mxu0 %v5864
    %5903 = vmatprep.subr.mxu0 0.0
    %5904 = vmatpush1.msra.mxu0 %v5863
    %5905 = vmatprep.subr.mxu0 0.0
    %5906 = vmatpush1.msra.mxu0 %v5862
    %5907 = vmatprep.subr.mxu0 0.0
    %5908 = vmatpush1.msra.mxu0 %v5861
    %5909 = vmatprep.subr.mxu0 0.0
    %5910 = vmatpush1.msra.mxu0 %v5860
    %5911 = vmatprep.subr.mxu0 0.0
    %5912 = vmatpush1.msra.mxu0 %v5859
    %5913 = vmatprep.subr.mxu0 0.0
    %5914 = vmatpush2.msra.mxu0 0.0
    %5915 = vmatprep.subr.mxu0 0.0
    %5916 = vmatpush2.msra.mxu0 0.0
    %5917 = vmatprep.subr.mxu0 0.0
    %5918 = vmatpush2.msra.mxu0 0.0
    %5919 = vmatprep.subr.mxu0 0.0
    %5920 = vmatpush2.msra.mxu0 0.0
    %5921 = vmatprep.subr.mxu0 0.0
    %5922 = vmatpush2.msra.mxu0 0.0
    %5923 = vmatprep.subr.mxu0 0.0
    %5924 = vmatpush2.msra.mxu0 0.0
    %5925 = vmatprep.subr.mxu0 0.0
    %5926 = vmatpush2.msra.mxu0 0.0
    %5927 = vmatprep.subr.mxu0 0.0
    %5928 = vmatpush2.msra.mxu0 0.0
    %5929 = vmatprep.subr.mxu0 0.0
    %5930 = vmatpush2.msra.mxu0 0.0
    %5931 = vmatprep.subr.mxu0 0.0
    %5932 = vmatpush2.msra.mxu0 0.0
    %5933 = vmatprep.subr.mxu0 0.0
    %5934 = vmatpush2.msra.mxu0 0.0
    %5935 = vmatprep.subr.mxu0 0.0
    %5936 = vmatpush2.msra.mxu0 0.0
    %5937 = vmatprep.subr.mxu0 0.0
    %5938 = vmatpush2.msra.mxu0 0.0
    %5939 = vmatprep.subr.mxu0 0.0
    %5940 = vmatpush2.msra.mxu0 0.0
    %5941 = vmatprep.subr.mxu0 0.0
    %5942 = vmatpush2.msra.mxu0 0.0
    %5943 = vmatprep.subr.mxu0 0.0
    %5944 = vmatpush2.msra.mxu0 0.0
    %5945 = vmatprep.mubr.f32.mxu0 0.0
    %5946 = vmatmul.mubr.f32.gmra.mxu0 %v3862
    %v5947 = vpop.f32.mrf.mxu0
    %v5948 = vadd.f32 %v5879, %v5947
    %v5949 = vpop.f32.mrf.mxu0
    %5950 = vdwg.mxu0
    %5951 = vst [vmem:[#allocation20] sm:$0xff] %v5948
    %v5952 = vld [vmem:[#allocation18] sm:$0xff]
    %v5953 = vld [vmem:[#allocation18 + $0x8] sm:$0xff]
    %v5954 = vld [vmem:[#allocation18 + $0x10] sm:$0xff]
    %v5955 = vld [vmem:[#allocation18 + $0x18] sm:$0xff]
    %v5956 = vld [vmem:[#allocation18 + $0x20] sm:$0xff]
    %v5957 = vld [vmem:[#allocation18 + $0x28] sm:$0xff]
    %v5958 = vld [vmem:[#allocation18 + $0x30] sm:$0xff]
    %v5959 = vld [vmem:[#allocation18 + $0x38] sm:$0xff]
    %v5960 = vld [vmem:[#allocation18 + $0x40] sm:$0xff]
    %v5961 = vld [vmem:[#allocation18 + $0x48] sm:$0xff]
    %v5962 = vld [vmem:[#allocation18 + $0x50] sm:$0xff]
    %v5963 = vld [vmem:[#allocation18 + $0x58] sm:$0xff]
    %v5964 = vld [vmem:[#allocation18 + $0x60] sm:$0xff]
    %v5965 = vld [vmem:[#allocation18 + $0x68] sm:$0xff]
    %v5966 = vld [vmem:[#allocation18 + $0x70] sm:$0xff]
    %v5967 = vld [vmem:[#allocation18 + $0x78] sm:$0xff]
    %5968 = vmatprep.subr.mxu0 0.0
    %5969 = vmatpush1.msra.mxu0 %v5967
    %5970 = vmatprep.subr.mxu0 0.0
    %5971 = vmatpush1.msra.mxu0 %v5966
    %5972 = vmatprep.subr.mxu0 0.0
    %5973 = vmatpush1.msra.mxu0 %v5965
    %5974 = vmatprep.subr.mxu0 0.0
    %5975 = vmatpush1.msra.mxu0 %v5964
    %5976 = vmatprep.subr.mxu0 0.0
    %5977 = vmatpush1.msra.mxu0 %v5963
    %5978 = vmatprep.subr.mxu0 0.0
    %5979 = vmatpush1.msra.mxu0 %v5962
    %5980 = vmatprep.subr.mxu0 0.0
    %5981 = vmatpush1.msra.mxu0 %v5961
    %5982 = vmatprep.subr.mxu0 0.0
    %5983 = vmatpush1.msra.mxu0 %v5960
    %5984 = vmatprep.subr.mxu0 0.0
    %5985 = vmatpush1.msra.mxu0 %v5959
    %5986 = vmatprep.subr.mxu0 0.0
    %5987 = vmatpush1.msra.mxu0 %v5958
    %5988 = vmatprep.subr.mxu0 0.0
    %5989 = vmatpush1.msra.mxu0 %v5957
    %5990 = vmatprep.subr.mxu0 0.0
    %5991 = vmatpush1.msra.mxu0 %v5956
    %5992 = vmatprep.subr.mxu0 0.0
    %5993 = vmatpush1.msra.mxu0 %v5955
    %5994 = vmatprep.subr.mxu0 0.0
    %5995 = vmatpush1.msra.mxu0 %v5954
    %5996 = vmatprep.subr.mxu0 0.0
    %5997 = vmatpush1.msra.mxu0 %v5953
    %5998 = vmatprep.subr.mxu0 0.0
    %5999 = vmatpush1.msra.mxu0 %v5952
    %6000 = vmatprep.subr.mxu0 0.0
    %6001 = vmatpush2.msra.mxu0 0.0
    %6002 = vmatprep.subr.mxu0 0.0
    %6003 = vmatpush2.msra.mxu0 0.0
    %6004 = vmatprep.subr.mxu0 0.0
    %6005 = vmatpush2.msra.mxu0 0.0
    %6006 = vmatprep.subr.mxu0 0.0
    %6007 = vmatpush2.msra.mxu0 0.0
    %6008 = vmatprep.subr.mxu0 0.0
    %6009 = vmatpush2.msra.mxu0 0.0
    %6010 = vmatprep.subr.mxu0 0.0
    %6011 = vmatpush2.msra.mxu0 0.0
    %6012 = vmatprep.subr.mxu0 0.0
    %6013 = vmatpush2.msra.mxu0 0.0
    %6014 = vmatprep.subr.mxu0 0.0
    %6015 = vmatpush2.msra.mxu0 0.0
    %6016 = vmatprep.subr.mxu0 0.0
    %6017 = vmatpush2.msra.mxu0 0.0
    %6018 = vmatprep.subr.mxu0 0.0
    %6019 = vmatpush2.msra.mxu0 0.0
    %6020 = vmatprep.subr.mxu0 0.0
    %6021 = vmatpush2.msra.mxu0 0.0
    %6022 = vmatprep.subr.mxu0 0.0
    %6023 = vmatpush2.msra.mxu0 0.0
    %6024 = vmatprep.subr.mxu0 0.0
    %6025 = vmatpush2.msra.mxu0 0.0
    %6026 = vmatprep.subr.mxu0 0.0
    %6027 = vmatpush2.msra.mxu0 0.0
    %6028 = vmatprep.subr.mxu0 0.0
    %6029 = vmatpush2.msra.mxu0 0.0
    %6030 = vmatprep.subr.mxu0 0.0
    %6031 = vmatpush2.msra.mxu0 0.0
    %6032 = vmatprep.mubr.f32.mxu0 0.0
    %6033 = vmatmul.mubr.f32.gmra.mxu0 %v3862
    %v6034 = vpop.f32.mrf.mxu0
    %v6035 = vadd.f32 %v5879, %v6034
    %v6036 = vpop.f32.mrf.mxu0
    %6037 = vdwg.mxu0
    %6038 = vst [vmem:[#allocation20 + $0x8] sm:$0xff] %v6035
    %v6039 = vld [vmem:[#allocation17] sm:$0xff]
    %v6040 = vld [vmem:[#allocation17 + $0x8] sm:$0xff]
    %v6041 = vld [vmem:[#allocation17 + $0x10] sm:$0xff]
    %v6042 = vld [vmem:[#allocation17 + $0x18] sm:$0xff]
    %v6043 = vld [vmem:[#allocation17 + $0x20] sm:$0xff]
    %v6044 = vld [vmem:[#allocation17 + $0x28] sm:$0xff]
    %v6045 = vld [vmem:[#allocation17 + $0x30] sm:$0xff]
    %v6046 = vld [vmem:[#allocation17 + $0x38] sm:$0xff]
    %v6047 = vld [vmem:[#allocation17 + $0x40] sm:$0xff]
    %v6048 = vld [vmem:[#allocation17 + $0x48] sm:$0xff]
    %v6049 = vld [vmem:[#allocation17 + $0x50] sm:$0xff]
    %v6050 = vld [vmem:[#allocation17 + $0x58] sm:$0xff]
    %v6051 = vld [vmem:[#allocation17 + $0x60] sm:$0xff]
    %v6052 = vld [vmem:[#allocation17 + $0x68] sm:$0xff]
    %v6053 = vld [vmem:[#allocation17 + $0x70] sm:$0xff]
    %v6054 = vld [vmem:[#allocation17 + $0x78] sm:$0xff]
    %6055 = vmatprep.subr.mxu0 0.0
    %6056 = vmatpush1.msra.mxu0 %v6054
    %6057 = vmatprep.subr.mxu0 0.0
    %6058 = vmatpush1.msra.mxu0 %v6053
    %6059 = vmatprep.subr.mxu0 0.0
    %6060 = vmatpush1.msra.mxu0 %v6052
    %6061 = vmatprep.subr.mxu0 0.0
    %6062 = vmatpush1.msra.mxu0 %v6051
    %6063 = vmatprep.subr.mxu0 0.0
    %6064 = vmatpush1.msra.mxu0 %v6050
    %6065 = vmatprep.subr.mxu0 0.0
    %6066 = vmatpush1.msra.mxu0 %v6049
    %6067 = vmatprep.subr.mxu0 0.0
    %6068 = vmatpush1.msra.mxu0 %v6048
    %6069 = vmatprep.subr.mxu0 0.0
    %6070 = vmatpush1.msra.mxu0 %v6047
    %6071 = vmatprep.subr.mxu0 0.0
    %6072 = vmatpush1.msra.mxu0 %v6046
    %6073 = vmatprep.subr.mxu0 0.0
    %6074 = vmatpush1.msra.mxu0 %v6045
    %6075 = vmatprep.subr.mxu0 0.0
    %6076 = vmatpush1.msra.mxu0 %v6044
    %6077 = vmatprep.subr.mxu0 0.0
    %6078 = vmatpush1.msra.mxu0 %v6043
    %6079 = vmatprep.subr.mxu0 0.0
    %6080 = vmatpush1.msra.mxu0 %v6042
    %6081 = vmatprep.subr.mxu0 0.0
    %6082 = vmatpush1.msra.mxu0 %v6041
    %6083 = vmatprep.subr.mxu0 0.0
    %6084 = vmatpush1.msra.mxu0 %v6040
    %6085 = vmatprep.subr.mxu0 0.0
    %6086 = vmatpush1.msra.mxu0 %v6039
    %6087 = vmatprep.subr.mxu0 0.0
    %6088 = vmatpush2.msra.mxu0 0.0
    %6089 = vmatprep.subr.mxu0 0.0
    %6090 = vmatpush2.msra.mxu0 0.0
    %6091 = vmatprep.subr.mxu0 0.0
    %6092 = vmatpush2.msra.mxu0 0.0
    %6093 = vmatprep.subr.mxu0 0.0
    %6094 = vmatpush2.msra.mxu0 0.0
    %6095 = vmatprep.subr.mxu0 0.0
    %6096 = vmatpush2.msra.mxu0 0.0
    %6097 = vmatprep.subr.mxu0 0.0
    %6098 = vmatpush2.msra.mxu0 0.0
    %6099 = vmatprep.subr.mxu0 0.0
    %6100 = vmatpush2.msra.mxu0 0.0
    %6101 = vmatprep.subr.mxu0 0.0
    %6102 = vmatpush2.msra.mxu0 0.0
    %6103 = vmatprep.subr.mxu0 0.0
    %6104 = vmatpush2.msra.mxu0 0.0
    %6105 = vmatprep.subr.mxu0 0.0
    %6106 = vmatpush2.msra.mxu0 0.0
    %6107 = vmatprep.subr.mxu0 0.0
    %6108 = vmatpush2.msra.mxu0 0.0
    %6109 = vmatprep.subr.mxu0 0.0
    %6110 = vmatpush2.msra.mxu0 0.0
    %6111 = vmatprep.subr.mxu0 0.0
    %6112 = vmatpush2.msra.mxu0 0.0
    %6113 = vmatprep.subr.mxu0 0.0
    %6114 = vmatpush2.msra.mxu0 0.0
    %6115 = vmatprep.subr.mxu0 0.0
    %6116 = vmatpush2.msra.mxu0 0.0
    %6117 = vmatprep.subr.mxu0 0.0
    %6118 = vmatpush2.msra.mxu0 0.0
    %6119 = vmatprep.mubr.f32.mxu0 0.0
    %6120 = vmatmul.mubr.f32.gmra.mxu0 %v5857
    %v6121 = vpop.f32.mrf.mxu0
    %v6122 = vadd.f32 %v5879, %v6121
    %v6123 = vpop.f32.mrf.mxu0
    %6124 = vdwg.mxu0
    %6125 = vst [vmem:[#allocation20 + $0x10] sm:$0xff] %v6122
    %v6126 = vld [vmem:[#allocation18] sm:$0xff]
    %v6127 = vld [vmem:[#allocation18 + $0x8] sm:$0xff]
    %v6128 = vld [vmem:[#allocation18 + $0x10] sm:$0xff]
    %v6129 = vld [vmem:[#allocation18 + $0x18] sm:$0xff]
    %v6130 = vld [vmem:[#allocation18 + $0x20] sm:$0xff]
    %v6131 = vld [vmem:[#allocation18 + $0x28] sm:$0xff]
    %v6132 = vld [vmem:[#allocation18 + $0x30] sm:$0xff]
    %v6133 = vld [vmem:[#allocation18 + $0x38] sm:$0xff]
    %v6134 = vld [vmem:[#allocation18 + $0x40] sm:$0xff]
    %v6135 = vld [vmem:[#allocation18 + $0x48] sm:$0xff]
    %v6136 = vld [vmem:[#allocation18 + $0x50] sm:$0xff]
    %v6137 = vld [vmem:[#allocation18 + $0x58] sm:$0xff]
    %v6138 = vld [vmem:[#allocation18 + $0x60] sm:$0xff]
    %v6139 = vld [vmem:[#allocation18 + $0x68] sm:$0xff]
    %v6140 = vld [vmem:[#allocation18 + $0x70] sm:$0xff]
    %v6141 = vld [vmem:[#allocation18 + $0x78] sm:$0xff]
    %6142 = vmatprep.subr.mxu0 0.0
    %6143 = vmatpush1.msra.mxu0 %v6141
    %6144 = vmatprep.subr.mxu0 0.0
    %6145 = vmatpush1.msra.mxu0 %v6140
    %6146 = vmatprep.subr.mxu0 0.0
    %6147 = vmatpush1.msra.mxu0 %v6139
    %6148 = vmatprep.subr.mxu0 0.0
    %6149 = vmatpush1.msra.mxu0 %v6138
    %6150 = vmatprep.subr.mxu0 0.0
    %6151 = vmatpush1.msra.mxu0 %v6137
    %6152 = vmatprep.subr.mxu0 0.0
    %6153 = vmatpush1.msra.mxu0 %v6136
    %6154 = vmatprep.subr.mxu0 0.0
    %6155 = vmatpush1.msra.mxu0 %v6135
    %6156 = vmatprep.subr.mxu0 0.0
    %6157 = vmatpush1.msra.mxu0 %v6134
    %6158 = vmatprep.subr.mxu0 0.0
    %6159 = vmatpush1.msra.mxu0 %v6133
    %6160 = vmatprep.subr.mxu0 0.0
    %6161 = vmatpush1.msra.mxu0 %v6132
    %6162 = vmatprep.subr.mxu0 0.0
    %6163 = vmatpush1.msra.mxu0 %v6131
    %6164 = vmatprep.subr.mxu0 0.0
    %6165 = vmatpush1.msra.mxu0 %v6130
    %6166 = vmatprep.subr.mxu0 0.0
    %6167 = vmatpush1.msra.mxu0 %v6129
    %6168 = vmatprep.subr.mxu0 0.0
    %6169 = vmatpush1.msra.mxu0 %v6128
    %6170 = vmatprep.subr.mxu0 0.0
    %6171 = vmatpush1.msra.mxu0 %v6127
    %6172 = vmatprep.subr.mxu0 0.0
    %6173 = vmatpush1.msra.mxu0 %v6126
    %6174 = vmatprep.subr.mxu0 0.0
    %6175 = vmatpush2.msra.mxu0 0.0
    %6176 = vmatprep.subr.mxu0 0.0
    %6177 = vmatpush2.msra.mxu0 0.0
    %6178 = vmatprep.subr.mxu0 0.0
    %6179 = vmatpush2.msra.mxu0 0.0
    %6180 = vmatprep.subr.mxu0 0.0
    %6181 = vmatpush2.msra.mxu0 0.0
    %6182 = vmatprep.subr.mxu0 0.0
    %6183 = vmatpush2.msra.mxu0 0.0
    %6184 = vmatprep.subr.mxu0 0.0
    %6185 = vmatpush2.msra.mxu0 0.0
    %6186 = vmatprep.subr.mxu0 0.0
    %6187 = vmatpush2.msra.mxu0 0.0
    %6188 = vmatprep.subr.mxu0 0.0
    %6189 = vmatpush2.msra.mxu0 0.0
    %6190 = vmatprep.subr.mxu0 0.0
    %6191 = vmatpush2.msra.mxu0 0.0
    %6192 = vmatprep.subr.mxu0 0.0
    %6193 = vmatpush2.msra.mxu0 0.0
    %6194 = vmatprep.subr.mxu0 0.0
    %6195 = vmatpush2.msra.mxu0 0.0
    %6196 = vmatprep.subr.mxu0 0.0
    %6197 = vmatpush2.msra.mxu0 0.0
    %6198 = vmatprep.subr.mxu0 0.0
    %6199 = vmatpush2.msra.mxu0 0.0
    %6200 = vmatprep.subr.mxu0 0.0
    %6201 = vmatpush2.msra.mxu0 0.0
    %6202 = vmatprep.subr.mxu0 0.0
    %6203 = vmatpush2.msra.mxu0 0.0
    %6204 = vmatprep.subr.mxu0 0.0
    %6205 = vmatpush2.msra.mxu0 0.0
    %6206 = vmatprep.mubr.f32.mxu0 0.0
    %6207 = vmatmul.mubr.f32.gmra.mxu0 %v5857
    %v6208 = vpop.f32.mrf.mxu0
    %v6209 = vadd.f32 %v5879, %v6208
    %v6210 = vpop.f32.mrf.mxu0
    %6211 = vdwg.mxu0
    %6212 = vst [vmem:[#allocation20 + $0x18] sm:$0xff] %v6209
    // Predicated region
    $region546: #{tpu_custom_call.1} parent=1 // pred_check
      _
    $region547: #{tpu_custom_call.1} parent=1 // pred_check_branch
      %6214 = sbr.rel (0) target = $region549
    $region548: #{tpu_custom_call.1} parent=1 // pred_region
      %s6216 = ssub.s32 512, 512
      %6217 = vsyncadd [#allocation11], %s6216
      %s6218 = sshll.u32 [#allocation20], 4
      %s6219 = int_to_ptr.vmem [resolvable:$true] %s6218
      %6224 = dma.vmem_to_hbm [thread:$0]  %s6219, 512, %s12, [#allocation11], 128, 128, 8
    $region549: #{tpu_custom_call.1} parent=1 // pred_fallthru
      _
    // Predicated region
    $region550: #{tpu_custom_call.1} parent=1 // pred_check
      _
    $region551: #{tpu_custom_call.1} parent=1 // pred_check_branch
      %6226 = sbr.rel (0) target = $region553
    $region552: #{tpu_custom_call.1} parent=1 // pred_region
      %6227 = dma.done [#allocation11], 512
    $region553: #{tpu_custom_call.1} parent=1 // pred_fallthru
      _
    %6228 = vsyncpa [#allocation10], 1
    %6229 = vsyncpa [#allocation13], 1
    %6230 = vsyncpa [#allocation16], 1
    %6231 = vsyncpa [#allocation19], 1
    %6232 = vsyncpa [#allocation11], 1
  %6233 = vsyncmov [#allocation6]
  %s6234 = vpop.sfrf %6233
  %p6235 = scmp.eq.s32.totalorder %s6234, 0
  %p6236 = pneg %p6235
  %6238 = shalt.err (%p6236)

</llo_original>
